<compile_context>
chip_gen: v7x
topology: tpu7x:2x2x1
jax: 0.10.0
libtpu: 0.0.40
codegen_flags: <defaults>
</compile_context>

<pallas_src>
import functools
import math

import jax
import jax.numpy as jnp
from jax.experimental import pallas as pl
from jax.experimental.pallas import tpu as pltpu

EMB = 256                                   # embedding_size = output_dim
N_HEADS = 8
D_K = EMB // N_HEADS
D_FF = 128
CONV_FILTERS = [[1, 32], [3, 32], [3, 64], [5, 128]]
NUM_FILTERS = sum(f[1] for f in CONV_FILTERS)   # 256
K_MAX = max(f[0] for f in CONV_FILTERS)         # 5
SEQ_VOCAB = 21                              # SEQCharLen
SMI_VOCAB = 53                              # SMICharLen
LN_EPS = 1e-5
PAD_MULT = 16                               # pad seq length to multiple of 16
EXTRA = 16                                  # conv halo rows (>= K_MAX - 1)

WEIGHT_KEYS = ('conv_w', 'conv_b', 'proj_w', 'proj_b',
               'wqkv', 'bqkv', 'wo', 'bo',
               'w1', 'b1', 'w2', 'b2',
               'ln1_g', 'ln1_b', 'ln2_g', 'ln2_b')
N_W = len(WEIGHT_KEYS)

_CONTRACT_LAST = (((1,), (1,)), ((), ()))   # dot_general: contract axis1/axis1


# ----------------------------- in-kernel math ------------------------------

def _layer_norm(x, g, b, eps):
    """One-pass LayerNorm statistics (mean and E[x^2])."""
    d = x.shape[-1]
    mean = jnp.sum(x, axis=-1, keepdims=True) * (1.0 / d)
    msq = jnp.sum(x * x, axis=-1, keepdims=True) * (1.0 / d)
    var = msq - mean * mean
    return (x - mean) * jax.lax.rsqrt(var + eps) * g + b


def _encode_one(e_ref, w_refs, l_pad, l_real, eps, out_scale):
    """Conv-embedding + projection + one post-LN transformer layer (in VMEM).

    e_ref: (l_pad + EXTRA, EMB) bf16, real tokens at rows [2, 2 + l_real),
           zeros elsewhere (emulates Conv1d 'same' zero padding).
    Returns (l_pad, EMB) f32; rows >= l_real are garbage (masked downstream).
    """
    (cw, cb, pw, pb, wqkv, bqkv, wo, bo,
     w1, b1, w2, b2, g1, be1, g2, be2) = w_refs

    # ---- fused 4-branch conv: 5 shifted taps x block-structured weight ----
    e = e_ref[...]                                        # (l_pad+EXTRA, EMB)
    acc = None
    for j in range(K_MAX):
        tap = e[j:j + l_pad, :]                           # (l_pad, EMB) bf16
        wj = cw[j * EMB:(j + 1) * EMB, :]                 # (EMB, NUM_FILTERS)
        d = jnp.dot(tap, wj, preferred_element_type=jnp.float32)
        acc = d if acc is None else acc + d
    h = jnp.maximum(acc + cb[...], 0.0)                   # ReLU, f32
    x = (jnp.dot(h.astype(jnp.bfloat16), pw[...],
                 preferred_element_type=jnp.float32) + pb[...])  # (l_pad, EMB)

    # ---- multi-head self-attention (fused QKV, per-head wo accumulation) --
    xb = x.astype(jnp.bfloat16)
    qkv = (jnp.dot(xb, wqkv[...], preferred_element_type=jnp.float32)
           + bqkv[...])                                   # (l_pad, 3*EMB)
    q = qkv[:, :EMB]
    k = qkv[:, EMB:2 * EMB]
    v = qkv[:, 2 * EMB:]

    col = jax.lax.broadcasted_iota(jnp.int32, (l_pad, l_pad), 1)
    key_mask = jnp.where(col < l_real, 0.0, -1e30).astype(jnp.float32)

    wo_full = wo[...]                                     # (EMB, EMB) bf16
    qscale = 1.0 / math.sqrt(D_K)
    attn = None
    for hd in range(N_HEADS):
        sl = slice(hd * D_K, (hd + 1) * D_K)
        qh = (q[:, sl] * qscale).astype(jnp.bfloat16)     # scale folded in
        kh = k[:, sl].astype(jnp.bfloat16)
        vh = v[:, sl].astype(jnp.bfloat16)
        s = jax.lax.dot_general(qh, kh, _CONTRACT_LAST,
                                preferred_element_type=jnp.float32) + key_mask
        s = s - jnp.max(s, axis=-1, keepdims=True)
        p = jnp.exp(s)
        p = p * pl.reciprocal(jnp.sum(p, axis=-1, keepdims=True), approx=True)
        hh = jnp.dot(p.astype(jnp.bfloat16), vh,
                     preferred_element_type=jnp.float32)  # (l_pad, D_K)
        part = jnp.dot(hh.astype(jnp.bfloat16), wo_full[sl, :],
                       preferred_element_type=jnp.float32)
        attn = part if attn is None else attn + part      # (l_pad, EMB)

    # ---- residual + LN1, FFN + residual + LN2 ----
    h1 = x + attn + bo[...]
    x1 = _layer_norm(h1, g1[...], be1[...], eps)
    ff = jnp.maximum(
        jnp.dot(x1.astype(jnp.bfloat16), w1[...],
                preferred_element_type=jnp.float32) + b1[...], 0.0)
    ff2 = (jnp.dot(ff.astype(jnp.bfloat16), w2[...],
                   preferred_element_type=jnp.float32) + b2[...])
    h2 = x1 + ff2
    g2v, b2v = g2[...], be2[...]
    if out_scale != 1.0:        # fold 1/sqrt(EMB) score scale into LN2 affine
        g2v = g2v * out_scale
        b2v = b2v * out_scale
    return _layer_norm(h2, g2v, b2v, eps)


def _la_kernel(*refs, lq_pad, lq_real, lk_pad, lk_real, eps, score_scale):
    """Whole LA_Module forward for one batch element, entirely in VMEM."""
    seq_e_ref, smi_e_ref = refs[0], refs[1]
    seq_w = refs[2:2 + N_W]
    smi_w = refs[2 + N_W:2 + 2 * N_W]
    o_ref = refs[2 + 2 * N_W]

    seq_out = _encode_one(seq_e_ref, seq_w, lq_pad, lq_real, eps, score_scale)
    smi_out = _encode_one(smi_e_ref, smi_w, lk_pad, lk_real, eps, 1.0)

    # score = (seq_out / sqrt(EMB)) @ smi_out^T   (scale already folded in)
    o_ref[...] = jax.lax.dot_general(
        seq_out.astype(jnp.bfloat16), smi_out.astype(jnp.bfloat16),
        _CONTRACT_LAST, preferred_element_type=jnp.float32)


# ------------------------------- wrapper -----------------------------------

def _round_up(x, m):
    return ((x + m - 1) // m) * m


def _embed_padded(tokens, table, l_ext):
    # TODO(synk): nn.Embedding gather is JAX-side glue (no clean Pallas
    # gather needed at these sizes).
    B, L = tokens.shape
    emb = jnp.take(table, tokens, axis=0)                 # (B, L, EMB) bf16
    emb = jnp.pad(emb, ((0, 0), (2, l_ext - L - 2), (0, 0)))
    return emb.reshape(B * l_ext, EMB)


def _weights(p):
    return [p[k] for k in WEIGHT_KEYS]


def la_module_forward(seq_encode, smi_encode, params):
    B, Lq = seq_encode.shape
    Bs, Lk = smi_encode.shape
    assert B == Bs
    lqp = _round_up(Lq, PAD_MULT)
    lkp = _round_up(Lk, PAD_MULT)
    lqe = lqp + EXTRA
    lke = lkp + EXTRA

    seq_emb = _embed_padded(seq_encode, params['seq']['embed'], lqe)
    smi_emb = _embed_padded(smi_encode, params['smi']['embed'], lke)
    seq_w = _weights(params['seq'])
    smi_w = _weights(params['smi'])

    kernel = functools.partial(
        _la_kernel, lq_pad=lqp, lq_real=Lq, lk_pad=lkp, lk_real=Lk,
        eps=LN_EPS, score_scale=1.0 / math.sqrt(EMB))

    weight_specs = [pl.BlockSpec(w.shape, lambda b: (0, 0))
                    for w in (seq_w + smi_w)]

    score = pl.pallas_call(
        kernel,
        out_shape=jax.ShapeDtypeStruct((B * lqp, lkp), jnp.float32),
        grid=(B,),
        in_specs=([pl.BlockSpec((lqe, EMB), lambda b: (b, 0)),
                   pl.BlockSpec((lke, EMB), lambda b: (b, 0))]
                  + weight_specs),
        out_specs=pl.BlockSpec((lqp, lkp), lambda b: (b, 0)),
        compiler_params=pltpu.CompilerParams(
            dimension_semantics=("parallel",)),
    )(seq_emb, smi_emb, *seq_w, *smi_w)

    return score.reshape(B, lqp, lkp)[:, :Lq, :Lk]


# ----------------------------- parameter init ------------------------------

def _dense(key, k_in, n_out, scale=0.02):
    kw, kb = jax.random.split(key)
    w = jax.random.normal(kw, (k_in, n_out), jnp.float32) * scale
    b = jax.random.normal(kb, (n_out,), jnp.float32) * scale
    return w, b


def init_encoder_params(key, vocab):
    keys = jax.random.split(key, 12)
    embed = (jax.random.normal(keys[0], (vocab, EMB), jnp.float32)
             * 0.02).astype(jnp.bfloat16)

    # Fuse the four conv filters into one block-structured (5*EMB, 256)
    # weight: each filter's taps are centered in the 5-tap window; unused
    # taps are zero (matches Conv1d 'same' zero padding).
    w_fused = jnp.zeros((K_MAX * EMB, NUM_FILTERS), jnp.float32)
    b_parts, col = [], 0
    for i, (k, cout) in enumerate(CONV_FILTERS):
        w, b = _dense(keys[1 + i], k * EMB, cout)
        off = (K_MAX - k) // 2
        w_fused = w_fused.at[off * EMB:(off + k) * EMB, col:col + cout].set(w)
        b_parts.append(b)
        col += cout
    proj_w, proj_b = _dense(keys[5], NUM_FILTERS, EMB)

    wq, bq = _dense(keys[6], EMB, EMB)
    wk, bk = _dense(keys[7], EMB, EMB)
    wv, bv = _dense(keys[8], EMB, EMB)
    wo, bo = _dense(keys[9], EMB, EMB)
    w1, b1 = _dense(keys[10], EMB, D_FF)
    w2, b2 = _dense(keys[11], D_FF, EMB)

    return {
        'embed': embed,
        'conv_w': w_fused.astype(jnp.bfloat16),
        'conv_b': jnp.concatenate(b_parts).reshape(1, NUM_FILTERS),
        'proj_w': proj_w.astype(jnp.bfloat16),
        'proj_b': proj_b.reshape(1, EMB),
        'wqkv': jnp.concatenate([wq, wk, wv], axis=1).astype(jnp.bfloat16),
        'bqkv': jnp.concatenate([bq, bk, bv]).reshape(1, 3 * EMB),
        'wo': wo.astype(jnp.bfloat16),
        'bo': bo.reshape(1, EMB),
        'w1': w1.astype(jnp.bfloat16), 'b1': b1.reshape(1, D_FF),
        'w2': w2.astype(jnp.bfloat16), 'b2': b2.reshape(1, EMB),
        'ln1_g': jnp.ones((1, EMB), jnp.float32),
        'ln1_b': jnp.zeros((1, EMB), jnp.float32),
        'ln2_g': jnp.ones((1, EMB), jnp.float32),
        'ln2_b': jnp.zeros((1, EMB), jnp.float32),
    }


def init_params(key):
    k_seq, k_smi = jax.random.split(key)
    return {'seq': init_encoder_params(k_seq, SEQ_VOCAB),
            'smi': init_encoder_params(k_smi, SMI_VOCAB)}


# --------------------------------- main -------------------------------------

if __name__ == "__main__":
    B, L_SEQ, L_SMI = 2, 16, 24

    key = jax.random.PRNGKey(0)
    k_seq, k_smi, k_par = jax.random.split(key, 3)
    seq_encode = jax.random.randint(k_seq, (B, L_SEQ), 0, SEQ_VOCAB, jnp.int32)
    smi_encode = jax.random.randint(k_smi, (B, L_SMI), 0, SMI_VOCAB, jnp.int32)
    params = init_params(k_par)

    fwd = jax.jit(lambda a, b: la_module_forward(a, b, params))
    score = fwd(seq_encode, smi_encode)
    jax.block_until_ready(score)

    assert score.shape == (B, L_SEQ, L_SMI)
    assert score.dtype == jnp.float32
    print("KERNEL_OK")
</pallas_src>

<mosaic_0001>
module attributes {stable_mosaic.version = 11 : i64} {
  func.func @_la_kernel(%arg0: i32, %arg1: memref<32x256xbf16, #tpu.memory_space<vmem>>, %arg2: memref<48x256xbf16, #tpu.memory_space<vmem>>, %arg3: memref<1280x256xbf16, #tpu.memory_space<vmem>>, %arg4: memref<1x256xf32, #tpu.memory_space<vmem>>, %arg5: memref<256x256xbf16, #tpu.memory_space<vmem>>, %arg6: memref<1x256xf32, #tpu.memory_space<vmem>>, %arg7: memref<256x768xbf16, #tpu.memory_space<vmem>>, %arg8: memref<1x768xf32, #tpu.memory_space<vmem>>, %arg9: memref<256x256xbf16, #tpu.memory_space<vmem>>, %arg10: memref<1x256xf32, #tpu.memory_space<vmem>>, %arg11: memref<256x128xbf16, #tpu.memory_space<vmem>>, %arg12: memref<1x128xf32, #tpu.memory_space<vmem>>, %arg13: memref<128x256xbf16, #tpu.memory_space<vmem>>, %arg14: memref<1x256xf32, #tpu.memory_space<vmem>>, %arg15: memref<1x256xf32, #tpu.memory_space<vmem>>, %arg16: memref<1x256xf32, #tpu.memory_space<vmem>>, %arg17: memref<1x256xf32, #tpu.memory_space<vmem>>, %arg18: memref<1x256xf32, #tpu.memory_space<vmem>>, %arg19: memref<1280x256xbf16, #tpu.memory_space<vmem>>, %arg20: memref<1x256xf32, #tpu.memory_space<vmem>>, %arg21: memref<256x256xbf16, #tpu.memory_space<vmem>>, %arg22: memref<1x256xf32, #tpu.memory_space<vmem>>, %arg23: memref<256x768xbf16, #tpu.memory_space<vmem>>, %arg24: memref<1x768xf32, #tpu.memory_space<vmem>>, %arg25: memref<256x256xbf16, #tpu.memory_space<vmem>>, %arg26: memref<1x256xf32, #tpu.memory_space<vmem>>, %arg27: memref<256x128xbf16, #tpu.memory_space<vmem>>, %arg28: memref<1x128xf32, #tpu.memory_space<vmem>>, %arg29: memref<128x256xbf16, #tpu.memory_space<vmem>>, %arg30: memref<1x256xf32, #tpu.memory_space<vmem>>, %arg31: memref<1x256xf32, #tpu.memory_space<vmem>>, %arg32: memref<1x256xf32, #tpu.memory_space<vmem>>, %arg33: memref<1x256xf32, #tpu.memory_space<vmem>>, %arg34: memref<1x256xf32, #tpu.memory_space<vmem>>, %arg35: memref<16x32xf32, #tpu.memory_space<vmem>>) attributes {dimension_semantics = [#tpu.dimension_semantics<parallel>], iteration_bounds = array<i64: 2>, scalar_prefetch = 0 : i64, scratch_operands = 0 : i64, tpu.core_type = #tpu.core_type<tc>, window_params = [{transform_indices = @transform_0, window_bounds = array<i64: 32, 256>}, {transform_indices = @transform_1, window_bounds = array<i64: 48, 256>}, {pipeline_mode = #tpu.pipeline_mode<synchronous>, transform_indices = @transform_2, window_bounds = array<i64: 1280, 256>}, {pipeline_mode = #tpu.pipeline_mode<synchronous>, transform_indices = @transform_3, window_bounds = array<i64: 1, 256>}, {pipeline_mode = #tpu.pipeline_mode<synchronous>, transform_indices = @transform_4, window_bounds = array<i64: 256, 256>}, {pipeline_mode = #tpu.pipeline_mode<synchronous>, transform_indices = @transform_5, window_bounds = array<i64: 1, 256>}, {pipeline_mode = #tpu.pipeline_mode<synchronous>, transform_indices = @transform_6, window_bounds = array<i64: 256, 768>}, {pipeline_mode = #tpu.pipeline_mode<synchronous>, transform_indices = @transform_7, window_bounds = array<i64: 1, 768>}, {pipeline_mode = #tpu.pipeline_mode<synchronous>, transform_indices = @transform_8, window_bounds = array<i64: 256, 256>}, {pipeline_mode = #tpu.pipeline_mode<synchronous>, transform_indices = @transform_9, window_bounds = array<i64: 1, 256>}, {pipeline_mode = #tpu.pipeline_mode<synchronous>, transform_indices = @transform_10, window_bounds = array<i64: 256, 128>}, {pipeline_mode = #tpu.pipeline_mode<synchronous>, transform_indices = @transform_11, window_bounds = array<i64: 1, 128>}, {pipeline_mode = #tpu.pipeline_mode<synchronous>, transform_indices = @transform_12, window_bounds = array<i64: 128, 256>}, {pipeline_mode = #tpu.pipeline_mode<synchronous>, transform_indices = @transform_13, window_bounds = array<i64: 1, 256>}, {pipeline_mode = #tpu.pipeline_mode<synchronous>, transform_indices = @transform_14, window_bounds = array<i64: 1, 256>}, {pipeline_mode = #tpu.pipeline_mode<synchronous>, transform_indices = @transform_15, window_bounds = array<i64: 1, 256>}, {pipeline_mode = #tpu.pipeline_mode<synchronous>, transform_indices = @transform_16, window_bounds = array<i64: 1, 256>}, {pipeline_mode = #tpu.pipeline_mode<synchronous>, transform_indices = @transform_17, window_bounds = array<i64: 1, 256>}, {pipeline_mode = #tpu.pipeline_mode<synchronous>, transform_indices = @transform_18, window_bounds = array<i64: 1280, 256>}, {pipeline_mode = #tpu.pipeline_mode<synchronous>, transform_indices = @transform_19, window_bounds = array<i64: 1, 256>}, {pipeline_mode = #tpu.pipeline_mode<synchronous>, transform_indices = @transform_20, window_bounds = array<i64: 256, 256>}, {pipeline_mode = #tpu.pipeline_mode<synchronous>, transform_indices = @transform_21, window_bounds = array<i64: 1, 256>}, {pipeline_mode = #tpu.pipeline_mode<synchronous>, transform_indices = @transform_22, window_bounds = array<i64: 256, 768>}, {pipeline_mode = #tpu.pipeline_mode<synchronous>, transform_indices = @transform_23, window_bounds = array<i64: 1, 768>}, {pipeline_mode = #tpu.pipeline_mode<synchronous>, transform_indices = @transform_24, window_bounds = array<i64: 256, 256>}, {pipeline_mode = #tpu.pipeline_mode<synchronous>, transform_indices = @transform_25, window_bounds = array<i64: 1, 256>}, {pipeline_mode = #tpu.pipeline_mode<synchronous>, transform_indices = @transform_26, window_bounds = array<i64: 256, 128>}, {pipeline_mode = #tpu.pipeline_mode<synchronous>, transform_indices = @transform_27, window_bounds = array<i64: 1, 128>}, {pipeline_mode = #tpu.pipeline_mode<synchronous>, transform_indices = @transform_28, window_bounds = array<i64: 128, 256>}, {pipeline_mode = #tpu.pipeline_mode<synchronous>, transform_indices = @transform_29, window_bounds = array<i64: 1, 256>}, {pipeline_mode = #tpu.pipeline_mode<synchronous>, transform_indices = @transform_30, window_bounds = array<i64: 1, 256>}, {pipeline_mode = #tpu.pipeline_mode<synchronous>, transform_indices = @transform_31, window_bounds = array<i64: 1, 256>}, {pipeline_mode = #tpu.pipeline_mode<synchronous>, transform_indices = @transform_32, window_bounds = array<i64: 1, 256>}, {pipeline_mode = #tpu.pipeline_mode<synchronous>, transform_indices = @transform_33, window_bounds = array<i64: 1, 256>}, {transform_indices = @transform_34, window_bounds = array<i64: 16, 32>}]} {
    %c0 = arith.constant 0 : index
    %c0_0 = arith.constant 0 : index
    %0 = vector.load %arg1[%c0, %c0_0] : memref<32x256xbf16, #tpu.memory_space<vmem>>, vector<32x256xbf16>
    %1 = vector.extract_strided_slice %0 {offsets = [0, 0], sizes = [16, 256], strides = [1, 1]} : vector<32x256xbf16> to vector<16x256xbf16>
    %c0_1 = arith.constant 0 : index
    %c0_2 = arith.constant 0 : index
    %2 = vector.load %arg3[%c0_1, %c0_2] : memref<1280x256xbf16, #tpu.memory_space<vmem>>, vector<256x256xbf16>
    %cst = arith.constant dense<0.000000e+00> : vector<16x256xf32>
    %3 = tpu.matmul %1, %2, %cst {dimension_numbers = #tpu.dot_dimension_numbers<[1], [0], [0], [1], [0, 0, 1, 1], [], []>} : vector<16x256xbf16>, vector<256x256xbf16>, vector<16x256xf32> -> vector<16x256xf32>
    %4 = vector.extract_strided_slice %0 {offsets = [1, 0], sizes = [16, 256], strides = [1, 1]} : vector<32x256xbf16> to vector<16x256xbf16>
    %c256 = arith.constant 256 : index
    %c0_3 = arith.constant 0 : index
    %5 = vector.load %arg3[%c256, %c0_3] : memref<1280x256xbf16, #tpu.memory_space<vmem>>, vector<256x256xbf16>
    %cst_4 = arith.constant dense<0.000000e+00> : vector<16x256xf32>
    %6 = tpu.matmul %4, %5, %cst_4 {dimension_numbers = #tpu.dot_dimension_numbers<[1], [0], [0], [1], [0, 0, 1, 1], [], []>} : vector<16x256xbf16>, vector<256x256xbf16>, vector<16x256xf32> -> vector<16x256xf32>
    %7 = arith.addf %3, %6 : vector<16x256xf32>
    %8 = vector.extract_strided_slice %0 {offsets = [2, 0], sizes = [16, 256], strides = [1, 1]} : vector<32x256xbf16> to vector<16x256xbf16>
    %c512 = arith.constant 512 : index
    %c0_5 = arith.constant 0 : index
    %9 = vector.load %arg3[%c512, %c0_5] : memref<1280x256xbf16, #tpu.memory_space<vmem>>, vector<256x256xbf16>
    %cst_6 = arith.constant dense<0.000000e+00> : vector<16x256xf32>
    %10 = tpu.matmul %8, %9, %cst_6 {dimension_numbers = #tpu.dot_dimension_numbers<[1], [0], [0], [1], [0, 0, 1, 1], [], []>} : vector<16x256xbf16>, vector<256x256xbf16>, vector<16x256xf32> -> vector<16x256xf32>
    %11 = arith.addf %7, %10 : vector<16x256xf32>
    %12 = vector.extract_strided_slice %0 {offsets = [3, 0], sizes = [16, 256], strides = [1, 1]} : vector<32x256xbf16> to vector<16x256xbf16>
    %c768 = arith.constant 768 : index
    %c0_7 = arith.constant 0 : index
    %13 = vector.load %arg3[%c768, %c0_7] : memref<1280x256xbf16, #tpu.memory_space<vmem>>, vector<256x256xbf16>
    %cst_8 = arith.constant dense<0.000000e+00> : vector<16x256xf32>
    %14 = tpu.matmul %12, %13, %cst_8 {dimension_numbers = #tpu.dot_dimension_numbers<[1], [0], [0], [1], [0, 0, 1, 1], [], []>} : vector<16x256xbf16>, vector<256x256xbf16>, vector<16x256xf32> -> vector<16x256xf32>
    %15 = arith.addf %11, %14 : vector<16x256xf32>
    %16 = vector.extract_strided_slice %0 {offsets = [4, 0], sizes = [16, 256], strides = [1, 1]} : vector<32x256xbf16> to vector<16x256xbf16>
    %c1024 = arith.constant 1024 : index
    %c0_9 = arith.constant 0 : index
    %17 = vector.load %arg3[%c1024, %c0_9] : memref<1280x256xbf16, #tpu.memory_space<vmem>>, vector<256x256xbf16>
    %cst_10 = arith.constant dense<0.000000e+00> : vector<16x256xf32>
    %18 = tpu.matmul %16, %17, %cst_10 {dimension_numbers = #tpu.dot_dimension_numbers<[1], [0], [0], [1], [0, 0, 1, 1], [], []>} : vector<16x256xbf16>, vector<256x256xbf16>, vector<16x256xf32> -> vector<16x256xf32>
    %19 = arith.addf %15, %18 : vector<16x256xf32>
    %c0_11 = arith.constant 0 : index
    %c0_12 = arith.constant 0 : index
    %20 = vector.load %arg4[%c0_11, %c0_12] : memref<1x256xf32, #tpu.memory_space<vmem>>, vector<1x256xf32>
    %21 = vector.broadcast %20 : vector<1x256xf32> to vector<16x256xf32>
    %22 = arith.addf %19, %21 : vector<16x256xf32>
    %cst_13 = arith.constant 0.000000e+00 : f32
    %23 = vector.broadcast %cst_13 : f32 to vector<16x256xf32>
    %24 = arith.maximumf %22, %23 : vector<16x256xf32>
    %25 = arith.truncf %24 : vector<16x256xf32> to vector<16x256xbf16>
    %c0_14 = arith.constant 0 : index
    %c0_15 = arith.constant 0 : index
    %26 = vector.load %arg5[%c0_14, %c0_15] : memref<256x256xbf16, #tpu.memory_space<vmem>>, vector<256x256xbf16>
    %cst_16 = arith.constant dense<0.000000e+00> : vector<16x256xf32>
    %27 = tpu.matmul %25, %26, %cst_16 {dimension_numbers = #tpu.dot_dimension_numbers<[1], [0], [0], [1], [0, 0, 1, 1], [], []>} : vector<16x256xbf16>, vector<256x256xbf16>, vector<16x256xf32> -> vector<16x256xf32>
    %c0_17 = arith.constant 0 : index
    %c0_18 = arith.constant 0 : index
    %28 = vector.load %arg6[%c0_17, %c0_18] : memref<1x256xf32, #tpu.memory_space<vmem>>, vector<1x256xf32>
    %29 = vector.broadcast %28 : vector<1x256xf32> to vector<16x256xf32>
    %30 = arith.addf %27, %29 : vector<16x256xf32>
    %31 = arith.truncf %30 : vector<16x256xf32> to vector<16x256xbf16>
    %c0_19 = arith.constant 0 : index
    %c0_20 = arith.constant 0 : index
    %32 = vector.load %arg7[%c0_19, %c0_20] : memref<256x768xbf16, #tpu.memory_space<vmem>>, vector<256x768xbf16>
    %cst_21 = arith.constant dense<0.000000e+00> : vector<16x768xf32>
    %33 = tpu.matmul %31, %32, %cst_21 {dimension_numbers = #tpu.dot_dimension_numbers<[1], [0], [0], [1], [0, 0, 1, 1], [], []>} : vector<16x256xbf16>, vector<256x768xbf16>, vector<16x768xf32> -> vector<16x768xf32>
    %c0_22 = arith.constant 0 : index
    %c0_23 = arith.constant 0 : index
    %34 = vector.load %arg8[%c0_22, %c0_23] : memref<1x768xf32, #tpu.memory_space<vmem>>, vector<1x768xf32>
    %35 = vector.broadcast %34 : vector<1x768xf32> to vector<16x768xf32>
    %36 = arith.addf %33, %35 : vector<16x768xf32>
    %37 = vector.extract_strided_slice %36 {offsets = [0, 0], sizes = [16, 256], strides = [1, 1]} : vector<16x768xf32> to vector<16x256xf32>
    %38 = vector.extract_strided_slice %36 {offsets = [0, 256], sizes = [16, 256], strides = [1, 1]} : vector<16x768xf32> to vector<16x256xf32>
    %39 = vector.extract_strided_slice %36 {offsets = [0, 512], sizes = [16, 256], strides = [1, 1]} : vector<16x768xf32> to vector<16x256xf32>
    %40 = tpu.iota {dimensions = array<i32: 1>} : vector<16x16xi32>
    %c16_i32 = arith.constant 16 : i32
    %41 = vector.broadcast %c16_i32 : i32 to vector<16x16xi32>
    %42 = arith.cmpi slt, %40, %41 : vector<16x16xi32>
    %cst_24 = arith.constant 0.000000e+00 : f32
    %cst_25 = arith.constant -1.000000e+30 : f32
    %43 = vector.broadcast %cst_24 : f32 to vector<16x16xf32>
    %44 = vector.broadcast %cst_25 : f32 to vector<16x16xf32>
    %45 = arith.select %42, %43, %44 : vector<16x16xi1>, vector<16x16xf32>
    %c0_26 = arith.constant 0 : index
    %c0_27 = arith.constant 0 : index
    %46 = vector.load %arg9[%c0_26, %c0_27] : memref<256x256xbf16, #tpu.memory_space<vmem>>, vector<256x256xbf16>
    %47 = vector.extract_strided_slice %37 {offsets = [0, 0], sizes = [16, 32], strides = [1, 1]} : vector<16x256xf32> to vector<16x32xf32>
    %cst_28 = arith.constant 0.176776692 : f32
    %48 = vector.broadcast %cst_28 : f32 to vector<16x32xf32>
    %49 = arith.mulf %47, %48 : vector<16x32xf32>
    %50 = arith.truncf %49 : vector<16x32xf32> to vector<16x32xbf16>
    %51 = vector.extract_strided_slice %38 {offsets = [0, 0], sizes = [16, 32], strides = [1, 1]} : vector<16x256xf32> to vector<16x32xf32>
    %52 = arith.truncf %51 : vector<16x32xf32> to vector<16x32xbf16>
    %53 = vector.extract_strided_slice %39 {offsets = [0, 0], sizes = [16, 32], strides = [1, 1]} : vector<16x256xf32> to vector<16x32xf32>
    %54 = arith.truncf %53 : vector<16x32xf32> to vector<16x32xbf16>
    %cst_29 = arith.constant dense<0.000000e+00> : vector<16x16xf32>
    %55 = tpu.matmul %50, %52, %cst_29 {dimension_numbers = #tpu.dot_dimension_numbers<[1], [1], [0], [0], [0, 0, 1, 0], [], []>} : vector<16x32xbf16>, vector<16x32xbf16>, vector<16x16xf32> -> vector<16x16xf32>
    %56 = arith.addf %55, %45 : vector<16x16xf32>
    %cst_30 = arith.constant dense<0xFF800000> : vector<16xf32>
    %57 = vector.multi_reduction <maximumf>, %56, %cst_30 [1] : vector<16x16xf32> to vector<16xf32>
    %58 = vector.shape_cast %57 : vector<16xf32> to vector<16x1xf32>
    %59 = vector.broadcast %58 : vector<16x1xf32> to vector<16x16xf32>
    %60 = arith.subf %56, %59 : vector<16x16xf32>
    %61 = math.exp %60 : vector<16x16xf32>
    %cst_31 = arith.constant dense<0.000000e+00> : vector<16xf32>
    %62 = vector.multi_reduction <add>, %61, %cst_31 [1] : vector<16x16xf32> to vector<16xf32>
    %63 = vector.shape_cast %62 : vector<16xf32> to vector<16x1xf32>
    %64 = tpu.reciprocal %63 {approx = true} : vector<16x1xf32> -> vector<16x1xf32>
    %65 = vector.broadcast %64 : vector<16x1xf32> to vector<16x16xf32>
    %66 = arith.mulf %61, %65 : vector<16x16xf32>
    %67 = arith.truncf %66 : vector<16x16xf32> to vector<16x16xbf16>
    %cst_32 = arith.constant dense<0.000000e+00> : vector<16x32xf32>
    %68 = tpu.matmul %67, %54, %cst_32 {dimension_numbers = #tpu.dot_dimension_numbers<[1], [0], [0], [1], [0, 0, 1, 1], [], []>} : vector<16x16xbf16>, vector<16x32xbf16>, vector<16x32xf32> -> vector<16x32xf32>
    %69 = arith.truncf %68 : vector<16x32xf32> to vector<16x32xbf16>
    %70 = vector.extract_strided_slice %46 {offsets = [0, 0], sizes = [32, 256], strides = [1, 1]} : vector<256x256xbf16> to vector<32x256xbf16>
    %cst_33 = arith.constant dense<0.000000e+00> : vector<16x256xf32>
    %71 = tpu.matmul %69, %70, %cst_33 {dimension_numbers = #tpu.dot_dimension_numbers<[1], [0], [0], [1], [0, 0, 1, 1], [], []>} : vector<16x32xbf16>, vector<32x256xbf16>, vector<16x256xf32> -> vector<16x256xf32>
    %72 = vector.extract_strided_slice %37 {offsets = [0, 32], sizes = [16, 32], strides = [1, 1]} : vector<16x256xf32> to vector<16x32xf32>
    %cst_34 = arith.constant 0.176776692 : f32
    %73 = vector.broadcast %cst_34 : f32 to vector<16x32xf32>
    %74 = arith.mulf %72, %73 : vector<16x32xf32>
    %75 = arith.truncf %74 : vector<16x32xf32> to vector<16x32xbf16>
    %76 = vector.extract_strided_slice %38 {offsets = [0, 32], sizes = [16, 32], strides = [1, 1]} : vector<16x256xf32> to vector<16x32xf32>
    %77 = arith.truncf %76 : vector<16x32xf32> to vector<16x32xbf16>
    %78 = vector.extract_strided_slice %39 {offsets = [0, 32], sizes = [16, 32], strides = [1, 1]} : vector<16x256xf32> to vector<16x32xf32>
    %79 = arith.truncf %78 : vector<16x32xf32> to vector<16x32xbf16>
    %cst_35 = arith.constant dense<0.000000e+00> : vector<16x16xf32>
    %80 = tpu.matmul %75, %77, %cst_35 {dimension_numbers = #tpu.dot_dimension_numbers<[1], [1], [0], [0], [0, 0, 1, 0], [], []>} : vector<16x32xbf16>, vector<16x32xbf16>, vector<16x16xf32> -> vector<16x16xf32>
    %81 = arith.addf %80, %45 : vector<16x16xf32>
    %cst_36 = arith.constant dense<0xFF800000> : vector<16xf32>
    %82 = vector.multi_reduction <maximumf>, %81, %cst_36 [1] : vector<16x16xf32> to vector<16xf32>
    %83 = vector.shape_cast %82 : vector<16xf32> to vector<16x1xf32>
    %84 = vector.broadcast %83 : vector<16x1xf32> to vector<16x16xf32>
    %85 = arith.subf %81, %84 : vector<16x16xf32>
    %86 = math.exp %85 : vector<16x16xf32>
    %cst_37 = arith.constant dense<0.000000e+00> : vector<16xf32>
    %87 = vector.multi_reduction <add>, %86, %cst_37 [1] : vector<16x16xf32> to vector<16xf32>
    %88 = vector.shape_cast %87 : vector<16xf32> to vector<16x1xf32>
    %89 = tpu.reciprocal %88 {approx = true} : vector<16x1xf32> -> vector<16x1xf32>
    %90 = vector.broadcast %89 : vector<16x1xf32> to vector<16x16xf32>
    %91 = arith.mulf %86, %90 : vector<16x16xf32>
    %92 = arith.truncf %91 : vector<16x16xf32> to vector<16x16xbf16>
    %cst_38 = arith.constant dense<0.000000e+00> : vector<16x32xf32>
    %93 = tpu.matmul %92, %79, %cst_38 {dimension_numbers = #tpu.dot_dimension_numbers<[1], [0], [0], [1], [0, 0, 1, 1], [], []>} : vector<16x16xbf16>, vector<16x32xbf16>, vector<16x32xf32> -> vector<16x32xf32>
    %94 = arith.truncf %93 : vector<16x32xf32> to vector<16x32xbf16>
    %95 = vector.extract_strided_slice %46 {offsets = [32, 0], sizes = [32, 256], strides = [1, 1]} : vector<256x256xbf16> to vector<32x256xbf16>
    %cst_39 = arith.constant dense<0.000000e+00> : vector<16x256xf32>
    %96 = tpu.matmul %94, %95, %cst_39 {dimension_numbers = #tpu.dot_dimension_numbers<[1], [0], [0], [1], [0, 0, 1, 1], [], []>} : vector<16x32xbf16>, vector<32x256xbf16>, vector<16x256xf32> -> vector<16x256xf32>
    %97 = arith.addf %71, %96 : vector<16x256xf32>
    %98 = vector.extract_strided_slice %37 {offsets = [0, 64], sizes = [16, 32], strides = [1, 1]} : vector<16x256xf32> to vector<16x32xf32>
    %cst_40 = arith.constant 0.176776692 : f32
    %99 = vector.broadcast %cst_40 : f32 to vector<16x32xf32>
    %100 = arith.mulf %98, %99 : vector<16x32xf32>
    %101 = arith.truncf %100 : vector<16x32xf32> to vector<16x32xbf16>
    %102 = vector.extract_strided_slice %38 {offsets = [0, 64], sizes = [16, 32], strides = [1, 1]} : vector<16x256xf32> to vector<16x32xf32>
    %103 = arith.truncf %102 : vector<16x32xf32> to vector<16x32xbf16>
    %104 = vector.extract_strided_slice %39 {offsets = [0, 64], sizes = [16, 32], strides = [1, 1]} : vector<16x256xf32> to vector<16x32xf32>
    %105 = arith.truncf %104 : vector<16x32xf32> to vector<16x32xbf16>
    %cst_41 = arith.constant dense<0.000000e+00> : vector<16x16xf32>
    %106 = tpu.matmul %101, %103, %cst_41 {dimension_numbers = #tpu.dot_dimension_numbers<[1], [1], [0], [0], [0, 0, 1, 0], [], []>} : vector<16x32xbf16>, vector<16x32xbf16>, vector<16x16xf32> -> vector<16x16xf32>
    %107 = arith.addf %106, %45 : vector<16x16xf32>
    %cst_42 = arith.constant dense<0xFF800000> : vector<16xf32>
    %108 = vector.multi_reduction <maximumf>, %107, %cst_42 [1] : vector<16x16xf32> to vector<16xf32>
    %109 = vector.shape_cast %108 : vector<16xf32> to vector<16x1xf32>
    %110 = vector.broadcast %109 : vector<16x1xf32> to vector<16x16xf32>
    %111 = arith.subf %107, %110 : vector<16x16xf32>
    %112 = math.exp %111 : vector<16x16xf32>
    %cst_43 = arith.constant dense<0.000000e+00> : vector<16xf32>
    %113 = vector.multi_reduction <add>, %112, %cst_43 [1] : vector<16x16xf32> to vector<16xf32>
    %114 = vector.shape_cast %113 : vector<16xf32> to vector<16x1xf32>
    %115 = tpu.reciprocal %114 {approx = true} : vector<16x1xf32> -> vector<16x1xf32>
    %116 = vector.broadcast %115 : vector<16x1xf32> to vector<16x16xf32>
    %117 = arith.mulf %112, %116 : vector<16x16xf32>
    %118 = arith.truncf %117 : vector<16x16xf32> to vector<16x16xbf16>
    %cst_44 = arith.constant dense<0.000000e+00> : vector<16x32xf32>
    %119 = tpu.matmul %118, %105, %cst_44 {dimension_numbers = #tpu.dot_dimension_numbers<[1], [0], [0], [1], [0, 0, 1, 1], [], []>} : vector<16x16xbf16>, vector<16x32xbf16>, vector<16x32xf32> -> vector<16x32xf32>
    %120 = arith.truncf %119 : vector<16x32xf32> to vector<16x32xbf16>
    %121 = vector.extract_strided_slice %46 {offsets = [64, 0], sizes = [32, 256], strides = [1, 1]} : vector<256x256xbf16> to vector<32x256xbf16>
    %cst_45 = arith.constant dense<0.000000e+00> : vector<16x256xf32>
    %122 = tpu.matmul %120, %121, %cst_45 {dimension_numbers = #tpu.dot_dimension_numbers<[1], [0], [0], [1], [0, 0, 1, 1], [], []>} : vector<16x32xbf16>, vector<32x256xbf16>, vector<16x256xf32> -> vector<16x256xf32>
    %123 = arith.addf %97, %122 : vector<16x256xf32>
    %124 = vector.extract_strided_slice %37 {offsets = [0, 96], sizes = [16, 32], strides = [1, 1]} : vector<16x256xf32> to vector<16x32xf32>
    %cst_46 = arith.constant 0.176776692 : f32
    %125 = vector.broadcast %cst_46 : f32 to vector<16x32xf32>
    %126 = arith.mulf %124, %125 : vector<16x32xf32>
    %127 = arith.truncf %126 : vector<16x32xf32> to vector<16x32xbf16>
    %128 = vector.extract_strided_slice %38 {offsets = [0, 96], sizes = [16, 32], strides = [1, 1]} : vector<16x256xf32> to vector<16x32xf32>
    %129 = arith.truncf %128 : vector<16x32xf32> to vector<16x32xbf16>
    %130 = vector.extract_strided_slice %39 {offsets = [0, 96], sizes = [16, 32], strides = [1, 1]} : vector<16x256xf32> to vector<16x32xf32>
    %131 = arith.truncf %130 : vector<16x32xf32> to vector<16x32xbf16>
    %cst_47 = arith.constant dense<0.000000e+00> : vector<16x16xf32>
    %132 = tpu.matmul %127, %129, %cst_47 {dimension_numbers = #tpu.dot_dimension_numbers<[1], [1], [0], [0], [0, 0, 1, 0], [], []>} : vector<16x32xbf16>, vector<16x32xbf16>, vector<16x16xf32> -> vector<16x16xf32>
    %133 = arith.addf %132, %45 : vector<16x16xf32>
    %cst_48 = arith.constant dense<0xFF800000> : vector<16xf32>
    %134 = vector.multi_reduction <maximumf>, %133, %cst_48 [1] : vector<16x16xf32> to vector<16xf32>
    %135 = vector.shape_cast %134 : vector<16xf32> to vector<16x1xf32>
    %136 = vector.broadcast %135 : vector<16x1xf32> to vector<16x16xf32>
    %137 = arith.subf %133, %136 : vector<16x16xf32>
    %138 = math.exp %137 : vector<16x16xf32>
    %cst_49 = arith.constant dense<0.000000e+00> : vector<16xf32>
    %139 = vector.multi_reduction <add>, %138, %cst_49 [1] : vector<16x16xf32> to vector<16xf32>
    %140 = vector.shape_cast %139 : vector<16xf32> to vector<16x1xf32>
    %141 = tpu.reciprocal %140 {approx = true} : vector<16x1xf32> -> vector<16x1xf32>
    %142 = vector.broadcast %141 : vector<16x1xf32> to vector<16x16xf32>
    %143 = arith.mulf %138, %142 : vector<16x16xf32>
    %144 = arith.truncf %143 : vector<16x16xf32> to vector<16x16xbf16>
    %cst_50 = arith.constant dense<0.000000e+00> : vector<16x32xf32>
    %145 = tpu.matmul %144, %131, %cst_50 {dimension_numbers = #tpu.dot_dimension_numbers<[1], [0], [0], [1], [0, 0, 1, 1], [], []>} : vector<16x16xbf16>, vector<16x32xbf16>, vector<16x32xf32> -> vector<16x32xf32>
    %146 = arith.truncf %145 : vector<16x32xf32> to vector<16x32xbf16>
    %147 = vector.extract_strided_slice %46 {offsets = [96, 0], sizes = [32, 256], strides = [1, 1]} : vector<256x256xbf16> to vector<32x256xbf16>
    %cst_51 = arith.constant dense<0.000000e+00> : vector<16x256xf32>
    %148 = tpu.matmul %146, %147, %cst_51 {dimension_numbers = #tpu.dot_dimension_numbers<[1], [0], [0], [1], [0, 0, 1, 1], [], []>} : vector<16x32xbf16>, vector<32x256xbf16>, vector<16x256xf32> -> vector<16x256xf32>
    %149 = arith.addf %123, %148 : vector<16x256xf32>
    %150 = vector.extract_strided_slice %37 {offsets = [0, 128], sizes = [16, 32], strides = [1, 1]} : vector<16x256xf32> to vector<16x32xf32>
    %cst_52 = arith.constant 0.176776692 : f32
    %151 = vector.broadcast %cst_52 : f32 to vector<16x32xf32>
    %152 = arith.mulf %150, %151 : vector<16x32xf32>
    %153 = arith.truncf %152 : vector<16x32xf32> to vector<16x32xbf16>
    %154 = vector.extract_strided_slice %38 {offsets = [0, 128], sizes = [16, 32], strides = [1, 1]} : vector<16x256xf32> to vector<16x32xf32>
    %155 = arith.truncf %154 : vector<16x32xf32> to vector<16x32xbf16>
    %156 = vector.extract_strided_slice %39 {offsets = [0, 128], sizes = [16, 32], strides = [1, 1]} : vector<16x256xf32> to vector<16x32xf32>
    %157 = arith.truncf %156 : vector<16x32xf32> to vector<16x32xbf16>
    %cst_53 = arith.constant dense<0.000000e+00> : vector<16x16xf32>
    %158 = tpu.matmul %153, %155, %cst_53 {dimension_numbers = #tpu.dot_dimension_numbers<[1], [1], [0], [0], [0, 0, 1, 0], [], []>} : vector<16x32xbf16>, vector<16x32xbf16>, vector<16x16xf32> -> vector<16x16xf32>
    %159 = arith.addf %158, %45 : vector<16x16xf32>
    %cst_54 = arith.constant dense<0xFF800000> : vector<16xf32>
    %160 = vector.multi_reduction <maximumf>, %159, %cst_54 [1] : vector<16x16xf32> to vector<16xf32>
    %161 = vector.shape_cast %160 : vector<16xf32> to vector<16x1xf32>
    %162 = vector.broadcast %161 : vector<16x1xf32> to vector<16x16xf32>
    %163 = arith.subf %159, %162 : vector<16x16xf32>
    %164 = math.exp %163 : vector<16x16xf32>
    %cst_55 = arith.constant dense<0.000000e+00> : vector<16xf32>
    %165 = vector.multi_reduction <add>, %164, %cst_55 [1] : vector<16x16xf32> to vector<16xf32>
    %166 = vector.shape_cast %165 : vector<16xf32> to vector<16x1xf32>
    %167 = tpu.reciprocal %166 {approx = true} : vector<16x1xf32> -> vector<16x1xf32>
    %168 = vector.broadcast %167 : vector<16x1xf32> to vector<16x16xf32>
    %169 = arith.mulf %164, %168 : vector<16x16xf32>
    %170 = arith.truncf %169 : vector<16x16xf32> to vector<16x16xbf16>
    %cst_56 = arith.constant dense<0.000000e+00> : vector<16x32xf32>
    %171 = tpu.matmul %170, %157, %cst_56 {dimension_numbers = #tpu.dot_dimension_numbers<[1], [0], [0], [1], [0, 0, 1, 1], [], []>} : vector<16x16xbf16>, vector<16x32xbf16>, vector<16x32xf32> -> vector<16x32xf32>
    %172 = arith.truncf %171 : vector<16x32xf32> to vector<16x32xbf16>
    %173 = vector.extract_strided_slice %46 {offsets = [128, 0], sizes = [32, 256], strides = [1, 1]} : vector<256x256xbf16> to vector<32x256xbf16>
    %cst_57 = arith.constant dense<0.000000e+00> : vector<16x256xf32>
    %174 = tpu.matmul %172, %173, %cst_57 {dimension_numbers = #tpu.dot_dimension_numbers<[1], [0], [0], [1], [0, 0, 1, 1], [], []>} : vector<16x32xbf16>, vector<32x256xbf16>, vector<16x256xf32> -> vector<16x256xf32>
    %175 = arith.addf %149, %174 : vector<16x256xf32>
    %176 = vector.extract_strided_slice %37 {offsets = [0, 160], sizes = [16, 32], strides = [1, 1]} : vector<16x256xf32> to vector<16x32xf32>
    %cst_58 = arith.constant 0.176776692 : f32
    %177 = vector.broadcast %cst_58 : f32 to vector<16x32xf32>
    %178 = arith.mulf %176, %177 : vector<16x32xf32>
    %179 = arith.truncf %178 : vector<16x32xf32> to vector<16x32xbf16>
    %180 = vector.extract_strided_slice %38 {offsets = [0, 160], sizes = [16, 32], strides = [1, 1]} : vector<16x256xf32> to vector<16x32xf32>
    %181 = arith.truncf %180 : vector<16x32xf32> to vector<16x32xbf16>
    %182 = vector.extract_strided_slice %39 {offsets = [0, 160], sizes = [16, 32], strides = [1, 1]} : vector<16x256xf32> to vector<16x32xf32>
    %183 = arith.truncf %182 : vector<16x32xf32> to vector<16x32xbf16>
    %cst_59 = arith.constant dense<0.000000e+00> : vector<16x16xf32>
    %184 = tpu.matmul %179, %181, %cst_59 {dimension_numbers = #tpu.dot_dimension_numbers<[1], [1], [0], [0], [0, 0, 1, 0], [], []>} : vector<16x32xbf16>, vector<16x32xbf16>, vector<16x16xf32> -> vector<16x16xf32>
    %185 = arith.addf %184, %45 : vector<16x16xf32>
    %cst_60 = arith.constant dense<0xFF800000> : vector<16xf32>
    %186 = vector.multi_reduction <maximumf>, %185, %cst_60 [1] : vector<16x16xf32> to vector<16xf32>
    %187 = vector.shape_cast %186 : vector<16xf32> to vector<16x1xf32>
    %188 = vector.broadcast %187 : vector<16x1xf32> to vector<16x16xf32>
    %189 = arith.subf %185, %188 : vector<16x16xf32>
    %190 = math.exp %189 : vector<16x16xf32>
    %cst_61 = arith.constant dense<0.000000e+00> : vector<16xf32>
    %191 = vector.multi_reduction <add>, %190, %cst_61 [1] : vector<16x16xf32> to vector<16xf32>
    %192 = vector.shape_cast %191 : vector<16xf32> to vector<16x1xf32>
    %193 = tpu.reciprocal %192 {approx = true} : vector<16x1xf32> -> vector<16x1xf32>
    %194 = vector.broadcast %193 : vector<16x1xf32> to vector<16x16xf32>
    %195 = arith.mulf %190, %194 : vector<16x16xf32>
    %196 = arith.truncf %195 : vector<16x16xf32> to vector<16x16xbf16>
    %cst_62 = arith.constant dense<0.000000e+00> : vector<16x32xf32>
    %197 = tpu.matmul %196, %183, %cst_62 {dimension_numbers = #tpu.dot_dimension_numbers<[1], [0], [0], [1], [0, 0, 1, 1], [], []>} : vector<16x16xbf16>, vector<16x32xbf16>, vector<16x32xf32> -> vector<16x32xf32>
    %198 = arith.truncf %197 : vector<16x32xf32> to vector<16x32xbf16>
    %199 = vector.extract_strided_slice %46 {offsets = [160, 0], sizes = [32, 256], strides = [1, 1]} : vector<256x256xbf16> to vector<32x256xbf16>
    %cst_63 = arith.constant dense<0.000000e+00> : vector<16x256xf32>
    %200 = tpu.matmul %198, %199, %cst_63 {dimension_numbers = #tpu.dot_dimension_numbers<[1], [0], [0], [1], [0, 0, 1, 1], [], []>} : vector<16x32xbf16>, vector<32x256xbf16>, vector<16x256xf32> -> vector<16x256xf32>
    %201 = arith.addf %175, %200 : vector<16x256xf32>
    %202 = vector.extract_strided_slice %37 {offsets = [0, 192], sizes = [16, 32], strides = [1, 1]} : vector<16x256xf32> to vector<16x32xf32>
    %cst_64 = arith.constant 0.176776692 : f32
    %203 = vector.broadcast %cst_64 : f32 to vector<16x32xf32>
    %204 = arith.mulf %202, %203 : vector<16x32xf32>
    %205 = arith.truncf %204 : vector<16x32xf32> to vector<16x32xbf16>
    %206 = vector.extract_strided_slice %38 {offsets = [0, 192], sizes = [16, 32], strides = [1, 1]} : vector<16x256xf32> to vector<16x32xf32>
    %207 = arith.truncf %206 : vector<16x32xf32> to vector<16x32xbf16>
    %208 = vector.extract_strided_slice %39 {offsets = [0, 192], sizes = [16, 32], strides = [1, 1]} : vector<16x256xf32> to vector<16x32xf32>
    %209 = arith.truncf %208 : vector<16x32xf32> to vector<16x32xbf16>
    %cst_65 = arith.constant dense<0.000000e+00> : vector<16x16xf32>
    %210 = tpu.matmul %205, %207, %cst_65 {dimension_numbers = #tpu.dot_dimension_numbers<[1], [1], [0], [0], [0, 0, 1, 0], [], []>} : vector<16x32xbf16>, vector<16x32xbf16>, vector<16x16xf32> -> vector<16x16xf32>
    %211 = arith.addf %210, %45 : vector<16x16xf32>
    %cst_66 = arith.constant dense<0xFF800000> : vector<16xf32>
    %212 = vector.multi_reduction <maximumf>, %211, %cst_66 [1] : vector<16x16xf32> to vector<16xf32>
    %213 = vector.shape_cast %212 : vector<16xf32> to vector<16x1xf32>
    %214 = vector.broadcast %213 : vector<16x1xf32> to vector<16x16xf32>
    %215 = arith.subf %211, %214 : vector<16x16xf32>
    %216 = math.exp %215 : vector<16x16xf32>
    %cst_67 = arith.constant dense<0.000000e+00> : vector<16xf32>
    %217 = vector.multi_reduction <add>, %216, %cst_67 [1] : vector<16x16xf32> to vector<16xf32>
    %218 = vector.shape_cast %217 : vector<16xf32> to vector<16x1xf32>
    %219 = tpu.reciprocal %218 {approx = true} : vector<16x1xf32> -> vector<16x1xf32>
    %220 = vector.broadcast %219 : vector<16x1xf32> to vector<16x16xf32>
    %221 = arith.mulf %216, %220 : vector<16x16xf32>
    %222 = arith.truncf %221 : vector<16x16xf32> to vector<16x16xbf16>
    %cst_68 = arith.constant dense<0.000000e+00> : vector<16x32xf32>
    %223 = tpu.matmul %222, %209, %cst_68 {dimension_numbers = #tpu.dot_dimension_numbers<[1], [0], [0], [1], [0, 0, 1, 1], [], []>} : vector<16x16xbf16>, vector<16x32xbf16>, vector<16x32xf32> -> vector<16x32xf32>
    %224 = arith.truncf %223 : vector<16x32xf32> to vector<16x32xbf16>
    %225 = vector.extract_strided_slice %46 {offsets = [192, 0], sizes = [32, 256], strides = [1, 1]} : vector<256x256xbf16> to vector<32x256xbf16>
    %cst_69 = arith.constant dense<0.000000e+00> : vector<16x256xf32>
    %226 = tpu.matmul %224, %225, %cst_69 {dimension_numbers = #tpu.dot_dimension_numbers<[1], [0], [0], [1], [0, 0, 1, 1], [], []>} : vector<16x32xbf16>, vector<32x256xbf16>, vector<16x256xf32> -> vector<16x256xf32>
    %227 = arith.addf %201, %226 : vector<16x256xf32>
    %228 = vector.extract_strided_slice %37 {offsets = [0, 224], sizes = [16, 32], strides = [1, 1]} : vector<16x256xf32> to vector<16x32xf32>
    %cst_70 = arith.constant 0.176776692 : f32
    %229 = vector.broadcast %cst_70 : f32 to vector<16x32xf32>
    %230 = arith.mulf %228, %229 : vector<16x32xf32>
    %231 = arith.truncf %230 : vector<16x32xf32> to vector<16x32xbf16>
    %232 = vector.extract_strided_slice %38 {offsets = [0, 224], sizes = [16, 32], strides = [1, 1]} : vector<16x256xf32> to vector<16x32xf32>
    %233 = arith.truncf %232 : vector<16x32xf32> to vector<16x32xbf16>
    %234 = vector.extract_strided_slice %39 {offsets = [0, 224], sizes = [16, 32], strides = [1, 1]} : vector<16x256xf32> to vector<16x32xf32>
    %235 = arith.truncf %234 : vector<16x32xf32> to vector<16x32xbf16>
    %cst_71 = arith.constant dense<0.000000e+00> : vector<16x16xf32>
    %236 = tpu.matmul %231, %233, %cst_71 {dimension_numbers = #tpu.dot_dimension_numbers<[1], [1], [0], [0], [0, 0, 1, 0], [], []>} : vector<16x32xbf16>, vector<16x32xbf16>, vector<16x16xf32> -> vector<16x16xf32>
    %237 = arith.addf %236, %45 : vector<16x16xf32>
    %cst_72 = arith.constant dense<0xFF800000> : vector<16xf32>
    %238 = vector.multi_reduction <maximumf>, %237, %cst_72 [1] : vector<16x16xf32> to vector<16xf32>
    %239 = vector.shape_cast %238 : vector<16xf32> to vector<16x1xf32>
    %240 = vector.broadcast %239 : vector<16x1xf32> to vector<16x16xf32>
    %241 = arith.subf %237, %240 : vector<16x16xf32>
    %242 = math.exp %241 : vector<16x16xf32>
    %cst_73 = arith.constant dense<0.000000e+00> : vector<16xf32>
    %243 = vector.multi_reduction <add>, %242, %cst_73 [1] : vector<16x16xf32> to vector<16xf32>
    %244 = vector.shape_cast %243 : vector<16xf32> to vector<16x1xf32>
    %245 = tpu.reciprocal %244 {approx = true} : vector<16x1xf32> -> vector<16x1xf32>
    %246 = vector.broadcast %245 : vector<16x1xf32> to vector<16x16xf32>
    %247 = arith.mulf %242, %246 : vector<16x16xf32>
    %248 = arith.truncf %247 : vector<16x16xf32> to vector<16x16xbf16>
    %cst_74 = arith.constant dense<0.000000e+00> : vector<16x32xf32>
    %249 = tpu.matmul %248, %235, %cst_74 {dimension_numbers = #tpu.dot_dimension_numbers<[1], [0], [0], [1], [0, 0, 1, 1], [], []>} : vector<16x16xbf16>, vector<16x32xbf16>, vector<16x32xf32> -> vector<16x32xf32>
    %250 = arith.truncf %249 : vector<16x32xf32> to vector<16x32xbf16>
    %251 = vector.extract_strided_slice %46 {offsets = [224, 0], sizes = [32, 256], strides = [1, 1]} : vector<256x256xbf16> to vector<32x256xbf16>
    %cst_75 = arith.constant dense<0.000000e+00> : vector<16x256xf32>
    %252 = tpu.matmul %250, %251, %cst_75 {dimension_numbers = #tpu.dot_dimension_numbers<[1], [0], [0], [1], [0, 0, 1, 1], [], []>} : vector<16x32xbf16>, vector<32x256xbf16>, vector<16x256xf32> -> vector<16x256xf32>
    %253 = arith.addf %227, %252 : vector<16x256xf32>
    %254 = arith.addf %30, %253 : vector<16x256xf32>
    %c0_76 = arith.constant 0 : index
    %c0_77 = arith.constant 0 : index
    %255 = vector.load %arg10[%c0_76, %c0_77] : memref<1x256xf32, #tpu.memory_space<vmem>>, vector<1x256xf32>
    %256 = vector.broadcast %255 : vector<1x256xf32> to vector<16x256xf32>
    %257 = arith.addf %254, %256 : vector<16x256xf32>
    %c0_78 = arith.constant 0 : index
    %c0_79 = arith.constant 0 : index
    %258 = vector.load %arg15[%c0_78, %c0_79] : memref<1x256xf32, #tpu.memory_space<vmem>>, vector<1x256xf32>
    %c0_80 = arith.constant 0 : index
    %c0_81 = arith.constant 0 : index
    %259 = vector.load %arg16[%c0_80, %c0_81] : memref<1x256xf32, #tpu.memory_space<vmem>>, vector<1x256xf32>
    %cst_82 = arith.constant dense<0.000000e+00> : vector<16xf32>
    %260 = vector.multi_reduction <add>, %257, %cst_82 [1] : vector<16x256xf32> to vector<16xf32>
    %261 = vector.shape_cast %260 : vector<16xf32> to vector<16x1xf32>
    %cst_83 = arith.constant 3.906250e-03 : f32
    %262 = vector.broadcast %cst_83 : f32 to vector<16x1xf32>
    %263 = arith.mulf %261, %262 : vector<16x1xf32>
    %264 = arith.mulf %257, %257 : vector<16x256xf32>
    %cst_84 = arith.constant dense<0.000000e+00> : vector<16xf32>
    %265 = vector.multi_reduction <add>, %264, %cst_84 [1] : vector<16x256xf32> to vector<16xf32>
    %266 = vector.shape_cast %265 : vector<16xf32> to vector<16x1xf32>
    %cst_85 = arith.constant 3.906250e-03 : f32
    %267 = vector.broadcast %cst_85 : f32 to vector<16x1xf32>
    %268 = arith.mulf %266, %267 : vector<16x1xf32>
    %269 = arith.mulf %263, %263 : vector<16x1xf32>
    %270 = arith.subf %268, %269 : vector<16x1xf32>
    %271 = vector.broadcast %263 : vector<16x1xf32> to vector<16x256xf32>
    %272 = arith.subf %257, %271 : vector<16x256xf32>
    %cst_86 = arith.constant 9.99999974E-6 : f32
    %273 = vector.broadcast %cst_86 : f32 to vector<16x1xf32>
    %274 = arith.addf %270, %273 : vector<16x1xf32>
    %275 = math.rsqrt %274 : vector<16x1xf32>
    %276 = vector.broadcast %275 : vector<16x1xf32> to vector<16x256xf32>
    %277 = arith.mulf %272, %276 : vector<16x256xf32>
    %278 = vector.broadcast %258 : vector<1x256xf32> to vector<16x256xf32>
    %279 = arith.mulf %277, %278 : vector<16x256xf32>
    %280 = vector.broadcast %259 : vector<1x256xf32> to vector<16x256xf32>
    %281 = arith.addf %279, %280 : vector<16x256xf32>
    %282 = arith.truncf %281 : vector<16x256xf32> to vector<16x256xbf16>
    %c0_87 = arith.constant 0 : index
    %c0_88 = arith.constant 0 : index
    %283 = vector.load %arg11[%c0_87, %c0_88] : memref<256x128xbf16, #tpu.memory_space<vmem>>, vector<256x128xbf16>
    %cst_89 = arith.constant dense<0.000000e+00> : vector<16x128xf32>
    %284 = tpu.matmul %282, %283, %cst_89 {dimension_numbers = #tpu.dot_dimension_numbers<[1], [0], [0], [1], [0, 0, 1, 1], [], []>} : vector<16x256xbf16>, vector<256x128xbf16>, vector<16x128xf32> -> vector<16x128xf32>
    %c0_90 = arith.constant 0 : index
    %c0_91 = arith.constant 0 : index
    %285 = vector.load %arg12[%c0_90, %c0_91] : memref<1x128xf32, #tpu.memory_space<vmem>>, vector<1x128xf32>
    %286 = vector.broadcast %285 : vector<1x128xf32> to vector<16x128xf32>
    %287 = arith.addf %284, %286 : vector<16x128xf32>
    %cst_92 = arith.constant 0.000000e+00 : f32
    %288 = vector.broadcast %cst_92 : f32 to vector<16x128xf32>
    %289 = arith.maximumf %287, %288 : vector<16x128xf32>
    %290 = arith.truncf %289 : vector<16x128xf32> to vector<16x128xbf16>
    %c0_93 = arith.constant 0 : index
    %c0_94 = arith.constant 0 : index
    %291 = vector.load %arg13[%c0_93, %c0_94] : memref<128x256xbf16, #tpu.memory_space<vmem>>, vector<128x256xbf16>
    %cst_95 = arith.constant dense<0.000000e+00> : vector<16x256xf32>
    %292 = tpu.matmul %290, %291, %cst_95 {dimension_numbers = #tpu.dot_dimension_numbers<[1], [0], [0], [1], [0, 0, 1, 1], [], []>} : vector<16x128xbf16>, vector<128x256xbf16>, vector<16x256xf32> -> vector<16x256xf32>
    %c0_96 = arith.constant 0 : index
    %c0_97 = arith.constant 0 : index
    %293 = vector.load %arg14[%c0_96, %c0_97] : memref<1x256xf32, #tpu.memory_space<vmem>>, vector<1x256xf32>
    %294 = vector.broadcast %293 : vector<1x256xf32> to vector<16x256xf32>
    %295 = arith.addf %292, %294 : vector<16x256xf32>
    %296 = arith.addf %281, %295 : vector<16x256xf32>
    %c0_98 = arith.constant 0 : index
    %c0_99 = arith.constant 0 : index
    %297 = vector.load %arg17[%c0_98, %c0_99] : memref<1x256xf32, #tpu.memory_space<vmem>>, vector<1x256xf32>
    %c0_100 = arith.constant 0 : index
    %c0_101 = arith.constant 0 : index
    %298 = vector.load %arg18[%c0_100, %c0_101] : memref<1x256xf32, #tpu.memory_space<vmem>>, vector<1x256xf32>
    %cst_102 = arith.constant 6.250000e-02 : f32
    %299 = vector.broadcast %cst_102 : f32 to vector<1x256xf32>
    %300 = arith.mulf %297, %299 : vector<1x256xf32>
    %cst_103 = arith.constant 6.250000e-02 : f32
    %301 = vector.broadcast %cst_103 : f32 to vector<1x256xf32>
    %302 = arith.mulf %298, %301 : vector<1x256xf32>
    %cst_104 = arith.constant dense<0.000000e+00> : vector<16xf32>
    %303 = vector.multi_reduction <add>, %296, %cst_104 [1] : vector<16x256xf32> to vector<16xf32>
    %304 = vector.shape_cast %303 : vector<16xf32> to vector<16x1xf32>
    %cst_105 = arith.constant 3.906250e-03 : f32
    %305 = vector.broadcast %cst_105 : f32 to vector<16x1xf32>
    %306 = arith.mulf %304, %305 : vector<16x1xf32>
    %307 = arith.mulf %296, %296 : vector<16x256xf32>
    %cst_106 = arith.constant dense<0.000000e+00> : vector<16xf32>
    %308 = vector.multi_reduction <add>, %307, %cst_106 [1] : vector<16x256xf32> to vector<16xf32>
    %309 = vector.shape_cast %308 : vector<16xf32> to vector<16x1xf32>
    %cst_107 = arith.constant 3.906250e-03 : f32
    %310 = vector.broadcast %cst_107 : f32 to vector<16x1xf32>
    %311 = arith.mulf %309, %310 : vector<16x1xf32>
    %312 = arith.mulf %306, %306 : vector<16x1xf32>
    %313 = arith.subf %311, %312 : vector<16x1xf32>
    %314 = vector.broadcast %306 : vector<16x1xf32> to vector<16x256xf32>
    %315 = arith.subf %296, %314 : vector<16x256xf32>
    %cst_108 = arith.constant 9.99999974E-6 : f32
    %316 = vector.broadcast %cst_108 : f32 to vector<16x1xf32>
    %317 = arith.addf %313, %316 : vector<16x1xf32>
    %318 = math.rsqrt %317 : vector<16x1xf32>
    %319 = vector.broadcast %318 : vector<16x1xf32> to vector<16x256xf32>
    %320 = arith.mulf %315, %319 : vector<16x256xf32>
    %321 = vector.broadcast %300 : vector<1x256xf32> to vector<16x256xf32>
    %322 = arith.mulf %320, %321 : vector<16x256xf32>
    %323 = vector.broadcast %302 : vector<1x256xf32> to vector<16x256xf32>
    %324 = arith.addf %322, %323 : vector<16x256xf32>
    %c0_109 = arith.constant 0 : index
    %c0_110 = arith.constant 0 : index
    %325 = vector.load %arg2[%c0_109, %c0_110] : memref<48x256xbf16, #tpu.memory_space<vmem>>, vector<48x256xbf16>
    %326 = vector.extract_strided_slice %325 {offsets = [0, 0], sizes = [32, 256], strides = [1, 1]} : vector<48x256xbf16> to vector<32x256xbf16>
    %c0_111 = arith.constant 0 : index
    %c0_112 = arith.constant 0 : index
    %327 = vector.load %arg19[%c0_111, %c0_112] : memref<1280x256xbf16, #tpu.memory_space<vmem>>, vector<256x256xbf16>
    %cst_113 = arith.constant dense<0.000000e+00> : vector<32x256xf32>
    %328 = tpu.matmul %326, %327, %cst_113 {dimension_numbers = #tpu.dot_dimension_numbers<[1], [0], [0], [1], [0, 0, 1, 1], [], []>} : vector<32x256xbf16>, vector<256x256xbf16>, vector<32x256xf32> -> vector<32x256xf32>
    %329 = vector.extract_strided_slice %325 {offsets = [1, 0], sizes = [32, 256], strides = [1, 1]} : vector<48x256xbf16> to vector<32x256xbf16>
    %c256_114 = arith.constant 256 : index
    %c0_115 = arith.constant 0 : index
    %330 = vector.load %arg19[%c256_114, %c0_115] : memref<1280x256xbf16, #tpu.memory_space<vmem>>, vector<256x256xbf16>
    %cst_116 = arith.constant dense<0.000000e+00> : vector<32x256xf32>
    %331 = tpu.matmul %329, %330, %cst_116 {dimension_numbers = #tpu.dot_dimension_numbers<[1], [0], [0], [1], [0, 0, 1, 1], [], []>} : vector<32x256xbf16>, vector<256x256xbf16>, vector<32x256xf32> -> vector<32x256xf32>
    %332 = arith.addf %328, %331 : vector<32x256xf32>
    %333 = vector.extract_strided_slice %325 {offsets = [2, 0], sizes = [32, 256], strides = [1, 1]} : vector<48x256xbf16> to vector<32x256xbf16>
    %c512_117 = arith.constant 512 : index
    %c0_118 = arith.constant 0 : index
    %334 = vector.load %arg19[%c512_117, %c0_118] : memref<1280x256xbf16, #tpu.memory_space<vmem>>, vector<256x256xbf16>
    %cst_119 = arith.constant dense<0.000000e+00> : vector<32x256xf32>
    %335 = tpu.matmul %333, %334, %cst_119 {dimension_numbers = #tpu.dot_dimension_numbers<[1], [0], [0], [1], [0, 0, 1, 1], [], []>} : vector<32x256xbf16>, vector<256x256xbf16>, vector<32x256xf32> -> vector<32x256xf32>
    %336 = arith.addf %332, %335 : vector<32x256xf32>
    %337 = vector.extract_strided_slice %325 {offsets = [3, 0], sizes = [32, 256], strides = [1, 1]} : vector<48x256xbf16> to vector<32x256xbf16>
    %c768_120 = arith.constant 768 : index
    %c0_121 = arith.constant 0 : index
    %338 = vector.load %arg19[%c768_120, %c0_121] : memref<1280x256xbf16, #tpu.memory_space<vmem>>, vector<256x256xbf16>
    %cst_122 = arith.constant dense<0.000000e+00> : vector<32x256xf32>
    %339 = tpu.matmul %337, %338, %cst_122 {dimension_numbers = #tpu.dot_dimension_numbers<[1], [0], [0], [1], [0, 0, 1, 1], [], []>} : vector<32x256xbf16>, vector<256x256xbf16>, vector<32x256xf32> -> vector<32x256xf32>
    %340 = arith.addf %336, %339 : vector<32x256xf32>
    %341 = vector.extract_strided_slice %325 {offsets = [4, 0], sizes = [32, 256], strides = [1, 1]} : vector<48x256xbf16> to vector<32x256xbf16>
    %c1024_123 = arith.constant 1024 : index
    %c0_124 = arith.constant 0 : index
    %342 = vector.load %arg19[%c1024_123, %c0_124] : memref<1280x256xbf16, #tpu.memory_space<vmem>>, vector<256x256xbf16>
    %cst_125 = arith.constant dense<0.000000e+00> : vector<32x256xf32>
    %343 = tpu.matmul %341, %342, %cst_125 {dimension_numbers = #tpu.dot_dimension_numbers<[1], [0], [0], [1], [0, 0, 1, 1], [], []>} : vector<32x256xbf16>, vector<256x256xbf16>, vector<32x256xf32> -> vector<32x256xf32>
    %344 = arith.addf %340, %343 : vector<32x256xf32>
    %c0_126 = arith.constant 0 : index
    %c0_127 = arith.constant 0 : index
    %345 = vector.load %arg20[%c0_126, %c0_127] : memref<1x256xf32, #tpu.memory_space<vmem>>, vector<1x256xf32>
    %346 = vector.broadcast %345 : vector<1x256xf32> to vector<32x256xf32>
    %347 = arith.addf %344, %346 : vector<32x256xf32>
    %cst_128 = arith.constant 0.000000e+00 : f32
    %348 = vector.broadcast %cst_128 : f32 to vector<32x256xf32>
    %349 = arith.maximumf %347, %348 : vector<32x256xf32>
    %350 = arith.truncf %349 : vector<32x256xf32> to vector<32x256xbf16>
    %c0_129 = arith.constant 0 : index
    %c0_130 = arith.constant 0 : index
    %351 = vector.load %arg21[%c0_129, %c0_130] : memref<256x256xbf16, #tpu.memory_space<vmem>>, vector<256x256xbf16>
    %cst_131 = arith.constant dense<0.000000e+00> : vector<32x256xf32>
    %352 = tpu.matmul %350, %351, %cst_131 {dimension_numbers = #tpu.dot_dimension_numbers<[1], [0], [0], [1], [0, 0, 1, 1], [], []>} : vector<32x256xbf16>, vector<256x256xbf16>, vector<32x256xf32> -> vector<32x256xf32>
    %c0_132 = arith.constant 0 : index
    %c0_133 = arith.constant 0 : index
    %353 = vector.load %arg22[%c0_132, %c0_133] : memref<1x256xf32, #tpu.memory_space<vmem>>, vector<1x256xf32>
    %354 = vector.broadcast %353 : vector<1x256xf32> to vector<32x256xf32>
    %355 = arith.addf %352, %354 : vector<32x256xf32>
    %356 = arith.truncf %355 : vector<32x256xf32> to vector<32x256xbf16>
    %c0_134 = arith.constant 0 : index
    %c0_135 = arith.constant 0 : index
    %357 = vector.load %arg23[%c0_134, %c0_135] : memref<256x768xbf16, #tpu.memory_space<vmem>>, vector<256x768xbf16>
    %cst_136 = arith.constant dense<0.000000e+00> : vector<32x768xf32>
    %358 = tpu.matmul %356, %357, %cst_136 {dimension_numbers = #tpu.dot_dimension_numbers<[1], [0], [0], [1], [0, 0, 1, 1], [], []>} : vector<32x256xbf16>, vector<256x768xbf16>, vector<32x768xf32> -> vector<32x768xf32>
    %c0_137 = arith.constant 0 : index
    %c0_138 = arith.constant 0 : index
    %359 = vector.load %arg24[%c0_137, %c0_138] : memref<1x768xf32, #tpu.memory_space<vmem>>, vector<1x768xf32>
    %360 = vector.broadcast %359 : vector<1x768xf32> to vector<32x768xf32>
    %361 = arith.addf %358, %360 : vector<32x768xf32>
    %362 = vector.extract_strided_slice %361 {offsets = [0, 0], sizes = [32, 256], strides = [1, 1]} : vector<32x768xf32> to vector<32x256xf32>
    %363 = vector.extract_strided_slice %361 {offsets = [0, 256], sizes = [32, 256], strides = [1, 1]} : vector<32x768xf32> to vector<32x256xf32>
    %364 = vector.extract_strided_slice %361 {offsets = [0, 512], sizes = [32, 256], strides = [1, 1]} : vector<32x768xf32> to vector<32x256xf32>
    %365 = tpu.iota {dimensions = array<i32: 1>} : vector<32x32xi32>
    %c24_i32 = arith.constant 24 : i32
    %366 = vector.broadcast %c24_i32 : i32 to vector<32x32xi32>
    %367 = arith.cmpi slt, %365, %366 : vector<32x32xi32>
    %cst_139 = arith.constant 0.000000e+00 : f32
    %cst_140 = arith.constant -1.000000e+30 : f32
    %368 = vector.broadcast %cst_139 : f32 to vector<32x32xf32>
    %369 = vector.broadcast %cst_140 : f32 to vector<32x32xf32>
    %370 = arith.select %367, %368, %369 : vector<32x32xi1>, vector<32x32xf32>
    %c0_141 = arith.constant 0 : index
    %c0_142 = arith.constant 0 : index
    %371 = vector.load %arg25[%c0_141, %c0_142] : memref<256x256xbf16, #tpu.memory_space<vmem>>, vector<256x256xbf16>
    %372 = vector.extract_strided_slice %362 {offsets = [0, 0], sizes = [32, 32], strides = [1, 1]} : vector<32x256xf32> to vector<32x32xf32>
    %cst_143 = arith.constant 0.176776692 : f32
    %373 = vector.broadcast %cst_143 : f32 to vector<32x32xf32>
    %374 = arith.mulf %372, %373 : vector<32x32xf32>
    %375 = arith.truncf %374 : vector<32x32xf32> to vector<32x32xbf16>
    %376 = vector.extract_strided_slice %363 {offsets = [0, 0], sizes = [32, 32], strides = [1, 1]} : vector<32x256xf32> to vector<32x32xf32>
    %377 = arith.truncf %376 : vector<32x32xf32> to vector<32x32xbf16>
    %378 = vector.extract_strided_slice %364 {offsets = [0, 0], sizes = [32, 32], strides = [1, 1]} : vector<32x256xf32> to vector<32x32xf32>
    %379 = arith.truncf %378 : vector<32x32xf32> to vector<32x32xbf16>
    %cst_144 = arith.constant dense<0.000000e+00> : vector<32x32xf32>
    %380 = tpu.matmul %375, %377, %cst_144 {dimension_numbers = #tpu.dot_dimension_numbers<[1], [1], [0], [0], [0, 0, 1, 0], [], []>} : vector<32x32xbf16>, vector<32x32xbf16>, vector<32x32xf32> -> vector<32x32xf32>
    %381 = arith.addf %380, %370 : vector<32x32xf32>
    %cst_145 = arith.constant dense<0xFF800000> : vector<32xf32>
    %382 = vector.multi_reduction <maximumf>, %381, %cst_145 [1] : vector<32x32xf32> to vector<32xf32>
    %383 = vector.shape_cast %382 : vector<32xf32> to vector<32x1xf32>
    %384 = vector.broadcast %383 : vector<32x1xf32> to vector<32x32xf32>
    %385 = arith.subf %381, %384 : vector<32x32xf32>
    %386 = math.exp %385 : vector<32x32xf32>
    %cst_146 = arith.constant dense<0.000000e+00> : vector<32xf32>
    %387 = vector.multi_reduction <add>, %386, %cst_146 [1] : vector<32x32xf32> to vector<32xf32>
    %388 = vector.shape_cast %387 : vector<32xf32> to vector<32x1xf32>
    %389 = tpu.reciprocal %388 {approx = true} : vector<32x1xf32> -> vector<32x1xf32>
    %390 = vector.broadcast %389 : vector<32x1xf32> to vector<32x32xf32>
    %391 = arith.mulf %386, %390 : vector<32x32xf32>
    %392 = arith.truncf %391 : vector<32x32xf32> to vector<32x32xbf16>
    %cst_147 = arith.constant dense<0.000000e+00> : vector<32x32xf32>
    %393 = tpu.matmul %392, %379, %cst_147 {dimension_numbers = #tpu.dot_dimension_numbers<[1], [0], [0], [1], [0, 0, 1, 1], [], []>} : vector<32x32xbf16>, vector<32x32xbf16>, vector<32x32xf32> -> vector<32x32xf32>
    %394 = arith.truncf %393 : vector<32x32xf32> to vector<32x32xbf16>
    %395 = vector.extract_strided_slice %371 {offsets = [0, 0], sizes = [32, 256], strides = [1, 1]} : vector<256x256xbf16> to vector<32x256xbf16>
    %cst_148 = arith.constant dense<0.000000e+00> : vector<32x256xf32>
    %396 = tpu.matmul %394, %395, %cst_148 {dimension_numbers = #tpu.dot_dimension_numbers<[1], [0], [0], [1], [0, 0, 1, 1], [], []>} : vector<32x32xbf16>, vector<32x256xbf16>, vector<32x256xf32> -> vector<32x256xf32>
    %397 = vector.extract_strided_slice %362 {offsets = [0, 32], sizes = [32, 32], strides = [1, 1]} : vector<32x256xf32> to vector<32x32xf32>
    %cst_149 = arith.constant 0.176776692 : f32
    %398 = vector.broadcast %cst_149 : f32 to vector<32x32xf32>
    %399 = arith.mulf %397, %398 : vector<32x32xf32>
    %400 = arith.truncf %399 : vector<32x32xf32> to vector<32x32xbf16>
    %401 = vector.extract_strided_slice %363 {offsets = [0, 32], sizes = [32, 32], strides = [1, 1]} : vector<32x256xf32> to vector<32x32xf32>
    %402 = arith.truncf %401 : vector<32x32xf32> to vector<32x32xbf16>
    %403 = vector.extract_strided_slice %364 {offsets = [0, 32], sizes = [32, 32], strides = [1, 1]} : vector<32x256xf32> to vector<32x32xf32>
    %404 = arith.truncf %403 : vector<32x32xf32> to vector<32x32xbf16>
    %cst_150 = arith.constant dense<0.000000e+00> : vector<32x32xf32>
    %405 = tpu.matmul %400, %402, %cst_150 {dimension_numbers = #tpu.dot_dimension_numbers<[1], [1], [0], [0], [0, 0, 1, 0], [], []>} : vector<32x32xbf16>, vector<32x32xbf16>, vector<32x32xf32> -> vector<32x32xf32>
    %406 = arith.addf %405, %370 : vector<32x32xf32>
    %cst_151 = arith.constant dense<0xFF800000> : vector<32xf32>
    %407 = vector.multi_reduction <maximumf>, %406, %cst_151 [1] : vector<32x32xf32> to vector<32xf32>
    %408 = vector.shape_cast %407 : vector<32xf32> to vector<32x1xf32>
    %409 = vector.broadcast %408 : vector<32x1xf32> to vector<32x32xf32>
    %410 = arith.subf %406, %409 : vector<32x32xf32>
    %411 = math.exp %410 : vector<32x32xf32>
    %cst_152 = arith.constant dense<0.000000e+00> : vector<32xf32>
    %412 = vector.multi_reduction <add>, %411, %cst_152 [1] : vector<32x32xf32> to vector<32xf32>
    %413 = vector.shape_cast %412 : vector<32xf32> to vector<32x1xf32>
    %414 = tpu.reciprocal %413 {approx = true} : vector<32x1xf32> -> vector<32x1xf32>
    %415 = vector.broadcast %414 : vector<32x1xf32> to vector<32x32xf32>
    %416 = arith.mulf %411, %415 : vector<32x32xf32>
    %417 = arith.truncf %416 : vector<32x32xf32> to vector<32x32xbf16>
    %cst_153 = arith.constant dense<0.000000e+00> : vector<32x32xf32>
    %418 = tpu.matmul %417, %404, %cst_153 {dimension_numbers = #tpu.dot_dimension_numbers<[1], [0], [0], [1], [0, 0, 1, 1], [], []>} : vector<32x32xbf16>, vector<32x32xbf16>, vector<32x32xf32> -> vector<32x32xf32>
    %419 = arith.truncf %418 : vector<32x32xf32> to vector<32x32xbf16>
    %420 = vector.extract_strided_slice %371 {offsets = [32, 0], sizes = [32, 256], strides = [1, 1]} : vector<256x256xbf16> to vector<32x256xbf16>
    %cst_154 = arith.constant dense<0.000000e+00> : vector<32x256xf32>
    %421 = tpu.matmul %419, %420, %cst_154 {dimension_numbers = #tpu.dot_dimension_numbers<[1], [0], [0], [1], [0, 0, 1, 1], [], []>} : vector<32x32xbf16>, vector<32x256xbf16>, vector<32x256xf32> -> vector<32x256xf32>
    %422 = arith.addf %396, %421 : vector<32x256xf32>
    %423 = vector.extract_strided_slice %362 {offsets = [0, 64], sizes = [32, 32], strides = [1, 1]} : vector<32x256xf32> to vector<32x32xf32>
    %cst_155 = arith.constant 0.176776692 : f32
    %424 = vector.broadcast %cst_155 : f32 to vector<32x32xf32>
    %425 = arith.mulf %423, %424 : vector<32x32xf32>
    %426 = arith.truncf %425 : vector<32x32xf32> to vector<32x32xbf16>
    %427 = vector.extract_strided_slice %363 {offsets = [0, 64], sizes = [32, 32], strides = [1, 1]} : vector<32x256xf32> to vector<32x32xf32>
    %428 = arith.truncf %427 : vector<32x32xf32> to vector<32x32xbf16>
    %429 = vector.extract_strided_slice %364 {offsets = [0, 64], sizes = [32, 32], strides = [1, 1]} : vector<32x256xf32> to vector<32x32xf32>
    %430 = arith.truncf %429 : vector<32x32xf32> to vector<32x32xbf16>
    %cst_156 = arith.constant dense<0.000000e+00> : vector<32x32xf32>
    %431 = tpu.matmul %426, %428, %cst_156 {dimension_numbers = #tpu.dot_dimension_numbers<[1], [1], [0], [0], [0, 0, 1, 0], [], []>} : vector<32x32xbf16>, vector<32x32xbf16>, vector<32x32xf32> -> vector<32x32xf32>
    %432 = arith.addf %431, %370 : vector<32x32xf32>
    %cst_157 = arith.constant dense<0xFF800000> : vector<32xf32>
    %433 = vector.multi_reduction <maximumf>, %432, %cst_157 [1] : vector<32x32xf32> to vector<32xf32>
    %434 = vector.shape_cast %433 : vector<32xf32> to vector<32x1xf32>
    %435 = vector.broadcast %434 : vector<32x1xf32> to vector<32x32xf32>
    %436 = arith.subf %432, %435 : vector<32x32xf32>
    %437 = math.exp %436 : vector<32x32xf32>
    %cst_158 = arith.constant dense<0.000000e+00> : vector<32xf32>
    %438 = vector.multi_reduction <add>, %437, %cst_158 [1] : vector<32x32xf32> to vector<32xf32>
    %439 = vector.shape_cast %438 : vector<32xf32> to vector<32x1xf32>
    %440 = tpu.reciprocal %439 {approx = true} : vector<32x1xf32> -> vector<32x1xf32>
    %441 = vector.broadcast %440 : vector<32x1xf32> to vector<32x32xf32>
    %442 = arith.mulf %437, %441 : vector<32x32xf32>
    %443 = arith.truncf %442 : vector<32x32xf32> to vector<32x32xbf16>
    %cst_159 = arith.constant dense<0.000000e+00> : vector<32x32xf32>
    %444 = tpu.matmul %443, %430, %cst_159 {dimension_numbers = #tpu.dot_dimension_numbers<[1], [0], [0], [1], [0, 0, 1, 1], [], []>} : vector<32x32xbf16>, vector<32x32xbf16>, vector<32x32xf32> -> vector<32x32xf32>
    %445 = arith.truncf %444 : vector<32x32xf32> to vector<32x32xbf16>
    %446 = vector.extract_strided_slice %371 {offsets = [64, 0], sizes = [32, 256], strides = [1, 1]} : vector<256x256xbf16> to vector<32x256xbf16>
    %cst_160 = arith.constant dense<0.000000e+00> : vector<32x256xf32>
    %447 = tpu.matmul %445, %446, %cst_160 {dimension_numbers = #tpu.dot_dimension_numbers<[1], [0], [0], [1], [0, 0, 1, 1], [], []>} : vector<32x32xbf16>, vector<32x256xbf16>, vector<32x256xf32> -> vector<32x256xf32>
    %448 = arith.addf %422, %447 : vector<32x256xf32>
    %449 = vector.extract_strided_slice %362 {offsets = [0, 96], sizes = [32, 32], strides = [1, 1]} : vector<32x256xf32> to vector<32x32xf32>
    %cst_161 = arith.constant 0.176776692 : f32
    %450 = vector.broadcast %cst_161 : f32 to vector<32x32xf32>
    %451 = arith.mulf %449, %450 : vector<32x32xf32>
    %452 = arith.truncf %451 : vector<32x32xf32> to vector<32x32xbf16>
    %453 = vector.extract_strided_slice %363 {offsets = [0, 96], sizes = [32, 32], strides = [1, 1]} : vector<32x256xf32> to vector<32x32xf32>
    %454 = arith.truncf %453 : vector<32x32xf32> to vector<32x32xbf16>
    %455 = vector.extract_strided_slice %364 {offsets = [0, 96], sizes = [32, 32], strides = [1, 1]} : vector<32x256xf32> to vector<32x32xf32>
    %456 = arith.truncf %455 : vector<32x32xf32> to vector<32x32xbf16>
    %cst_162 = arith.constant dense<0.000000e+00> : vector<32x32xf32>
    %457 = tpu.matmul %452, %454, %cst_162 {dimension_numbers = #tpu.dot_dimension_numbers<[1], [1], [0], [0], [0, 0, 1, 0], [], []>} : vector<32x32xbf16>, vector<32x32xbf16>, vector<32x32xf32> -> vector<32x32xf32>
    %458 = arith.addf %457, %370 : vector<32x32xf32>
    %cst_163 = arith.constant dense<0xFF800000> : vector<32xf32>
    %459 = vector.multi_reduction <maximumf>, %458, %cst_163 [1] : vector<32x32xf32> to vector<32xf32>
    %460 = vector.shape_cast %459 : vector<32xf32> to vector<32x1xf32>
    %461 = vector.broadcast %460 : vector<32x1xf32> to vector<32x32xf32>
    %462 = arith.subf %458, %461 : vector<32x32xf32>
    %463 = math.exp %462 : vector<32x32xf32>
    %cst_164 = arith.constant dense<0.000000e+00> : vector<32xf32>
    %464 = vector.multi_reduction <add>, %463, %cst_164 [1] : vector<32x32xf32> to vector<32xf32>
    %465 = vector.shape_cast %464 : vector<32xf32> to vector<32x1xf32>
    %466 = tpu.reciprocal %465 {approx = true} : vector<32x1xf32> -> vector<32x1xf32>
    %467 = vector.broadcast %466 : vector<32x1xf32> to vector<32x32xf32>
    %468 = arith.mulf %463, %467 : vector<32x32xf32>
    %469 = arith.truncf %468 : vector<32x32xf32> to vector<32x32xbf16>
    %cst_165 = arith.constant dense<0.000000e+00> : vector<32x32xf32>
    %470 = tpu.matmul %469, %456, %cst_165 {dimension_numbers = #tpu.dot_dimension_numbers<[1], [0], [0], [1], [0, 0, 1, 1], [], []>} : vector<32x32xbf16>, vector<32x32xbf16>, vector<32x32xf32> -> vector<32x32xf32>
    %471 = arith.truncf %470 : vector<32x32xf32> to vector<32x32xbf16>
    %472 = vector.extract_strided_slice %371 {offsets = [96, 0], sizes = [32, 256], strides = [1, 1]} : vector<256x256xbf16> to vector<32x256xbf16>
    %cst_166 = arith.constant dense<0.000000e+00> : vector<32x256xf32>
    %473 = tpu.matmul %471, %472, %cst_166 {dimension_numbers = #tpu.dot_dimension_numbers<[1], [0], [0], [1], [0, 0, 1, 1], [], []>} : vector<32x32xbf16>, vector<32x256xbf16>, vector<32x256xf32> -> vector<32x256xf32>
    %474 = arith.addf %448, %473 : vector<32x256xf32>
    %475 = vector.extract_strided_slice %362 {offsets = [0, 128], sizes = [32, 32], strides = [1, 1]} : vector<32x256xf32> to vector<32x32xf32>
    %cst_167 = arith.constant 0.176776692 : f32
    %476 = vector.broadcast %cst_167 : f32 to vector<32x32xf32>
    %477 = arith.mulf %475, %476 : vector<32x32xf32>
    %478 = arith.truncf %477 : vector<32x32xf32> to vector<32x32xbf16>
    %479 = vector.extract_strided_slice %363 {offsets = [0, 128], sizes = [32, 32], strides = [1, 1]} : vector<32x256xf32> to vector<32x32xf32>
    %480 = arith.truncf %479 : vector<32x32xf32> to vector<32x32xbf16>
    %481 = vector.extract_strided_slice %364 {offsets = [0, 128], sizes = [32, 32], strides = [1, 1]} : vector<32x256xf32> to vector<32x32xf32>
    %482 = arith.truncf %481 : vector<32x32xf32> to vector<32x32xbf16>
    %cst_168 = arith.constant dense<0.000000e+00> : vector<32x32xf32>
    %483 = tpu.matmul %478, %480, %cst_168 {dimension_numbers = #tpu.dot_dimension_numbers<[1], [1], [0], [0], [0, 0, 1, 0], [], []>} : vector<32x32xbf16>, vector<32x32xbf16>, vector<32x32xf32> -> vector<32x32xf32>
    %484 = arith.addf %483, %370 : vector<32x32xf32>
    %cst_169 = arith.constant dense<0xFF800000> : vector<32xf32>
    %485 = vector.multi_reduction <maximumf>, %484, %cst_169 [1] : vector<32x32xf32> to vector<32xf32>
    %486 = vector.shape_cast %485 : vector<32xf32> to vector<32x1xf32>
    %487 = vector.broadcast %486 : vector<32x1xf32> to vector<32x32xf32>
    %488 = arith.subf %484, %487 : vector<32x32xf32>
    %489 = math.exp %488 : vector<32x32xf32>
    %cst_170 = arith.constant dense<0.000000e+00> : vector<32xf32>
    %490 = vector.multi_reduction <add>, %489, %cst_170 [1] : vector<32x32xf32> to vector<32xf32>
    %491 = vector.shape_cast %490 : vector<32xf32> to vector<32x1xf32>
    %492 = tpu.reciprocal %491 {approx = true} : vector<32x1xf32> -> vector<32x1xf32>
    %493 = vector.broadcast %492 : vector<32x1xf32> to vector<32x32xf32>
    %494 = arith.mulf %489, %493 : vector<32x32xf32>
    %495 = arith.truncf %494 : vector<32x32xf32> to vector<32x32xbf16>
    %cst_171 = arith.constant dense<0.000000e+00> : vector<32x32xf32>
    %496 = tpu.matmul %495, %482, %cst_171 {dimension_numbers = #tpu.dot_dimension_numbers<[1], [0], [0], [1], [0, 0, 1, 1], [], []>} : vector<32x32xbf16>, vector<32x32xbf16>, vector<32x32xf32> -> vector<32x32xf32>
    %497 = arith.truncf %496 : vector<32x32xf32> to vector<32x32xbf16>
    %498 = vector.extract_strided_slice %371 {offsets = [128, 0], sizes = [32, 256], strides = [1, 1]} : vector<256x256xbf16> to vector<32x256xbf16>
    %cst_172 = arith.constant dense<0.000000e+00> : vector<32x256xf32>
    %499 = tpu.matmul %497, %498, %cst_172 {dimension_numbers = #tpu.dot_dimension_numbers<[1], [0], [0], [1], [0, 0, 1, 1], [], []>} : vector<32x32xbf16>, vector<32x256xbf16>, vector<32x256xf32> -> vector<32x256xf32>
    %500 = arith.addf %474, %499 : vector<32x256xf32>
    %501 = vector.extract_strided_slice %362 {offsets = [0, 160], sizes = [32, 32], strides = [1, 1]} : vector<32x256xf32> to vector<32x32xf32>
    %cst_173 = arith.constant 0.176776692 : f32
    %502 = vector.broadcast %cst_173 : f32 to vector<32x32xf32>
    %503 = arith.mulf %501, %502 : vector<32x32xf32>
    %504 = arith.truncf %503 : vector<32x32xf32> to vector<32x32xbf16>
    %505 = vector.extract_strided_slice %363 {offsets = [0, 160], sizes = [32, 32], strides = [1, 1]} : vector<32x256xf32> to vector<32x32xf32>
    %506 = arith.truncf %505 : vector<32x32xf32> to vector<32x32xbf16>
    %507 = vector.extract_strided_slice %364 {offsets = [0, 160], sizes = [32, 32], strides = [1, 1]} : vector<32x256xf32> to vector<32x32xf32>
    %508 = arith.truncf %507 : vector<32x32xf32> to vector<32x32xbf16>
    %cst_174 = arith.constant dense<0.000000e+00> : vector<32x32xf32>
    %509 = tpu.matmul %504, %506, %cst_174 {dimension_numbers = #tpu.dot_dimension_numbers<[1], [1], [0], [0], [0, 0, 1, 0], [], []>} : vector<32x32xbf16>, vector<32x32xbf16>, vector<32x32xf32> -> vector<32x32xf32>
    %510 = arith.addf %509, %370 : vector<32x32xf32>
    %cst_175 = arith.constant dense<0xFF800000> : vector<32xf32>
    %511 = vector.multi_reduction <maximumf>, %510, %cst_175 [1] : vector<32x32xf32> to vector<32xf32>
    %512 = vector.shape_cast %511 : vector<32xf32> to vector<32x1xf32>
    %513 = vector.broadcast %512 : vector<32x1xf32> to vector<32x32xf32>
    %514 = arith.subf %510, %513 : vector<32x32xf32>
    %515 = math.exp %514 : vector<32x32xf32>
    %cst_176 = arith.constant dense<0.000000e+00> : vector<32xf32>
    %516 = vector.multi_reduction <add>, %515, %cst_176 [1] : vector<32x32xf32> to vector<32xf32>
    %517 = vector.shape_cast %516 : vector<32xf32> to vector<32x1xf32>
    %518 = tpu.reciprocal %517 {approx = true} : vector<32x1xf32> -> vector<32x1xf32>
    %519 = vector.broadcast %518 : vector<32x1xf32> to vector<32x32xf32>
    %520 = arith.mulf %515, %519 : vector<32x32xf32>
    %521 = arith.truncf %520 : vector<32x32xf32> to vector<32x32xbf16>
    %cst_177 = arith.constant dense<0.000000e+00> : vector<32x32xf32>
    %522 = tpu.matmul %521, %508, %cst_177 {dimension_numbers = #tpu.dot_dimension_numbers<[1], [0], [0], [1], [0, 0, 1, 1], [], []>} : vector<32x32xbf16>, vector<32x32xbf16>, vector<32x32xf32> -> vector<32x32xf32>
    %523 = arith.truncf %522 : vector<32x32xf32> to vector<32x32xbf16>
    %524 = vector.extract_strided_slice %371 {offsets = [160, 0], sizes = [32, 256], strides = [1, 1]} : vector<256x256xbf16> to vector<32x256xbf16>
    %cst_178 = arith.constant dense<0.000000e+00> : vector<32x256xf32>
    %525 = tpu.matmul %523, %524, %cst_178 {dimension_numbers = #tpu.dot_dimension_numbers<[1], [0], [0], [1], [0, 0, 1, 1], [], []>} : vector<32x32xbf16>, vector<32x256xbf16>, vector<32x256xf32> -> vector<32x256xf32>
    %526 = arith.addf %500, %525 : vector<32x256xf32>
    %527 = vector.extract_strided_slice %362 {offsets = [0, 192], sizes = [32, 32], strides = [1, 1]} : vector<32x256xf32> to vector<32x32xf32>
    %cst_179 = arith.constant 0.176776692 : f32
    %528 = vector.broadcast %cst_179 : f32 to vector<32x32xf32>
    %529 = arith.mulf %527, %528 : vector<32x32xf32>
    %530 = arith.truncf %529 : vector<32x32xf32> to vector<32x32xbf16>
    %531 = vector.extract_strided_slice %363 {offsets = [0, 192], sizes = [32, 32], strides = [1, 1]} : vector<32x256xf32> to vector<32x32xf32>
    %532 = arith.truncf %531 : vector<32x32xf32> to vector<32x32xbf16>
    %533 = vector.extract_strided_slice %364 {offsets = [0, 192], sizes = [32, 32], strides = [1, 1]} : vector<32x256xf32> to vector<32x32xf32>
    %534 = arith.truncf %533 : vector<32x32xf32> to vector<32x32xbf16>
    %cst_180 = arith.constant dense<0.000000e+00> : vector<32x32xf32>
    %535 = tpu.matmul %530, %532, %cst_180 {dimension_numbers = #tpu.dot_dimension_numbers<[1], [1], [0], [0], [0, 0, 1, 0], [], []>} : vector<32x32xbf16>, vector<32x32xbf16>, vector<32x32xf32> -> vector<32x32xf32>
    %536 = arith.addf %535, %370 : vector<32x32xf32>
    %cst_181 = arith.constant dense<0xFF800000> : vector<32xf32>
    %537 = vector.multi_reduction <maximumf>, %536, %cst_181 [1] : vector<32x32xf32> to vector<32xf32>
    %538 = vector.shape_cast %537 : vector<32xf32> to vector<32x1xf32>
    %539 = vector.broadcast %538 : vector<32x1xf32> to vector<32x32xf32>
    %540 = arith.subf %536, %539 : vector<32x32xf32>
    %541 = math.exp %540 : vector<32x32xf32>
    %cst_182 = arith.constant dense<0.000000e+00> : vector<32xf32>
    %542 = vector.multi_reduction <add>, %541, %cst_182 [1] : vector<32x32xf32> to vector<32xf32>
    %543 = vector.shape_cast %542 : vector<32xf32> to vector<32x1xf32>
    %544 = tpu.reciprocal %543 {approx = true} : vector<32x1xf32> -> vector<32x1xf32>
    %545 = vector.broadcast %544 : vector<32x1xf32> to vector<32x32xf32>
    %546 = arith.mulf %541, %545 : vector<32x32xf32>
    %547 = arith.truncf %546 : vector<32x32xf32> to vector<32x32xbf16>
    %cst_183 = arith.constant dense<0.000000e+00> : vector<32x32xf32>
    %548 = tpu.matmul %547, %534, %cst_183 {dimension_numbers = #tpu.dot_dimension_numbers<[1], [0], [0], [1], [0, 0, 1, 1], [], []>} : vector<32x32xbf16>, vector<32x32xbf16>, vector<32x32xf32> -> vector<32x32xf32>
    %549 = arith.truncf %548 : vector<32x32xf32> to vector<32x32xbf16>
    %550 = vector.extract_strided_slice %371 {offsets = [192, 0], sizes = [32, 256], strides = [1, 1]} : vector<256x256xbf16> to vector<32x256xbf16>
    %cst_184 = arith.constant dense<0.000000e+00> : vector<32x256xf32>
    %551 = tpu.matmul %549, %550, %cst_184 {dimension_numbers = #tpu.dot_dimension_numbers<[1], [0], [0], [1], [0, 0, 1, 1], [], []>} : vector<32x32xbf16>, vector<32x256xbf16>, vector<32x256xf32> -> vector<32x256xf32>
    %552 = arith.addf %526, %551 : vector<32x256xf32>
    %553 = vector.extract_strided_slice %362 {offsets = [0, 224], sizes = [32, 32], strides = [1, 1]} : vector<32x256xf32> to vector<32x32xf32>
    %cst_185 = arith.constant 0.176776692 : f32
    %554 = vector.broadcast %cst_185 : f32 to vector<32x32xf32>
    %555 = arith.mulf %553, %554 : vector<32x32xf32>
    %556 = arith.truncf %555 : vector<32x32xf32> to vector<32x32xbf16>
    %557 = vector.extract_strided_slice %363 {offsets = [0, 224], sizes = [32, 32], strides = [1, 1]} : vector<32x256xf32> to vector<32x32xf32>
    %558 = arith.truncf %557 : vector<32x32xf32> to vector<32x32xbf16>
    %559 = vector.extract_strided_slice %364 {offsets = [0, 224], sizes = [32, 32], strides = [1, 1]} : vector<32x256xf32> to vector<32x32xf32>
    %560 = arith.truncf %559 : vector<32x32xf32> to vector<32x32xbf16>
    %cst_186 = arith.constant dense<0.000000e+00> : vector<32x32xf32>
    %561 = tpu.matmul %556, %558, %cst_186 {dimension_numbers = #tpu.dot_dimension_numbers<[1], [1], [0], [0], [0, 0, 1, 0], [], []>} : vector<32x32xbf16>, vector<32x32xbf16>, vector<32x32xf32> -> vector<32x32xf32>
    %562 = arith.addf %561, %370 : vector<32x32xf32>
    %cst_187 = arith.constant dense<0xFF800000> : vector<32xf32>
    %563 = vector.multi_reduction <maximumf>, %562, %cst_187 [1] : vector<32x32xf32> to vector<32xf32>
    %564 = vector.shape_cast %563 : vector<32xf32> to vector<32x1xf32>
    %565 = vector.broadcast %564 : vector<32x1xf32> to vector<32x32xf32>
    %566 = arith.subf %562, %565 : vector<32x32xf32>
    %567 = math.exp %566 : vector<32x32xf32>
    %cst_188 = arith.constant dense<0.000000e+00> : vector<32xf32>
    %568 = vector.multi_reduction <add>, %567, %cst_188 [1] : vector<32x32xf32> to vector<32xf32>
    %569 = vector.shape_cast %568 : vector<32xf32> to vector<32x1xf32>
    %570 = tpu.reciprocal %569 {approx = true} : vector<32x1xf32> -> vector<32x1xf32>
    %571 = vector.broadcast %570 : vector<32x1xf32> to vector<32x32xf32>
    %572 = arith.mulf %567, %571 : vector<32x32xf32>
    %573 = arith.truncf %572 : vector<32x32xf32> to vector<32x32xbf16>
    %cst_189 = arith.constant dense<0.000000e+00> : vector<32x32xf32>
    %574 = tpu.matmul %573, %560, %cst_189 {dimension_numbers = #tpu.dot_dimension_numbers<[1], [0], [0], [1], [0, 0, 1, 1], [], []>} : vector<32x32xbf16>, vector<32x32xbf16>, vector<32x32xf32> -> vector<32x32xf32>
    %575 = arith.truncf %574 : vector<32x32xf32> to vector<32x32xbf16>
    %576 = vector.extract_strided_slice %371 {offsets = [224, 0], sizes = [32, 256], strides = [1, 1]} : vector<256x256xbf16> to vector<32x256xbf16>
    %cst_190 = arith.constant dense<0.000000e+00> : vector<32x256xf32>
    %577 = tpu.matmul %575, %576, %cst_190 {dimension_numbers = #tpu.dot_dimension_numbers<[1], [0], [0], [1], [0, 0, 1, 1], [], []>} : vector<32x32xbf16>, vector<32x256xbf16>, vector<32x256xf32> -> vector<32x256xf32>
    %578 = arith.addf %552, %577 : vector<32x256xf32>
    %579 = arith.addf %355, %578 : vector<32x256xf32>
    %c0_191 = arith.constant 0 : index
    %c0_192 = arith.constant 0 : index
    %580 = vector.load %arg26[%c0_191, %c0_192] : memref<1x256xf32, #tpu.memory_space<vmem>>, vector<1x256xf32>
    %581 = vector.broadcast %580 : vector<1x256xf32> to vector<32x256xf32>
    %582 = arith.addf %579, %581 : vector<32x256xf32>
    %c0_193 = arith.constant 0 : index
    %c0_194 = arith.constant 0 : index
    %583 = vector.load %arg31[%c0_193, %c0_194] : memref<1x256xf32, #tpu.memory_space<vmem>>, vector<1x256xf32>
    %c0_195 = arith.constant 0 : index
    %c0_196 = arith.constant 0 : index
    %584 = vector.load %arg32[%c0_195, %c0_196] : memref<1x256xf32, #tpu.memory_space<vmem>>, vector<1x256xf32>
    %cst_197 = arith.constant dense<0.000000e+00> : vector<32xf32>
    %585 = vector.multi_reduction <add>, %582, %cst_197 [1] : vector<32x256xf32> to vector<32xf32>
    %586 = vector.shape_cast %585 : vector<32xf32> to vector<32x1xf32>
    %cst_198 = arith.constant 3.906250e-03 : f32
    %587 = vector.broadcast %cst_198 : f32 to vector<32x1xf32>
    %588 = arith.mulf %586, %587 : vector<32x1xf32>
    %589 = arith.mulf %582, %582 : vector<32x256xf32>
    %cst_199 = arith.constant dense<0.000000e+00> : vector<32xf32>
    %590 = vector.multi_reduction <add>, %589, %cst_199 [1] : vector<32x256xf32> to vector<32xf32>
    %591 = vector.shape_cast %590 : vector<32xf32> to vector<32x1xf32>
    %cst_200 = arith.constant 3.906250e-03 : f32
    %592 = vector.broadcast %cst_200 : f32 to vector<32x1xf32>
    %593 = arith.mulf %591, %592 : vector<32x1xf32>
    %594 = arith.mulf %588, %588 : vector<32x1xf32>
    %595 = arith.subf %593, %594 : vector<32x1xf32>
    %596 = vector.broadcast %588 : vector<32x1xf32> to vector<32x256xf32>
    %597 = arith.subf %582, %596 : vector<32x256xf32>
    %cst_201 = arith.constant 9.99999974E-6 : f32
    %598 = vector.broadcast %cst_201 : f32 to vector<32x1xf32>
    %599 = arith.addf %595, %598 : vector<32x1xf32>
    %600 = math.rsqrt %599 : vector<32x1xf32>
    %601 = vector.broadcast %600 : vector<32x1xf32> to vector<32x256xf32>
    %602 = arith.mulf %597, %601 : vector<32x256xf32>
    %603 = vector.broadcast %583 : vector<1x256xf32> to vector<32x256xf32>
    %604 = arith.mulf %602, %603 : vector<32x256xf32>
    %605 = vector.broadcast %584 : vector<1x256xf32> to vector<32x256xf32>
    %606 = arith.addf %604, %605 : vector<32x256xf32>
    %607 = arith.truncf %606 : vector<32x256xf32> to vector<32x256xbf16>
    %c0_202 = arith.constant 0 : index
    %c0_203 = arith.constant 0 : index
    %608 = vector.load %arg27[%c0_202, %c0_203] : memref<256x128xbf16, #tpu.memory_space<vmem>>, vector<256x128xbf16>
    %cst_204 = arith.constant dense<0.000000e+00> : vector<32x128xf32>
    %609 = tpu.matmul %607, %608, %cst_204 {dimension_numbers = #tpu.dot_dimension_numbers<[1], [0], [0], [1], [0, 0, 1, 1], [], []>} : vector<32x256xbf16>, vector<256x128xbf16>, vector<32x128xf32> -> vector<32x128xf32>
    %c0_205 = arith.constant 0 : index
    %c0_206 = arith.constant 0 : index
    %610 = vector.load %arg28[%c0_205, %c0_206] : memref<1x128xf32, #tpu.memory_space<vmem>>, vector<1x128xf32>
    %611 = vector.broadcast %610 : vector<1x128xf32> to vector<32x128xf32>
    %612 = arith.addf %609, %611 : vector<32x128xf32>
    %cst_207 = arith.constant 0.000000e+00 : f32
    %613 = vector.broadcast %cst_207 : f32 to vector<32x128xf32>
    %614 = arith.maximumf %612, %613 : vector<32x128xf32>
    %615 = arith.truncf %614 : vector<32x128xf32> to vector<32x128xbf16>
    %c0_208 = arith.constant 0 : index
    %c0_209 = arith.constant 0 : index
    %616 = vector.load %arg29[%c0_208, %c0_209] : memref<128x256xbf16, #tpu.memory_space<vmem>>, vector<128x256xbf16>
    %cst_210 = arith.constant dense<0.000000e+00> : vector<32x256xf32>
    %617 = tpu.matmul %615, %616, %cst_210 {dimension_numbers = #tpu.dot_dimension_numbers<[1], [0], [0], [1], [0, 0, 1, 1], [], []>} : vector<32x128xbf16>, vector<128x256xbf16>, vector<32x256xf32> -> vector<32x256xf32>
    %c0_211 = arith.constant 0 : index
    %c0_212 = arith.constant 0 : index
    %618 = vector.load %arg30[%c0_211, %c0_212] : memref<1x256xf32, #tpu.memory_space<vmem>>, vector<1x256xf32>
    %619 = vector.broadcast %618 : vector<1x256xf32> to vector<32x256xf32>
    %620 = arith.addf %617, %619 : vector<32x256xf32>
    %621 = arith.addf %606, %620 : vector<32x256xf32>
    %c0_213 = arith.constant 0 : index
    %c0_214 = arith.constant 0 : index
    %622 = vector.load %arg33[%c0_213, %c0_214] : memref<1x256xf32, #tpu.memory_space<vmem>>, vector<1x256xf32>
    %c0_215 = arith.constant 0 : index
    %c0_216 = arith.constant 0 : index
    %623 = vector.load %arg34[%c0_215, %c0_216] : memref<1x256xf32, #tpu.memory_space<vmem>>, vector<1x256xf32>
    %cst_217 = arith.constant dense<0.000000e+00> : vector<32xf32>
    %624 = vector.multi_reduction <add>, %621, %cst_217 [1] : vector<32x256xf32> to vector<32xf32>
    %625 = vector.shape_cast %624 : vector<32xf32> to vector<32x1xf32>
    %cst_218 = arith.constant 3.906250e-03 : f32
    %626 = vector.broadcast %cst_218 : f32 to vector<32x1xf32>
    %627 = arith.mulf %625, %626 : vector<32x1xf32>
    %628 = arith.mulf %621, %621 : vector<32x256xf32>
    %cst_219 = arith.constant dense<0.000000e+00> : vector<32xf32>
    %629 = vector.multi_reduction <add>, %628, %cst_219 [1] : vector<32x256xf32> to vector<32xf32>
    %630 = vector.shape_cast %629 : vector<32xf32> to vector<32x1xf32>
    %cst_220 = arith.constant 3.906250e-03 : f32
    %631 = vector.broadcast %cst_220 : f32 to vector<32x1xf32>
    %632 = arith.mulf %630, %631 : vector<32x1xf32>
    %633 = arith.mulf %627, %627 : vector<32x1xf32>
    %634 = arith.subf %632, %633 : vector<32x1xf32>
    %635 = vector.broadcast %627 : vector<32x1xf32> to vector<32x256xf32>
    %636 = arith.subf %621, %635 : vector<32x256xf32>
    %cst_221 = arith.constant 9.99999974E-6 : f32
    %637 = vector.broadcast %cst_221 : f32 to vector<32x1xf32>
    %638 = arith.addf %634, %637 : vector<32x1xf32>
    %639 = math.rsqrt %638 : vector<32x1xf32>
    %640 = vector.broadcast %639 : vector<32x1xf32> to vector<32x256xf32>
    %641 = arith.mulf %636, %640 : vector<32x256xf32>
    %642 = vector.broadcast %622 : vector<1x256xf32> to vector<32x256xf32>
    %643 = arith.mulf %641, %642 : vector<32x256xf32>
    %644 = vector.broadcast %623 : vector<1x256xf32> to vector<32x256xf32>
    %645 = arith.addf %643, %644 : vector<32x256xf32>
    %646 = arith.truncf %324 : vector<16x256xf32> to vector<16x256xbf16>
    %647 = arith.truncf %645 : vector<32x256xf32> to vector<32x256xbf16>
    %cst_222 = arith.constant dense<0.000000e+00> : vector<16x32xf32>
    %648 = tpu.matmul %646, %647, %cst_222 {dimension_numbers = #tpu.dot_dimension_numbers<[1], [1], [0], [0], [0, 0, 1, 0], [], []>} : vector<16x256xbf16>, vector<32x256xbf16>, vector<16x32xf32> -> vector<16x32xf32>
    %c0_223 = arith.constant 0 : index
    %c0_224 = arith.constant 0 : index
    %649 = vector.load %arg35[%c0_223, %c0_224] : memref<16x32xf32, #tpu.memory_space<vmem>>, vector<16x32xf32>
    tpu.vector_store %arg35[%c0_223, %c0_224], %648 {strides = array<i32>} : memref<16x32xf32, #tpu.memory_space<vmem>>, vector<16x32xf32>,
    return
  }
  func.func @transform_0(%arg0: i32) -> (i32, i32) {
    %c0_i32 = arith.constant 0 : i32
    %c0_i32_0 = arith.constant 0 : i32
    return %arg0, %c0_i32 : i32, i32
  }
  func.func @transform_1(%arg0: i32) -> (i32, i32) {
    %c0_i32 = arith.constant 0 : i32
    %c0_i32_0 = arith.constant 0 : i32
    return %arg0, %c0_i32 : i32, i32
  }
  func.func @transform_2(%arg0: i32) -> (i32, i32) {
    %c0_i32 = arith.constant 0 : i32
    %c0_i32_0 = arith.constant 0 : i32
    %c0_i32_1 = arith.constant 0 : i32
    return %c0_i32, %c0_i32_0 : i32, i32
  }
  func.func @transform_3(%arg0: i32) -> (i32, i32) {
    %c0_i32 = arith.constant 0 : i32
    %c0_i32_0 = arith.constant 0 : i32
    %c0_i32_1 = arith.constant 0 : i32
    return %c0_i32, %c0_i32_0 : i32, i32
  }
  func.func @transform_4(%arg0: i32) -> (i32, i32) {
    %c0_i32 = arith.constant 0 : i32
    %c0_i32_0 = arith.constant 0 : i32
    %c0_i32_1 = arith.constant 0 : i32
    return %c0_i32, %c0_i32_0 : i32, i32
  }
  func.func @transform_5(%arg0: i32) -> (i32, i32) {
    %c0_i32 = arith.constant 0 : i32
    %c0_i32_0 = arith.constant 0 : i32
    %c0_i32_1 = arith.constant 0 : i32
    return %c0_i32, %c0_i32_0 : i32, i32
  }
  func.func @transform_6(%arg0: i32) -> (i32, i32) {
    %c0_i32 = arith.constant 0 : i32
    %c0_i32_0 = arith.constant 0 : i32
    %c0_i32_1 = arith.constant 0 : i32
    return %c0_i32, %c0_i32_0 : i32, i32
  }
  func.func @transform_7(%arg0: i32) -> (i32, i32) {
    %c0_i32 = arith.constant 0 : i32
    %c0_i32_0 = arith.constant 0 : i32
    %c0_i32_1 = arith.constant 0 : i32
    return %c0_i32, %c0_i32_0 : i32, i32
  }
  func.func @transform_8(%arg0: i32) -> (i32, i32) {
    %c0_i32 = arith.constant 0 : i32
    %c0_i32_0 = arith.constant 0 : i32
    %c0_i32_1 = arith.constant 0 : i32
    return %c0_i32, %c0_i32_0 : i32, i32
  }
  func.func @transform_9(%arg0: i32) -> (i32, i32) {
    %c0_i32 = arith.constant 0 : i32
    %c0_i32_0 = arith.constant 0 : i32
    %c0_i32_1 = arith.constant 0 : i32
    return %c0_i32, %c0_i32_0 : i32, i32
  }
  func.func @transform_10(%arg0: i32) -> (i32, i32) {
    %c0_i32 = arith.constant 0 : i32
    %c0_i32_0 = arith.constant 0 : i32
    %c0_i32_1 = arith.constant 0 : i32
    return %c0_i32, %c0_i32_0 : i32, i32
  }
  func.func @transform_11(%arg0: i32) -> (i32, i32) {
    %c0_i32 = arith.constant 0 : i32
    %c0_i32_0 = arith.constant 0 : i32
    %c0_i32_1 = arith.constant 0 : i32
    return %c0_i32, %c0_i32_0 : i32, i32
  }
  func.func @transform_12(%arg0: i32) -> (i32, i32) {
    %c0_i32 = arith.constant 0 : i32
    %c0_i32_0 = arith.constant 0 : i32
    %c0_i32_1 = arith.constant 0 : i32
    return %c0_i32, %c0_i32_0 : i32, i32
  }
  func.func @transform_13(%arg0: i32) -> (i32, i32) {
    %c0_i32 = arith.constant 0 : i32
    %c0_i32_0 = arith.constant 0 : i32
    %c0_i32_1 = arith.constant 0 : i32
    return %c0_i32, %c0_i32_0 : i32, i32
  }
  func.func @transform_14(%arg0: i32) -> (i32, i32) {
    %c0_i32 = arith.constant 0 : i32
    %c0_i32_0 = arith.constant 0 : i32
    %c0_i32_1 = arith.constant 0 : i32
    return %c0_i32, %c0_i32_0 : i32, i32
  }
  func.func @transform_15(%arg0: i32) -> (i32, i32) {
    %c0_i32 = arith.constant 0 : i32
    %c0_i32_0 = arith.constant 0 : i32
    %c0_i32_1 = arith.constant 0 : i32
    return %c0_i32, %c0_i32_0 : i32, i32
  }
  func.func @transform_16(%arg0: i32) -> (i32, i32) {
    %c0_i32 = arith.constant 0 : i32
    %c0_i32_0 = arith.constant 0 : i32
    %c0_i32_1 = arith.constant 0 : i32
    return %c0_i32, %c0_i32_0 : i32, i32
  }
  func.func @transform_17(%arg0: i32) -> (i32, i32) {
    %c0_i32 = arith.constant 0 : i32
    %c0_i32_0 = arith.constant 0 : i32
    %c0_i32_1 = arith.constant 0 : i32
    return %c0_i32, %c0_i32_0 : i32, i32
  }
  func.func @transform_18(%arg0: i32) -> (i32, i32) {
    %c0_i32 = arith.constant 0 : i32
    %c0_i32_0 = arith.constant 0 : i32
    %c0_i32_1 = arith.constant 0 : i32
    return %c0_i32, %c0_i32_0 : i32, i32
  }
  func.func @transform_19(%arg0: i32) -> (i32, i32) {
    %c0_i32 = arith.constant 0 : i32
    %c0_i32_0 = arith.constant 0 : i32
    %c0_i32_1 = arith.constant 0 : i32
    return %c0_i32, %c0_i32_0 : i32, i32
  }
  func.func @transform_20(%arg0: i32) -> (i32, i32) {
    %c0_i32 = arith.constant 0 : i32
    %c0_i32_0 = arith.constant 0 : i32
    %c0_i32_1 = arith.constant 0 : i32
    return %c0_i32, %c0_i32_0 : i32, i32
  }
  func.func @transform_21(%arg0: i32) -> (i32, i32) {
    %c0_i32 = arith.constant 0 : i32
    %c0_i32_0 = arith.constant 0 : i32
    %c0_i32_1 = arith.constant 0 : i32
    return %c0_i32, %c0_i32_0 : i32, i32
  }
  func.func @transform_22(%arg0: i32) -> (i32, i32) {
    %c0_i32 = arith.constant 0 : i32
    %c0_i32_0 = arith.constant 0 : i32
    %c0_i32_1 = arith.constant 0 : i32
    return %c0_i32, %c0_i32_0 : i32, i32
  }
  func.func @transform_23(%arg0: i32) -> (i32, i32) {
    %c0_i32 = arith.constant 0 : i32
    %c0_i32_0 = arith.constant 0 : i32
    %c0_i32_1 = arith.constant 0 : i32
    return %c0_i32, %c0_i32_0 : i32, i32
  }
  func.func @transform_24(%arg0: i32) -> (i32, i32) {
    %c0_i32 = arith.constant 0 : i32
    %c0_i32_0 = arith.constant 0 : i32
    %c0_i32_1 = arith.constant 0 : i32
    return %c0_i32, %c0_i32_0 : i32, i32
  }
  func.func @transform_25(%arg0: i32) -> (i32, i32) {
    %c0_i32 = arith.constant 0 : i32
    %c0_i32_0 = arith.constant 0 : i32
    %c0_i32_1 = arith.constant 0 : i32
    return %c0_i32, %c0_i32_0 : i32, i32
  }
  func.func @transform_26(%arg0: i32) -> (i32, i32) {
    %c0_i32 = arith.constant 0 : i32
    %c0_i32_0 = arith.constant 0 : i32
    %c0_i32_1 = arith.constant 0 : i32
    return %c0_i32, %c0_i32_0 : i32, i32
  }
  func.func @transform_27(%arg0: i32) -> (i32, i32) {
    %c0_i32 = arith.constant 0 : i32
    %c0_i32_0 = arith.constant 0 : i32
    %c0_i32_1 = arith.constant 0 : i32
    return %c0_i32, %c0_i32_0 : i32, i32
  }
  func.func @transform_28(%arg0: i32) -> (i32, i32) {
    %c0_i32 = arith.constant 0 : i32
    %c0_i32_0 = arith.constant 0 : i32
    %c0_i32_1 = arith.constant 0 : i32
    return %c0_i32, %c0_i32_0 : i32, i32
  }
  func.func @transform_29(%arg0: i32) -> (i32, i32) {
    %c0_i32 = arith.constant 0 : i32
    %c0_i32_0 = arith.constant 0 : i32
    %c0_i32_1 = arith.constant 0 : i32
    return %c0_i32, %c0_i32_0 : i32, i32
  }
  func.func @transform_30(%arg0: i32) -> (i32, i32) {
    %c0_i32 = arith.constant 0 : i32
    %c0_i32_0 = arith.constant 0 : i32
    %c0_i32_1 = arith.constant 0 : i32
    return %c0_i32, %c0_i32_0 : i32, i32
  }
  func.func @transform_31(%arg0: i32) -> (i32, i32) {
    %c0_i32 = arith.constant 0 : i32
    %c0_i32_0 = arith.constant 0 : i32
    %c0_i32_1 = arith.constant 0 : i32
    return %c0_i32, %c0_i32_0 : i32, i32
  }
  func.func @transform_32(%arg0: i32) -> (i32, i32) {
    %c0_i32 = arith.constant 0 : i32
    %c0_i32_0 = arith.constant 0 : i32
    %c0_i32_1 = arith.constant 0 : i32
    return %c0_i32, %c0_i32_0 : i32, i32
  }
  func.func @transform_33(%arg0: i32) -> (i32, i32) {
    %c0_i32 = arith.constant 0 : i32
    %c0_i32_0 = arith.constant 0 : i32
    %c0_i32_1 = arith.constant 0 : i32
    return %c0_i32, %c0_i32_0 : i32, i32
  }
  func.func @transform_34(%arg0: i32) -> (i32, i32) {
    %c0_i32 = arith.constant 0 : i32
    %c0_i32_0 = arith.constant 0 : i32
    return %arg0, %c0_i32 : i32, i32
  }
}

</mosaic_0001>

<llo_original>
// kernel: _lambda_.1
$region0: #{_lambda_.1}
  #allocation0 [shape = 'u32[]', space=smem, size = 0x4, offset = 0x4, fixed_abs, tag = 'smem constant byte address 0x4 - core index']
  #allocation1 [shape = 'u32[144,128]{1,0:T(1,128)}', space=vmem, size = 0x12000, scoped, tag = 'internal scratch']
  %s0 = inlined_call_operand.smem [shape: u32[35], index: -1, kind: input, shape index: {}]
  %s1 = sld [smem:[%s0]]
  %s2 = scalar_lea.smem %s0, 1
  %s3 = sld [smem:[%s2]]
  %s4 = scalar_lea.smem %s0, 2
  %s5 = sld [smem:[%s4]]
  %s6 = scalar_lea.smem %s0, 3
  %s7 = sld [smem:[%s6]]
  %s8 = scalar_lea.smem %s0, 4
  %s9 = sld [smem:[%s8]]
  %s10 = scalar_lea.smem %s0, 5
  %s11 = sld [smem:[%s10]]
  %s12 = scalar_lea.smem %s0, 6
  %s13 = sld [smem:[%s12]]
  %s14 = scalar_lea.smem %s0, 7
  %s15 = sld [smem:[%s14]]
  %s16 = scalar_lea.smem %s0, 8
  %s17 = sld [smem:[%s16]]
  %s18 = scalar_lea.smem %s0, 9
  %s19 = sld [smem:[%s18]]
  %s20 = scalar_lea.smem %s0, 10
  %s21 = sld [smem:[%s20]]
  %s22 = scalar_lea.smem %s0, 11
  %s23 = sld [smem:[%s22]]
  %s24 = scalar_lea.smem %s0, 12
  %s25 = sld [smem:[%s24]]
  %s26 = scalar_lea.smem %s0, 13
  %s27 = sld [smem:[%s26]]
  %s28 = scalar_lea.smem %s0, 14
  %s29 = sld [smem:[%s28]]
  %s30 = scalar_lea.smem %s0, 15
  %s31 = sld [smem:[%s30]]
  %s32 = scalar_lea.smem %s0, 16
  %s33 = sld [smem:[%s32]]
  %s34 = scalar_lea.smem %s0, 17
  %s35 = sld [smem:[%s34]]
  %s36 = scalar_lea.smem %s0, 18
  %s37 = sld [smem:[%s36]]
  %s38 = scalar_lea.smem %s0, 19
  %s39 = sld [smem:[%s38]]
  %s40 = scalar_lea.smem %s0, 20
  %s41 = sld [smem:[%s40]]
  %s42 = scalar_lea.smem %s0, 21
  %s43 = sld [smem:[%s42]]
  %s44 = scalar_lea.smem %s0, 22
  %s45 = sld [smem:[%s44]]
  %s46 = scalar_lea.smem %s0, 23
  %s47 = sld [smem:[%s46]]
  %s48 = scalar_lea.smem %s0, 24
  %s49 = sld [smem:[%s48]]
  %s50 = scalar_lea.smem %s0, 25
  %s51 = sld [smem:[%s50]]
  %s52 = scalar_lea.smem %s0, 26
  %s53 = sld [smem:[%s52]]
  %s54 = scalar_lea.smem %s0, 27
  %s55 = sld [smem:[%s54]]
  %s56 = scalar_lea.smem %s0, 28
  %s57 = sld [smem:[%s56]]
  %s58 = scalar_lea.smem %s0, 29
  %s59 = sld [smem:[%s58]]
  %s60 = scalar_lea.smem %s0, 30
  %s61 = sld [smem:[%s60]]
  %s62 = scalar_lea.smem %s0, 31
  %s63 = sld [smem:[%s62]]
  %s64 = scalar_lea.smem %s0, 32
  %s65 = sld [smem:[%s64]]
  %s66 = scalar_lea.smem %s0, 33
  %s67 = sld [smem:[%s66]]
  %s68 = scalar_lea.smem %s0, 34
  %s69 = sld [smem:[%s68]]
  %s70 = sld [smem:[#allocation0]]
  $region169: #{_lambda_.1} parent=0
    _
  %s72 = ssub.s32 1, %s70
  %s73 = scalar_select 0, %s72, %s70
  $region1: #{_lambda_.1} parent=0
    #allocation2 [shape = 'u8[16384]{0}', space=vmem, size = 0x4000, scoped, tag = 'output window, operand 0']
    #allocation3 [shape = 's32[2]{0}', space=sflag, size = 0x8, scoped, tag = 'scoped memory for _lambda_.1']
    %74 = vsyncpa [#allocation3], 0
    %s75 = scalar_lea.sflag [#allocation3], 1
    %76 = vsyncpa %s75, 0
    loop: start=0, step=1, limit=4
    $region2: #{_lambda_.1} parent=1 // loop_pre_header
      _
    $region3: #{_lambda_.1} parent=1 // loop_header
      %s78 = sphi 0, %s82
      %p79 = scmp.ge.s32.totalorder %s78, 4
      %s88 = sphi 0, %s90
      %s91 = sphi 0, %s88
      %s92 = sphi 0, %s91
      %s108 = sphi 0, %s92
      %s114 = sphi 0, %s116
      %s117 = sphi 0, %s114
      %s118 = sphi 0, %s117
      %s134 = sphi 0, %s118
      %s138 = sphi 0, %s138
      %s140 = sphi 0, %s138
      %s141 = sphi 0, %s140
      %s155 = sphi 0, %s141
      %s159 = sphi 0, %s159
      %s161 = sphi 0, %s159
      %s162 = sphi 0, %s161
      %s176 = sphi 0, %s162
      %s180 = sphi 0, %s180
      %s182 = sphi 0, %s180
      %s183 = sphi 0, %s182
      %s197 = sphi 0, %s183
      %s201 = sphi 0, %s201
      %s203 = sphi 0, %s201
      %s204 = sphi 0, %s203
      %s218 = sphi 0, %s204
      %s222 = sphi 0, %s222
      %s224 = sphi 0, %s222
      %s225 = sphi 0, %s224
      %s239 = sphi 0, %s225
      %s243 = sphi 0, %s243
      %s245 = sphi 0, %s243
      %s246 = sphi 0, %s245
      %s260 = sphi 0, %s246
      %s264 = sphi 0, %s264
      %s266 = sphi 0, %s264
      %s267 = sphi 0, %s266
      %s281 = sphi 0, %s267
      %s285 = sphi 0, %s285
      %s287 = sphi 0, %s285
      %s288 = sphi 0, %s287
      %s302 = sphi 0, %s288
      %s306 = sphi 0, %s306
      %s308 = sphi 0, %s306
      %s309 = sphi 0, %s308
      %s323 = sphi 0, %s309
      %s327 = sphi 0, %s327
      %s329 = sphi 0, %s327
      %s330 = sphi 0, %s329
      %s344 = sphi 0, %s330
      %s348 = sphi 0, %s348
      %s350 = sphi 0, %s348
      %s351 = sphi 0, %s350
      %s365 = sphi 0, %s351
      %s369 = sphi 0, %s369
      %s371 = sphi 0, %s369
      %s372 = sphi 0, %s371
      %s386 = sphi 0, %s372
      %s390 = sphi 0, %s390
      %s392 = sphi 0, %s390
      %s393 = sphi 0, %s392
      %s407 = sphi 0, %s393
      %s411 = sphi 0, %s411
      %s413 = sphi 0, %s411
      %s414 = sphi 0, %s413
      %s428 = sphi 0, %s414
      %s432 = sphi 0, %s432
      %s434 = sphi 0, %s432
      %s435 = sphi 0, %s434
      %s449 = sphi 0, %s435
      %s453 = sphi 0, %s453
      %s455 = sphi 0, %s453
      %s456 = sphi 0, %s455
      %s470 = sphi 0, %s456
      %s474 = sphi 0, %s474
      %s476 = sphi 0, %s474
      %s477 = sphi 0, %s476
      %s491 = sphi 0, %s477
      %s495 = sphi 0, %s495
      %s497 = sphi 0, %s495
      %s498 = sphi 0, %s497
      %s512 = sphi 0, %s498
      %s516 = sphi 0, %s516
      %s518 = sphi 0, %s516
      %s519 = sphi 0, %s518
      %s533 = sphi 0, %s519
      %s537 = sphi 0, %s537
      %s539 = sphi 0, %s537
      %s540 = sphi 0, %s539
      %s554 = sphi 0, %s540
      %s558 = sphi 0, %s558
      %s560 = sphi 0, %s558
      %s561 = sphi 0, %s560
      %s575 = sphi 0, %s561
      %s579 = sphi 0, %s579
      %s581 = sphi 0, %s579
      %s582 = sphi 0, %s581
      %s596 = sphi 0, %s582
      %s600 = sphi 0, %s600
      %s602 = sphi 0, %s600
      %s603 = sphi 0, %s602
      %s617 = sphi 0, %s603
      %s621 = sphi 0, %s621
      %s623 = sphi 0, %s621
      %s624 = sphi 0, %s623
      %s638 = sphi 0, %s624
      %s642 = sphi 0, %s642
      %s644 = sphi 0, %s642
      %s645 = sphi 0, %s644
      %s659 = sphi 0, %s645
      %s663 = sphi 0, %s663
      %s665 = sphi 0, %s663
      %s666 = sphi 0, %s665
      %s680 = sphi 0, %s666
      %s684 = sphi 0, %s684
      %s686 = sphi 0, %s684
      %s687 = sphi 0, %s686
      %s701 = sphi 0, %s687
      %s705 = sphi 0, %s705
      %s707 = sphi 0, %s705
      %s708 = sphi 0, %s707
      %s722 = sphi 0, %s708
      %s726 = sphi 0, %s726
      %s728 = sphi 0, %s726
      %s729 = sphi 0, %s728
      %s743 = sphi 0, %s729
      %s747 = sphi 0, %s747
      %s749 = sphi 0, %s747
      %s750 = sphi 0, %s749
      %s764 = sphi 0, %s750
      %s768 = sphi 0, %s768
      %s770 = sphi 0, %s768
      %s771 = sphi 0, %s770
      %s785 = sphi 0, %s771
      %s789 = sphi 0, %s789
      %s791 = sphi 0, %s789
      %s792 = sphi 0, %s791
      %s806 = sphi 0, %s792
      %s812 = sphi 0, %s814
      %s815 = sphi 0, %s812
      %s816 = sphi 0, %s815
      %s832 = sphi 0, %s816
    $region4: #{_lambda_.1} parent=1 // loop_header_branch
      %81 = sbr.rel (%p79) target = $region8
    $region5: #{_lambda_.1} parent=1 // loop_body
      %s83 = ssub.s32 %s78, 1
      %s84 = ssub.s32 %s78, 2
      %s85 = sadd.s32 %s78, 1
      %s86 = ssub.s32 %s78, %s85
      %p87 = scmp.eq.s32.totalorder %s86, 0
      %s89 = sadd.s32 %s88, 1
      %s90 = scalar_select %p87, %s88, %s89
      %p93 = pneg %p87
      %p94 = scmp.eq.s32.totalorder %s78, 1
      %p95 = por %p93, %p94
      %p96 = scmp.ne.s32.totalorder %s88, %s91
      %p97 = scmp.eq.s32.totalorder %s78, 0
      %p98 = por %p96, %p97
      %p99 = scmp.ne.s32.totalorder %s88, %s91
      %p100 = scmp.eq.s32.totalorder %s83, 1
      %p101 = por %p99, %p100
      %p102 = scmp.ne.s32.totalorder %s91, %s92
      %p103 = scmp.eq.s32.totalorder %s83, 0
      %p104 = por %p102, %p103
      %p105 = scmp.ne.s32.totalorder %s91, %s92
      %p106 = scmp.eq.s32.totalorder %s84, 1
      %p107 = por %p105, %p106
      %p109 = scmp.ne.s32.totalorder %s92, %s108
      %p110 = scmp.eq.s32.totalorder %s84, 0
      %p111 = por %p109, %p110
      %s112 = ssub.s32 %s78, %s85
      %p113 = scmp.eq.s32.totalorder %s112, 0
      %s115 = sadd.s32 %s114, 1
      %s116 = scalar_select %p113, %s114, %s115
      %p119 = pneg %p113
      %p120 = scmp.eq.s32.totalorder %s78, 1
      %p121 = por %p119, %p120
      %p122 = scmp.ne.s32.totalorder %s114, %s117
      %p123 = scmp.eq.s32.totalorder %s78, 0
      %p124 = por %p122, %p123
      %p125 = scmp.ne.s32.totalorder %s114, %s117
      %p126 = scmp.eq.s32.totalorder %s83, 1
      %p127 = por %p125, %p126
      %p128 = scmp.ne.s32.totalorder %s117, %s118
      %p129 = scmp.eq.s32.totalorder %s83, 0
      %p130 = por %p128, %p129
      %p131 = scmp.ne.s32.totalorder %s117, %s118
      %p132 = scmp.eq.s32.totalorder %s84, 1
      %p133 = por %p131, %p132
      %p135 = scmp.ne.s32.totalorder %s118, %s134
      %p136 = scmp.eq.s32.totalorder %s84, 0
      %p137 = por %p135, %p136
      %s139 = sadd.s32 %s138, 1
      %p142 = scmp.eq.s32.totalorder %s78, 1
      %p143 = scmp.ne.s32.totalorder %s138, %s140
      %p144 = scmp.eq.s32.totalorder %s78, 0
      %p145 = por %p143, %p144
      %p146 = scmp.ne.s32.totalorder %s138, %s140
      %p147 = scmp.eq.s32.totalorder %s83, 1
      %p148 = por %p146, %p147
      %p149 = scmp.ne.s32.totalorder %s140, %s141
      %p150 = scmp.eq.s32.totalorder %s83, 0
      %p151 = por %p149, %p150
      %p152 = scmp.ne.s32.totalorder %s140, %s141
      %p153 = scmp.eq.s32.totalorder %s84, 1
      %p154 = por %p152, %p153
      %p156 = scmp.ne.s32.totalorder %s141, %s155
      %p157 = scmp.eq.s32.totalorder %s84, 0
      %p158 = por %p156, %p157
      %s160 = sadd.s32 %s159, 1
      %p163 = scmp.eq.s32.totalorder %s78, 1
      %p164 = scmp.ne.s32.totalorder %s159, %s161
      %p165 = scmp.eq.s32.totalorder %s78, 0
      %p166 = por %p164, %p165
      %p167 = scmp.ne.s32.totalorder %s159, %s161
      %p168 = scmp.eq.s32.totalorder %s83, 1
      %p169 = por %p167, %p168
      %p170 = scmp.ne.s32.totalorder %s161, %s162
      %p171 = scmp.eq.s32.totalorder %s83, 0
      %p172 = por %p170, %p171
      %p173 = scmp.ne.s32.totalorder %s161, %s162
      %p174 = scmp.eq.s32.totalorder %s84, 1
      %p175 = por %p173, %p174
      %p177 = scmp.ne.s32.totalorder %s162, %s176
      %p178 = scmp.eq.s32.totalorder %s84, 0
      %p179 = por %p177, %p178
      %s181 = sadd.s32 %s180, 1
      %p184 = scmp.eq.s32.totalorder %s78, 1
      %p185 = scmp.ne.s32.totalorder %s180, %s182
      %p186 = scmp.eq.s32.totalorder %s78, 0
      %p187 = por %p185, %p186
      %p188 = scmp.ne.s32.totalorder %s180, %s182
      %p189 = scmp.eq.s32.totalorder %s83, 1
      %p190 = por %p188, %p189
      %p191 = scmp.ne.s32.totalorder %s182, %s183
      %p192 = scmp.eq.s32.totalorder %s83, 0
      %p193 = por %p191, %p192
      %p194 = scmp.ne.s32.totalorder %s182, %s183
      %p195 = scmp.eq.s32.totalorder %s84, 1
      %p196 = por %p194, %p195
      %p198 = scmp.ne.s32.totalorder %s183, %s197
      %p199 = scmp.eq.s32.totalorder %s84, 0
      %p200 = por %p198, %p199
      %s202 = sadd.s32 %s201, 1
      %p205 = scmp.eq.s32.totalorder %s78, 1
      %p206 = scmp.ne.s32.totalorder %s201, %s203
      %p207 = scmp.eq.s32.totalorder %s78, 0
      %p208 = por %p206, %p207
      %p209 = scmp.ne.s32.totalorder %s201, %s203
      %p210 = scmp.eq.s32.totalorder %s83, 1
      %p211 = por %p209, %p210
      %p212 = scmp.ne.s32.totalorder %s203, %s204
      %p213 = scmp.eq.s32.totalorder %s83, 0
      %p214 = por %p212, %p213
      %p215 = scmp.ne.s32.totalorder %s203, %s204
      %p216 = scmp.eq.s32.totalorder %s84, 1
      %p217 = por %p215, %p216
      %p219 = scmp.ne.s32.totalorder %s204, %s218
      %p220 = scmp.eq.s32.totalorder %s84, 0
      %p221 = por %p219, %p220
      %s223 = sadd.s32 %s222, 1
      %p226 = scmp.eq.s32.totalorder %s78, 1
      %p227 = scmp.ne.s32.totalorder %s222, %s224
      %p228 = scmp.eq.s32.totalorder %s78, 0
      %p229 = por %p227, %p228
      %p230 = scmp.ne.s32.totalorder %s222, %s224
      %p231 = scmp.eq.s32.totalorder %s83, 1
      %p232 = por %p230, %p231
      %p233 = scmp.ne.s32.totalorder %s224, %s225
      %p234 = scmp.eq.s32.totalorder %s83, 0
      %p235 = por %p233, %p234
      %p236 = scmp.ne.s32.totalorder %s224, %s225
      %p237 = scmp.eq.s32.totalorder %s84, 1
      %p238 = por %p236, %p237
      %p240 = scmp.ne.s32.totalorder %s225, %s239
      %p241 = scmp.eq.s32.totalorder %s84, 0
      %p242 = por %p240, %p241
      %s244 = sadd.s32 %s243, 1
      %p247 = scmp.eq.s32.totalorder %s78, 1
      %p248 = scmp.ne.s32.totalorder %s243, %s245
      %p249 = scmp.eq.s32.totalorder %s78, 0
      %p250 = por %p248, %p249
      %p251 = scmp.ne.s32.totalorder %s243, %s245
      %p252 = scmp.eq.s32.totalorder %s83, 1
      %p253 = por %p251, %p252
      %p254 = scmp.ne.s32.totalorder %s245, %s246
      %p255 = scmp.eq.s32.totalorder %s83, 0
      %p256 = por %p254, %p255
      %p257 = scmp.ne.s32.totalorder %s245, %s246
      %p258 = scmp.eq.s32.totalorder %s84, 1
      %p259 = por %p257, %p258
      %p261 = scmp.ne.s32.totalorder %s246, %s260
      %p262 = scmp.eq.s32.totalorder %s84, 0
      %p263 = por %p261, %p262
      %s265 = sadd.s32 %s264, 1
      %p268 = scmp.eq.s32.totalorder %s78, 1
      %p269 = scmp.ne.s32.totalorder %s264, %s266
      %p270 = scmp.eq.s32.totalorder %s78, 0
      %p271 = por %p269, %p270
      %p272 = scmp.ne.s32.totalorder %s264, %s266
      %p273 = scmp.eq.s32.totalorder %s83, 1
      %p274 = por %p272, %p273
      %p275 = scmp.ne.s32.totalorder %s266, %s267
      %p276 = scmp.eq.s32.totalorder %s83, 0
      %p277 = por %p275, %p276
      %p278 = scmp.ne.s32.totalorder %s266, %s267
      %p279 = scmp.eq.s32.totalorder %s84, 1
      %p280 = por %p278, %p279
      %p282 = scmp.ne.s32.totalorder %s267, %s281
      %p283 = scmp.eq.s32.totalorder %s84, 0
      %p284 = por %p282, %p283
      %s286 = sadd.s32 %s285, 1
      %p289 = scmp.eq.s32.totalorder %s78, 1
      %p290 = scmp.ne.s32.totalorder %s285, %s287
      %p291 = scmp.eq.s32.totalorder %s78, 0
      %p292 = por %p290, %p291
      %p293 = scmp.ne.s32.totalorder %s285, %s287
      %p294 = scmp.eq.s32.totalorder %s83, 1
      %p295 = por %p293, %p294
      %p296 = scmp.ne.s32.totalorder %s287, %s288
      %p297 = scmp.eq.s32.totalorder %s83, 0
      %p298 = por %p296, %p297
      %p299 = scmp.ne.s32.totalorder %s287, %s288
      %p300 = scmp.eq.s32.totalorder %s84, 1
      %p301 = por %p299, %p300
      %p303 = scmp.ne.s32.totalorder %s288, %s302
      %p304 = scmp.eq.s32.totalorder %s84, 0
      %p305 = por %p303, %p304
      %s307 = sadd.s32 %s306, 1
      %p310 = scmp.eq.s32.totalorder %s78, 1
      %p311 = scmp.ne.s32.totalorder %s306, %s308
      %p312 = scmp.eq.s32.totalorder %s78, 0
      %p313 = por %p311, %p312
      %p314 = scmp.ne.s32.totalorder %s306, %s308
      %p315 = scmp.eq.s32.totalorder %s83, 1
      %p316 = por %p314, %p315
      %p317 = scmp.ne.s32.totalorder %s308, %s309
      %p318 = scmp.eq.s32.totalorder %s83, 0
      %p319 = por %p317, %p318
      %p320 = scmp.ne.s32.totalorder %s308, %s309
      %p321 = scmp.eq.s32.totalorder %s84, 1
      %p322 = por %p320, %p321
      %p324 = scmp.ne.s32.totalorder %s309, %s323
      %p325 = scmp.eq.s32.totalorder %s84, 0
      %p326 = por %p324, %p325
      %s328 = sadd.s32 %s327, 1
      %p331 = scmp.eq.s32.totalorder %s78, 1
      %p332 = scmp.ne.s32.totalorder %s327, %s329
      %p333 = scmp.eq.s32.totalorder %s78, 0
      %p334 = por %p332, %p333
      %p335 = scmp.ne.s32.totalorder %s327, %s329
      %p336 = scmp.eq.s32.totalorder %s83, 1
      %p337 = por %p335, %p336
      %p338 = scmp.ne.s32.totalorder %s329, %s330
      %p339 = scmp.eq.s32.totalorder %s83, 0
      %p340 = por %p338, %p339
      %p341 = scmp.ne.s32.totalorder %s329, %s330
      %p342 = scmp.eq.s32.totalorder %s84, 1
      %p343 = por %p341, %p342
      %p345 = scmp.ne.s32.totalorder %s330, %s344
      %p346 = scmp.eq.s32.totalorder %s84, 0
      %p347 = por %p345, %p346
      %s349 = sadd.s32 %s348, 1
      %p352 = scmp.eq.s32.totalorder %s78, 1
      %p353 = scmp.ne.s32.totalorder %s348, %s350
      %p354 = scmp.eq.s32.totalorder %s78, 0
      %p355 = por %p353, %p354
      %p356 = scmp.ne.s32.totalorder %s348, %s350
      %p357 = scmp.eq.s32.totalorder %s83, 1
      %p358 = por %p356, %p357
      %p359 = scmp.ne.s32.totalorder %s350, %s351
      %p360 = scmp.eq.s32.totalorder %s83, 0
      %p361 = por %p359, %p360
      %p362 = scmp.ne.s32.totalorder %s350, %s351
      %p363 = scmp.eq.s32.totalorder %s84, 1
      %p364 = por %p362, %p363
      %p366 = scmp.ne.s32.totalorder %s351, %s365
      %p367 = scmp.eq.s32.totalorder %s84, 0
      %p368 = por %p366, %p367
      %s370 = sadd.s32 %s369, 1
      %p373 = scmp.eq.s32.totalorder %s78, 1
      %p374 = scmp.ne.s32.totalorder %s369, %s371
      %p375 = scmp.eq.s32.totalorder %s78, 0
      %p376 = por %p374, %p375
      %p377 = scmp.ne.s32.totalorder %s369, %s371
      %p378 = scmp.eq.s32.totalorder %s83, 1
      %p379 = por %p377, %p378
      %p380 = scmp.ne.s32.totalorder %s371, %s372
      %p381 = scmp.eq.s32.totalorder %s83, 0
      %p382 = por %p380, %p381
      %p383 = scmp.ne.s32.totalorder %s371, %s372
      %p384 = scmp.eq.s32.totalorder %s84, 1
      %p385 = por %p383, %p384
      %p387 = scmp.ne.s32.totalorder %s372, %s386
      %p388 = scmp.eq.s32.totalorder %s84, 0
      %p389 = por %p387, %p388
      %s391 = sadd.s32 %s390, 1
      %p394 = scmp.eq.s32.totalorder %s78, 1
      %p395 = scmp.ne.s32.totalorder %s390, %s392
      %p396 = scmp.eq.s32.totalorder %s78, 0
      %p397 = por %p395, %p396
      %p398 = scmp.ne.s32.totalorder %s390, %s392
      %p399 = scmp.eq.s32.totalorder %s83, 1
      %p400 = por %p398, %p399
      %p401 = scmp.ne.s32.totalorder %s392, %s393
      %p402 = scmp.eq.s32.totalorder %s83, 0
      %p403 = por %p401, %p402
      %p404 = scmp.ne.s32.totalorder %s392, %s393
      %p405 = scmp.eq.s32.totalorder %s84, 1
      %p406 = por %p404, %p405
      %p408 = scmp.ne.s32.totalorder %s393, %s407
      %p409 = scmp.eq.s32.totalorder %s84, 0
      %p410 = por %p408, %p409
      %s412 = sadd.s32 %s411, 1
      %p415 = scmp.eq.s32.totalorder %s78, 1
      %p416 = scmp.ne.s32.totalorder %s411, %s413
      %p417 = scmp.eq.s32.totalorder %s78, 0
      %p418 = por %p416, %p417
      %p419 = scmp.ne.s32.totalorder %s411, %s413
      %p420 = scmp.eq.s32.totalorder %s83, 1
      %p421 = por %p419, %p420
      %p422 = scmp.ne.s32.totalorder %s413, %s414
      %p423 = scmp.eq.s32.totalorder %s83, 0
      %p424 = por %p422, %p423
      %p425 = scmp.ne.s32.totalorder %s413, %s414
      %p426 = scmp.eq.s32.totalorder %s84, 1
      %p427 = por %p425, %p426
      %p429 = scmp.ne.s32.totalorder %s414, %s428
      %p430 = scmp.eq.s32.totalorder %s84, 0
      %p431 = por %p429, %p430
      %s433 = sadd.s32 %s432, 1
      %p436 = scmp.eq.s32.totalorder %s78, 1
      %p437 = scmp.ne.s32.totalorder %s432, %s434
      %p438 = scmp.eq.s32.totalorder %s78, 0
      %p439 = por %p437, %p438
      %p440 = scmp.ne.s32.totalorder %s432, %s434
      %p441 = scmp.eq.s32.totalorder %s83, 1
      %p442 = por %p440, %p441
      %p443 = scmp.ne.s32.totalorder %s434, %s435
      %p444 = scmp.eq.s32.totalorder %s83, 0
      %p445 = por %p443, %p444
      %p446 = scmp.ne.s32.totalorder %s434, %s435
      %p447 = scmp.eq.s32.totalorder %s84, 1
      %p448 = por %p446, %p447
      %p450 = scmp.ne.s32.totalorder %s435, %s449
      %p451 = scmp.eq.s32.totalorder %s84, 0
      %p452 = por %p450, %p451
      %s454 = sadd.s32 %s453, 1
      %p457 = scmp.eq.s32.totalorder %s78, 1
      %p458 = scmp.ne.s32.totalorder %s453, %s455
      %p459 = scmp.eq.s32.totalorder %s78, 0
      %p460 = por %p458, %p459
      %p461 = scmp.ne.s32.totalorder %s453, %s455
      %p462 = scmp.eq.s32.totalorder %s83, 1
      %p463 = por %p461, %p462
      %p464 = scmp.ne.s32.totalorder %s455, %s456
      %p465 = scmp.eq.s32.totalorder %s83, 0
      %p466 = por %p464, %p465
      %p467 = scmp.ne.s32.totalorder %s455, %s456
      %p468 = scmp.eq.s32.totalorder %s84, 1
      %p469 = por %p467, %p468
      %p471 = scmp.ne.s32.totalorder %s456, %s470
      %p472 = scmp.eq.s32.totalorder %s84, 0
      %p473 = por %p471, %p472
      %s475 = sadd.s32 %s474, 1
      %p478 = scmp.eq.s32.totalorder %s78, 1
      %p479 = scmp.ne.s32.totalorder %s474, %s476
      %p480 = scmp.eq.s32.totalorder %s78, 0
      %p481 = por %p479, %p480
      %p482 = scmp.ne.s32.totalorder %s474, %s476
      %p483 = scmp.eq.s32.totalorder %s83, 1
      %p484 = por %p482, %p483
      %p485 = scmp.ne.s32.totalorder %s476, %s477
      %p486 = scmp.eq.s32.totalorder %s83, 0
      %p487 = por %p485, %p486
      %p488 = scmp.ne.s32.totalorder %s476, %s477
      %p489 = scmp.eq.s32.totalorder %s84, 1
      %p490 = por %p488, %p489
      %p492 = scmp.ne.s32.totalorder %s477, %s491
      %p493 = scmp.eq.s32.totalorder %s84, 0
      %p494 = por %p492, %p493
      %s496 = sadd.s32 %s495, 1
      %p499 = scmp.eq.s32.totalorder %s78, 1
      %p500 = scmp.ne.s32.totalorder %s495, %s497
      %p501 = scmp.eq.s32.totalorder %s78, 0
      %p502 = por %p500, %p501
      %p503 = scmp.ne.s32.totalorder %s495, %s497
      %p504 = scmp.eq.s32.totalorder %s83, 1
      %p505 = por %p503, %p504
      %p506 = scmp.ne.s32.totalorder %s497, %s498
      %p507 = scmp.eq.s32.totalorder %s83, 0
      %p508 = por %p506, %p507
      %p509 = scmp.ne.s32.totalorder %s497, %s498
      %p510 = scmp.eq.s32.totalorder %s84, 1
      %p511 = por %p509, %p510
      %p513 = scmp.ne.s32.totalorder %s498, %s512
      %p514 = scmp.eq.s32.totalorder %s84, 0
      %p515 = por %p513, %p514
      %s517 = sadd.s32 %s516, 1
      %p520 = scmp.eq.s32.totalorder %s78, 1
      %p521 = scmp.ne.s32.totalorder %s516, %s518
      %p522 = scmp.eq.s32.totalorder %s78, 0
      %p523 = por %p521, %p522
      %p524 = scmp.ne.s32.totalorder %s516, %s518
      %p525 = scmp.eq.s32.totalorder %s83, 1
      %p526 = por %p524, %p525
      %p527 = scmp.ne.s32.totalorder %s518, %s519
      %p528 = scmp.eq.s32.totalorder %s83, 0
      %p529 = por %p527, %p528
      %p530 = scmp.ne.s32.totalorder %s518, %s519
      %p531 = scmp.eq.s32.totalorder %s84, 1
      %p532 = por %p530, %p531
      %p534 = scmp.ne.s32.totalorder %s519, %s533
      %p535 = scmp.eq.s32.totalorder %s84, 0
      %p536 = por %p534, %p535
      %s538 = sadd.s32 %s537, 1
      %p541 = scmp.eq.s32.totalorder %s78, 1
      %p542 = scmp.ne.s32.totalorder %s537, %s539
      %p543 = scmp.eq.s32.totalorder %s78, 0
      %p544 = por %p542, %p543
      %p545 = scmp.ne.s32.totalorder %s537, %s539
      %p546 = scmp.eq.s32.totalorder %s83, 1
      %p547 = por %p545, %p546
      %p548 = scmp.ne.s32.totalorder %s539, %s540
      %p549 = scmp.eq.s32.totalorder %s83, 0
      %p550 = por %p548, %p549
      %p551 = scmp.ne.s32.totalorder %s539, %s540
      %p552 = scmp.eq.s32.totalorder %s84, 1
      %p553 = por %p551, %p552
      %p555 = scmp.ne.s32.totalorder %s540, %s554
      %p556 = scmp.eq.s32.totalorder %s84, 0
      %p557 = por %p555, %p556
      %s559 = sadd.s32 %s558, 1
      %p562 = scmp.eq.s32.totalorder %s78, 1
      %p563 = scmp.ne.s32.totalorder %s558, %s560
      %p564 = scmp.eq.s32.totalorder %s78, 0
      %p565 = por %p563, %p564
      %p566 = scmp.ne.s32.totalorder %s558, %s560
      %p567 = scmp.eq.s32.totalorder %s83, 1
      %p568 = por %p566, %p567
      %p569 = scmp.ne.s32.totalorder %s560, %s561
      %p570 = scmp.eq.s32.totalorder %s83, 0
      %p571 = por %p569, %p570
      %p572 = scmp.ne.s32.totalorder %s560, %s561
      %p573 = scmp.eq.s32.totalorder %s84, 1
      %p574 = por %p572, %p573
      %p576 = scmp.ne.s32.totalorder %s561, %s575
      %p577 = scmp.eq.s32.totalorder %s84, 0
      %p578 = por %p576, %p577
      %s580 = sadd.s32 %s579, 1
      %p583 = scmp.eq.s32.totalorder %s78, 1
      %p584 = scmp.ne.s32.totalorder %s579, %s581
      %p585 = scmp.eq.s32.totalorder %s78, 0
      %p586 = por %p584, %p585
      %p587 = scmp.ne.s32.totalorder %s579, %s581
      %p588 = scmp.eq.s32.totalorder %s83, 1
      %p589 = por %p587, %p588
      %p590 = scmp.ne.s32.totalorder %s581, %s582
      %p591 = scmp.eq.s32.totalorder %s83, 0
      %p592 = por %p590, %p591
      %p593 = scmp.ne.s32.totalorder %s581, %s582
      %p594 = scmp.eq.s32.totalorder %s84, 1
      %p595 = por %p593, %p594
      %p597 = scmp.ne.s32.totalorder %s582, %s596
      %p598 = scmp.eq.s32.totalorder %s84, 0
      %p599 = por %p597, %p598
      %s601 = sadd.s32 %s600, 1
      %p604 = scmp.eq.s32.totalorder %s78, 1
      %p605 = scmp.ne.s32.totalorder %s600, %s602
      %p606 = scmp.eq.s32.totalorder %s78, 0
      %p607 = por %p605, %p606
      %p608 = scmp.ne.s32.totalorder %s600, %s602
      %p609 = scmp.eq.s32.totalorder %s83, 1
      %p610 = por %p608, %p609
      %p611 = scmp.ne.s32.totalorder %s602, %s603
      %p612 = scmp.eq.s32.totalorder %s83, 0
      %p613 = por %p611, %p612
      %p614 = scmp.ne.s32.totalorder %s602, %s603
      %p615 = scmp.eq.s32.totalorder %s84, 1
      %p616 = por %p614, %p615
      %p618 = scmp.ne.s32.totalorder %s603, %s617
      %p619 = scmp.eq.s32.totalorder %s84, 0
      %p620 = por %p618, %p619
      %s622 = sadd.s32 %s621, 1
      %p625 = scmp.eq.s32.totalorder %s78, 1
      %p626 = scmp.ne.s32.totalorder %s621, %s623
      %p627 = scmp.eq.s32.totalorder %s78, 0
      %p628 = por %p626, %p627
      %p629 = scmp.ne.s32.totalorder %s621, %s623
      %p630 = scmp.eq.s32.totalorder %s83, 1
      %p631 = por %p629, %p630
      %p632 = scmp.ne.s32.totalorder %s623, %s624
      %p633 = scmp.eq.s32.totalorder %s83, 0
      %p634 = por %p632, %p633
      %p635 = scmp.ne.s32.totalorder %s623, %s624
      %p636 = scmp.eq.s32.totalorder %s84, 1
      %p637 = por %p635, %p636
      %p639 = scmp.ne.s32.totalorder %s624, %s638
      %p640 = scmp.eq.s32.totalorder %s84, 0
      %p641 = por %p639, %p640
      %s643 = sadd.s32 %s642, 1
      %p646 = scmp.eq.s32.totalorder %s78, 1
      %p647 = scmp.ne.s32.totalorder %s642, %s644
      %p648 = scmp.eq.s32.totalorder %s78, 0
      %p649 = por %p647, %p648
      %p650 = scmp.ne.s32.totalorder %s642, %s644
      %p651 = scmp.eq.s32.totalorder %s83, 1
      %p652 = por %p650, %p651
      %p653 = scmp.ne.s32.totalorder %s644, %s645
      %p654 = scmp.eq.s32.totalorder %s83, 0
      %p655 = por %p653, %p654
      %p656 = scmp.ne.s32.totalorder %s644, %s645
      %p657 = scmp.eq.s32.totalorder %s84, 1
      %p658 = por %p656, %p657
      %p660 = scmp.ne.s32.totalorder %s645, %s659
      %p661 = scmp.eq.s32.totalorder %s84, 0
      %p662 = por %p660, %p661
      %s664 = sadd.s32 %s663, 1
      %p667 = scmp.eq.s32.totalorder %s78, 1
      %p668 = scmp.ne.s32.totalorder %s663, %s665
      %p669 = scmp.eq.s32.totalorder %s78, 0
      %p670 = por %p668, %p669
      %p671 = scmp.ne.s32.totalorder %s663, %s665
      %p672 = scmp.eq.s32.totalorder %s83, 1
      %p673 = por %p671, %p672
      %p674 = scmp.ne.s32.totalorder %s665, %s666
      %p675 = scmp.eq.s32.totalorder %s83, 0
      %p676 = por %p674, %p675
      %p677 = scmp.ne.s32.totalorder %s665, %s666
      %p678 = scmp.eq.s32.totalorder %s84, 1
      %p679 = por %p677, %p678
      %p681 = scmp.ne.s32.totalorder %s666, %s680
      %p682 = scmp.eq.s32.totalorder %s84, 0
      %p683 = por %p681, %p682
      %s685 = sadd.s32 %s684, 1
      %p688 = scmp.eq.s32.totalorder %s78, 1
      %p689 = scmp.ne.s32.totalorder %s684, %s686
      %p690 = scmp.eq.s32.totalorder %s78, 0
      %p691 = por %p689, %p690
      %p692 = scmp.ne.s32.totalorder %s684, %s686
      %p693 = scmp.eq.s32.totalorder %s83, 1
      %p694 = por %p692, %p693
      %p695 = scmp.ne.s32.totalorder %s686, %s687
      %p696 = scmp.eq.s32.totalorder %s83, 0
      %p697 = por %p695, %p696
      %p698 = scmp.ne.s32.totalorder %s686, %s687
      %p699 = scmp.eq.s32.totalorder %s84, 1
      %p700 = por %p698, %p699
      %p702 = scmp.ne.s32.totalorder %s687, %s701
      %p703 = scmp.eq.s32.totalorder %s84, 0
      %p704 = por %p702, %p703
      %s706 = sadd.s32 %s705, 1
      %p709 = scmp.eq.s32.totalorder %s78, 1
      %p710 = scmp.ne.s32.totalorder %s705, %s707
      %p711 = scmp.eq.s32.totalorder %s78, 0
      %p712 = por %p710, %p711
      %p713 = scmp.ne.s32.totalorder %s705, %s707
      %p714 = scmp.eq.s32.totalorder %s83, 1
      %p715 = por %p713, %p714
      %p716 = scmp.ne.s32.totalorder %s707, %s708
      %p717 = scmp.eq.s32.totalorder %s83, 0
      %p718 = por %p716, %p717
      %p719 = scmp.ne.s32.totalorder %s707, %s708
      %p720 = scmp.eq.s32.totalorder %s84, 1
      %p721 = por %p719, %p720
      %p723 = scmp.ne.s32.totalorder %s708, %s722
      %p724 = scmp.eq.s32.totalorder %s84, 0
      %p725 = por %p723, %p724
      %s727 = sadd.s32 %s726, 1
      %p730 = scmp.eq.s32.totalorder %s78, 1
      %p731 = scmp.ne.s32.totalorder %s726, %s728
      %p732 = scmp.eq.s32.totalorder %s78, 0
      %p733 = por %p731, %p732
      %p734 = scmp.ne.s32.totalorder %s726, %s728
      %p735 = scmp.eq.s32.totalorder %s83, 1
      %p736 = por %p734, %p735
      %p737 = scmp.ne.s32.totalorder %s728, %s729
      %p738 = scmp.eq.s32.totalorder %s83, 0
      %p739 = por %p737, %p738
      %p740 = scmp.ne.s32.totalorder %s728, %s729
      %p741 = scmp.eq.s32.totalorder %s84, 1
      %p742 = por %p740, %p741
      %p744 = scmp.ne.s32.totalorder %s729, %s743
      %p745 = scmp.eq.s32.totalorder %s84, 0
      %p746 = por %p744, %p745
      %s748 = sadd.s32 %s747, 1
      %p751 = scmp.eq.s32.totalorder %s78, 1
      %p752 = scmp.ne.s32.totalorder %s747, %s749
      %p753 = scmp.eq.s32.totalorder %s78, 0
      %p754 = por %p752, %p753
      %p755 = scmp.ne.s32.totalorder %s747, %s749
      %p756 = scmp.eq.s32.totalorder %s83, 1
      %p757 = por %p755, %p756
      %p758 = scmp.ne.s32.totalorder %s749, %s750
      %p759 = scmp.eq.s32.totalorder %s83, 0
      %p760 = por %p758, %p759
      %p761 = scmp.ne.s32.totalorder %s749, %s750
      %p762 = scmp.eq.s32.totalorder %s84, 1
      %p763 = por %p761, %p762
      %p765 = scmp.ne.s32.totalorder %s750, %s764
      %p766 = scmp.eq.s32.totalorder %s84, 0
      %p767 = por %p765, %p766
      %s769 = sadd.s32 %s768, 1
      %p772 = scmp.eq.s32.totalorder %s78, 1
      %p773 = scmp.ne.s32.totalorder %s768, %s770
      %p774 = scmp.eq.s32.totalorder %s78, 0
      %p775 = por %p773, %p774
      %p776 = scmp.ne.s32.totalorder %s768, %s770
      %p777 = scmp.eq.s32.totalorder %s83, 1
      %p778 = por %p776, %p777
      %p779 = scmp.ne.s32.totalorder %s770, %s771
      %p780 = scmp.eq.s32.totalorder %s83, 0
      %p781 = por %p779, %p780
      %p782 = scmp.ne.s32.totalorder %s770, %s771
      %p783 = scmp.eq.s32.totalorder %s84, 1
      %p784 = por %p782, %p783
      %p786 = scmp.ne.s32.totalorder %s771, %s785
      %p787 = scmp.eq.s32.totalorder %s84, 0
      %p788 = por %p786, %p787
      %s790 = sadd.s32 %s789, 1
      %p793 = scmp.eq.s32.totalorder %s78, 1
      %p794 = scmp.ne.s32.totalorder %s789, %s791
      %p795 = scmp.eq.s32.totalorder %s78, 0
      %p796 = por %p794, %p795
      %p797 = scmp.ne.s32.totalorder %s789, %s791
      %p798 = scmp.eq.s32.totalorder %s83, 1
      %p799 = por %p797, %p798
      %p800 = scmp.ne.s32.totalorder %s791, %s792
      %p801 = scmp.eq.s32.totalorder %s83, 0
      %p802 = por %p800, %p801
      %p803 = scmp.ne.s32.totalorder %s791, %s792
      %p804 = scmp.eq.s32.totalorder %s84, 1
      %p805 = por %p803, %p804
      %p807 = scmp.ne.s32.totalorder %s792, %s806
      %p808 = scmp.eq.s32.totalorder %s84, 0
      %p809 = por %p807, %p808
      %s810 = ssub.s32 %s78, %s85
      %p811 = scmp.eq.s32.totalorder %s810, 0
      %s813 = sadd.s32 %s812, 1
      %s814 = scalar_select %p811, %s812, %s813
      %p817 = pneg %p811
      %p818 = scmp.eq.s32.totalorder %s78, 1
      %p819 = por %p817, %p818
      %p820 = scmp.ne.s32.totalorder %s812, %s815
      %p821 = scmp.eq.s32.totalorder %s78, 0
      %p822 = por %p820, %p821
      %p823 = scmp.ne.s32.totalorder %s812, %s815
      %p824 = scmp.eq.s32.totalorder %s83, 1
      %p825 = por %p823, %p824
      %p826 = scmp.ne.s32.totalorder %s815, %s816
      %p827 = scmp.eq.s32.totalorder %s83, 0
      %p828 = por %p826, %p827
      %p829 = scmp.ne.s32.totalorder %s815, %s816
      %p830 = scmp.eq.s32.totalorder %s84, 1
      %p831 = por %p829, %p830
      %p833 = scmp.ne.s32.totalorder %s816, %s832
      %p834 = scmp.eq.s32.totalorder %s84, 0
      %p835 = por %p833, %p834
      %p836 = scmp.le.s32.totalorder 1, %s78
      %p837 = scmp.lt.s32.totalorder %s78, 3
      %p838 = pnand %p836, %p837
      %p839 = pneg %p838
      // Predicated region
      $region9: #{_lambda_.1} parent=5 // pred_check
        _
      $region10: #{_lambda_.1} parent=5 // pred_check_branch
        %841 = sbr.rel (%p838) target = $region12
      $region11: #{_lambda_.1} parent=5 // pred_region
        %s842 = ssub.s32 %s78, 1
        // Predicated region
        $region13: #{_lambda_.1} parent=11 // pred_check
          %p843 = pneg %p151
        $region14: #{_lambda_.1} parent=11 // pred_check_branch
          %845 = sbr.rel (%p843) target = $region16
        $region15: #{_lambda_.1} parent=11 // pred_region
          _
        $region16: #{_lambda_.1} parent=11 // pred_fallthru
          _
        // Predicated region
        $region17: #{_lambda_.1} parent=11 // pred_check
          %p846 = pneg %p172
        $region18: #{_lambda_.1} parent=11 // pred_check_branch
          %848 = sbr.rel (%p846) target = $region20
        $region19: #{_lambda_.1} parent=11 // pred_region
          _
        $region20: #{_lambda_.1} parent=11 // pred_fallthru
          _
        // Predicated region
        $region21: #{_lambda_.1} parent=11 // pred_check
          %p849 = pneg %p193
        $region22: #{_lambda_.1} parent=11 // pred_check_branch
          %851 = sbr.rel (%p849) target = $region24
        $region23: #{_lambda_.1} parent=11 // pred_region
          _
        $region24: #{_lambda_.1} parent=11 // pred_fallthru
          _
        // Predicated region
        $region25: #{_lambda_.1} parent=11 // pred_check
          %p852 = pneg %p214
        $region26: #{_lambda_.1} parent=11 // pred_check_branch
          %854 = sbr.rel (%p852) target = $region28
        $region27: #{_lambda_.1} parent=11 // pred_region
          _
        $region28: #{_lambda_.1} parent=11 // pred_fallthru
          _
        // Predicated region
        $region29: #{_lambda_.1} parent=11 // pred_check
          %p855 = pneg %p235
        $region30: #{_lambda_.1} parent=11 // pred_check_branch
          %857 = sbr.rel (%p855) target = $region32
        $region31: #{_lambda_.1} parent=11 // pred_region
          _
        $region32: #{_lambda_.1} parent=11 // pred_fallthru
          _
        // Predicated region
        $region33: #{_lambda_.1} parent=11 // pred_check
          %p858 = pneg %p256
        $region34: #{_lambda_.1} parent=11 // pred_check_branch
          %860 = sbr.rel (%p858) target = $region36
        $region35: #{_lambda_.1} parent=11 // pred_region
          _
        $region36: #{_lambda_.1} parent=11 // pred_fallthru
          _
        // Predicated region
        $region37: #{_lambda_.1} parent=11 // pred_check
          %p861 = pneg %p277
        $region38: #{_lambda_.1} parent=11 // pred_check_branch
          %863 = sbr.rel (%p861) target = $region40
        $region39: #{_lambda_.1} parent=11 // pred_region
          _
        $region40: #{_lambda_.1} parent=11 // pred_fallthru
          _
        // Predicated region
        $region41: #{_lambda_.1} parent=11 // pred_check
          %p864 = pneg %p298
        $region42: #{_lambda_.1} parent=11 // pred_check_branch
          %866 = sbr.rel (%p864) target = $region44
        $region43: #{_lambda_.1} parent=11 // pred_region
          _
        $region44: #{_lambda_.1} parent=11 // pred_fallthru
          _
        // Predicated region
        $region45: #{_lambda_.1} parent=11 // pred_check
          %p867 = pneg %p319
        $region46: #{_lambda_.1} parent=11 // pred_check_branch
          %869 = sbr.rel (%p867) target = $region48
        $region47: #{_lambda_.1} parent=11 // pred_region
          _
        $region48: #{_lambda_.1} parent=11 // pred_fallthru
          _
        // Predicated region
        $region49: #{_lambda_.1} parent=11 // pred_check
          %p870 = pneg %p340
        $region50: #{_lambda_.1} parent=11 // pred_check_branch
          %872 = sbr.rel (%p870) target = $region52
        $region51: #{_lambda_.1} parent=11 // pred_region
          _
        $region52: #{_lambda_.1} parent=11 // pred_fallthru
          _
        // Predicated region
        $region53: #{_lambda_.1} parent=11 // pred_check
          %p873 = pneg %p361
        $region54: #{_lambda_.1} parent=11 // pred_check_branch
          %875 = sbr.rel (%p873) target = $region56
        $region55: #{_lambda_.1} parent=11 // pred_region
          _
        $region56: #{_lambda_.1} parent=11 // pred_fallthru
          _
        // Predicated region
        $region57: #{_lambda_.1} parent=11 // pred_check
          %p876 = pneg %p382
        $region58: #{_lambda_.1} parent=11 // pred_check_branch
          %878 = sbr.rel (%p876) target = $region60
        $region59: #{_lambda_.1} parent=11 // pred_region
          _
        $region60: #{_lambda_.1} parent=11 // pred_fallthru
          _
        // Predicated region
        $region61: #{_lambda_.1} parent=11 // pred_check
          %p879 = pneg %p403
        $region62: #{_lambda_.1} parent=11 // pred_check_branch
          %881 = sbr.rel (%p879) target = $region64
        $region63: #{_lambda_.1} parent=11 // pred_region
          _
        $region64: #{_lambda_.1} parent=11 // pred_fallthru
          _
        // Predicated region
        $region65: #{_lambda_.1} parent=11 // pred_check
          %p882 = pneg %p424
        $region66: #{_lambda_.1} parent=11 // pred_check_branch
          %884 = sbr.rel (%p882) target = $region68
        $region67: #{_lambda_.1} parent=11 // pred_region
          _
        $region68: #{_lambda_.1} parent=11 // pred_fallthru
          _
        // Predicated region
        $region69: #{_lambda_.1} parent=11 // pred_check
          %p885 = pneg %p445
        $region70: #{_lambda_.1} parent=11 // pred_check_branch
          %887 = sbr.rel (%p885) target = $region72
        $region71: #{_lambda_.1} parent=11 // pred_region
          _
        $region72: #{_lambda_.1} parent=11 // pred_fallthru
          _
        // Predicated region
        $region73: #{_lambda_.1} parent=11 // pred_check
          %p888 = pneg %p466
        $region74: #{_lambda_.1} parent=11 // pred_check_branch
          %890 = sbr.rel (%p888) target = $region76
        $region75: #{_lambda_.1} parent=11 // pred_region
          _
        $region76: #{_lambda_.1} parent=11 // pred_fallthru
          _
        // Predicated region
        $region77: #{_lambda_.1} parent=11 // pred_check
          %p891 = pneg %p487
        $region78: #{_lambda_.1} parent=11 // pred_check_branch
          %893 = sbr.rel (%p891) target = $region80
        $region79: #{_lambda_.1} parent=11 // pred_region
          _
        $region80: #{_lambda_.1} parent=11 // pred_fallthru
          _
        // Predicated region
        $region81: #{_lambda_.1} parent=11 // pred_check
          %p894 = pneg %p508
        $region82: #{_lambda_.1} parent=11 // pred_check_branch
          %896 = sbr.rel (%p894) target = $region84
        $region83: #{_lambda_.1} parent=11 // pred_region
          _
        $region84: #{_lambda_.1} parent=11 // pred_fallthru
          _
        // Predicated region
        $region85: #{_lambda_.1} parent=11 // pred_check
          %p897 = pneg %p529
        $region86: #{_lambda_.1} parent=11 // pred_check_branch
          %899 = sbr.rel (%p897) target = $region88
        $region87: #{_lambda_.1} parent=11 // pred_region
          _
        $region88: #{_lambda_.1} parent=11 // pred_fallthru
          _
        // Predicated region
        $region89: #{_lambda_.1} parent=11 // pred_check
          %p900 = pneg %p550
        $region90: #{_lambda_.1} parent=11 // pred_check_branch
          %902 = sbr.rel (%p900) target = $region92
        $region91: #{_lambda_.1} parent=11 // pred_region
          _
        $region92: #{_lambda_.1} parent=11 // pred_fallthru
          _
        // Predicated region
        $region93: #{_lambda_.1} parent=11 // pred_check
          %p903 = pneg %p571
        $region94: #{_lambda_.1} parent=11 // pred_check_branch
          %905 = sbr.rel (%p903) target = $region96
        $region95: #{_lambda_.1} parent=11 // pred_region
          _
        $region96: #{_lambda_.1} parent=11 // pred_fallthru
          _
        // Predicated region
        $region97: #{_lambda_.1} parent=11 // pred_check
          %p906 = pneg %p592
        $region98: #{_lambda_.1} parent=11 // pred_check_branch
          %908 = sbr.rel (%p906) target = $region100
        $region99: #{_lambda_.1} parent=11 // pred_region
          _
        $region100: #{_lambda_.1} parent=11 // pred_fallthru
          _
        // Predicated region
        $region101: #{_lambda_.1} parent=11 // pred_check
          %p909 = pneg %p613
        $region102: #{_lambda_.1} parent=11 // pred_check_branch
          %911 = sbr.rel (%p909) target = $region104
        $region103: #{_lambda_.1} parent=11 // pred_region
          _
        $region104: #{_lambda_.1} parent=11 // pred_fallthru
          _
        // Predicated region
        $region105: #{_lambda_.1} parent=11 // pred_check
          %p912 = pneg %p634
        $region106: #{_lambda_.1} parent=11 // pred_check_branch
          %914 = sbr.rel (%p912) target = $region108
        $region107: #{_lambda_.1} parent=11 // pred_region
          _
        $region108: #{_lambda_.1} parent=11 // pred_fallthru
          _
        // Predicated region
        $region109: #{_lambda_.1} parent=11 // pred_check
          %p915 = pneg %p655
        $region110: #{_lambda_.1} parent=11 // pred_check_branch
          %917 = sbr.rel (%p915) target = $region112
        $region111: #{_lambda_.1} parent=11 // pred_region
          _
        $region112: #{_lambda_.1} parent=11 // pred_fallthru
          _
        // Predicated region
        $region113: #{_lambda_.1} parent=11 // pred_check
          %p918 = pneg %p676
        $region114: #{_lambda_.1} parent=11 // pred_check_branch
          %920 = sbr.rel (%p918) target = $region116
        $region115: #{_lambda_.1} parent=11 // pred_region
          _
        $region116: #{_lambda_.1} parent=11 // pred_fallthru
          _
        // Predicated region
        $region117: #{_lambda_.1} parent=11 // pred_check
          %p921 = pneg %p697
        $region118: #{_lambda_.1} parent=11 // pred_check_branch
          %923 = sbr.rel (%p921) target = $region120
        $region119: #{_lambda_.1} parent=11 // pred_region
          _
        $region120: #{_lambda_.1} parent=11 // pred_fallthru
          _
        // Predicated region
        $region121: #{_lambda_.1} parent=11 // pred_check
          %p924 = pneg %p718
        $region122: #{_lambda_.1} parent=11 // pred_check_branch
          %926 = sbr.rel (%p924) target = $region124
        $region123: #{_lambda_.1} parent=11 // pred_region
          _
        $region124: #{_lambda_.1} parent=11 // pred_fallthru
          _
        // Predicated region
        $region125: #{_lambda_.1} parent=11 // pred_check
          %p927 = pneg %p739
        $region126: #{_lambda_.1} parent=11 // pred_check_branch
          %929 = sbr.rel (%p927) target = $region128
        $region127: #{_lambda_.1} parent=11 // pred_region
          _
        $region128: #{_lambda_.1} parent=11 // pred_fallthru
          _
        // Predicated region
        $region129: #{_lambda_.1} parent=11 // pred_check
          %p930 = pneg %p760
        $region130: #{_lambda_.1} parent=11 // pred_check_branch
          %932 = sbr.rel (%p930) target = $region132
        $region131: #{_lambda_.1} parent=11 // pred_region
          _
        $region132: #{_lambda_.1} parent=11 // pred_fallthru
          _
        // Predicated region
        $region133: #{_lambda_.1} parent=11 // pred_check
          %p933 = pneg %p781
        $region134: #{_lambda_.1} parent=11 // pred_check_branch
          %935 = sbr.rel (%p933) target = $region136
        $region135: #{_lambda_.1} parent=11 // pred_region
          _
        $region136: #{_lambda_.1} parent=11 // pred_fallthru
          _
        // Predicated region
        $region137: #{_lambda_.1} parent=11 // pred_check
          %p936 = pneg %p802
        $region138: #{_lambda_.1} parent=11 // pred_check_branch
          %938 = sbr.rel (%p936) target = $region140
        $region139: #{_lambda_.1} parent=11 // pred_region
          _
        $region140: #{_lambda_.1} parent=11 // pred_fallthru
          _
      $region12: #{_lambda_.1} parent=5 // pred_fallthru
        _
      %p939 = scmp.lt.s32.totalorder %s78, 2
      // Predicated region
      $region141: #{_lambda_.1} parent=5 // pred_check
        %p940 = pneg %p939
      $region142: #{_lambda_.1} parent=5 // pred_check_branch
        %942 = sbr.rel (%p940) target = $region144
      $region143: #{_lambda_.1} parent=5 // pred_region
        // Predicated region
        $region145: #{_lambda_.1} parent=143 // pred_check
          %p943 = pneg %p98
        $region146: #{_lambda_.1} parent=143 // pred_check_branch
          %945 = sbr.rel (%p943) target = $region148
        $region147: #{_lambda_.1} parent=143 // pred_region
          %s946 = smul.u32 4, %s78
          %p947 = scmp.lt.s32.totalorder %s946, 7
          %s948 = scalar_select %p947, %s946, 7
          %s949 = smul.addr %s948, 2
          %s950 = smul.addr %s949, 4
          %s951 = scalar_lea.vmem %s1, %s950
          %s952 = smul.u32 4, %s78
        $region148: #{_lambda_.1} parent=143 // pred_fallthru
          _
        // Predicated region
        $region149: #{_lambda_.1} parent=143 // pred_check
          %p953 = pneg %p124
        $region150: #{_lambda_.1} parent=143 // pred_check_branch
          %955 = sbr.rel (%p953) target = $region152
        $region151: #{_lambda_.1} parent=143 // pred_region
          %s956 = smul.u32 6, %s78
          %p957 = scmp.lt.s32.totalorder %s956, 11
          %s958 = scalar_select %p957, %s956, 11
          %s959 = smul.addr %s958, 2
          %s960 = smul.addr %s959, 4
          %s961 = scalar_lea.vmem %s3, %s960
          %s962 = smul.u32 6, %s78
        $region152: #{_lambda_.1} parent=143 // pred_fallthru
          _
      $region144: #{_lambda_.1} parent=5 // pred_fallthru
        _
      %p963 = scmp.le.s32.totalorder 1, %s78
      %p964 = scmp.lt.s32.totalorder %s78, 3
      %p965 = pnand %p963, %p964
      %p966 = pneg %p965
      // Predicated region
      $region153: #{_lambda_.1} parent=5 // pred_check
        _
      $region154: #{_lambda_.1} parent=5 // pred_check_branch
        %968 = sbr.rel (%p965) target = $region156
      $region155: #{_lambda_.1} parent=5 // pred_region
        %s969 = ssub.s32 %s78, 1
        %s970 = smul.u32 4, %s83
        %p971 = scmp.lt.s32.totalorder %s970, 7
        %s972 = scalar_select %p971, %s970, 7
        %s973 = smul.addr %s972, 2
        %s974 = smul.addr %s973, 4
        %s975 = scalar_lea.vmem %s1, %s974
        %p976 = pneg %p104
        %p977 = pneg %p101
        %s978 = smul.u32 6, %s83
        %p979 = scmp.lt.s32.totalorder %s978, 11
        %s980 = scalar_select %p979, %s978, 11
        %s981 = smul.addr %s980, 2
        %s982 = smul.addr %s981, 4
        %s983 = scalar_lea.vmem %s3, %s982
        %p984 = pneg %p130
        %p985 = pneg %p127
        %p986 = pneg %p151
        %p987 = pneg %p148
        %p988 = pneg %p172
        %p989 = pneg %p169
        %p990 = pneg %p193
        %p991 = pneg %p190
        %p992 = pneg %p214
        %p993 = pneg %p211
        %p994 = pneg %p235
        %p995 = pneg %p232
        %p996 = pneg %p256
        %p997 = pneg %p253
        %p998 = pneg %p277
        %p999 = pneg %p274
        %p1000 = pneg %p298
        %p1001 = pneg %p295
        %p1002 = pneg %p319
        %p1003 = pneg %p316
        %p1004 = pneg %p340
        %p1005 = pneg %p337
        %p1006 = pneg %p361
        %p1007 = pneg %p358
        %p1008 = pneg %p382
        %p1009 = pneg %p379
        %p1010 = pneg %p403
        %p1011 = pneg %p400
        %p1012 = pneg %p424
        %p1013 = pneg %p421
        %p1014 = pneg %p445
        %p1015 = pneg %p442
        %p1016 = pneg %p466
        %p1017 = pneg %p463
        %p1018 = pneg %p487
        %p1019 = pneg %p484
        %p1020 = pneg %p508
        %p1021 = pneg %p505
        %p1022 = pneg %p529
        %p1023 = pneg %p526
        %p1024 = pneg %p550
        %p1025 = pneg %p547
        %p1026 = pneg %p571
        %p1027 = pneg %p568
        %p1028 = pneg %p592
        %p1029 = pneg %p589
        %p1030 = pneg %p613
        %p1031 = pneg %p610
        %p1032 = pneg %p634
        %p1033 = pneg %p631
        %p1034 = pneg %p655
        %p1035 = pneg %p652
        %p1036 = pneg %p676
        %p1037 = pneg %p673
        %p1038 = pneg %p697
        %p1039 = pneg %p694
        %p1040 = pneg %p718
        %p1041 = pneg %p715
        %p1042 = pneg %p739
        %p1043 = pneg %p736
        %p1044 = pneg %p760
        %p1045 = pneg %p757
        %p1046 = pneg %p781
        %p1047 = pneg %p778
        %p1048 = pneg %p802
        %p1049 = pneg %p799
        %p1050 = pneg %p828
        %p1051 = pneg %p825
        %s1052 = sand.u32 %s815, 1
        %s1053 = scalar_lea.sflag [#allocation3], %s1052
        %s1054 = sand.u32 %s815, 1
        %s1055 = smul.addr %s1054, 16
        %s1056 = scalar_lea.vmem [#allocation2], %s1055
        %s1057 = smul.u32 4, %s83
        %p1058 = scmp.lt.s32.totalorder %s1057, 7
        %s1059 = scalar_select %p1058, %s1057, 7
        %s1060 = smul.addr %s1059, 2
        %s1061 = smul.addr %s1060, 4
        %s1062 = scalar_lea.vmem %s1, %s1061
        %s1063 = smul.u32 4, %s83
        %s1064 = smul.u32 6, %s83
        %p1065 = scmp.lt.s32.totalorder %s1064, 11
        %s1066 = scalar_select %p1065, %s1064, 11
        %s1067 = smul.addr %s1066, 2
        %s1068 = smul.addr %s1067, 4
        %s1069 = scalar_lea.vmem %s3, %s1068
        %s1070 = smul.u32 6, %s83
        %s1071 = smul.u32 2, %s83
        %v1073 = vld [vmem:[%s1062] sm:$0xff]
        %v1074 = vld [vmem:[%s1062 + $0x8] sm:$0xff]
        %v1075 = vld [vmem:[%s1062 + $0x10] sm:$0xff]
        %v1076 = vld [vmem:[%s5] sm:$0xff]
        %v1077 = vld [vmem:[%s5 + $0x8] sm:$0xff]
        %v1078 = vld [vmem:[%s5 + $0x10] sm:$0xff]
        %v1079 = vld [vmem:[%s5 + $0x18] sm:$0xff]
        %v1080 = vld [vmem:[%s5 + $0x20] sm:$0xff]
        %v1081 = vld [vmem:[%s5 + $0x28] sm:$0xff]
        %v1082 = vld [vmem:[%s5 + $0x30] sm:$0xff]
        %v1083 = vld [vmem:[%s5 + $0x38] sm:$0xff]
        %v1084 = vld [vmem:[%s5 + $0x40] sm:$0xff]
        %v1085 = vld [vmem:[%s5 + $0x48] sm:$0xff]
        %v1086 = vld [vmem:[%s5 + $0x50] sm:$0xff]
        %v1087 = vld [vmem:[%s5 + $0x58] sm:$0xff]
        %v1088 = vld [vmem:[%s5 + $0x60] sm:$0xff]
        %v1089 = vld [vmem:[%s5 + $0x68] sm:$0xff]
        %v1090 = vld [vmem:[%s5 + $0x70] sm:$0xff]
        %v1091 = vld [vmem:[%s5 + $0x78] sm:$0xff]
        %v1092 = vld [vmem:[%s5 + $0x80] sm:$0xff]
        %v1093 = vld [vmem:[%s5 + $0x88] sm:$0xff]
        %v1094 = vld [vmem:[%s5 + $0x90] sm:$0xff]
        %v1095 = vld [vmem:[%s5 + $0x98] sm:$0xff]
        %v1096 = vld [vmem:[%s5 + $0xa0] sm:$0xff]
        %v1097 = vld [vmem:[%s5 + $0xa8] sm:$0xff]
        %v1098 = vld [vmem:[%s5 + $0xb0] sm:$0xff]
        %v1099 = vld [vmem:[%s5 + $0xb8] sm:$0xff]
        %v1100 = vld [vmem:[%s5 + $0xc0] sm:$0xff]
        %v1101 = vld [vmem:[%s5 + $0xc8] sm:$0xff]
        %v1102 = vld [vmem:[%s5 + $0xd0] sm:$0xff]
        %v1103 = vld [vmem:[%s5 + $0xd8] sm:$0xff]
        %v1104 = vld [vmem:[%s5 + $0xe0] sm:$0xff]
        %v1105 = vld [vmem:[%s5 + $0xe8] sm:$0xff]
        %v1106 = vld [vmem:[%s5 + $0xf0] sm:$0xff]
        %v1107 = vld [vmem:[%s5 + $0xf8] sm:$0xff]
        %v1108 = vld [vmem:[%s5 + $0x100] sm:$0xff]
        %v1109 = vld [vmem:[%s5 + $0x108] sm:$0xff]
        %v1110 = vld [vmem:[%s5 + $0x110] sm:$0xff]
        %v1111 = vld [vmem:[%s5 + $0x118] sm:$0xff]
        %v1112 = vld [vmem:[%s5 + $0x120] sm:$0xff]
        %v1113 = vld [vmem:[%s5 + $0x128] sm:$0xff]
        %v1114 = vld [vmem:[%s5 + $0x130] sm:$0xff]
        %v1115 = vld [vmem:[%s5 + $0x138] sm:$0xff]
        %v1116 = vld [vmem:[%s5 + $0x140] sm:$0xff]
        %v1117 = vld [vmem:[%s5 + $0x148] sm:$0xff]
        %v1118 = vld [vmem:[%s5 + $0x150] sm:$0xff]
        %v1119 = vld [vmem:[%s5 + $0x158] sm:$0xff]
        %v1120 = vld [vmem:[%s5 + $0x160] sm:$0xff]
        %v1121 = vld [vmem:[%s5 + $0x168] sm:$0xff]
        %v1122 = vld [vmem:[%s5 + $0x170] sm:$0xff]
        %v1123 = vld [vmem:[%s5 + $0x178] sm:$0xff]
        %v1124 = vld [vmem:[%s5 + $0x180] sm:$0xff]
        %v1125 = vld [vmem:[%s5 + $0x188] sm:$0xff]
        %v1126 = vld [vmem:[%s5 + $0x190] sm:$0xff]
        %v1127 = vld [vmem:[%s5 + $0x198] sm:$0xff]
        %v1128 = vld [vmem:[%s5 + $0x1a0] sm:$0xff]
        %v1129 = vld [vmem:[%s5 + $0x1a8] sm:$0xff]
        %v1130 = vld [vmem:[%s5 + $0x1b0] sm:$0xff]
        %v1131 = vld [vmem:[%s5 + $0x1b8] sm:$0xff]
        %v1132 = vld [vmem:[%s5 + $0x1c0] sm:$0xff]
        %v1133 = vld [vmem:[%s5 + $0x1c8] sm:$0xff]
        %v1134 = vld [vmem:[%s5 + $0x1d0] sm:$0xff]
        %v1135 = vld [vmem:[%s5 + $0x1d8] sm:$0xff]
        %v1136 = vld [vmem:[%s5 + $0x1e0] sm:$0xff]
        %v1137 = vld [vmem:[%s5 + $0x1e8] sm:$0xff]
        %v1138 = vld [vmem:[%s5 + $0x1f0] sm:$0xff]
        %v1139 = vld [vmem:[%s5 + $0x1f8] sm:$0xff]
        %v1143 = vunpack.c.l.b16 %v1073
        %v1144 = vunpack.c.h.b16 %v1073
        %v1145 = vunpack.c.l.b16 %v1074
        %v1146 = vunpack.c.h.b16 %v1074
        %v1147 = vunpack.c.l.b16 %v1075
        %v1148 = vunpack.c.h.b16 %v1075
        %v1149 = vpack.c.b16 %v1145, %v1143
        %v1150 = vpack.c.b16 %v1146, %v1144
        %v1151 = vpack.c.b16 %v1147, %v1147
        %v1152 = vpack.c.b16 %v1148, %v1148
        %vm1153 = vsmask.f32 7424
        %v1155 = vshrl.u32 %v1149, 16
        %v1157 = vshll.u32 %v1149, 16
        %v1159 = vrot.slane %v1157, 1
        %v1160 = vor.u32 %v1155, %v1159
        %v1162 = vshll.u32 %v1151, 16
        %v1164 = vrot.slane %v1162, 1
        %v1165 = vsel %vm1153, %v1160, %v1164
        %v1167 = vshrl.u32 %v1150, 16
        %v1169 = vshll.u32 %v1150, 16
        %v1171 = vrot.slane %v1169, 1
        %v1172 = vor.u32 %v1167, %v1171
        %v1174 = vshll.u32 %v1152, 16
        %v1176 = vrot.slane %v1174, 1
        %v1177 = vsel %vm1153, %v1172, %v1176
        %v1212 = vunpack.c.l.b16 %v1108
        %v1213 = vunpack.c.h.b16 %v1108
        %v1214 = vunpack.c.l.b16 %v1109
        %v1215 = vunpack.c.h.b16 %v1109
        %v1216 = vunpack.c.l.b16 %v1110
        %v1217 = vunpack.c.h.b16 %v1110
        %v1218 = vunpack.c.l.b16 %v1111
        %v1219 = vunpack.c.h.b16 %v1111
        %v1220 = vunpack.c.l.b16 %v1112
        %v1221 = vunpack.c.h.b16 %v1112
        %v1222 = vunpack.c.l.b16 %v1113
        %v1223 = vunpack.c.h.b16 %v1113
        %v1224 = vunpack.c.l.b16 %v1114
        %v1225 = vunpack.c.h.b16 %v1114
        %v1226 = vunpack.c.l.b16 %v1115
        %v1227 = vunpack.c.h.b16 %v1115
        %v1228 = vunpack.c.l.b16 %v1116
        %v1229 = vunpack.c.h.b16 %v1116
        %v1230 = vunpack.c.l.b16 %v1117
        %v1231 = vunpack.c.h.b16 %v1117
        %v1232 = vunpack.c.l.b16 %v1118
        %v1233 = vunpack.c.h.b16 %v1118
        %v1234 = vunpack.c.l.b16 %v1119
        %v1235 = vunpack.c.h.b16 %v1119
        %v1236 = vunpack.c.l.b16 %v1120
        %v1237 = vunpack.c.h.b16 %v1120
        %v1238 = vunpack.c.l.b16 %v1121
        %v1239 = vunpack.c.h.b16 %v1121
        %v1240 = vunpack.c.l.b16 %v1122
        %v1241 = vunpack.c.h.b16 %v1122
        %v1242 = vunpack.c.l.b16 %v1123
        %v1243 = vunpack.c.h.b16 %v1123
        %v1244 = vunpack.c.l.b16 %v1124
        %v1245 = vunpack.c.h.b16 %v1124
        %v1246 = vunpack.c.l.b16 %v1125
        %v1247 = vunpack.c.h.b16 %v1125
        %v1248 = vunpack.c.l.b16 %v1126
        %v1249 = vunpack.c.h.b16 %v1126
        %v1250 = vunpack.c.l.b16 %v1127
        %v1251 = vunpack.c.h.b16 %v1127
        %v1252 = vunpack.c.l.b16 %v1128
        %v1253 = vunpack.c.h.b16 %v1128
        %v1254 = vunpack.c.l.b16 %v1129
        %v1255 = vunpack.c.h.b16 %v1129
        %v1256 = vunpack.c.l.b16 %v1130
        %v1257 = vunpack.c.h.b16 %v1130
        %v1258 = vunpack.c.l.b16 %v1131
        %v1259 = vunpack.c.h.b16 %v1131
        %v1260 = vunpack.c.l.b16 %v1132
        %v1261 = vunpack.c.h.b16 %v1132
        %v1262 = vunpack.c.l.b16 %v1133
        %v1263 = vunpack.c.h.b16 %v1133
        %v1264 = vunpack.c.l.b16 %v1134
        %v1265 = vunpack.c.h.b16 %v1134
        %v1266 = vunpack.c.l.b16 %v1135
        %v1267 = vunpack.c.h.b16 %v1135
        %v1268 = vunpack.c.l.b16 %v1136
        %v1269 = vunpack.c.h.b16 %v1136
        %v1270 = vunpack.c.l.b16 %v1137
        %v1271 = vunpack.c.h.b16 %v1137
        %v1272 = vunpack.c.l.b16 %v1138
        %v1273 = vunpack.c.h.b16 %v1138
        %v1274 = vunpack.c.l.b16 %v1139
        %v1275 = vunpack.c.h.b16 %v1139
        %v1276 = vpack.c.b16 %v1214, %v1212
        %v1277 = vpack.c.b16 %v1215, %v1213
        %v1278 = vpack.c.b16 %v1218, %v1216
        %v1279 = vpack.c.b16 %v1219, %v1217
        %v1280 = vpack.c.b16 %v1222, %v1220
        %v1281 = vpack.c.b16 %v1223, %v1221
        %v1282 = vpack.c.b16 %v1226, %v1224
        %v1283 = vpack.c.b16 %v1227, %v1225
        %v1284 = vpack.c.b16 %v1230, %v1228
        %v1285 = vpack.c.b16 %v1231, %v1229
        %v1286 = vpack.c.b16 %v1234, %v1232
        %v1287 = vpack.c.b16 %v1235, %v1233
        %v1288 = vpack.c.b16 %v1238, %v1236
        %v1289 = vpack.c.b16 %v1239, %v1237
        %v1290 = vpack.c.b16 %v1242, %v1240
        %v1291 = vpack.c.b16 %v1243, %v1241
        %v1292 = vpack.c.b16 %v1246, %v1244
        %v1293 = vpack.c.b16 %v1247, %v1245
        %v1294 = vpack.c.b16 %v1250, %v1248
        %v1295 = vpack.c.b16 %v1251, %v1249
        %v1296 = vpack.c.b16 %v1254, %v1252
        %v1297 = vpack.c.b16 %v1255, %v1253
        %v1298 = vpack.c.b16 %v1258, %v1256
        %v1299 = vpack.c.b16 %v1259, %v1257
        %v1300 = vpack.c.b16 %v1262, %v1260
        %v1301 = vpack.c.b16 %v1263, %v1261
        %v1302 = vpack.c.b16 %v1266, %v1264
        %v1303 = vpack.c.b16 %v1267, %v1265
        %v1304 = vpack.c.b16 %v1270, %v1268
        %v1305 = vpack.c.b16 %v1271, %v1269
        %v1306 = vpack.c.b16 %v1274, %v1272
        %v1307 = vpack.c.b16 %v1275, %v1273
        %1340 = vmatprep.subr.bf16.mxu0 %v1277
        %1341 = vmatpush1.bf16.msra.mxu0 %v1276
        %1342 = vmatprep.subr.bf16.mxu0 %v1279
        %1343 = vmatpush1.bf16.msra.mxu0 %v1278
        %1344 = vmatprep.subr.bf16.mxu0 %v1281
        %1345 = vmatpush1.bf16.msra.mxu0 %v1280
        %1346 = vmatprep.subr.bf16.mxu0 %v1283
        %1347 = vmatpush1.bf16.msra.mxu0 %v1282
        %1348 = vmatprep.subr.bf16.mxu0 %v1285
        %1349 = vmatpush1.bf16.msra.mxu0 %v1284
        %1350 = vmatprep.subr.bf16.mxu0 %v1287
        %1351 = vmatpush1.bf16.msra.mxu0 %v1286
        %1352 = vmatprep.subr.bf16.mxu0 %v1289
        %1353 = vmatpush1.bf16.msra.mxu0 %v1288
        %1354 = vmatprep.subr.bf16.mxu0 %v1291
        %1355 = vmatpush1.bf16.msra.mxu0 %v1290
        %1356 = vmatprep.subr.bf16.mxu0 %v1293
        %1357 = vmatpush1.bf16.msra.mxu0 %v1292
        %1358 = vmatprep.subr.bf16.mxu0 %v1295
        %1359 = vmatpush1.bf16.msra.mxu0 %v1294
        %1360 = vmatprep.subr.bf16.mxu0 %v1297
        %1361 = vmatpush1.bf16.msra.mxu0 %v1296
        %1362 = vmatprep.subr.bf16.mxu0 %v1299
        %1363 = vmatpush1.bf16.msra.mxu0 %v1298
        %1364 = vmatprep.subr.bf16.mxu0 %v1301
        %1365 = vmatpush1.bf16.msra.mxu0 %v1300
        %1366 = vmatprep.subr.bf16.mxu0 %v1303
        %1367 = vmatpush1.bf16.msra.mxu0 %v1302
        %1368 = vmatprep.subr.bf16.mxu0 %v1305
        %1369 = vmatpush1.bf16.msra.mxu0 %v1304
        %1370 = vmatprep.subr.bf16.mxu0 %v1307
        %1371 = vmatpush1.bf16.msra.mxu0 %v1306
        %1372 = vmatprep.mubr.bf16.mxu0 %v1177
        %1373 = vmatmul.mubr.bf16.gmra.mrb[0].mxu0 %v1165
        %v1374 = vpop.f32.mrb[0].mxu0
        %v1375 = vadd.f32 0.0, %v1374
        %v1376 = vpop.f32.mrb[0].mxu0
        %v1377 = vadd.f32 0.0, %v1376
        %v1378 = vpop.f32.mrb[0].mxu0
        %v1379 = vadd.f32 0.0, %v1378
        %v1380 = vpop.f32.mrb[0].mxu0
        %v1381 = vadd.f32 0.0, %v1380
        %1382 = vdwg.mxu0
        %v1417 = vunpack.c.l.b16 %v1076
        %v1418 = vunpack.c.h.b16 %v1076
        %v1419 = vunpack.c.l.b16 %v1077
        %v1420 = vunpack.c.h.b16 %v1077
        %v1421 = vunpack.c.l.b16 %v1078
        %v1422 = vunpack.c.h.b16 %v1078
        %v1423 = vunpack.c.l.b16 %v1079
        %v1424 = vunpack.c.h.b16 %v1079
        %v1425 = vunpack.c.l.b16 %v1080
        %v1426 = vunpack.c.h.b16 %v1080
        %v1427 = vunpack.c.l.b16 %v1081
        %v1428 = vunpack.c.h.b16 %v1081
        %v1429 = vunpack.c.l.b16 %v1082
        %v1430 = vunpack.c.h.b16 %v1082
        %v1431 = vunpack.c.l.b16 %v1083
        %v1432 = vunpack.c.h.b16 %v1083
        %v1433 = vunpack.c.l.b16 %v1084
        %v1434 = vunpack.c.h.b16 %v1084
        %v1435 = vunpack.c.l.b16 %v1085
        %v1436 = vunpack.c.h.b16 %v1085
        %v1437 = vunpack.c.l.b16 %v1086
        %v1438 = vunpack.c.h.b16 %v1086
        %v1439 = vunpack.c.l.b16 %v1087
        %v1440 = vunpack.c.h.b16 %v1087
        %v1441 = vunpack.c.l.b16 %v1088
        %v1442 = vunpack.c.h.b16 %v1088
        %v1443 = vunpack.c.l.b16 %v1089
        %v1444 = vunpack.c.h.b16 %v1089
        %v1445 = vunpack.c.l.b16 %v1090
        %v1446 = vunpack.c.h.b16 %v1090
        %v1447 = vunpack.c.l.b16 %v1091
        %v1448 = vunpack.c.h.b16 %v1091
        %v1449 = vunpack.c.l.b16 %v1092
        %v1450 = vunpack.c.h.b16 %v1092
        %v1451 = vunpack.c.l.b16 %v1093
        %v1452 = vunpack.c.h.b16 %v1093
        %v1453 = vunpack.c.l.b16 %v1094
        %v1454 = vunpack.c.h.b16 %v1094
        %v1455 = vunpack.c.l.b16 %v1095
        %v1456 = vunpack.c.h.b16 %v1095
        %v1457 = vunpack.c.l.b16 %v1096
        %v1458 = vunpack.c.h.b16 %v1096
        %v1459 = vunpack.c.l.b16 %v1097
        %v1460 = vunpack.c.h.b16 %v1097
        %v1461 = vunpack.c.l.b16 %v1098
        %v1462 = vunpack.c.h.b16 %v1098
        %v1463 = vunpack.c.l.b16 %v1099
        %v1464 = vunpack.c.h.b16 %v1099
        %v1465 = vunpack.c.l.b16 %v1100
        %v1466 = vunpack.c.h.b16 %v1100
        %v1467 = vunpack.c.l.b16 %v1101
        %v1468 = vunpack.c.h.b16 %v1101
        %v1469 = vunpack.c.l.b16 %v1102
        %v1470 = vunpack.c.h.b16 %v1102
        %v1471 = vunpack.c.l.b16 %v1103
        %v1472 = vunpack.c.h.b16 %v1103
        %v1473 = vunpack.c.l.b16 %v1104
        %v1474 = vunpack.c.h.b16 %v1104
        %v1475 = vunpack.c.l.b16 %v1105
        %v1476 = vunpack.c.h.b16 %v1105
        %v1477 = vunpack.c.l.b16 %v1106
        %v1478 = vunpack.c.h.b16 %v1106
        %v1479 = vunpack.c.l.b16 %v1107
        %v1480 = vunpack.c.h.b16 %v1107
        %v1481 = vpack.c.b16 %v1419, %v1417
        %v1482 = vpack.c.b16 %v1420, %v1418
        %v1483 = vpack.c.b16 %v1423, %v1421
        %v1484 = vpack.c.b16 %v1424, %v1422
        %v1485 = vpack.c.b16 %v1427, %v1425
        %v1486 = vpack.c.b16 %v1428, %v1426
        %v1487 = vpack.c.b16 %v1431, %v1429
        %v1488 = vpack.c.b16 %v1432, %v1430
        %v1489 = vpack.c.b16 %v1435, %v1433
        %v1490 = vpack.c.b16 %v1436, %v1434
        %v1491 = vpack.c.b16 %v1439, %v1437
        %v1492 = vpack.c.b16 %v1440, %v1438
        %v1493 = vpack.c.b16 %v1443, %v1441
        %v1494 = vpack.c.b16 %v1444, %v1442
        %v1495 = vpack.c.b16 %v1447, %v1445
        %v1496 = vpack.c.b16 %v1448, %v1446
        %v1497 = vpack.c.b16 %v1451, %v1449
        %v1498 = vpack.c.b16 %v1452, %v1450
        %v1499 = vpack.c.b16 %v1455, %v1453
        %v1500 = vpack.c.b16 %v1456, %v1454
        %v1501 = vpack.c.b16 %v1459, %v1457
        %v1502 = vpack.c.b16 %v1460, %v1458
        %v1503 = vpack.c.b16 %v1463, %v1461
        %v1504 = vpack.c.b16 %v1464, %v1462
        %v1505 = vpack.c.b16 %v1467, %v1465
        %v1506 = vpack.c.b16 %v1468, %v1466
        %v1507 = vpack.c.b16 %v1471, %v1469
        %v1508 = vpack.c.b16 %v1472, %v1470
        %v1509 = vpack.c.b16 %v1475, %v1473
        %v1510 = vpack.c.b16 %v1476, %v1474
        %v1511 = vpack.c.b16 %v1479, %v1477
        %v1512 = vpack.c.b16 %v1480, %v1478
        %1545 = vmatprep.subr.bf16.mxu0 %v1482
        %1546 = vmatpush1.bf16.msra.mxu0 %v1481
        %1547 = vmatprep.subr.bf16.mxu0 %v1484
        %1548 = vmatpush1.bf16.msra.mxu0 %v1483
        %1549 = vmatprep.subr.bf16.mxu0 %v1486
        %1550 = vmatpush1.bf16.msra.mxu0 %v1485
        %1551 = vmatprep.subr.bf16.mxu0 %v1488
        %1552 = vmatpush1.bf16.msra.mxu0 %v1487
        %1553 = vmatprep.subr.bf16.mxu0 %v1490
        %1554 = vmatpush1.bf16.msra.mxu0 %v1489
        %1555 = vmatprep.subr.bf16.mxu0 %v1492
        %1556 = vmatpush1.bf16.msra.mxu0 %v1491
        %1557 = vmatprep.subr.bf16.mxu0 %v1494
        %1558 = vmatpush1.bf16.msra.mxu0 %v1493
        %1559 = vmatprep.subr.bf16.mxu0 %v1496
        %1560 = vmatpush1.bf16.msra.mxu0 %v1495
        %1561 = vmatprep.subr.bf16.mxu0 %v1498
        %1562 = vmatpush1.bf16.msra.mxu0 %v1497
        %1563 = vmatprep.subr.bf16.mxu0 %v1500
        %1564 = vmatpush1.bf16.msra.mxu0 %v1499
        %1565 = vmatprep.subr.bf16.mxu0 %v1502
        %1566 = vmatpush1.bf16.msra.mxu0 %v1501
        %1567 = vmatprep.subr.bf16.mxu0 %v1504
        %1568 = vmatpush1.bf16.msra.mxu0 %v1503
        %1569 = vmatprep.subr.bf16.mxu0 %v1506
        %1570 = vmatpush1.bf16.msra.mxu0 %v1505
        %1571 = vmatprep.subr.bf16.mxu0 %v1508
        %1572 = vmatpush1.bf16.msra.mxu0 %v1507
        %1573 = vmatprep.subr.bf16.mxu0 %v1510
        %1574 = vmatpush1.bf16.msra.mxu0 %v1509
        %1575 = vmatprep.subr.bf16.mxu0 %v1512
        %1576 = vmatpush1.bf16.msra.mxu0 %v1511
        %1577 = vmatprep.mubr.bf16.mxu0 %v1150
        %1578 = vmatmul.mubr.bf16.gmra.mrb[0].mxu0 %v1149
        %v1579 = vpop.f32.mrb[0].mxu0
        %v1580 = vadd.f32 %v1375, %v1579
        %v1581 = vpop.f32.mrb[0].mxu0
        %v1582 = vadd.f32 %v1377, %v1581
        %v1583 = vpop.f32.mrb[0].mxu0
        %v1584 = vadd.f32 %v1379, %v1583
        %v1585 = vpop.f32.mrb[0].mxu0
        %v1586 = vadd.f32 %v1381, %v1585
        %1587 = vdwg.mxu0
        %v1588 = vld [vmem:[%s5 + $0x200] sm:$0xff]
        %v1589 = vld [vmem:[%s5 + $0x208] sm:$0xff]
        %v1590 = vld [vmem:[%s5 + $0x210] sm:$0xff]
        %v1591 = vld [vmem:[%s5 + $0x218] sm:$0xff]
        %v1592 = vld [vmem:[%s5 + $0x220] sm:$0xff]
        %v1593 = vld [vmem:[%s5 + $0x228] sm:$0xff]
        %v1594 = vld [vmem:[%s5 + $0x230] sm:$0xff]
        %v1595 = vld [vmem:[%s5 + $0x238] sm:$0xff]
        %v1596 = vld [vmem:[%s5 + $0x240] sm:$0xff]
        %v1597 = vld [vmem:[%s5 + $0x248] sm:$0xff]
        %v1598 = vld [vmem:[%s5 + $0x250] sm:$0xff]
        %v1599 = vld [vmem:[%s5 + $0x258] sm:$0xff]
        %v1600 = vld [vmem:[%s5 + $0x260] sm:$0xff]
        %v1601 = vld [vmem:[%s5 + $0x268] sm:$0xff]
        %v1602 = vld [vmem:[%s5 + $0x270] sm:$0xff]
        %v1603 = vld [vmem:[%s5 + $0x278] sm:$0xff]
        %v1604 = vld [vmem:[%s5 + $0x280] sm:$0xff]
        %v1605 = vld [vmem:[%s5 + $0x288] sm:$0xff]
        %v1606 = vld [vmem:[%s5 + $0x290] sm:$0xff]
        %v1607 = vld [vmem:[%s5 + $0x298] sm:$0xff]
        %v1608 = vld [vmem:[%s5 + $0x2a0] sm:$0xff]
        %v1609 = vld [vmem:[%s5 + $0x2a8] sm:$0xff]
        %v1610 = vld [vmem:[%s5 + $0x2b0] sm:$0xff]
        %v1611 = vld [vmem:[%s5 + $0x2b8] sm:$0xff]
        %v1612 = vld [vmem:[%s5 + $0x2c0] sm:$0xff]
        %v1613 = vld [vmem:[%s5 + $0x2c8] sm:$0xff]
        %v1614 = vld [vmem:[%s5 + $0x2d0] sm:$0xff]
        %v1615 = vld [vmem:[%s5 + $0x2d8] sm:$0xff]
        %v1616 = vld [vmem:[%s5 + $0x2e0] sm:$0xff]
        %v1617 = vld [vmem:[%s5 + $0x2e8] sm:$0xff]
        %v1618 = vld [vmem:[%s5 + $0x2f0] sm:$0xff]
        %v1619 = vld [vmem:[%s5 + $0x2f8] sm:$0xff]
        %vm1620 = vcmask 1046528
        %v1621 = vrot.slane %v1149, 1
        %v1622 = vrot.slane %v1151, 1
        %v1623 = vsel %vm1620, %v1621, %v1622
        %v1624 = vrot.slane %v1150, 1
        %v1625 = vrot.slane %v1152, 1
        %v1626 = vsel %vm1620, %v1624, %v1625
        %v1661 = vunpack.c.l.b16 %v1588
        %v1662 = vunpack.c.h.b16 %v1588
        %v1663 = vunpack.c.l.b16 %v1589
        %v1664 = vunpack.c.h.b16 %v1589
        %v1665 = vunpack.c.l.b16 %v1590
        %v1666 = vunpack.c.h.b16 %v1590
        %v1667 = vunpack.c.l.b16 %v1591
        %v1668 = vunpack.c.h.b16 %v1591
        %v1669 = vunpack.c.l.b16 %v1592
        %v1670 = vunpack.c.h.b16 %v1592
        %v1671 = vunpack.c.l.b16 %v1593
        %v1672 = vunpack.c.h.b16 %v1593
        %v1673 = vunpack.c.l.b16 %v1594
        %v1674 = vunpack.c.h.b16 %v1594
        %v1675 = vunpack.c.l.b16 %v1595
        %v1676 = vunpack.c.h.b16 %v1595
        %v1677 = vunpack.c.l.b16 %v1596
        %v1678 = vunpack.c.h.b16 %v1596
        %v1679 = vunpack.c.l.b16 %v1597
        %v1680 = vunpack.c.h.b16 %v1597
        %v1681 = vunpack.c.l.b16 %v1598
        %v1682 = vunpack.c.h.b16 %v1598
        %v1683 = vunpack.c.l.b16 %v1599
        %v1684 = vunpack.c.h.b16 %v1599
        %v1685 = vunpack.c.l.b16 %v1600
        %v1686 = vunpack.c.h.b16 %v1600
        %v1687 = vunpack.c.l.b16 %v1601
        %v1688 = vunpack.c.h.b16 %v1601
        %v1689 = vunpack.c.l.b16 %v1602
        %v1690 = vunpack.c.h.b16 %v1602
        %v1691 = vunpack.c.l.b16 %v1603
        %v1692 = vunpack.c.h.b16 %v1603
        %v1693 = vunpack.c.l.b16 %v1604
        %v1694 = vunpack.c.h.b16 %v1604
        %v1695 = vunpack.c.l.b16 %v1605
        %v1696 = vunpack.c.h.b16 %v1605
        %v1697 = vunpack.c.l.b16 %v1606
        %v1698 = vunpack.c.h.b16 %v1606
        %v1699 = vunpack.c.l.b16 %v1607
        %v1700 = vunpack.c.h.b16 %v1607
        %v1701 = vunpack.c.l.b16 %v1608
        %v1702 = vunpack.c.h.b16 %v1608
        %v1703 = vunpack.c.l.b16 %v1609
        %v1704 = vunpack.c.h.b16 %v1609
        %v1705 = vunpack.c.l.b16 %v1610
        %v1706 = vunpack.c.h.b16 %v1610
        %v1707 = vunpack.c.l.b16 %v1611
        %v1708 = vunpack.c.h.b16 %v1611
        %v1709 = vunpack.c.l.b16 %v1612
        %v1710 = vunpack.c.h.b16 %v1612
        %v1711 = vunpack.c.l.b16 %v1613
        %v1712 = vunpack.c.h.b16 %v1613
        %v1713 = vunpack.c.l.b16 %v1614
        %v1714 = vunpack.c.h.b16 %v1614
        %v1715 = vunpack.c.l.b16 %v1615
        %v1716 = vunpack.c.h.b16 %v1615
        %v1717 = vunpack.c.l.b16 %v1616
        %v1718 = vunpack.c.h.b16 %v1616
        %v1719 = vunpack.c.l.b16 %v1617
        %v1720 = vunpack.c.h.b16 %v1617
        %v1721 = vunpack.c.l.b16 %v1618
        %v1722 = vunpack.c.h.b16 %v1618
        %v1723 = vunpack.c.l.b16 %v1619
        %v1724 = vunpack.c.h.b16 %v1619
        %v1725 = vpack.c.b16 %v1663, %v1661
        %v1726 = vpack.c.b16 %v1664, %v1662
        %v1727 = vpack.c.b16 %v1667, %v1665
        %v1728 = vpack.c.b16 %v1668, %v1666
        %v1729 = vpack.c.b16 %v1671, %v1669
        %v1730 = vpack.c.b16 %v1672, %v1670
        %v1731 = vpack.c.b16 %v1675, %v1673
        %v1732 = vpack.c.b16 %v1676, %v1674
        %v1733 = vpack.c.b16 %v1679, %v1677
        %v1734 = vpack.c.b16 %v1680, %v1678
        %v1735 = vpack.c.b16 %v1683, %v1681
        %v1736 = vpack.c.b16 %v1684, %v1682
        %v1737 = vpack.c.b16 %v1687, %v1685
        %v1738 = vpack.c.b16 %v1688, %v1686
        %v1739 = vpack.c.b16 %v1691, %v1689
        %v1740 = vpack.c.b16 %v1692, %v1690
        %v1741 = vpack.c.b16 %v1695, %v1693
        %v1742 = vpack.c.b16 %v1696, %v1694
        %v1743 = vpack.c.b16 %v1699, %v1697
        %v1744 = vpack.c.b16 %v1700, %v1698
        %v1745 = vpack.c.b16 %v1703, %v1701
        %v1746 = vpack.c.b16 %v1704, %v1702
        %v1747 = vpack.c.b16 %v1707, %v1705
        %v1748 = vpack.c.b16 %v1708, %v1706
        %v1749 = vpack.c.b16 %v1711, %v1709
        %v1750 = vpack.c.b16 %v1712, %v1710
        %v1751 = vpack.c.b16 %v1715, %v1713
        %v1752 = vpack.c.b16 %v1716, %v1714
        %v1753 = vpack.c.b16 %v1719, %v1717
        %v1754 = vpack.c.b16 %v1720, %v1718
        %v1755 = vpack.c.b16 %v1723, %v1721
        %v1756 = vpack.c.b16 %v1724, %v1722
        %1789 = vmatprep.subr.bf16.mxu0 %v1726
        %1790 = vmatpush1.bf16.msra.mxu0 %v1725
        %1791 = vmatprep.subr.bf16.mxu0 %v1728
        %1792 = vmatpush1.bf16.msra.mxu0 %v1727
        %1793 = vmatprep.subr.bf16.mxu0 %v1730
        %1794 = vmatpush1.bf16.msra.mxu0 %v1729
        %1795 = vmatprep.subr.bf16.mxu0 %v1732
        %1796 = vmatpush1.bf16.msra.mxu0 %v1731
        %1797 = vmatprep.subr.bf16.mxu0 %v1734
        %1798 = vmatpush1.bf16.msra.mxu0 %v1733
        %1799 = vmatprep.subr.bf16.mxu0 %v1736
        %1800 = vmatpush1.bf16.msra.mxu0 %v1735
        %1801 = vmatprep.subr.bf16.mxu0 %v1738
        %1802 = vmatpush1.bf16.msra.mxu0 %v1737
        %1803 = vmatprep.subr.bf16.mxu0 %v1740
        %1804 = vmatpush1.bf16.msra.mxu0 %v1739
        %1805 = vmatprep.subr.bf16.mxu0 %v1742
        %1806 = vmatpush1.bf16.msra.mxu0 %v1741
        %1807 = vmatprep.subr.bf16.mxu0 %v1744
        %1808 = vmatpush1.bf16.msra.mxu0 %v1743
        %1809 = vmatprep.subr.bf16.mxu0 %v1746
        %1810 = vmatpush1.bf16.msra.mxu0 %v1745
        %1811 = vmatprep.subr.bf16.mxu0 %v1748
        %1812 = vmatpush1.bf16.msra.mxu0 %v1747
        %1813 = vmatprep.subr.bf16.mxu0 %v1750
        %1814 = vmatpush1.bf16.msra.mxu0 %v1749
        %1815 = vmatprep.subr.bf16.mxu0 %v1752
        %1816 = vmatpush1.bf16.msra.mxu0 %v1751
        %1817 = vmatprep.subr.bf16.mxu0 %v1754
        %1818 = vmatpush1.bf16.msra.mxu0 %v1753
        %1819 = vmatprep.subr.bf16.mxu0 %v1756
        %1820 = vmatpush1.bf16.msra.mxu0 %v1755
        %1821 = vmatprep.mubr.bf16.mxu0 %v1626
        %1822 = vmatmul.mubr.bf16.gmra.mrb[0].mxu0 %v1623
        %v1823 = vpop.f32.mrb[0].mxu0
        %v1824 = vadd.f32 0.0, %v1823
        %v1825 = vpop.f32.mrb[0].mxu0
        %v1826 = vadd.f32 0.0, %v1825
        %v1827 = vpop.f32.mrb[0].mxu0
        %v1828 = vadd.f32 0.0, %v1827
        %v1829 = vpop.f32.mrb[0].mxu0
        %v1830 = vadd.f32 0.0, %v1829
        %1831 = vdwg.mxu0
        %v1832 = vadd.f32 %v1580, %v1824
        %v1833 = vadd.f32 %v1582, %v1826
        %v1834 = vadd.f32 %v1584, %v1828
        %v1835 = vadd.f32 %v1586, %v1830
        %v1836 = vld [vmem:[%s5 + $0x300] sm:$0xff]
        %v1837 = vld [vmem:[%s5 + $0x308] sm:$0xff]
        %v1838 = vld [vmem:[%s5 + $0x310] sm:$0xff]
        %v1839 = vld [vmem:[%s5 + $0x318] sm:$0xff]
        %v1840 = vld [vmem:[%s5 + $0x320] sm:$0xff]
        %v1841 = vld [vmem:[%s5 + $0x328] sm:$0xff]
        %v1842 = vld [vmem:[%s5 + $0x330] sm:$0xff]
        %v1843 = vld [vmem:[%s5 + $0x338] sm:$0xff]
        %v1844 = vld [vmem:[%s5 + $0x340] sm:$0xff]
        %v1845 = vld [vmem:[%s5 + $0x348] sm:$0xff]
        %v1846 = vld [vmem:[%s5 + $0x350] sm:$0xff]
        %v1847 = vld [vmem:[%s5 + $0x358] sm:$0xff]
        %v1848 = vld [vmem:[%s5 + $0x360] sm:$0xff]
        %v1849 = vld [vmem:[%s5 + $0x368] sm:$0xff]
        %v1850 = vld [vmem:[%s5 + $0x370] sm:$0xff]
        %v1851 = vld [vmem:[%s5 + $0x378] sm:$0xff]
        %v1852 = vld [vmem:[%s5 + $0x380] sm:$0xff]
        %v1853 = vld [vmem:[%s5 + $0x388] sm:$0xff]
        %v1854 = vld [vmem:[%s5 + $0x390] sm:$0xff]
        %v1855 = vld [vmem:[%s5 + $0x398] sm:$0xff]
        %v1856 = vld [vmem:[%s5 + $0x3a0] sm:$0xff]
        %v1857 = vld [vmem:[%s5 + $0x3a8] sm:$0xff]
        %v1858 = vld [vmem:[%s5 + $0x3b0] sm:$0xff]
        %v1859 = vld [vmem:[%s5 + $0x3b8] sm:$0xff]
        %v1860 = vld [vmem:[%s5 + $0x3c0] sm:$0xff]
        %v1861 = vld [vmem:[%s5 + $0x3c8] sm:$0xff]
        %v1862 = vld [vmem:[%s5 + $0x3d0] sm:$0xff]
        %v1863 = vld [vmem:[%s5 + $0x3d8] sm:$0xff]
        %v1864 = vld [vmem:[%s5 + $0x3e0] sm:$0xff]
        %v1865 = vld [vmem:[%s5 + $0x3e8] sm:$0xff]
        %v1866 = vld [vmem:[%s5 + $0x3f0] sm:$0xff]
        %v1867 = vld [vmem:[%s5 + $0x3f8] sm:$0xff]
        %vm1868 = vsmask.f32 6400
        %v1869 = vrot.slane %v1155, 1
        %v1870 = vrot.slane %v1157, 2
        %v1871 = vor.u32 %v1869, %v1870
        %v1872 = vshrl.u32 %v1151, 16
        %v1874 = vrot.slane %v1872, 1
        %v1875 = vrot.slane %v1162, 2
        %v1876 = vor.u32 %v1874, %v1875
        %v1877 = vsel %vm1868, %v1871, %v1876
        %v1878 = vrot.slane %v1167, 1
        %v1879 = vrot.slane %v1169, 2
        %v1880 = vor.u32 %v1878, %v1879
        %v1881 = vshrl.u32 %v1152, 16
        %v1883 = vrot.slane %v1881, 1
        %v1884 = vrot.slane %v1174, 2
        %v1885 = vor.u32 %v1883, %v1884
        %v1886 = vsel %vm1868, %v1880, %v1885
        %v1921 = vunpack.c.l.b16 %v1836
        %v1922 = vunpack.c.h.b16 %v1836
        %v1923 = vunpack.c.l.b16 %v1837
        %v1924 = vunpack.c.h.b16 %v1837
        %v1925 = vunpack.c.l.b16 %v1838
        %v1926 = vunpack.c.h.b16 %v1838
        %v1927 = vunpack.c.l.b16 %v1839
        %v1928 = vunpack.c.h.b16 %v1839
        %v1929 = vunpack.c.l.b16 %v1840
        %v1930 = vunpack.c.h.b16 %v1840
        %v1931 = vunpack.c.l.b16 %v1841
        %v1932 = vunpack.c.h.b16 %v1841
        %v1933 = vunpack.c.l.b16 %v1842
        %v1934 = vunpack.c.h.b16 %v1842
        %v1935 = vunpack.c.l.b16 %v1843
        %v1936 = vunpack.c.h.b16 %v1843
        %v1937 = vunpack.c.l.b16 %v1844
        %v1938 = vunpack.c.h.b16 %v1844
        %v1939 = vunpack.c.l.b16 %v1845
        %v1940 = vunpack.c.h.b16 %v1845
        %v1941 = vunpack.c.l.b16 %v1846
        %v1942 = vunpack.c.h.b16 %v1846
        %v1943 = vunpack.c.l.b16 %v1847
        %v1944 = vunpack.c.h.b16 %v1847
        %v1945 = vunpack.c.l.b16 %v1848
        %v1946 = vunpack.c.h.b16 %v1848
        %v1947 = vunpack.c.l.b16 %v1849
        %v1948 = vunpack.c.h.b16 %v1849
        %v1949 = vunpack.c.l.b16 %v1850
        %v1950 = vunpack.c.h.b16 %v1850
        %v1951 = vunpack.c.l.b16 %v1851
        %v1952 = vunpack.c.h.b16 %v1851
        %v1953 = vunpack.c.l.b16 %v1852
        %v1954 = vunpack.c.h.b16 %v1852
        %v1955 = vunpack.c.l.b16 %v1853
        %v1956 = vunpack.c.h.b16 %v1853
        %v1957 = vunpack.c.l.b16 %v1854
        %v1958 = vunpack.c.h.b16 %v1854
        %v1959 = vunpack.c.l.b16 %v1855
        %v1960 = vunpack.c.h.b16 %v1855
        %v1961 = vunpack.c.l.b16 %v1856
        %v1962 = vunpack.c.h.b16 %v1856
        %v1963 = vunpack.c.l.b16 %v1857
        %v1964 = vunpack.c.h.b16 %v1857
        %v1965 = vunpack.c.l.b16 %v1858
        %v1966 = vunpack.c.h.b16 %v1858
        %v1967 = vunpack.c.l.b16 %v1859
        %v1968 = vunpack.c.h.b16 %v1859
        %v1969 = vunpack.c.l.b16 %v1860
        %v1970 = vunpack.c.h.b16 %v1860
        %v1971 = vunpack.c.l.b16 %v1861
        %v1972 = vunpack.c.h.b16 %v1861
        %v1973 = vunpack.c.l.b16 %v1862
        %v1974 = vunpack.c.h.b16 %v1862
        %v1975 = vunpack.c.l.b16 %v1863
        %v1976 = vunpack.c.h.b16 %v1863
        %v1977 = vunpack.c.l.b16 %v1864
        %v1978 = vunpack.c.h.b16 %v1864
        %v1979 = vunpack.c.l.b16 %v1865
        %v1980 = vunpack.c.h.b16 %v1865
        %v1981 = vunpack.c.l.b16 %v1866
        %v1982 = vunpack.c.h.b16 %v1866
        %v1983 = vunpack.c.l.b16 %v1867
        %v1984 = vunpack.c.h.b16 %v1867
        %v1985 = vpack.c.b16 %v1923, %v1921
        %v1986 = vpack.c.b16 %v1924, %v1922
        %v1987 = vpack.c.b16 %v1927, %v1925
        %v1988 = vpack.c.b16 %v1928, %v1926
        %v1989 = vpack.c.b16 %v1931, %v1929
        %v1990 = vpack.c.b16 %v1932, %v1930
        %v1991 = vpack.c.b16 %v1935, %v1933
        %v1992 = vpack.c.b16 %v1936, %v1934
        %v1993 = vpack.c.b16 %v1939, %v1937
        %v1994 = vpack.c.b16 %v1940, %v1938
        %v1995 = vpack.c.b16 %v1943, %v1941
        %v1996 = vpack.c.b16 %v1944, %v1942
        %v1997 = vpack.c.b16 %v1947, %v1945
        %v1998 = vpack.c.b16 %v1948, %v1946
        %v1999 = vpack.c.b16 %v1951, %v1949
        %v2000 = vpack.c.b16 %v1952, %v1950
        %v2001 = vpack.c.b16 %v1955, %v1953
        %v2002 = vpack.c.b16 %v1956, %v1954
        %v2003 = vpack.c.b16 %v1959, %v1957
        %v2004 = vpack.c.b16 %v1960, %v1958
        %v2005 = vpack.c.b16 %v1963, %v1961
        %v2006 = vpack.c.b16 %v1964, %v1962
        %v2007 = vpack.c.b16 %v1967, %v1965
        %v2008 = vpack.c.b16 %v1968, %v1966
        %v2009 = vpack.c.b16 %v1971, %v1969
        %v2010 = vpack.c.b16 %v1972, %v1970
        %v2011 = vpack.c.b16 %v1975, %v1973
        %v2012 = vpack.c.b16 %v1976, %v1974
        %v2013 = vpack.c.b16 %v1979, %v1977
        %v2014 = vpack.c.b16 %v1980, %v1978
        %v2015 = vpack.c.b16 %v1983, %v1981
        %v2016 = vpack.c.b16 %v1984, %v1982
        %2049 = vmatprep.subr.bf16.mxu0 %v1986
        %2050 = vmatpush1.bf16.msra.mxu0 %v1985
        %2051 = vmatprep.subr.bf16.mxu0 %v1988
        %2052 = vmatpush1.bf16.msra.mxu0 %v1987
        %2053 = vmatprep.subr.bf16.mxu0 %v1990
        %2054 = vmatpush1.bf16.msra.mxu0 %v1989
        %2055 = vmatprep.subr.bf16.mxu0 %v1992
        %2056 = vmatpush1.bf16.msra.mxu0 %v1991
        %2057 = vmatprep.subr.bf16.mxu0 %v1994
        %2058 = vmatpush1.bf16.msra.mxu0 %v1993
        %2059 = vmatprep.subr.bf16.mxu0 %v1996
        %2060 = vmatpush1.bf16.msra.mxu0 %v1995
        %2061 = vmatprep.subr.bf16.mxu0 %v1998
        %2062 = vmatpush1.bf16.msra.mxu0 %v1997
        %2063 = vmatprep.subr.bf16.mxu0 %v2000
        %2064 = vmatpush1.bf16.msra.mxu0 %v1999
        %2065 = vmatprep.subr.bf16.mxu0 %v2002
        %2066 = vmatpush1.bf16.msra.mxu0 %v2001
        %2067 = vmatprep.subr.bf16.mxu0 %v2004
        %2068 = vmatpush1.bf16.msra.mxu0 %v2003
        %2069 = vmatprep.subr.bf16.mxu0 %v2006
        %2070 = vmatpush1.bf16.msra.mxu0 %v2005
        %2071 = vmatprep.subr.bf16.mxu0 %v2008
        %2072 = vmatpush1.bf16.msra.mxu0 %v2007
        %2073 = vmatprep.subr.bf16.mxu0 %v2010
        %2074 = vmatpush1.bf16.msra.mxu0 %v2009
        %2075 = vmatprep.subr.bf16.mxu0 %v2012
        %2076 = vmatpush1.bf16.msra.mxu0 %v2011
        %2077 = vmatprep.subr.bf16.mxu0 %v2014
        %2078 = vmatpush1.bf16.msra.mxu0 %v2013
        %2079 = vmatprep.subr.bf16.mxu0 %v2016
        %2080 = vmatpush1.bf16.msra.mxu0 %v2015
        %2081 = vmatprep.mubr.bf16.mxu0 %v1886
        %2082 = vmatmul.mubr.bf16.gmra.mrb[0].mxu0 %v1877
        %v2083 = vpop.f32.mrb[0].mxu0
        %v2084 = vadd.f32 0.0, %v2083
        %v2085 = vpop.f32.mrb[0].mxu0
        %v2086 = vadd.f32 0.0, %v2085
        %v2087 = vpop.f32.mrb[0].mxu0
        %v2088 = vadd.f32 0.0, %v2087
        %v2089 = vpop.f32.mrb[0].mxu0
        %v2090 = vadd.f32 0.0, %v2089
        %2091 = vdwg.mxu0
        %v2092 = vadd.f32 %v1832, %v2084
        %v2093 = vadd.f32 %v1833, %v2086
        %v2094 = vadd.f32 %v1834, %v2088
        %v2095 = vadd.f32 %v1835, %v2090
        %v2096 = vld [vmem:[%s5 + $0x400] sm:$0xff]
        %v2097 = vld [vmem:[%s5 + $0x408] sm:$0xff]
        %v2098 = vld [vmem:[%s5 + $0x410] sm:$0xff]
        %v2099 = vld [vmem:[%s5 + $0x418] sm:$0xff]
        %v2100 = vld [vmem:[%s5 + $0x420] sm:$0xff]
        %v2101 = vld [vmem:[%s5 + $0x428] sm:$0xff]
        %v2102 = vld [vmem:[%s5 + $0x430] sm:$0xff]
        %v2103 = vld [vmem:[%s5 + $0x438] sm:$0xff]
        %v2104 = vld [vmem:[%s5 + $0x440] sm:$0xff]
        %v2105 = vld [vmem:[%s5 + $0x448] sm:$0xff]
        %v2106 = vld [vmem:[%s5 + $0x450] sm:$0xff]
        %v2107 = vld [vmem:[%s5 + $0x458] sm:$0xff]
        %v2108 = vld [vmem:[%s5 + $0x460] sm:$0xff]
        %v2109 = vld [vmem:[%s5 + $0x468] sm:$0xff]
        %v2110 = vld [vmem:[%s5 + $0x470] sm:$0xff]
        %v2111 = vld [vmem:[%s5 + $0x478] sm:$0xff]
        %v2112 = vld [vmem:[%s5 + $0x480] sm:$0xff]
        %v2113 = vld [vmem:[%s5 + $0x488] sm:$0xff]
        %v2114 = vld [vmem:[%s5 + $0x490] sm:$0xff]
        %v2115 = vld [vmem:[%s5 + $0x498] sm:$0xff]
        %v2116 = vld [vmem:[%s5 + $0x4a0] sm:$0xff]
        %v2117 = vld [vmem:[%s5 + $0x4a8] sm:$0xff]
        %v2118 = vld [vmem:[%s5 + $0x4b0] sm:$0xff]
        %v2119 = vld [vmem:[%s5 + $0x4b8] sm:$0xff]
        %v2120 = vld [vmem:[%s5 + $0x4c0] sm:$0xff]
        %v2121 = vld [vmem:[%s5 + $0x4c8] sm:$0xff]
        %v2122 = vld [vmem:[%s5 + $0x4d0] sm:$0xff]
        %v2123 = vld [vmem:[%s5 + $0x4d8] sm:$0xff]
        %v2124 = vld [vmem:[%s5 + $0x4e0] sm:$0xff]
        %v2125 = vld [vmem:[%s5 + $0x4e8] sm:$0xff]
        %v2126 = vld [vmem:[%s5 + $0x4f0] sm:$0xff]
        %v2127 = vld [vmem:[%s5 + $0x4f8] sm:$0xff]
        %vm2128 = vcmask 1045504
        %v2129 = vrot.slane %v1149, 2
        %v2130 = vrot.slane %v1151, 2
        %v2131 = vsel %vm2128, %v2129, %v2130
        %v2132 = vrot.slane %v1150, 2
        %v2133 = vrot.slane %v1152, 2
        %v2134 = vsel %vm2128, %v2132, %v2133
        %v2169 = vunpack.c.l.b16 %v2096
        %v2170 = vunpack.c.h.b16 %v2096
        %v2171 = vunpack.c.l.b16 %v2097
        %v2172 = vunpack.c.h.b16 %v2097
        %v2173 = vunpack.c.l.b16 %v2098
        %v2174 = vunpack.c.h.b16 %v2098
        %v2175 = vunpack.c.l.b16 %v2099
        %v2176 = vunpack.c.h.b16 %v2099
        %v2177 = vunpack.c.l.b16 %v2100
        %v2178 = vunpack.c.h.b16 %v2100
        %v2179 = vunpack.c.l.b16 %v2101
        %v2180 = vunpack.c.h.b16 %v2101
        %v2181 = vunpack.c.l.b16 %v2102
        %v2182 = vunpack.c.h.b16 %v2102
        %v2183 = vunpack.c.l.b16 %v2103
        %v2184 = vunpack.c.h.b16 %v2103
        %v2185 = vunpack.c.l.b16 %v2104
        %v2186 = vunpack.c.h.b16 %v2104
        %v2187 = vunpack.c.l.b16 %v2105
        %v2188 = vunpack.c.h.b16 %v2105
        %v2189 = vunpack.c.l.b16 %v2106
        %v2190 = vunpack.c.h.b16 %v2106
        %v2191 = vunpack.c.l.b16 %v2107
        %v2192 = vunpack.c.h.b16 %v2107
        %v2193 = vunpack.c.l.b16 %v2108
        %v2194 = vunpack.c.h.b16 %v2108
        %v2195 = vunpack.c.l.b16 %v2109
        %v2196 = vunpack.c.h.b16 %v2109
        %v2197 = vunpack.c.l.b16 %v2110
        %v2198 = vunpack.c.h.b16 %v2110
        %v2199 = vunpack.c.l.b16 %v2111
        %v2200 = vunpack.c.h.b16 %v2111
        %v2201 = vunpack.c.l.b16 %v2112
        %v2202 = vunpack.c.h.b16 %v2112
        %v2203 = vunpack.c.l.b16 %v2113
        %v2204 = vunpack.c.h.b16 %v2113
        %v2205 = vunpack.c.l.b16 %v2114
        %v2206 = vunpack.c.h.b16 %v2114
        %v2207 = vunpack.c.l.b16 %v2115
        %v2208 = vunpack.c.h.b16 %v2115
        %v2209 = vunpack.c.l.b16 %v2116
        %v2210 = vunpack.c.h.b16 %v2116
        %v2211 = vunpack.c.l.b16 %v2117
        %v2212 = vunpack.c.h.b16 %v2117
        %v2213 = vunpack.c.l.b16 %v2118
        %v2214 = vunpack.c.h.b16 %v2118
        %v2215 = vunpack.c.l.b16 %v2119
        %v2216 = vunpack.c.h.b16 %v2119
        %v2217 = vunpack.c.l.b16 %v2120
        %v2218 = vunpack.c.h.b16 %v2120
        %v2219 = vunpack.c.l.b16 %v2121
        %v2220 = vunpack.c.h.b16 %v2121
        %v2221 = vunpack.c.l.b16 %v2122
        %v2222 = vunpack.c.h.b16 %v2122
        %v2223 = vunpack.c.l.b16 %v2123
        %v2224 = vunpack.c.h.b16 %v2123
        %v2225 = vunpack.c.l.b16 %v2124
        %v2226 = vunpack.c.h.b16 %v2124
        %v2227 = vunpack.c.l.b16 %v2125
        %v2228 = vunpack.c.h.b16 %v2125
        %v2229 = vunpack.c.l.b16 %v2126
        %v2230 = vunpack.c.h.b16 %v2126
        %v2231 = vunpack.c.l.b16 %v2127
        %v2232 = vunpack.c.h.b16 %v2127
        %v2233 = vpack.c.b16 %v2171, %v2169
        %v2234 = vpack.c.b16 %v2172, %v2170
        %v2235 = vpack.c.b16 %v2175, %v2173
        %v2236 = vpack.c.b16 %v2176, %v2174
        %v2237 = vpack.c.b16 %v2179, %v2177
        %v2238 = vpack.c.b16 %v2180, %v2178
        %v2239 = vpack.c.b16 %v2183, %v2181
        %v2240 = vpack.c.b16 %v2184, %v2182
        %v2241 = vpack.c.b16 %v2187, %v2185
        %v2242 = vpack.c.b16 %v2188, %v2186
        %v2243 = vpack.c.b16 %v2191, %v2189
        %v2244 = vpack.c.b16 %v2192, %v2190
        %v2245 = vpack.c.b16 %v2195, %v2193
        %v2246 = vpack.c.b16 %v2196, %v2194
        %v2247 = vpack.c.b16 %v2199, %v2197
        %v2248 = vpack.c.b16 %v2200, %v2198
        %v2249 = vpack.c.b16 %v2203, %v2201
        %v2250 = vpack.c.b16 %v2204, %v2202
        %v2251 = vpack.c.b16 %v2207, %v2205
        %v2252 = vpack.c.b16 %v2208, %v2206
        %v2253 = vpack.c.b16 %v2211, %v2209
        %v2254 = vpack.c.b16 %v2212, %v2210
        %v2255 = vpack.c.b16 %v2215, %v2213
        %v2256 = vpack.c.b16 %v2216, %v2214
        %v2257 = vpack.c.b16 %v2219, %v2217
        %v2258 = vpack.c.b16 %v2220, %v2218
        %v2259 = vpack.c.b16 %v2223, %v2221
        %v2260 = vpack.c.b16 %v2224, %v2222
        %v2261 = vpack.c.b16 %v2227, %v2225
        %v2262 = vpack.c.b16 %v2228, %v2226
        %v2263 = vpack.c.b16 %v2231, %v2229
        %v2264 = vpack.c.b16 %v2232, %v2230
        %2297 = vmatprep.subr.bf16.mxu0 %v2234
        %2298 = vmatpush1.bf16.msra.mxu0 %v2233
        %2299 = vmatprep.subr.bf16.mxu0 %v2236
        %2300 = vmatpush1.bf16.msra.mxu0 %v2235
        %2301 = vmatprep.subr.bf16.mxu0 %v2238
        %2302 = vmatpush1.bf16.msra.mxu0 %v2237
        %2303 = vmatprep.subr.bf16.mxu0 %v2240
        %2304 = vmatpush1.bf16.msra.mxu0 %v2239
        %2305 = vmatprep.subr.bf16.mxu0 %v2242
        %2306 = vmatpush1.bf16.msra.mxu0 %v2241
        %2307 = vmatprep.subr.bf16.mxu0 %v2244
        %2308 = vmatpush1.bf16.msra.mxu0 %v2243
        %2309 = vmatprep.subr.bf16.mxu0 %v2246
        %2310 = vmatpush1.bf16.msra.mxu0 %v2245
        %2311 = vmatprep.subr.bf16.mxu0 %v2248
        %2312 = vmatpush1.bf16.msra.mxu0 %v2247
        %2313 = vmatprep.subr.bf16.mxu0 %v2250
        %2314 = vmatpush1.bf16.msra.mxu0 %v2249
        %2315 = vmatprep.subr.bf16.mxu0 %v2252
        %2316 = vmatpush1.bf16.msra.mxu0 %v2251
        %2317 = vmatprep.subr.bf16.mxu0 %v2254
        %2318 = vmatpush1.bf16.msra.mxu0 %v2253
        %2319 = vmatprep.subr.bf16.mxu0 %v2256
        %2320 = vmatpush1.bf16.msra.mxu0 %v2255
        %2321 = vmatprep.subr.bf16.mxu0 %v2258
        %2322 = vmatpush1.bf16.msra.mxu0 %v2257
        %2323 = vmatprep.subr.bf16.mxu0 %v2260
        %2324 = vmatpush1.bf16.msra.mxu0 %v2259
        %2325 = vmatprep.subr.bf16.mxu0 %v2262
        %2326 = vmatpush1.bf16.msra.mxu0 %v2261
        %2327 = vmatprep.subr.bf16.mxu0 %v2264
        %2328 = vmatpush1.bf16.msra.mxu0 %v2263
        %2329 = vmatprep.mubr.bf16.mxu0 %v2134
        %2330 = vmatmul.mubr.bf16.gmra.mrb[0].mxu0 %v2131
        %v2331 = vpop.f32.mrb[0].mxu0
        %v2332 = vadd.f32 0.0, %v2331
        %v2333 = vpop.f32.mrb[0].mxu0
        %v2334 = vadd.f32 0.0, %v2333
        %v2335 = vpop.f32.mrb[0].mxu0
        %v2336 = vadd.f32 0.0, %v2335
        %v2337 = vpop.f32.mrb[0].mxu0
        %v2338 = vadd.f32 0.0, %v2337
        %2339 = vdwg.mxu0
        %v2340 = vadd.f32 %v2092, %v2332
        %v2341 = vadd.f32 %v2093, %v2334
        %v2342 = vadd.f32 %v2094, %v2336
        %v2343 = vadd.f32 %v2095, %v2338
        %v2344 = vld [vmem:[%s7] sm:$0x3]
        %v2346 = vlaneseq
        %v2347 = vshrl.u32 %v2346, 7
        %v2348 = vsub.s32 0, %v2347
        %v2349 = vrot.slane %v2344, %v2348
        %v2350 = vlaneseq
        %v2351 = vshrl.u32 %v2350, 7
        %v2352 = vsub.s32 1, %v2351
        %v2353 = vrot.slane %v2344, %v2352
        %v2356 = vadd.f32 %v2340, %v2349
        %v2357 = vadd.f32 %v2341, %v2353
        %v2358 = vadd.f32 %v2342, %v2349
        %v2359 = vadd.f32 %v2343, %v2353
        %v2360 = vmax.f32 %v2356, 0.0
        %v2361 = vmax.f32 %v2357, 0.0
        %v2362 = vmax.f32 %v2358, 0.0
        %v2363 = vmax.f32 %v2359, 0.0
        %v2364 = vpack.c.bf16 %v2362, %v2360
        %v2365 = vpack.c.bf16 %v2363, %v2361
        %v2366 = vld [vmem:[%s9] sm:$0xff]
        %v2367 = vld [vmem:[%s9 + $0x8] sm:$0xff]
        %v2368 = vld [vmem:[%s9 + $0x10] sm:$0xff]
        %v2369 = vld [vmem:[%s9 + $0x18] sm:$0xff]
        %v2370 = vld [vmem:[%s9 + $0x20] sm:$0xff]
        %v2371 = vld [vmem:[%s9 + $0x28] sm:$0xff]
        %v2372 = vld [vmem:[%s9 + $0x30] sm:$0xff]
        %v2373 = vld [vmem:[%s9 + $0x38] sm:$0xff]
        %v2374 = vld [vmem:[%s9 + $0x40] sm:$0xff]
        %v2375 = vld [vmem:[%s9 + $0x48] sm:$0xff]
        %v2376 = vld [vmem:[%s9 + $0x50] sm:$0xff]
        %v2377 = vld [vmem:[%s9 + $0x58] sm:$0xff]
        %v2378 = vld [vmem:[%s9 + $0x60] sm:$0xff]
        %v2379 = vld [vmem:[%s9 + $0x68] sm:$0xff]
        %v2380 = vld [vmem:[%s9 + $0x70] sm:$0xff]
        %v2381 = vld [vmem:[%s9 + $0x78] sm:$0xff]
        %v2382 = vld [vmem:[%s9 + $0x80] sm:$0xff]
        %v2383 = vld [vmem:[%s9 + $0x88] sm:$0xff]
        %v2384 = vld [vmem:[%s9 + $0x90] sm:$0xff]
        %v2385 = vld [vmem:[%s9 + $0x98] sm:$0xff]
        %v2386 = vld [vmem:[%s9 + $0xa0] sm:$0xff]
        %v2387 = vld [vmem:[%s9 + $0xa8] sm:$0xff]
        %v2388 = vld [vmem:[%s9 + $0xb0] sm:$0xff]
        %v2389 = vld [vmem:[%s9 + $0xb8] sm:$0xff]
        %v2390 = vld [vmem:[%s9 + $0xc0] sm:$0xff]
        %v2391 = vld [vmem:[%s9 + $0xc8] sm:$0xff]
        %v2392 = vld [vmem:[%s9 + $0xd0] sm:$0xff]
        %v2393 = vld [vmem:[%s9 + $0xd8] sm:$0xff]
        %v2394 = vld [vmem:[%s9 + $0xe0] sm:$0xff]
        %v2395 = vld [vmem:[%s9 + $0xe8] sm:$0xff]
        %v2396 = vld [vmem:[%s9 + $0xf0] sm:$0xff]
        %v2397 = vld [vmem:[%s9 + $0xf8] sm:$0xff]
        %v2398 = vld [vmem:[%s11] sm:$0x3]
        %v2400 = vlaneseq
        %v2401 = vshrl.u32 %v2400, 7
        %v2402 = vsub.s32 0, %v2401
        %v2403 = vrot.slane %v2398, %v2402
        %v2404 = vlaneseq
        %v2405 = vshrl.u32 %v2404, 7
        %v2406 = vsub.s32 1, %v2405
        %v2407 = vrot.slane %v2398, %v2406
        %v2442 = vunpack.c.l.b16 %v2366
        %v2443 = vunpack.c.h.b16 %v2366
        %v2444 = vunpack.c.l.b16 %v2367
        %v2445 = vunpack.c.h.b16 %v2367
        %v2446 = vunpack.c.l.b16 %v2368
        %v2447 = vunpack.c.h.b16 %v2368
        %v2448 = vunpack.c.l.b16 %v2369
        %v2449 = vunpack.c.h.b16 %v2369
        %v2450 = vunpack.c.l.b16 %v2370
        %v2451 = vunpack.c.h.b16 %v2370
        %v2452 = vunpack.c.l.b16 %v2371
        %v2453 = vunpack.c.h.b16 %v2371
        %v2454 = vunpack.c.l.b16 %v2372
        %v2455 = vunpack.c.h.b16 %v2372
        %v2456 = vunpack.c.l.b16 %v2373
        %v2457 = vunpack.c.h.b16 %v2373
        %v2458 = vunpack.c.l.b16 %v2374
        %v2459 = vunpack.c.h.b16 %v2374
        %v2460 = vunpack.c.l.b16 %v2375
        %v2461 = vunpack.c.h.b16 %v2375
        %v2462 = vunpack.c.l.b16 %v2376
        %v2463 = vunpack.c.h.b16 %v2376
        %v2464 = vunpack.c.l.b16 %v2377
        %v2465 = vunpack.c.h.b16 %v2377
        %v2466 = vunpack.c.l.b16 %v2378
        %v2467 = vunpack.c.h.b16 %v2378
        %v2468 = vunpack.c.l.b16 %v2379
        %v2469 = vunpack.c.h.b16 %v2379
        %v2470 = vunpack.c.l.b16 %v2380
        %v2471 = vunpack.c.h.b16 %v2380
        %v2472 = vunpack.c.l.b16 %v2381
        %v2473 = vunpack.c.h.b16 %v2381
        %v2474 = vunpack.c.l.b16 %v2382
        %v2475 = vunpack.c.h.b16 %v2382
        %v2476 = vunpack.c.l.b16 %v2383
        %v2477 = vunpack.c.h.b16 %v2383
        %v2478 = vunpack.c.l.b16 %v2384
        %v2479 = vunpack.c.h.b16 %v2384
        %v2480 = vunpack.c.l.b16 %v2385
        %v2481 = vunpack.c.h.b16 %v2385
        %v2482 = vunpack.c.l.b16 %v2386
        %v2483 = vunpack.c.h.b16 %v2386
        %v2484 = vunpack.c.l.b16 %v2387
        %v2485 = vunpack.c.h.b16 %v2387
        %v2486 = vunpack.c.l.b16 %v2388
        %v2487 = vunpack.c.h.b16 %v2388
        %v2488 = vunpack.c.l.b16 %v2389
        %v2489 = vunpack.c.h.b16 %v2389
        %v2490 = vunpack.c.l.b16 %v2390
        %v2491 = vunpack.c.h.b16 %v2390
        %v2492 = vunpack.c.l.b16 %v2391
        %v2493 = vunpack.c.h.b16 %v2391
        %v2494 = vunpack.c.l.b16 %v2392
        %v2495 = vunpack.c.h.b16 %v2392
        %v2496 = vunpack.c.l.b16 %v2393
        %v2497 = vunpack.c.h.b16 %v2393
        %v2498 = vunpack.c.l.b16 %v2394
        %v2499 = vunpack.c.h.b16 %v2394
        %v2500 = vunpack.c.l.b16 %v2395
        %v2501 = vunpack.c.h.b16 %v2395
        %v2502 = vunpack.c.l.b16 %v2396
        %v2503 = vunpack.c.h.b16 %v2396
        %v2504 = vunpack.c.l.b16 %v2397
        %v2505 = vunpack.c.h.b16 %v2397
        %v2506 = vpack.c.b16 %v2444, %v2442
        %v2507 = vpack.c.b16 %v2445, %v2443
        %v2508 = vpack.c.b16 %v2448, %v2446
        %v2509 = vpack.c.b16 %v2449, %v2447
        %v2510 = vpack.c.b16 %v2452, %v2450
        %v2511 = vpack.c.b16 %v2453, %v2451
        %v2512 = vpack.c.b16 %v2456, %v2454
        %v2513 = vpack.c.b16 %v2457, %v2455
        %v2514 = vpack.c.b16 %v2460, %v2458
        %v2515 = vpack.c.b16 %v2461, %v2459
        %v2516 = vpack.c.b16 %v2464, %v2462
        %v2517 = vpack.c.b16 %v2465, %v2463
        %v2518 = vpack.c.b16 %v2468, %v2466
        %v2519 = vpack.c.b16 %v2469, %v2467
        %v2520 = vpack.c.b16 %v2472, %v2470
        %v2521 = vpack.c.b16 %v2473, %v2471
        %v2522 = vpack.c.b16 %v2476, %v2474
        %v2523 = vpack.c.b16 %v2477, %v2475
        %v2524 = vpack.c.b16 %v2480, %v2478
        %v2525 = vpack.c.b16 %v2481, %v2479
        %v2526 = vpack.c.b16 %v2484, %v2482
        %v2527 = vpack.c.b16 %v2485, %v2483
        %v2528 = vpack.c.b16 %v2488, %v2486
        %v2529 = vpack.c.b16 %v2489, %v2487
        %v2530 = vpack.c.b16 %v2492, %v2490
        %v2531 = vpack.c.b16 %v2493, %v2491
        %v2532 = vpack.c.b16 %v2496, %v2494
        %v2533 = vpack.c.b16 %v2497, %v2495
        %v2534 = vpack.c.b16 %v2500, %v2498
        %v2535 = vpack.c.b16 %v2501, %v2499
        %v2536 = vpack.c.b16 %v2504, %v2502
        %v2537 = vpack.c.b16 %v2505, %v2503
        %2570 = vmatprep.subr.bf16.mxu0 %v2507
        %2571 = vmatpush1.bf16.msra.mxu0 %v2506
        %2572 = vmatprep.subr.bf16.mxu0 %v2509
        %2573 = vmatpush1.bf16.msra.mxu0 %v2508
        %2574 = vmatprep.subr.bf16.mxu0 %v2511
        %2575 = vmatpush1.bf16.msra.mxu0 %v2510
        %2576 = vmatprep.subr.bf16.mxu0 %v2513
        %2577 = vmatpush1.bf16.msra.mxu0 %v2512
        %2578 = vmatprep.subr.bf16.mxu0 %v2515
        %2579 = vmatpush1.bf16.msra.mxu0 %v2514
        %2580 = vmatprep.subr.bf16.mxu0 %v2517
        %2581 = vmatpush1.bf16.msra.mxu0 %v2516
        %2582 = vmatprep.subr.bf16.mxu0 %v2519
        %2583 = vmatpush1.bf16.msra.mxu0 %v2518
        %2584 = vmatprep.subr.bf16.mxu0 %v2521
        %2585 = vmatpush1.bf16.msra.mxu0 %v2520
        %2586 = vmatprep.subr.bf16.mxu0 %v2523
        %2587 = vmatpush1.bf16.msra.mxu0 %v2522
        %2588 = vmatprep.subr.bf16.mxu0 %v2525
        %2589 = vmatpush1.bf16.msra.mxu0 %v2524
        %2590 = vmatprep.subr.bf16.mxu0 %v2527
        %2591 = vmatpush1.bf16.msra.mxu0 %v2526
        %2592 = vmatprep.subr.bf16.mxu0 %v2529
        %2593 = vmatpush1.bf16.msra.mxu0 %v2528
        %2594 = vmatprep.subr.bf16.mxu0 %v2531
        %2595 = vmatpush1.bf16.msra.mxu0 %v2530
        %2596 = vmatprep.subr.bf16.mxu0 %v2533
        %2597 = vmatpush1.bf16.msra.mxu0 %v2532
        %2598 = vmatprep.subr.bf16.mxu0 %v2535
        %2599 = vmatpush1.bf16.msra.mxu0 %v2534
        %2600 = vmatprep.subr.bf16.mxu0 %v2537
        %2601 = vmatpush1.bf16.msra.mxu0 %v2536
        %2602 = vmatprep.mubr.bf16.mxu0 %v2365
        %2603 = vmatmul.mubr.bf16.gmra.mrb[0].mxu0 %v2364
        %v2604 = vpop.f32.mrb[0].mxu0
        %v2605 = vadd.f32 %v2403, %v2604
        %v2606 = vpop.f32.mrb[0].mxu0
        %v2607 = vadd.f32 %v2407, %v2606
        %v2608 = vpop.f32.mrb[0].mxu0
        %v2609 = vadd.f32 %v2403, %v2608
        %v2610 = vpop.f32.mrb[0].mxu0
        %v2611 = vadd.f32 %v2407, %v2610
        %2612 = vdwg.mxu0
        %v2613 = vpack.c.bf16 %v2609, %v2605
        %v2614 = vpack.c.bf16 %v2611, %v2607
        %v2615 = vld [vmem:[%s13] sm:$0xff]
        %v2616 = vld [vmem:[%s13 + $0x8] sm:$0xff]
        %v2617 = vld [vmem:[%s13 + $0x10] sm:$0xff]
        %v2618 = vld [vmem:[%s13 + $0x18] sm:$0xff]
        %v2619 = vld [vmem:[%s13 + $0x20] sm:$0xff]
        %v2620 = vld [vmem:[%s13 + $0x28] sm:$0xff]
        %v2621 = vld [vmem:[%s13 + $0x30] sm:$0xff]
        %v2622 = vld [vmem:[%s13 + $0x38] sm:$0xff]
        %v2623 = vld [vmem:[%s13 + $0x40] sm:$0xff]
        %v2624 = vld [vmem:[%s13 + $0x48] sm:$0xff]
        %v2625 = vld [vmem:[%s13 + $0x50] sm:$0xff]
        %v2626 = vld [vmem:[%s13 + $0x58] sm:$0xff]
        %v2627 = vld [vmem:[%s13 + $0x60] sm:$0xff]
        %v2628 = vld [vmem:[%s13 + $0x68] sm:$0xff]
        %v2629 = vld [vmem:[%s13 + $0x70] sm:$0xff]
        %v2630 = vld [vmem:[%s13 + $0x78] sm:$0xff]
        %v2631 = vld [vmem:[%s13 + $0x80] sm:$0xff]
        %v2632 = vld [vmem:[%s13 + $0x88] sm:$0xff]
        %v2633 = vld [vmem:[%s13 + $0x90] sm:$0xff]
        %v2634 = vld [vmem:[%s13 + $0x98] sm:$0xff]
        %v2635 = vld [vmem:[%s13 + $0xa0] sm:$0xff]
        %v2636 = vld [vmem:[%s13 + $0xa8] sm:$0xff]
        %v2637 = vld [vmem:[%s13 + $0xb0] sm:$0xff]
        %v2638 = vld [vmem:[%s13 + $0xb8] sm:$0xff]
        %v2639 = vld [vmem:[%s13 + $0xc0] sm:$0xff]
        %v2640 = vld [vmem:[%s13 + $0xc8] sm:$0xff]
        %v2641 = vld [vmem:[%s13 + $0xd0] sm:$0xff]
        %v2642 = vld [vmem:[%s13 + $0xd8] sm:$0xff]
        %v2643 = vld [vmem:[%s13 + $0xe0] sm:$0xff]
        %v2644 = vld [vmem:[%s13 + $0xe8] sm:$0xff]
        %v2645 = vld [vmem:[%s13 + $0xf0] sm:$0xff]
        %v2646 = vld [vmem:[%s13 + $0xf8] sm:$0xff]
        %v2647 = vld [vmem:[%s13 + $0x100] sm:$0xff]
        %v2648 = vld [vmem:[%s13 + $0x108] sm:$0xff]
        %v2649 = vld [vmem:[%s13 + $0x110] sm:$0xff]
        %v2650 = vld [vmem:[%s13 + $0x118] sm:$0xff]
        %v2651 = vld [vmem:[%s13 + $0x120] sm:$0xff]
        %v2652 = vld [vmem:[%s13 + $0x128] sm:$0xff]
        %v2653 = vld [vmem:[%s13 + $0x130] sm:$0xff]
        %v2654 = vld [vmem:[%s13 + $0x138] sm:$0xff]
        %v2655 = vld [vmem:[%s13 + $0x140] sm:$0xff]
        %v2656 = vld [vmem:[%s13 + $0x148] sm:$0xff]
        %v2657 = vld [vmem:[%s13 + $0x150] sm:$0xff]
        %v2658 = vld [vmem:[%s13 + $0x158] sm:$0xff]
        %v2659 = vld [vmem:[%s13 + $0x160] sm:$0xff]
        %v2660 = vld [vmem:[%s13 + $0x168] sm:$0xff]
        %v2661 = vld [vmem:[%s13 + $0x170] sm:$0xff]
        %v2662 = vld [vmem:[%s13 + $0x178] sm:$0xff]
        %v2663 = vld [vmem:[%s13 + $0x180] sm:$0xff]
        %v2664 = vld [vmem:[%s13 + $0x188] sm:$0xff]
        %v2665 = vld [vmem:[%s13 + $0x190] sm:$0xff]
        %v2666 = vld [vmem:[%s13 + $0x198] sm:$0xff]
        %v2667 = vld [vmem:[%s13 + $0x1a0] sm:$0xff]
        %v2668 = vld [vmem:[%s13 + $0x1a8] sm:$0xff]
        %v2669 = vld [vmem:[%s13 + $0x1b0] sm:$0xff]
        %v2670 = vld [vmem:[%s13 + $0x1b8] sm:$0xff]
        %v2671 = vld [vmem:[%s13 + $0x1c0] sm:$0xff]
        %v2672 = vld [vmem:[%s13 + $0x1c8] sm:$0xff]
        %v2673 = vld [vmem:[%s13 + $0x1d0] sm:$0xff]
        %v2674 = vld [vmem:[%s13 + $0x1d8] sm:$0xff]
        %v2675 = vld [vmem:[%s13 + $0x1e0] sm:$0xff]
        %v2676 = vld [vmem:[%s13 + $0x1e8] sm:$0xff]
        %v2677 = vld [vmem:[%s13 + $0x1f0] sm:$0xff]
        %v2678 = vld [vmem:[%s13 + $0x1f8] sm:$0xff]
        %v2679 = vld [vmem:[%s13 + $0x200] sm:$0xff]
        %v2680 = vld [vmem:[%s13 + $0x208] sm:$0xff]
        %v2681 = vld [vmem:[%s13 + $0x210] sm:$0xff]
        %v2682 = vld [vmem:[%s13 + $0x218] sm:$0xff]
        %v2683 = vld [vmem:[%s13 + $0x220] sm:$0xff]
        %v2684 = vld [vmem:[%s13 + $0x228] sm:$0xff]
        %v2685 = vld [vmem:[%s13 + $0x230] sm:$0xff]
        %v2686 = vld [vmem:[%s13 + $0x238] sm:$0xff]
        %v2687 = vld [vmem:[%s13 + $0x240] sm:$0xff]
        %v2688 = vld [vmem:[%s13 + $0x248] sm:$0xff]
        %v2689 = vld [vmem:[%s13 + $0x250] sm:$0xff]
        %v2690 = vld [vmem:[%s13 + $0x258] sm:$0xff]
        %v2691 = vld [vmem:[%s13 + $0x260] sm:$0xff]
        %v2692 = vld [vmem:[%s13 + $0x268] sm:$0xff]
        %v2693 = vld [vmem:[%s13 + $0x270] sm:$0xff]
        %v2694 = vld [vmem:[%s13 + $0x278] sm:$0xff]
        %v2695 = vld [vmem:[%s13 + $0x280] sm:$0xff]
        %v2696 = vld [vmem:[%s13 + $0x288] sm:$0xff]
        %v2697 = vld [vmem:[%s13 + $0x290] sm:$0xff]
        %v2698 = vld [vmem:[%s13 + $0x298] sm:$0xff]
        %v2699 = vld [vmem:[%s13 + $0x2a0] sm:$0xff]
        %v2700 = vld [vmem:[%s13 + $0x2a8] sm:$0xff]
        %v2701 = vld [vmem:[%s13 + $0x2b0] sm:$0xff]
        %v2702 = vld [vmem:[%s13 + $0x2b8] sm:$0xff]
        %v2703 = vld [vmem:[%s13 + $0x2c0] sm:$0xff]
        %v2704 = vld [vmem:[%s13 + $0x2c8] sm:$0xff]
        %v2705 = vld [vmem:[%s13 + $0x2d0] sm:$0xff]
        %v2706 = vld [vmem:[%s13 + $0x2d8] sm:$0xff]
        %v2707 = vld [vmem:[%s13 + $0x2e0] sm:$0xff]
        %v2708 = vld [vmem:[%s13 + $0x2e8] sm:$0xff]
        %v2709 = vld [vmem:[%s13 + $0x2f0] sm:$0xff]
        %v2710 = vld [vmem:[%s13 + $0x2f8] sm:$0xff]
        %v2711 = vld [vmem:[%s15] sm:$0x3f]
        %v2713 = vlaneseq
        %v2714 = vshrl.u32 %v2713, 7
        %v2715 = vsub.s32 0, %v2714
        %v2716 = vrot.slane %v2711, %v2715
        %v2717 = vlaneseq
        %v2718 = vshrl.u32 %v2717, 7
        %v2719 = vsub.s32 1, %v2718
        %v2720 = vrot.slane %v2711, %v2719
        %v2721 = vlaneseq
        %v2722 = vshrl.u32 %v2721, 7
        %v2723 = vsub.s32 2, %v2722
        %v2724 = vrot.slane %v2711, %v2723
        %v2725 = vlaneseq
        %v2726 = vshrl.u32 %v2725, 7
        %v2727 = vsub.s32 3, %v2726
        %v2728 = vrot.slane %v2711, %v2727
        %v2729 = vlaneseq
        %v2730 = vshrl.u32 %v2729, 7
        %v2731 = vsub.s32 4, %v2730
        %v2732 = vrot.slane %v2711, %v2731
        %v2733 = vlaneseq
        %v2734 = vshrl.u32 %v2733, 7
        %v2735 = vsub.s32 5, %v2734
        %v2736 = vrot.slane %v2711, %v2735
        %v2839 = vunpack.c.l.b16 %v2615
        %v2840 = vunpack.c.h.b16 %v2615
        %v2841 = vunpack.c.l.b16 %v2616
        %v2842 = vunpack.c.h.b16 %v2616
        %v2843 = vunpack.c.l.b16 %v2617
        %v2844 = vunpack.c.h.b16 %v2617
        %v2845 = vunpack.c.l.b16 %v2618
        %v2846 = vunpack.c.h.b16 %v2618
        %v2847 = vunpack.c.l.b16 %v2619
        %v2848 = vunpack.c.h.b16 %v2619
        %v2849 = vunpack.c.l.b16 %v2620
        %v2850 = vunpack.c.h.b16 %v2620
        %v2851 = vunpack.c.l.b16 %v2621
        %v2852 = vunpack.c.h.b16 %v2621
        %v2853 = vunpack.c.l.b16 %v2622
        %v2854 = vunpack.c.h.b16 %v2622
        %v2855 = vunpack.c.l.b16 %v2623
        %v2856 = vunpack.c.h.b16 %v2623
        %v2857 = vunpack.c.l.b16 %v2624
        %v2858 = vunpack.c.h.b16 %v2624
        %v2859 = vunpack.c.l.b16 %v2625
        %v2860 = vunpack.c.h.b16 %v2625
        %v2861 = vunpack.c.l.b16 %v2626
        %v2862 = vunpack.c.h.b16 %v2626
        %v2863 = vunpack.c.l.b16 %v2627
        %v2864 = vunpack.c.h.b16 %v2627
        %v2865 = vunpack.c.l.b16 %v2628
        %v2866 = vunpack.c.h.b16 %v2628
        %v2867 = vunpack.c.l.b16 %v2629
        %v2868 = vunpack.c.h.b16 %v2629
        %v2869 = vunpack.c.l.b16 %v2630
        %v2870 = vunpack.c.h.b16 %v2630
        %v2871 = vunpack.c.l.b16 %v2631
        %v2872 = vunpack.c.h.b16 %v2631
        %v2873 = vunpack.c.l.b16 %v2632
        %v2874 = vunpack.c.h.b16 %v2632
        %v2875 = vunpack.c.l.b16 %v2633
        %v2876 = vunpack.c.h.b16 %v2633
        %v2877 = vunpack.c.l.b16 %v2634
        %v2878 = vunpack.c.h.b16 %v2634
        %v2879 = vunpack.c.l.b16 %v2635
        %v2880 = vunpack.c.h.b16 %v2635
        %v2881 = vunpack.c.l.b16 %v2636
        %v2882 = vunpack.c.h.b16 %v2636
        %v2883 = vunpack.c.l.b16 %v2637
        %v2884 = vunpack.c.h.b16 %v2637
        %v2885 = vunpack.c.l.b16 %v2638
        %v2886 = vunpack.c.h.b16 %v2638
        %v2887 = vunpack.c.l.b16 %v2639
        %v2888 = vunpack.c.h.b16 %v2639
        %v2889 = vunpack.c.l.b16 %v2640
        %v2890 = vunpack.c.h.b16 %v2640
        %v2891 = vunpack.c.l.b16 %v2641
        %v2892 = vunpack.c.h.b16 %v2641
        %v2893 = vunpack.c.l.b16 %v2642
        %v2894 = vunpack.c.h.b16 %v2642
        %v2895 = vunpack.c.l.b16 %v2643
        %v2896 = vunpack.c.h.b16 %v2643
        %v2897 = vunpack.c.l.b16 %v2644
        %v2898 = vunpack.c.h.b16 %v2644
        %v2899 = vunpack.c.l.b16 %v2645
        %v2900 = vunpack.c.h.b16 %v2645
        %v2901 = vunpack.c.l.b16 %v2646
        %v2902 = vunpack.c.h.b16 %v2646
        %v2903 = vunpack.c.l.b16 %v2647
        %v2904 = vunpack.c.h.b16 %v2647
        %v2905 = vunpack.c.l.b16 %v2648
        %v2906 = vunpack.c.h.b16 %v2648
        %v2907 = vunpack.c.l.b16 %v2649
        %v2908 = vunpack.c.h.b16 %v2649
        %v2909 = vunpack.c.l.b16 %v2650
        %v2910 = vunpack.c.h.b16 %v2650
        %v2911 = vunpack.c.l.b16 %v2651
        %v2912 = vunpack.c.h.b16 %v2651
        %v2913 = vunpack.c.l.b16 %v2652
        %v2914 = vunpack.c.h.b16 %v2652
        %v2915 = vunpack.c.l.b16 %v2653
        %v2916 = vunpack.c.h.b16 %v2653
        %v2917 = vunpack.c.l.b16 %v2654
        %v2918 = vunpack.c.h.b16 %v2654
        %v2919 = vunpack.c.l.b16 %v2655
        %v2920 = vunpack.c.h.b16 %v2655
        %v2921 = vunpack.c.l.b16 %v2656
        %v2922 = vunpack.c.h.b16 %v2656
        %v2923 = vunpack.c.l.b16 %v2657
        %v2924 = vunpack.c.h.b16 %v2657
        %v2925 = vunpack.c.l.b16 %v2658
        %v2926 = vunpack.c.h.b16 %v2658
        %v2927 = vunpack.c.l.b16 %v2659
        %v2928 = vunpack.c.h.b16 %v2659
        %v2929 = vunpack.c.l.b16 %v2660
        %v2930 = vunpack.c.h.b16 %v2660
        %v2931 = vunpack.c.l.b16 %v2661
        %v2932 = vunpack.c.h.b16 %v2661
        %v2933 = vunpack.c.l.b16 %v2662
        %v2934 = vunpack.c.h.b16 %v2662
        %v2935 = vunpack.c.l.b16 %v2663
        %v2936 = vunpack.c.h.b16 %v2663
        %v2937 = vunpack.c.l.b16 %v2664
        %v2938 = vunpack.c.h.b16 %v2664
        %v2939 = vunpack.c.l.b16 %v2665
        %v2940 = vunpack.c.h.b16 %v2665
        %v2941 = vunpack.c.l.b16 %v2666
        %v2942 = vunpack.c.h.b16 %v2666
        %v2943 = vunpack.c.l.b16 %v2667
        %v2944 = vunpack.c.h.b16 %v2667
        %v2945 = vunpack.c.l.b16 %v2668
        %v2946 = vunpack.c.h.b16 %v2668
        %v2947 = vunpack.c.l.b16 %v2669
        %v2948 = vunpack.c.h.b16 %v2669
        %v2949 = vunpack.c.l.b16 %v2670
        %v2950 = vunpack.c.h.b16 %v2670
        %v2951 = vunpack.c.l.b16 %v2671
        %v2952 = vunpack.c.h.b16 %v2671
        %v2953 = vunpack.c.l.b16 %v2672
        %v2954 = vunpack.c.h.b16 %v2672
        %v2955 = vunpack.c.l.b16 %v2673
        %v2956 = vunpack.c.h.b16 %v2673
        %v2957 = vunpack.c.l.b16 %v2674
        %v2958 = vunpack.c.h.b16 %v2674
        %v2959 = vunpack.c.l.b16 %v2675
        %v2960 = vunpack.c.h.b16 %v2675
        %v2961 = vunpack.c.l.b16 %v2676
        %v2962 = vunpack.c.h.b16 %v2676
        %v2963 = vunpack.c.l.b16 %v2677
        %v2964 = vunpack.c.h.b16 %v2677
        %v2965 = vunpack.c.l.b16 %v2678
        %v2966 = vunpack.c.h.b16 %v2678
        %v2967 = vunpack.c.l.b16 %v2679
        %v2968 = vunpack.c.h.b16 %v2679
        %v2969 = vunpack.c.l.b16 %v2680
        %v2970 = vunpack.c.h.b16 %v2680
        %v2971 = vunpack.c.l.b16 %v2681
        %v2972 = vunpack.c.h.b16 %v2681
        %v2973 = vunpack.c.l.b16 %v2682
        %v2974 = vunpack.c.h.b16 %v2682
        %v2975 = vunpack.c.l.b16 %v2683
        %v2976 = vunpack.c.h.b16 %v2683
        %v2977 = vunpack.c.l.b16 %v2684
        %v2978 = vunpack.c.h.b16 %v2684
        %v2979 = vunpack.c.l.b16 %v2685
        %v2980 = vunpack.c.h.b16 %v2685
        %v2981 = vunpack.c.l.b16 %v2686
        %v2982 = vunpack.c.h.b16 %v2686
        %v2983 = vunpack.c.l.b16 %v2687
        %v2984 = vunpack.c.h.b16 %v2687
        %v2985 = vunpack.c.l.b16 %v2688
        %v2986 = vunpack.c.h.b16 %v2688
        %v2987 = vunpack.c.l.b16 %v2689
        %v2988 = vunpack.c.h.b16 %v2689
        %v2989 = vunpack.c.l.b16 %v2690
        %v2990 = vunpack.c.h.b16 %v2690
        %v2991 = vunpack.c.l.b16 %v2691
        %v2992 = vunpack.c.h.b16 %v2691
        %v2993 = vunpack.c.l.b16 %v2692
        %v2994 = vunpack.c.h.b16 %v2692
        %v2995 = vunpack.c.l.b16 %v2693
        %v2996 = vunpack.c.h.b16 %v2693
        %v2997 = vunpack.c.l.b16 %v2694
        %v2998 = vunpack.c.h.b16 %v2694
        %v2999 = vunpack.c.l.b16 %v2695
        %v3000 = vunpack.c.h.b16 %v2695
        %v3001 = vunpack.c.l.b16 %v2696
        %v3002 = vunpack.c.h.b16 %v2696
        %v3003 = vunpack.c.l.b16 %v2697
        %v3004 = vunpack.c.h.b16 %v2697
        %v3005 = vunpack.c.l.b16 %v2698
        %v3006 = vunpack.c.h.b16 %v2698
        %v3007 = vunpack.c.l.b16 %v2699
        %v3008 = vunpack.c.h.b16 %v2699
        %v3009 = vunpack.c.l.b16 %v2700
        %v3010 = vunpack.c.h.b16 %v2700
        %v3011 = vunpack.c.l.b16 %v2701
        %v3012 = vunpack.c.h.b16 %v2701
        %v3013 = vunpack.c.l.b16 %v2702
        %v3014 = vunpack.c.h.b16 %v2702
        %v3015 = vunpack.c.l.b16 %v2703
        %v3016 = vunpack.c.h.b16 %v2703
        %v3017 = vunpack.c.l.b16 %v2704
        %v3018 = vunpack.c.h.b16 %v2704
        %v3019 = vunpack.c.l.b16 %v2705
        %v3020 = vunpack.c.h.b16 %v2705
        %v3021 = vunpack.c.l.b16 %v2706
        %v3022 = vunpack.c.h.b16 %v2706
        %v3023 = vunpack.c.l.b16 %v2707
        %v3024 = vunpack.c.h.b16 %v2707
        %v3025 = vunpack.c.l.b16 %v2708
        %v3026 = vunpack.c.h.b16 %v2708
        %v3027 = vunpack.c.l.b16 %v2709
        %v3028 = vunpack.c.h.b16 %v2709
        %v3029 = vunpack.c.l.b16 %v2710
        %v3030 = vunpack.c.h.b16 %v2710
        %v3031 = vpack.c.b16 %v2845, %v2839
        %v3032 = vpack.c.b16 %v2846, %v2840
        %v3033 = vpack.c.b16 %v2847, %v2841
        %v3034 = vpack.c.b16 %v2848, %v2842
        %v3035 = vpack.c.b16 %v2849, %v2843
        %v3036 = vpack.c.b16 %v2850, %v2844
        %v3037 = vpack.c.b16 %v2857, %v2851
        %v3038 = vpack.c.b16 %v2858, %v2852
        %v3039 = vpack.c.b16 %v2859, %v2853
        %v3040 = vpack.c.b16 %v2860, %v2854
        %v3041 = vpack.c.b16 %v2861, %v2855
        %v3042 = vpack.c.b16 %v2862, %v2856
        %v3043 = vpack.c.b16 %v2869, %v2863
        %v3044 = vpack.c.b16 %v2870, %v2864
        %v3045 = vpack.c.b16 %v2871, %v2865
        %v3046 = vpack.c.b16 %v2872, %v2866
        %v3047 = vpack.c.b16 %v2873, %v2867
        %v3048 = vpack.c.b16 %v2874, %v2868
        %v3049 = vpack.c.b16 %v2881, %v2875
        %v3050 = vpack.c.b16 %v2882, %v2876
        %v3051 = vpack.c.b16 %v2883, %v2877
        %v3052 = vpack.c.b16 %v2884, %v2878
        %v3053 = vpack.c.b16 %v2885, %v2879
        %v3054 = vpack.c.b16 %v2886, %v2880
        %v3055 = vpack.c.b16 %v2893, %v2887
        %v3056 = vpack.c.b16 %v2894, %v2888
        %v3057 = vpack.c.b16 %v2895, %v2889
        %v3058 = vpack.c.b16 %v2896, %v2890
        %v3059 = vpack.c.b16 %v2897, %v2891
        %v3060 = vpack.c.b16 %v2898, %v2892
        %v3061 = vpack.c.b16 %v2905, %v2899
        %v3062 = vpack.c.b16 %v2906, %v2900
        %v3063 = vpack.c.b16 %v2907, %v2901
        %v3064 = vpack.c.b16 %v2908, %v2902
        %v3065 = vpack.c.b16 %v2909, %v2903
        %v3066 = vpack.c.b16 %v2910, %v2904
        %v3067 = vpack.c.b16 %v2917, %v2911
        %v3068 = vpack.c.b16 %v2918, %v2912
        %v3069 = vpack.c.b16 %v2919, %v2913
        %v3070 = vpack.c.b16 %v2920, %v2914
        %v3071 = vpack.c.b16 %v2921, %v2915
        %v3072 = vpack.c.b16 %v2922, %v2916
        %v3073 = vpack.c.b16 %v2929, %v2923
        %v3074 = vpack.c.b16 %v2930, %v2924
        %v3075 = vpack.c.b16 %v2931, %v2925
        %v3076 = vpack.c.b16 %v2932, %v2926
        %v3077 = vpack.c.b16 %v2933, %v2927
        %v3078 = vpack.c.b16 %v2934, %v2928
        %v3079 = vpack.c.b16 %v2941, %v2935
        %v3080 = vpack.c.b16 %v2942, %v2936
        %v3081 = vpack.c.b16 %v2943, %v2937
        %v3082 = vpack.c.b16 %v2944, %v2938
        %v3083 = vpack.c.b16 %v2945, %v2939
        %v3084 = vpack.c.b16 %v2946, %v2940
        %v3085 = vpack.c.b16 %v2953, %v2947
        %v3086 = vpack.c.b16 %v2954, %v2948
        %v3087 = vpack.c.b16 %v2955, %v2949
        %v3088 = vpack.c.b16 %v2956, %v2950
        %v3089 = vpack.c.b16 %v2957, %v2951
        %v3090 = vpack.c.b16 %v2958, %v2952
        %v3091 = vpack.c.b16 %v2965, %v2959
        %v3092 = vpack.c.b16 %v2966, %v2960
        %v3093 = vpack.c.b16 %v2967, %v2961
        %v3094 = vpack.c.b16 %v2968, %v2962
        %v3095 = vpack.c.b16 %v2969, %v2963
        %v3096 = vpack.c.b16 %v2970, %v2964
        %v3097 = vpack.c.b16 %v2977, %v2971
        %v3098 = vpack.c.b16 %v2978, %v2972
        %v3099 = vpack.c.b16 %v2979, %v2973
        %v3100 = vpack.c.b16 %v2980, %v2974
        %v3101 = vpack.c.b16 %v2981, %v2975
        %v3102 = vpack.c.b16 %v2982, %v2976
        %v3103 = vpack.c.b16 %v2989, %v2983
        %v3104 = vpack.c.b16 %v2990, %v2984
        %v3105 = vpack.c.b16 %v2991, %v2985
        %v3106 = vpack.c.b16 %v2992, %v2986
        %v3107 = vpack.c.b16 %v2993, %v2987
        %v3108 = vpack.c.b16 %v2994, %v2988
        %v3109 = vpack.c.b16 %v3001, %v2995
        %v3110 = vpack.c.b16 %v3002, %v2996
        %v3111 = vpack.c.b16 %v3003, %v2997
        %v3112 = vpack.c.b16 %v3004, %v2998
        %v3113 = vpack.c.b16 %v3005, %v2999
        %v3114 = vpack.c.b16 %v3006, %v3000
        %v3115 = vpack.c.b16 %v3013, %v3007
        %v3116 = vpack.c.b16 %v3014, %v3008
        %v3117 = vpack.c.b16 %v3015, %v3009
        %v3118 = vpack.c.b16 %v3016, %v3010
        %v3119 = vpack.c.b16 %v3017, %v3011
        %v3120 = vpack.c.b16 %v3018, %v3012
        %v3121 = vpack.c.b16 %v3025, %v3019
        %v3122 = vpack.c.b16 %v3026, %v3020
        %v3123 = vpack.c.b16 %v3027, %v3021
        %v3124 = vpack.c.b16 %v3028, %v3022
        %v3125 = vpack.c.b16 %v3029, %v3023
        %v3126 = vpack.c.b16 %v3030, %v3024
        %3223 = vmatprep.subr.bf16.mxu0 %v3032
        %3224 = vmatpush1.bf16.msra.mxu0 %v3031
        %3225 = vmatprep.subr.bf16.mxu0 %v3038
        %3226 = vmatpush1.bf16.msra.mxu0 %v3037
        %3227 = vmatprep.subr.bf16.mxu0 %v3044
        %3228 = vmatpush1.bf16.msra.mxu0 %v3043
        %3229 = vmatprep.subr.bf16.mxu0 %v3050
        %3230 = vmatpush1.bf16.msra.mxu0 %v3049
        %3231 = vmatprep.subr.bf16.mxu0 %v3056
        %3232 = vmatpush1.bf16.msra.mxu0 %v3055
        %3233 = vmatprep.subr.bf16.mxu0 %v3062
        %3234 = vmatpush1.bf16.msra.mxu0 %v3061
        %3235 = vmatprep.subr.bf16.mxu0 %v3068
        %3236 = vmatpush1.bf16.msra.mxu0 %v3067
        %3237 = vmatprep.subr.bf16.mxu0 %v3074
        %3238 = vmatpush1.bf16.msra.mxu0 %v3073
        %3239 = vmatprep.subr.bf16.mxu0 %v3080
        %3240 = vmatpush1.bf16.msra.mxu0 %v3079
        %3241 = vmatprep.subr.bf16.mxu0 %v3086
        %3242 = vmatpush1.bf16.msra.mxu0 %v3085
        %3243 = vmatprep.subr.bf16.mxu0 %v3092
        %3244 = vmatpush1.bf16.msra.mxu0 %v3091
        %3245 = vmatprep.subr.bf16.mxu0 %v3098
        %3246 = vmatpush1.bf16.msra.mxu0 %v3097
        %3247 = vmatprep.subr.bf16.mxu0 %v3104
        %3248 = vmatpush1.bf16.msra.mxu0 %v3103
        %3249 = vmatprep.subr.bf16.mxu0 %v3110
        %3250 = vmatpush1.bf16.msra.mxu0 %v3109
        %3251 = vmatprep.subr.bf16.mxu0 %v3116
        %3252 = vmatpush1.bf16.msra.mxu0 %v3115
        %3253 = vmatprep.subr.bf16.mxu0 %v3122
        %3254 = vmatpush1.bf16.msra.mxu0 %v3121
        %3255 = vmatprep.mubr.bf16.mxu0 %v2614
        %3256 = vmatmul.mubr.bf16.gmra.mrb[0].mxu0 %v2613
        %v3257 = vpop.f32.mrb[0].mxu0
        %v3258 = vadd.f32 %v2716, %v3257
        %v3259 = vpop.f32.mrb[0].mxu0
        %v3260 = vadd.f32 %v2720, %v3259
        %v3261 = vpop.f32.mrb[0].mxu0
        %v3262 = vadd.f32 %v2716, %v3261
        %v3263 = vpop.f32.mrb[0].mxu0
        %v3264 = vadd.f32 %v2720, %v3263
        %3265 = vdwg.mxu0
        %3266 = vmatprep.subr.bf16.mxu0 %v3034
        %3267 = vmatpush1.bf16.msra.mxu0 %v3033
        %3268 = vmatprep.subr.bf16.mxu0 %v3040
        %3269 = vmatpush1.bf16.msra.mxu0 %v3039
        %3270 = vmatprep.subr.bf16.mxu0 %v3046
        %3271 = vmatpush1.bf16.msra.mxu0 %v3045
        %3272 = vmatprep.subr.bf16.mxu0 %v3052
        %3273 = vmatpush1.bf16.msra.mxu0 %v3051
        %3274 = vmatprep.subr.bf16.mxu0 %v3058
        %3275 = vmatpush1.bf16.msra.mxu0 %v3057
        %3276 = vmatprep.subr.bf16.mxu0 %v3064
        %3277 = vmatpush1.bf16.msra.mxu0 %v3063
        %3278 = vmatprep.subr.bf16.mxu0 %v3070
        %3279 = vmatpush1.bf16.msra.mxu0 %v3069
        %3280 = vmatprep.subr.bf16.mxu0 %v3076
        %3281 = vmatpush1.bf16.msra.mxu0 %v3075
        %3282 = vmatprep.subr.bf16.mxu0 %v3082
        %3283 = vmatpush1.bf16.msra.mxu0 %v3081
        %3284 = vmatprep.subr.bf16.mxu0 %v3088
        %3285 = vmatpush1.bf16.msra.mxu0 %v3087
        %3286 = vmatprep.subr.bf16.mxu0 %v3094
        %3287 = vmatpush1.bf16.msra.mxu0 %v3093
        %3288 = vmatprep.subr.bf16.mxu0 %v3100
        %3289 = vmatpush1.bf16.msra.mxu0 %v3099
        %3290 = vmatprep.subr.bf16.mxu0 %v3106
        %3291 = vmatpush1.bf16.msra.mxu0 %v3105
        %3292 = vmatprep.subr.bf16.mxu0 %v3112
        %3293 = vmatpush1.bf16.msra.mxu0 %v3111
        %3294 = vmatprep.subr.bf16.mxu0 %v3118
        %3295 = vmatpush1.bf16.msra.mxu0 %v3117
        %3296 = vmatprep.subr.bf16.mxu0 %v3124
        %3297 = vmatpush1.bf16.msra.mxu0 %v3123
        %3298 = vmatprep.mubr.bf16.mxu0 %v2614
        %3299 = vmatmul.mubr.bf16.gmra.mrb[0].mxu0 %v2613
        %v3300 = vpop.f32.mrb[0].mxu0
        %v3301 = vadd.f32 %v2724, %v3300
        %v3302 = vpop.f32.mrb[0].mxu0
        %v3303 = vadd.f32 %v2728, %v3302
        %v3304 = vpop.f32.mrb[0].mxu0
        %v3305 = vadd.f32 %v2724, %v3304
        %v3306 = vpop.f32.mrb[0].mxu0
        %v3307 = vadd.f32 %v2728, %v3306
        %3308 = vdwg.mxu0
        %3309 = vmatprep.subr.bf16.mxu0 %v3036
        %3310 = vmatpush1.bf16.msra.mxu0 %v3035
        %3311 = vmatprep.subr.bf16.mxu0 %v3042
        %3312 = vmatpush1.bf16.msra.mxu0 %v3041
        %3313 = vmatprep.subr.bf16.mxu0 %v3048
        %3314 = vmatpush1.bf16.msra.mxu0 %v3047
        %3315 = vmatprep.subr.bf16.mxu0 %v3054
        %3316 = vmatpush1.bf16.msra.mxu0 %v3053
        %3317 = vmatprep.subr.bf16.mxu0 %v3060
        %3318 = vmatpush1.bf16.msra.mxu0 %v3059
        %3319 = vmatprep.subr.bf16.mxu0 %v3066
        %3320 = vmatpush1.bf16.msra.mxu0 %v3065
        %3321 = vmatprep.subr.bf16.mxu0 %v3072
        %3322 = vmatpush1.bf16.msra.mxu0 %v3071
        %3323 = vmatprep.subr.bf16.mxu0 %v3078
        %3324 = vmatpush1.bf16.msra.mxu0 %v3077
        %3325 = vmatprep.subr.bf16.mxu0 %v3084
        %3326 = vmatpush1.bf16.msra.mxu0 %v3083
        %3327 = vmatprep.subr.bf16.mxu0 %v3090
        %3328 = vmatpush1.bf16.msra.mxu0 %v3089
        %3329 = vmatprep.subr.bf16.mxu0 %v3096
        %3330 = vmatpush1.bf16.msra.mxu0 %v3095
        %3331 = vmatprep.subr.bf16.mxu0 %v3102
        %3332 = vmatpush1.bf16.msra.mxu0 %v3101
        %3333 = vmatprep.subr.bf16.mxu0 %v3108
        %3334 = vmatpush1.bf16.msra.mxu0 %v3107
        %3335 = vmatprep.subr.bf16.mxu0 %v3114
        %3336 = vmatpush1.bf16.msra.mxu0 %v3113
        %3337 = vmatprep.subr.bf16.mxu0 %v3120
        %3338 = vmatpush1.bf16.msra.mxu0 %v3119
        %3339 = vmatprep.subr.bf16.mxu0 %v3126
        %3340 = vmatpush1.bf16.msra.mxu0 %v3125
        %3341 = vmatprep.mubr.bf16.mxu0 %v2614
        %3342 = vmatmul.mubr.bf16.gmra.mrb[0].mxu0 %v2613
        %v3343 = vpop.f32.mrb[0].mxu0
        %v3344 = vadd.f32 %v2732, %v3343
        %v3345 = vpop.f32.mrb[0].mxu0
        %v3346 = vadd.f32 %v2736, %v3345
        %v3347 = vpop.f32.mrb[0].mxu0
        %v3348 = vadd.f32 %v2732, %v3347
        %v3349 = vpop.f32.mrb[0].mxu0
        %v3350 = vadd.f32 %v2736, %v3349
        %3351 = vdwg.mxu0
        %v3352 = vlaneseq
        %v3353 = vand.u32 %v3352, 127
        %vm3354 = vcmp.lt.s32.totalorder %v3353, 16
        %v3355 = vsel %vm3354, 0.0, -1e+30
        %v3356 = vld [vmem:[%s17] sm:$0xff]
        %v3357 = vld [vmem:[%s17 + $0x8] sm:$0xff]
        %v3358 = vld [vmem:[%s17 + $0x10] sm:$0xff]
        %v3359 = vld [vmem:[%s17 + $0x18] sm:$0xff]
        %v3360 = vld [vmem:[%s17 + $0x20] sm:$0xff]
        %v3361 = vld [vmem:[%s17 + $0x28] sm:$0xff]
        %v3362 = vld [vmem:[%s17 + $0x30] sm:$0xff]
        %v3363 = vld [vmem:[%s17 + $0x38] sm:$0xff]
        %v3364 = vld [vmem:[%s17 + $0x40] sm:$0xff]
        %v3365 = vld [vmem:[%s17 + $0x48] sm:$0xff]
        %v3366 = vld [vmem:[%s17 + $0x50] sm:$0xff]
        %v3367 = vld [vmem:[%s17 + $0x58] sm:$0xff]
        %v3368 = vld [vmem:[%s17 + $0x60] sm:$0xff]
        %v3369 = vld [vmem:[%s17 + $0x68] sm:$0xff]
        %v3370 = vld [vmem:[%s17 + $0x70] sm:$0xff]
        %v3371 = vld [vmem:[%s17 + $0x78] sm:$0xff]
        %v3372 = vld [vmem:[%s17 + $0x80] sm:$0xff]
        %v3373 = vld [vmem:[%s17 + $0x88] sm:$0xff]
        %v3374 = vld [vmem:[%s17 + $0x90] sm:$0xff]
        %v3375 = vld [vmem:[%s17 + $0x98] sm:$0xff]
        %v3376 = vld [vmem:[%s17 + $0xa0] sm:$0xff]
        %v3377 = vld [vmem:[%s17 + $0xa8] sm:$0xff]
        %v3378 = vld [vmem:[%s17 + $0xb0] sm:$0xff]
        %v3379 = vld [vmem:[%s17 + $0xb8] sm:$0xff]
        %v3380 = vld [vmem:[%s17 + $0xc0] sm:$0xff]
        %v3381 = vld [vmem:[%s17 + $0xc8] sm:$0xff]
        %v3382 = vld [vmem:[%s17 + $0xd0] sm:$0xff]
        %v3383 = vld [vmem:[%s17 + $0xd8] sm:$0xff]
        %v3384 = vld [vmem:[%s17 + $0xe0] sm:$0xff]
        %v3385 = vld [vmem:[%s17 + $0xe8] sm:$0xff]
        %v3386 = vld [vmem:[%s17 + $0xf0] sm:$0xff]
        %v3387 = vld [vmem:[%s17 + $0xf8] sm:$0xff]
        %v3388 = vmul.f32 %v3258, 0.17677669
        %v3389 = vmul.f32 %v3262, 0.17677669
        %v3390 = vpack.c.bf16 %v3389, %v3388
        %v3391 = vpack.c.bf16 %v3305, %v3301
        %v3392 = vpack.c.bf16 %v3348, %v3344
        %vm3393 = vcmask 261120
        %v3395 = vsel %vm3393, %v3390, 0
        %v3398 = vsel %vm3393, %v3391, 0
        %3400 = vmatprep.subr.bf16.mxu0 0
        %3401 = vmatpush1.bf16.xpose.msra.mxu0 %v3398
        %3402 = vmatprep.subr.bf16.mxu0 0
        %3403 = vmatpush1.bf16.xpose.msra.mxu0 0
        %3404 = vmatprep.subr.bf16.mxu0 0
        %3405 = vmatpush1.bf16.xpose.msra.mxu0 0
        %3406 = vmatprep.subr.bf16.mxu0 0
        %3407 = vmatpush1.bf16.xpose.msra.mxu0 0
        %3408 = vmatprep.subr.bf16.mxu0 0
        %3409 = vmatpush1.bf16.xpose.msra.mxu0 0
        %3410 = vmatprep.subr.bf16.mxu0 0
        %3411 = vmatpush1.bf16.xpose.msra.mxu0 0
        %3412 = vmatprep.subr.bf16.mxu0 0
        %3413 = vmatpush1.bf16.xpose.msra.mxu0 0
        %3414 = vmatprep.subr.bf16.mxu0 0
        %3415 = vmatpush1.bf16.xpose.msra.mxu0 0
        %3416 = vmatprep.subr.bf16.mxu0 0
        %3417 = vmatpush1.bf16.xpose.msra.mxu0 0
        %3418 = vmatprep.subr.bf16.mxu0 0
        %3419 = vmatpush1.bf16.xpose.msra.mxu0 0
        %3420 = vmatprep.subr.bf16.mxu0 0
        %3421 = vmatpush1.bf16.xpose.msra.mxu0 0
        %3422 = vmatprep.subr.bf16.mxu0 0
        %3423 = vmatpush1.bf16.xpose.msra.mxu0 0
        %3424 = vmatprep.subr.bf16.mxu0 0
        %3425 = vmatpush1.bf16.xpose.msra.mxu0 0
        %3426 = vmatprep.subr.bf16.mxu0 0
        %3427 = vmatpush1.bf16.xpose.msra.mxu0 0
        %3428 = vmatprep.subr.bf16.mxu0 0
        %3429 = vmatpush1.bf16.xpose.msra.mxu0 0
        %3430 = vmatprep.subr.bf16.mxu0 0
        %3431 = vmatpush1.bf16.xpose.msra.mxu0 0
        %3432 = vmatprep.mubr.bf16.mxu0 0
        %3433 = vmatmul.mubr.bf16.gmra.mrb[0].mxu0 %v3395
        %v3434 = vpop.f32.mrb[0].mxu0
        %v3435 = vadd.f32 %v3355, %v3434
        %v3436 = vpop.f32.mrb[0].mxu0
        %v3437 = vpop.f32.mrb[0].mxu0
        %v3438 = vadd.f32 %v3355, %v3437
        %v3439 = vpop.f32.mrb[0].mxu0
        %3440 = vdwg.mxu0
        %vm3441 = vcmask 130048
        %v3442 = vsel %vm3441, %v3435, -inf
        %3443 = vmax.xlane.f32.xlu0 %v3442
        %v3444 = vpop.xlane.xlu0 %3443
        %v3445 = vsel %vm3441, %v3438, -inf
        %3446 = vmax.xlane.f32.xlu0 %v3445
        %v3447 = vpop.xlane.xlu0 %3446
        %v3448 = vsub.f32 %v3435, %v3444
        %v3449 = vsub.f32 %v3438, %v3447
        %v3450 = vmul.f32 %v3448, 1.442695
        %v3451 = vpow.pop %v3450
        %v3452 = vmul.f32 %v3449, 1.442695
        %v3453 = vpow.pop %v3452
        %v3454 = vsel %vm3441, %v3451, 0.0
        %3455 = vadd.xlane.f32.xlu0 %v3454
        %v3456 = vpop.xlane.xlu0 %3455
        %v3457 = vsel %vm3441, %v3453, 0.0
        %3458 = vadd.xlane.f32.xlu0 %v3457
        %v3459 = vpop.xlane.xlu0 %3458
        %v3460 = vrcp.pop %v3456
        %v3461 = vrcp.pop %v3459
        %v3462 = vmul.f32 %v3451, %v3460
        %v3463 = vmul.f32 %v3453, %v3461
        %v3464 = vpack.c.bf16 %v3463, %v3462
        %v3466 = vsel %vm3441, %v3464, 0
        %3468 = vmatprep.subr.bf16.mxu0 0
        %3469 = vmatpush1.bf16.msra.mxu0 %v3392
        %3470 = vmatprep.subr.bf16.mxu0 0
        %3471 = vmatpush1.bf16.msra.mxu0 0
        %3472 = vmatprep.subr.bf16.mxu0 0
        %3473 = vmatpush1.bf16.msra.mxu0 0
        %3474 = vmatprep.subr.bf16.mxu0 0
        %3475 = vmatpush1.bf16.msra.mxu0 0
        %3476 = vmatprep.subr.bf16.mxu0 0
        %3477 = vmatpush1.bf16.msra.mxu0 0
        %3478 = vmatprep.subr.bf16.mxu0 0
        %3479 = vmatpush1.bf16.msra.mxu0 0
        %3480 = vmatprep.subr.bf16.mxu0 0
        %3481 = vmatpush1.bf16.msra.mxu0 0
        %3482 = vmatprep.subr.bf16.mxu0 0
        %3483 = vmatpush1.bf16.msra.mxu0 0
        %3484 = vmatprep.subr.bf16.mxu0 0
        %3485 = vmatpush1.bf16.msra.mxu0 0
        %3486 = vmatprep.subr.bf16.mxu0 0
        %3487 = vmatpush1.bf16.msra.mxu0 0
        %3488 = vmatprep.subr.bf16.mxu0 0
        %3489 = vmatpush1.bf16.msra.mxu0 0
        %3490 = vmatprep.subr.bf16.mxu0 0
        %3491 = vmatpush1.bf16.msra.mxu0 0
        %3492 = vmatprep.subr.bf16.mxu0 0
        %3493 = vmatpush1.bf16.msra.mxu0 0
        %3494 = vmatprep.subr.bf16.mxu0 0
        %3495 = vmatpush1.bf16.msra.mxu0 0
        %3496 = vmatprep.subr.bf16.mxu0 0
        %3497 = vmatpush1.bf16.msra.mxu0 0
        %3498 = vmatprep.subr.bf16.mxu0 0
        %3499 = vmatpush1.bf16.msra.mxu0 0
        %3500 = vmatprep.mubr.bf16.mxu0 0
        %3501 = vmatmul.mubr.bf16.gmra.mrb[0].mxu0 %v3466
        %v3502 = vpop.f32.mrb[0].mxu0
        %v3503 = vadd.f32 0.0, %v3502
        %v3504 = vpop.f32.mrb[0].mxu0
        %v3505 = vpop.f32.mrb[0].mxu0
        %v3506 = vadd.f32 0.0, %v3505
        %v3507 = vpop.f32.mrb[0].mxu0
        %3508 = vdwg.mxu0
        %v3509 = vpack.c.bf16 %v3506, %v3503
        %3511 = vrot.lane.b32.xlu0 %v3390, 96
        %v3512 = vpop.permute.xlu0 %3511
        %3514 = vrot.lane.b32.xlu0 %v3391, 96
        %v3515 = vpop.permute.xlu0 %3514
        %v3517 = vsel %vm3393, %v3512, 0
        %v3520 = vsel %vm3393, %v3515, 0
        %3522 = vmatprep.subr.bf16.mxu0 0
        %3523 = vmatpush1.bf16.xpose.msra.mxu0 %v3520
        %3524 = vmatprep.subr.bf16.mxu0 0
        %3525 = vmatpush1.bf16.xpose.msra.mxu0 0
        %3526 = vmatprep.subr.bf16.mxu0 0
        %3527 = vmatpush1.bf16.xpose.msra.mxu0 0
        %3528 = vmatprep.subr.bf16.mxu0 0
        %3529 = vmatpush1.bf16.xpose.msra.mxu0 0
        %3530 = vmatprep.subr.bf16.mxu0 0
        %3531 = vmatpush1.bf16.xpose.msra.mxu0 0
        %3532 = vmatprep.subr.bf16.mxu0 0
        %3533 = vmatpush1.bf16.xpose.msra.mxu0 0
        %3534 = vmatprep.subr.bf16.mxu0 0
        %3535 = vmatpush1.bf16.xpose.msra.mxu0 0
        %3536 = vmatprep.subr.bf16.mxu0 0
        %3537 = vmatpush1.bf16.xpose.msra.mxu0 0
        %3538 = vmatprep.subr.bf16.mxu0 0
        %3539 = vmatpush1.bf16.xpose.msra.mxu0 0
        %3540 = vmatprep.subr.bf16.mxu0 0
        %3541 = vmatpush1.bf16.xpose.msra.mxu0 0
        %3542 = vmatprep.subr.bf16.mxu0 0
        %3543 = vmatpush1.bf16.xpose.msra.mxu0 0
        %3544 = vmatprep.subr.bf16.mxu0 0
        %3545 = vmatpush1.bf16.xpose.msra.mxu0 0
        %3546 = vmatprep.subr.bf16.mxu0 0
        %3547 = vmatpush1.bf16.xpose.msra.mxu0 0
        %3548 = vmatprep.subr.bf16.mxu0 0
        %3549 = vmatpush1.bf16.xpose.msra.mxu0 0
        %3550 = vmatprep.subr.bf16.mxu0 0
        %3551 = vmatpush1.bf16.xpose.msra.mxu0 0
        %3552 = vmatprep.subr.bf16.mxu0 0
        %3553 = vmatpush1.bf16.xpose.msra.mxu0 0
        %3554 = vmatprep.mubr.bf16.mxu0 0
        %3555 = vmatmul.mubr.bf16.gmra.mrb[0].mxu0 %v3517
        %v3556 = vpop.f32.mrb[0].mxu0
        %v3557 = vadd.f32 %v3355, %v3556
        %v3558 = vpop.f32.mrb[0].mxu0
        %v3559 = vpop.f32.mrb[0].mxu0
        %v3560 = vadd.f32 %v3355, %v3559
        %v3561 = vpop.f32.mrb[0].mxu0
        %3562 = vdwg.mxu0
        %v3563 = vsel %vm3441, %v3557, -inf
        %3564 = vmax.xlane.f32.xlu0 %v3563
        %v3565 = vpop.xlane.xlu0 %3564
        %v3566 = vsel %vm3441, %v3560, -inf
        %3567 = vmax.xlane.f32.xlu0 %v3566
        %v3568 = vpop.xlane.xlu0 %3567
        %v3569 = vsub.f32 %v3557, %v3565
        %v3570 = vsub.f32 %v3560, %v3568
        %v3571 = vmul.f32 %v3569, 1.442695
        %v3572 = vpow.pop %v3571
        %v3573 = vmul.f32 %v3570, 1.442695
        %v3574 = vpow.pop %v3573
        %v3575 = vsel %vm3441, %v3572, 0.0
        %3576 = vadd.xlane.f32.xlu0 %v3575
        %v3577 = vpop.xlane.xlu0 %3576
        %v3578 = vsel %vm3441, %v3574, 0.0
        %3579 = vadd.xlane.f32.xlu0 %v3578
        %v3580 = vpop.xlane.xlu0 %3579
        %v3581 = vrcp.pop %v3577
        %v3582 = vrcp.pop %v3580
        %v3583 = vmul.f32 %v3572, %v3581
        %v3584 = vmul.f32 %v3574, %v3582
        %v3585 = vpack.c.bf16 %v3584, %v3583
        %3587 = vrot.lane.b32.xlu0 %v3392, 96
        %v3588 = vpop.permute.xlu0 %3587
        %v3591 = vsel %vm3441, %v3585, 0
        %3593 = vmatprep.subr.bf16.mxu0 0
        %3594 = vmatpush1.bf16.msra.mxu0 %v3588
        %3595 = vmatprep.subr.bf16.mxu0 0
        %3596 = vmatpush1.bf16.msra.mxu0 0
        %3597 = vmatprep.subr.bf16.mxu0 0
        %3598 = vmatpush1.bf16.msra.mxu0 0
        %3599 = vmatprep.subr.bf16.mxu0 0
        %3600 = vmatpush1.bf16.msra.mxu0 0
        %3601 = vmatprep.subr.bf16.mxu0 0
        %3602 = vmatpush1.bf16.msra.mxu0 0
        %3603 = vmatprep.subr.bf16.mxu0 0
        %3604 = vmatpush1.bf16.msra.mxu0 0
        %3605 = vmatprep.subr.bf16.mxu0 0
        %3606 = vmatpush1.bf16.msra.mxu0 0
        %3607 = vmatprep.subr.bf16.mxu0 0
        %3608 = vmatpush1.bf16.msra.mxu0 0
        %3609 = vmatprep.subr.bf16.mxu0 0
        %3610 = vmatpush1.bf16.msra.mxu0 0
        %3611 = vmatprep.subr.bf16.mxu0 0
        %3612 = vmatpush1.bf16.msra.mxu0 0
        %3613 = vmatprep.subr.bf16.mxu0 0
        %3614 = vmatpush1.bf16.msra.mxu0 0
        %3615 = vmatprep.subr.bf16.mxu0 0
        %3616 = vmatpush1.bf16.msra.mxu0 0
        %3617 = vmatprep.subr.bf16.mxu0 0
        %3618 = vmatpush1.bf16.msra.mxu0 0
        %3619 = vmatprep.subr.bf16.mxu0 0
        %3620 = vmatpush1.bf16.msra.mxu0 0
        %3621 = vmatprep.subr.bf16.mxu0 0
        %3622 = vmatpush1.bf16.msra.mxu0 0
        %3623 = vmatprep.subr.bf16.mxu0 0
        %3624 = vmatpush1.bf16.msra.mxu0 0
        %3625 = vmatprep.mubr.bf16.mxu0 0
        %3626 = vmatmul.mubr.bf16.gmra.mrb[0].mxu0 %v3591
        %v3627 = vpop.f32.mrb[0].mxu0
        %v3628 = vadd.f32 0.0, %v3627
        %v3629 = vpop.f32.mrb[0].mxu0
        %v3630 = vpop.f32.mrb[0].mxu0
        %v3631 = vadd.f32 0.0, %v3630
        %v3632 = vpop.f32.mrb[0].mxu0
        %3633 = vdwg.mxu0
        %v3634 = vpack.c.bf16 %v3631, %v3628
        %v3639 = vunpack.c.l.b16 %v3360
        %v3640 = vunpack.c.h.b16 %v3360
        %v3641 = vunpack.c.l.b16 %v3361
        %v3642 = vunpack.c.h.b16 %v3361
        %v3643 = vunpack.c.l.b16 %v3362
        %v3644 = vunpack.c.h.b16 %v3362
        %v3645 = vunpack.c.l.b16 %v3363
        %v3646 = vunpack.c.h.b16 %v3363
        %v3647 = vpack.c.b16 %v3641, %v3639
        %v3648 = vpack.c.b16 %v3642, %v3640
        %v3649 = vpack.c.b16 %v3645, %v3643
        %v3650 = vpack.c.b16 %v3646, %v3644
        %v3656 = vsel %vm3393, %v3634, 0
        %3658 = vmatprep.subr.bf16.mxu0 %v3648
        %3659 = vmatpush1.bf16.msra.mxu0 %v3647
        %3660 = vmatprep.subr.bf16.mxu0 %v3650
        %3661 = vmatpush1.bf16.msra.mxu0 %v3649
        %3662 = vmatprep.subr.bf16.mxu0 0
        %3663 = vmatpush1.bf16.msra.mxu0 0
        %3664 = vmatprep.subr.bf16.mxu0 0
        %3665 = vmatpush1.bf16.msra.mxu0 0
        %3666 = vmatprep.subr.bf16.mxu0 0
        %3667 = vmatpush1.bf16.msra.mxu0 0
        %3668 = vmatprep.subr.bf16.mxu0 0
        %3669 = vmatpush1.bf16.msra.mxu0 0
        %3670 = vmatprep.subr.bf16.mxu0 0
        %3671 = vmatpush1.bf16.msra.mxu0 0
        %3672 = vmatprep.subr.bf16.mxu0 0
        %3673 = vmatpush1.bf16.msra.mxu0 0
        %3674 = vmatprep.subr.bf16.mxu0 0
        %3675 = vmatpush1.bf16.msra.mxu0 0
        %3676 = vmatprep.subr.bf16.mxu0 0
        %3677 = vmatpush1.bf16.msra.mxu0 0
        %3678 = vmatprep.subr.bf16.mxu0 0
        %3679 = vmatpush1.bf16.msra.mxu0 0
        %3680 = vmatprep.subr.bf16.mxu0 0
        %3681 = vmatpush1.bf16.msra.mxu0 0
        %3682 = vmatprep.subr.bf16.mxu0 0
        %3683 = vmatpush1.bf16.msra.mxu0 0
        %3684 = vmatprep.subr.bf16.mxu0 0
        %3685 = vmatpush1.bf16.msra.mxu0 0
        %3686 = vmatprep.subr.bf16.mxu0 0
        %3687 = vmatpush1.bf16.msra.mxu0 0
        %3688 = vmatprep.subr.bf16.mxu0 0
        %3689 = vmatpush1.bf16.msra.mxu0 0
        %3690 = vmatprep.mubr.bf16.mxu0 0
        %3691 = vmatmul.mubr.bf16.gmra.mrb[0].mxu0 %v3656
        %v3692 = vpop.f32.mrb[0].mxu0
        %v3693 = vadd.f32 0.0, %v3692
        %v3694 = vpop.f32.mrb[0].mxu0
        %v3695 = vadd.f32 0.0, %v3694
        %v3696 = vpop.f32.mrb[0].mxu0
        %v3697 = vadd.f32 0.0, %v3696
        %v3698 = vpop.f32.mrb[0].mxu0
        %v3699 = vadd.f32 0.0, %v3698
        %3700 = vdwg.mxu0
        %v3705 = vunpack.c.l.b16 %v3356
        %v3706 = vunpack.c.h.b16 %v3356
        %v3707 = vunpack.c.l.b16 %v3357
        %v3708 = vunpack.c.h.b16 %v3357
        %v3709 = vunpack.c.l.b16 %v3358
        %v3710 = vunpack.c.h.b16 %v3358
        %v3711 = vunpack.c.l.b16 %v3359
        %v3712 = vunpack.c.h.b16 %v3359
        %v3713 = vpack.c.b16 %v3707, %v3705
        %v3714 = vpack.c.b16 %v3708, %v3706
        %v3715 = vpack.c.b16 %v3711, %v3709
        %v3716 = vpack.c.b16 %v3712, %v3710
        %v3722 = vsel %vm3393, %v3509, 0
        %3724 = vmatprep.subr.bf16.mxu0 %v3714
        %3725 = vmatpush1.bf16.msra.mxu0 %v3713
        %3726 = vmatprep.subr.bf16.mxu0 %v3716
        %3727 = vmatpush1.bf16.msra.mxu0 %v3715
        %3728 = vmatprep.subr.bf16.mxu0 0
        %3729 = vmatpush1.bf16.msra.mxu0 0
        %3730 = vmatprep.subr.bf16.mxu0 0
        %3731 = vmatpush1.bf16.msra.mxu0 0
        %3732 = vmatprep.subr.bf16.mxu0 0
        %3733 = vmatpush1.bf16.msra.mxu0 0
        %3734 = vmatprep.subr.bf16.mxu0 0
        %3735 = vmatpush1.bf16.msra.mxu0 0
        %3736 = vmatprep.subr.bf16.mxu0 0
        %3737 = vmatpush1.bf16.msra.mxu0 0
        %3738 = vmatprep.subr.bf16.mxu0 0
        %3739 = vmatpush1.bf16.msra.mxu0 0
        %3740 = vmatprep.subr.bf16.mxu0 0
        %3741 = vmatpush1.bf16.msra.mxu0 0
        %3742 = vmatprep.subr.bf16.mxu0 0
        %3743 = vmatpush1.bf16.msra.mxu0 0
        %3744 = vmatprep.subr.bf16.mxu0 0
        %3745 = vmatpush1.bf16.msra.mxu0 0
        %3746 = vmatprep.subr.bf16.mxu0 0
        %3747 = vmatpush1.bf16.msra.mxu0 0
        %3748 = vmatprep.subr.bf16.mxu0 0
        %3749 = vmatpush1.bf16.msra.mxu0 0
        %3750 = vmatprep.subr.bf16.mxu0 0
        %3751 = vmatpush1.bf16.msra.mxu0 0
        %3752 = vmatprep.subr.bf16.mxu0 0
        %3753 = vmatpush1.bf16.msra.mxu0 0
        %3754 = vmatprep.subr.bf16.mxu0 0
        %3755 = vmatpush1.bf16.msra.mxu0 0
        %3756 = vmatprep.mubr.bf16.mxu0 0
        %3757 = vmatmul.mubr.bf16.gmra.mrb[0].mxu0 %v3722
        %v3758 = vpop.f32.mrb[0].mxu0
        %v3759 = vadd.f32 %v3693, %v3758
        %v3760 = vpop.f32.mrb[0].mxu0
        %v3761 = vadd.f32 %v3695, %v3760
        %v3762 = vpop.f32.mrb[0].mxu0
        %v3763 = vadd.f32 %v3697, %v3762
        %v3764 = vpop.f32.mrb[0].mxu0
        %v3765 = vadd.f32 %v3699, %v3764
        %3766 = vdwg.mxu0
        %3767 = vrot.lane.b32.xlu0 %v3390, 64
        %v3768 = vpop.permute.xlu0 %3767
        %3769 = vrot.lane.b32.xlu0 %v3391, 64
        %v3770 = vpop.permute.xlu0 %3769
        %v3772 = vsel %vm3393, %v3768, 0
        %v3775 = vsel %vm3393, %v3770, 0
        %3777 = vmatprep.subr.bf16.mxu0 0
        %3778 = vmatpush1.bf16.xpose.msra.mxu0 %v3775
        %3779 = vmatprep.subr.bf16.mxu0 0
        %3780 = vmatpush1.bf16.xpose.msra.mxu0 0
        %3781 = vmatprep.subr.bf16.mxu0 0
        %3782 = vmatpush1.bf16.xpose.msra.mxu0 0
        %3783 = vmatprep.subr.bf16.mxu0 0
        %3784 = vmatpush1.bf16.xpose.msra.mxu0 0
        %3785 = vmatprep.subr.bf16.mxu0 0
        %3786 = vmatpush1.bf16.xpose.msra.mxu0 0
        %3787 = vmatprep.subr.bf16.mxu0 0
        %3788 = vmatpush1.bf16.xpose.msra.mxu0 0
        %3789 = vmatprep.subr.bf16.mxu0 0
        %3790 = vmatpush1.bf16.xpose.msra.mxu0 0
        %3791 = vmatprep.subr.bf16.mxu0 0
        %3792 = vmatpush1.bf16.xpose.msra.mxu0 0
        %3793 = vmatprep.subr.bf16.mxu0 0
        %3794 = vmatpush1.bf16.xpose.msra.mxu0 0
        %3795 = vmatprep.subr.bf16.mxu0 0
        %3796 = vmatpush1.bf16.xpose.msra.mxu0 0
        %3797 = vmatprep.subr.bf16.mxu0 0
        %3798 = vmatpush1.bf16.xpose.msra.mxu0 0
        %3799 = vmatprep.subr.bf16.mxu0 0
        %3800 = vmatpush1.bf16.xpose.msra.mxu0 0
        %3801 = vmatprep.subr.bf16.mxu0 0
        %3802 = vmatpush1.bf16.xpose.msra.mxu0 0
        %3803 = vmatprep.subr.bf16.mxu0 0
        %3804 = vmatpush1.bf16.xpose.msra.mxu0 0
        %3805 = vmatprep.subr.bf16.mxu0 0
        %3806 = vmatpush1.bf16.xpose.msra.mxu0 0
        %3807 = vmatprep.subr.bf16.mxu0 0
        %3808 = vmatpush1.bf16.xpose.msra.mxu0 0
        %3809 = vmatprep.mubr.bf16.mxu0 0
        %3810 = vmatmul.mubr.bf16.gmra.mrb[0].mxu0 %v3772
        %v3811 = vpop.f32.mrb[0].mxu0
        %v3812 = vadd.f32 %v3355, %v3811
        %v3813 = vpop.f32.mrb[0].mxu0
        %v3814 = vpop.f32.mrb[0].mxu0
        %v3815 = vadd.f32 %v3355, %v3814
        %v3816 = vpop.f32.mrb[0].mxu0
        %3817 = vdwg.mxu0
        %v3818 = vsel %vm3441, %v3812, -inf
        %3819 = vmax.xlane.f32.xlu0 %v3818
        %v3820 = vpop.xlane.xlu0 %3819
        %v3821 = vsel %vm3441, %v3815, -inf
        %3822 = vmax.xlane.f32.xlu0 %v3821
        %v3823 = vpop.xlane.xlu0 %3822
        %v3824 = vsub.f32 %v3812, %v3820
        %v3825 = vsub.f32 %v3815, %v3823
        %v3826 = vmul.f32 %v3824, 1.442695
        %v3827 = vpow.pop %v3826
        %v3828 = vmul.f32 %v3825, 1.442695
        %v3829 = vpow.pop %v3828
        %v3830 = vsel %vm3441, %v3827, 0.0
        %3831 = vadd.xlane.f32.xlu0 %v3830
        %v3832 = vpop.xlane.xlu0 %3831
        %v3833 = vsel %vm3441, %v3829, 0.0
        %3834 = vadd.xlane.f32.xlu0 %v3833
        %v3835 = vpop.xlane.xlu0 %3834
        %v3836 = vrcp.pop %v3832
        %v3837 = vrcp.pop %v3835
        %v3838 = vmul.f32 %v3827, %v3836
        %v3839 = vmul.f32 %v3829, %v3837
        %v3840 = vpack.c.bf16 %v3839, %v3838
        %3841 = vrot.lane.b32.xlu0 %v3392, 64
        %v3842 = vpop.permute.xlu0 %3841
        %v3845 = vsel %vm3441, %v3840, 0
        %3847 = vmatprep.subr.bf16.mxu0 0
        %3848 = vmatpush1.bf16.msra.mxu0 %v3842
        %3849 = vmatprep.subr.bf16.mxu0 0
        %3850 = vmatpush1.bf16.msra.mxu0 0
        %3851 = vmatprep.subr.bf16.mxu0 0
        %3852 = vmatpush1.bf16.msra.mxu0 0
        %3853 = vmatprep.subr.bf16.mxu0 0
        %3854 = vmatpush1.bf16.msra.mxu0 0
        %3855 = vmatprep.subr.bf16.mxu0 0
        %3856 = vmatpush1.bf16.msra.mxu0 0
        %3857 = vmatprep.subr.bf16.mxu0 0
        %3858 = vmatpush1.bf16.msra.mxu0 0
        %3859 = vmatprep.subr.bf16.mxu0 0
        %3860 = vmatpush1.bf16.msra.mxu0 0
        %3861 = vmatprep.subr.bf16.mxu0 0
        %3862 = vmatpush1.bf16.msra.mxu0 0
        %3863 = vmatprep.subr.bf16.mxu0 0
        %3864 = vmatpush1.bf16.msra.mxu0 0
        %3865 = vmatprep.subr.bf16.mxu0 0
        %3866 = vmatpush1.bf16.msra.mxu0 0
        %3867 = vmatprep.subr.bf16.mxu0 0
        %3868 = vmatpush1.bf16.msra.mxu0 0
        %3869 = vmatprep.subr.bf16.mxu0 0
        %3870 = vmatpush1.bf16.msra.mxu0 0
        %3871 = vmatprep.subr.bf16.mxu0 0
        %3872 = vmatpush1.bf16.msra.mxu0 0
        %3873 = vmatprep.subr.bf16.mxu0 0
        %3874 = vmatpush1.bf16.msra.mxu0 0
        %3875 = vmatprep.subr.bf16.mxu0 0
        %3876 = vmatpush1.bf16.msra.mxu0 0
        %3877 = vmatprep.subr.bf16.mxu0 0
        %3878 = vmatpush1.bf16.msra.mxu0 0
        %3879 = vmatprep.mubr.bf16.mxu0 0
        %3880 = vmatmul.mubr.bf16.gmra.mrb[0].mxu0 %v3845
        %v3881 = vpop.f32.mrb[0].mxu0
        %v3882 = vadd.f32 0.0, %v3881
        %v3883 = vpop.f32.mrb[0].mxu0
        %v3884 = vpop.f32.mrb[0].mxu0
        %v3885 = vadd.f32 0.0, %v3884
        %v3886 = vpop.f32.mrb[0].mxu0
        %3887 = vdwg.mxu0
        %v3888 = vpack.c.bf16 %v3885, %v3882
        %v3893 = vunpack.c.l.b16 %v3364
        %v3894 = vunpack.c.h.b16 %v3364
        %v3895 = vunpack.c.l.b16 %v3365
        %v3896 = vunpack.c.h.b16 %v3365
        %v3897 = vunpack.c.l.b16 %v3366
        %v3898 = vunpack.c.h.b16 %v3366
        %v3899 = vunpack.c.l.b16 %v3367
        %v3900 = vunpack.c.h.b16 %v3367
        %v3901 = vpack.c.b16 %v3895, %v3893
        %v3902 = vpack.c.b16 %v3896, %v3894
        %v3903 = vpack.c.b16 %v3899, %v3897
        %v3904 = vpack.c.b16 %v3900, %v3898
        %v3910 = vsel %vm3393, %v3888, 0
        %3912 = vmatprep.subr.bf16.mxu0 %v3902
        %3913 = vmatpush1.bf16.msra.mxu0 %v3901
        %3914 = vmatprep.subr.bf16.mxu0 %v3904
        %3915 = vmatpush1.bf16.msra.mxu0 %v3903
        %3916 = vmatprep.subr.bf16.mxu0 0
        %3917 = vmatpush1.bf16.msra.mxu0 0
        %3918 = vmatprep.subr.bf16.mxu0 0
        %3919 = vmatpush1.bf16.msra.mxu0 0
        %3920 = vmatprep.subr.bf16.mxu0 0
        %3921 = vmatpush1.bf16.msra.mxu0 0
        %3922 = vmatprep.subr.bf16.mxu0 0
        %3923 = vmatpush1.bf16.msra.mxu0 0
        %3924 = vmatprep.subr.bf16.mxu0 0
        %3925 = vmatpush1.bf16.msra.mxu0 0
        %3926 = vmatprep.subr.bf16.mxu0 0
        %3927 = vmatpush1.bf16.msra.mxu0 0
        %3928 = vmatprep.subr.bf16.mxu0 0
        %3929 = vmatpush1.bf16.msra.mxu0 0
        %3930 = vmatprep.subr.bf16.mxu0 0
        %3931 = vmatpush1.bf16.msra.mxu0 0
        %3932 = vmatprep.subr.bf16.mxu0 0
        %3933 = vmatpush1.bf16.msra.mxu0 0
        %3934 = vmatprep.subr.bf16.mxu0 0
        %3935 = vmatpush1.bf16.msra.mxu0 0
        %3936 = vmatprep.subr.bf16.mxu0 0
        %3937 = vmatpush1.bf16.msra.mxu0 0
        %3938 = vmatprep.subr.bf16.mxu0 0
        %3939 = vmatpush1.bf16.msra.mxu0 0
        %3940 = vmatprep.subr.bf16.mxu0 0
        %3941 = vmatpush1.bf16.msra.mxu0 0
        %3942 = vmatprep.subr.bf16.mxu0 0
        %3943 = vmatpush1.bf16.msra.mxu0 0
        %3944 = vmatprep.mubr.bf16.mxu0 0
        %3945 = vmatmul.mubr.bf16.gmra.mrb[0].mxu0 %v3910
        %v3946 = vpop.f32.mrb[0].mxu0
        %v3947 = vadd.f32 0.0, %v3946
        %v3948 = vpop.f32.mrb[0].mxu0
        %v3949 = vadd.f32 0.0, %v3948
        %v3950 = vpop.f32.mrb[0].mxu0
        %v3951 = vadd.f32 0.0, %v3950
        %v3952 = vpop.f32.mrb[0].mxu0
        %v3953 = vadd.f32 0.0, %v3952
        %3954 = vdwg.mxu0
        %v3955 = vadd.f32 %v3759, %v3947
        %v3956 = vadd.f32 %v3761, %v3949
        %v3957 = vadd.f32 %v3763, %v3951
        %v3958 = vadd.f32 %v3765, %v3953
        %3959 = vrot.lane.b32.xlu0 %v3390, 32
        %v3960 = vpop.permute.xlu0 %3959
        %3961 = vrot.lane.b32.xlu0 %v3391, 32
        %v3962 = vpop.permute.xlu0 %3961
        %v3964 = vsel %vm3393, %v3960, 0
        %v3967 = vsel %vm3393, %v3962, 0
        %3969 = vmatprep.subr.bf16.mxu0 0
        %3970 = vmatpush1.bf16.xpose.msra.mxu0 %v3967
        %3971 = vmatprep.subr.bf16.mxu0 0
        %3972 = vmatpush1.bf16.xpose.msra.mxu0 0
        %3973 = vmatprep.subr.bf16.mxu0 0
        %3974 = vmatpush1.bf16.xpose.msra.mxu0 0
        %3975 = vmatprep.subr.bf16.mxu0 0
        %3976 = vmatpush1.bf16.xpose.msra.mxu0 0
        %3977 = vmatprep.subr.bf16.mxu0 0
        %3978 = vmatpush1.bf16.xpose.msra.mxu0 0
        %3979 = vmatprep.subr.bf16.mxu0 0
        %3980 = vmatpush1.bf16.xpose.msra.mxu0 0
        %3981 = vmatprep.subr.bf16.mxu0 0
        %3982 = vmatpush1.bf16.xpose.msra.mxu0 0
        %3983 = vmatprep.subr.bf16.mxu0 0
        %3984 = vmatpush1.bf16.xpose.msra.mxu0 0
        %3985 = vmatprep.subr.bf16.mxu0 0
        %3986 = vmatpush1.bf16.xpose.msra.mxu0 0
        %3987 = vmatprep.subr.bf16.mxu0 0
        %3988 = vmatpush1.bf16.xpose.msra.mxu0 0
        %3989 = vmatprep.subr.bf16.mxu0 0
        %3990 = vmatpush1.bf16.xpose.msra.mxu0 0
        %3991 = vmatprep.subr.bf16.mxu0 0
        %3992 = vmatpush1.bf16.xpose.msra.mxu0 0
        %3993 = vmatprep.subr.bf16.mxu0 0
        %3994 = vmatpush1.bf16.xpose.msra.mxu0 0
        %3995 = vmatprep.subr.bf16.mxu0 0
        %3996 = vmatpush1.bf16.xpose.msra.mxu0 0
        %3997 = vmatprep.subr.bf16.mxu0 0
        %3998 = vmatpush1.bf16.xpose.msra.mxu0 0
        %3999 = vmatprep.subr.bf16.mxu0 0
        %4000 = vmatpush1.bf16.xpose.msra.mxu0 0
        %4001 = vmatprep.mubr.bf16.mxu0 0
        %4002 = vmatmul.mubr.bf16.gmra.mrb[0].mxu0 %v3964
        %v4003 = vpop.f32.mrb[0].mxu0
        %v4004 = vadd.f32 %v3355, %v4003
        %v4005 = vpop.f32.mrb[0].mxu0
        %v4006 = vpop.f32.mrb[0].mxu0
        %v4007 = vadd.f32 %v3355, %v4006
        %v4008 = vpop.f32.mrb[0].mxu0
        %4009 = vdwg.mxu0
        %v4010 = vsel %vm3441, %v4004, -inf
        %4011 = vmax.xlane.f32.xlu0 %v4010
        %v4012 = vpop.xlane.xlu0 %4011
        %v4013 = vsel %vm3441, %v4007, -inf
        %4014 = vmax.xlane.f32.xlu0 %v4013
        %v4015 = vpop.xlane.xlu0 %4014
        %v4016 = vsub.f32 %v4004, %v4012
        %v4017 = vsub.f32 %v4007, %v4015
        %v4018 = vmul.f32 %v4016, 1.442695
        %v4019 = vpow.pop %v4018
        %v4020 = vmul.f32 %v4017, 1.442695
        %v4021 = vpow.pop %v4020
        %v4022 = vsel %vm3441, %v4019, 0.0
        %4023 = vadd.xlane.f32.xlu0 %v4022
        %v4024 = vpop.xlane.xlu0 %4023
        %v4025 = vsel %vm3441, %v4021, 0.0
        %4026 = vadd.xlane.f32.xlu0 %v4025
        %v4027 = vpop.xlane.xlu0 %4026
        %v4028 = vrcp.pop %v4024
        %v4029 = vrcp.pop %v4027
        %v4030 = vmul.f32 %v4019, %v4028
        %v4031 = vmul.f32 %v4021, %v4029
        %v4032 = vpack.c.bf16 %v4031, %v4030
        %4033 = vrot.lane.b32.xlu0 %v3392, 32
        %v4034 = vpop.permute.xlu0 %4033
        %v4037 = vsel %vm3441, %v4032, 0
        %4039 = vmatprep.subr.bf16.mxu0 0
        %4040 = vmatpush1.bf16.msra.mxu0 %v4034
        %4041 = vmatprep.subr.bf16.mxu0 0
        %4042 = vmatpush1.bf16.msra.mxu0 0
        %4043 = vmatprep.subr.bf16.mxu0 0
        %4044 = vmatpush1.bf16.msra.mxu0 0
        %4045 = vmatprep.subr.bf16.mxu0 0
        %4046 = vmatpush1.bf16.msra.mxu0 0
        %4047 = vmatprep.subr.bf16.mxu0 0
        %4048 = vmatpush1.bf16.msra.mxu0 0
        %4049 = vmatprep.subr.bf16.mxu0 0
        %4050 = vmatpush1.bf16.msra.mxu0 0
        %4051 = vmatprep.subr.bf16.mxu0 0
        %4052 = vmatpush1.bf16.msra.mxu0 0
        %4053 = vmatprep.subr.bf16.mxu0 0
        %4054 = vmatpush1.bf16.msra.mxu0 0
        %4055 = vmatprep.subr.bf16.mxu0 0
        %4056 = vmatpush1.bf16.msra.mxu0 0
        %4057 = vmatprep.subr.bf16.mxu0 0
        %4058 = vmatpush1.bf16.msra.mxu0 0
        %4059 = vmatprep.subr.bf16.mxu0 0
        %4060 = vmatpush1.bf16.msra.mxu0 0
        %4061 = vmatprep.subr.bf16.mxu0 0
        %4062 = vmatpush1.bf16.msra.mxu0 0
        %4063 = vmatprep.subr.bf16.mxu0 0
        %4064 = vmatpush1.bf16.msra.mxu0 0
        %4065 = vmatprep.subr.bf16.mxu0 0
        %4066 = vmatpush1.bf16.msra.mxu0 0
        %4067 = vmatprep.subr.bf16.mxu0 0
        %4068 = vmatpush1.bf16.msra.mxu0 0
        %4069 = vmatprep.subr.bf16.mxu0 0
        %4070 = vmatpush1.bf16.msra.mxu0 0
        %4071 = vmatprep.mubr.bf16.mxu0 0
        %4072 = vmatmul.mubr.bf16.gmra.mrb[0].mxu0 %v4037
        %v4073 = vpop.f32.mrb[0].mxu0
        %v4074 = vadd.f32 0.0, %v4073
        %v4075 = vpop.f32.mrb[0].mxu0
        %v4076 = vpop.f32.mrb[0].mxu0
        %v4077 = vadd.f32 0.0, %v4076
        %v4078 = vpop.f32.mrb[0].mxu0
        %4079 = vdwg.mxu0
        %v4080 = vpack.c.bf16 %v4077, %v4074
        %v4085 = vunpack.c.l.b16 %v3368
        %v4086 = vunpack.c.h.b16 %v3368
        %v4087 = vunpack.c.l.b16 %v3369
        %v4088 = vunpack.c.h.b16 %v3369
        %v4089 = vunpack.c.l.b16 %v3370
        %v4090 = vunpack.c.h.b16 %v3370
        %v4091 = vunpack.c.l.b16 %v3371
        %v4092 = vunpack.c.h.b16 %v3371
        %v4093 = vpack.c.b16 %v4087, %v4085
        %v4094 = vpack.c.b16 %v4088, %v4086
        %v4095 = vpack.c.b16 %v4091, %v4089
        %v4096 = vpack.c.b16 %v4092, %v4090
        %v4102 = vsel %vm3393, %v4080, 0
        %4104 = vmatprep.subr.bf16.mxu0 %v4094
        %4105 = vmatpush1.bf16.msra.mxu0 %v4093
        %4106 = vmatprep.subr.bf16.mxu0 %v4096
        %4107 = vmatpush1.bf16.msra.mxu0 %v4095
        %4108 = vmatprep.subr.bf16.mxu0 0
        %4109 = vmatpush1.bf16.msra.mxu0 0
        %4110 = vmatprep.subr.bf16.mxu0 0
        %4111 = vmatpush1.bf16.msra.mxu0 0
        %4112 = vmatprep.subr.bf16.mxu0 0
        %4113 = vmatpush1.bf16.msra.mxu0 0
        %4114 = vmatprep.subr.bf16.mxu0 0
        %4115 = vmatpush1.bf16.msra.mxu0 0
        %4116 = vmatprep.subr.bf16.mxu0 0
        %4117 = vmatpush1.bf16.msra.mxu0 0
        %4118 = vmatprep.subr.bf16.mxu0 0
        %4119 = vmatpush1.bf16.msra.mxu0 0
        %4120 = vmatprep.subr.bf16.mxu0 0
        %4121 = vmatpush1.bf16.msra.mxu0 0
        %4122 = vmatprep.subr.bf16.mxu0 0
        %4123 = vmatpush1.bf16.msra.mxu0 0
        %4124 = vmatprep.subr.bf16.mxu0 0
        %4125 = vmatpush1.bf16.msra.mxu0 0
        %4126 = vmatprep.subr.bf16.mxu0 0
        %4127 = vmatpush1.bf16.msra.mxu0 0
        %4128 = vmatprep.subr.bf16.mxu0 0
        %4129 = vmatpush1.bf16.msra.mxu0 0
        %4130 = vmatprep.subr.bf16.mxu0 0
        %4131 = vmatpush1.bf16.msra.mxu0 0
        %4132 = vmatprep.subr.bf16.mxu0 0
        %4133 = vmatpush1.bf16.msra.mxu0 0
        %4134 = vmatprep.subr.bf16.mxu0 0
        %4135 = vmatpush1.bf16.msra.mxu0 0
        %4136 = vmatprep.mubr.bf16.mxu0 0
        %4137 = vmatmul.mubr.bf16.gmra.mrb[0].mxu0 %v4102
        %v4138 = vpop.f32.mrb[0].mxu0
        %v4139 = vadd.f32 0.0, %v4138
        %v4140 = vpop.f32.mrb[0].mxu0
        %v4141 = vadd.f32 0.0, %v4140
        %v4142 = vpop.f32.mrb[0].mxu0
        %v4143 = vadd.f32 0.0, %v4142
        %v4144 = vpop.f32.mrb[0].mxu0
        %v4145 = vadd.f32 0.0, %v4144
        %4146 = vdwg.mxu0
        %v4147 = vadd.f32 %v3955, %v4139
        %v4148 = vadd.f32 %v3956, %v4141
        %v4149 = vadd.f32 %v3957, %v4143
        %v4150 = vadd.f32 %v3958, %v4145
        %v4151 = vmul.f32 %v3260, 0.17677669
        %v4152 = vmul.f32 %v3264, 0.17677669
        %v4153 = vpack.c.bf16 %v4152, %v4151
        %v4154 = vpack.c.bf16 %v3307, %v3303
        %v4155 = vpack.c.bf16 %v3350, %v3346
        %v4157 = vsel %vm3393, %v4153, 0
        %v4160 = vsel %vm3393, %v4154, 0
        %4162 = vmatprep.subr.bf16.mxu0 0
        %4163 = vmatpush1.bf16.xpose.msra.mxu0 %v4160
        %4164 = vmatprep.subr.bf16.mxu0 0
        %4165 = vmatpush1.bf16.xpose.msra.mxu0 0
        %4166 = vmatprep.subr.bf16.mxu0 0
        %4167 = vmatpush1.bf16.xpose.msra.mxu0 0
        %4168 = vmatprep.subr.bf16.mxu0 0
        %4169 = vmatpush1.bf16.xpose.msra.mxu0 0
        %4170 = vmatprep.subr.bf16.mxu0 0
        %4171 = vmatpush1.bf16.xpose.msra.mxu0 0
        %4172 = vmatprep.subr.bf16.mxu0 0
        %4173 = vmatpush1.bf16.xpose.msra.mxu0 0
        %4174 = vmatprep.subr.bf16.mxu0 0
        %4175 = vmatpush1.bf16.xpose.msra.mxu0 0
        %4176 = vmatprep.subr.bf16.mxu0 0
        %4177 = vmatpush1.bf16.xpose.msra.mxu0 0
        %4178 = vmatprep.subr.bf16.mxu0 0
        %4179 = vmatpush1.bf16.xpose.msra.mxu0 0
        %4180 = vmatprep.subr.bf16.mxu0 0
        %4181 = vmatpush1.bf16.xpose.msra.mxu0 0
        %4182 = vmatprep.subr.bf16.mxu0 0
        %4183 = vmatpush1.bf16.xpose.msra.mxu0 0
        %4184 = vmatprep.subr.bf16.mxu0 0
        %4185 = vmatpush1.bf16.xpose.msra.mxu0 0
        %4186 = vmatprep.subr.bf16.mxu0 0
        %4187 = vmatpush1.bf16.xpose.msra.mxu0 0
        %4188 = vmatprep.subr.bf16.mxu0 0
        %4189 = vmatpush1.bf16.xpose.msra.mxu0 0
        %4190 = vmatprep.subr.bf16.mxu0 0
        %4191 = vmatpush1.bf16.xpose.msra.mxu0 0
        %4192 = vmatprep.subr.bf16.mxu0 0
        %4193 = vmatpush1.bf16.xpose.msra.mxu0 0
        %4194 = vmatprep.mubr.bf16.mxu0 0
        %4195 = vmatmul.mubr.bf16.gmra.mrb[0].mxu0 %v4157
        %v4196 = vpop.f32.mrb[0].mxu0
        %v4197 = vadd.f32 %v3355, %v4196
        %v4198 = vpop.f32.mrb[0].mxu0
        %v4199 = vpop.f32.mrb[0].mxu0
        %v4200 = vadd.f32 %v3355, %v4199
        %v4201 = vpop.f32.mrb[0].mxu0
        %4202 = vdwg.mxu0
        %v4203 = vsel %vm3441, %v4197, -inf
        %4204 = vmax.xlane.f32.xlu0 %v4203
        %v4205 = vpop.xlane.xlu0 %4204
        %v4206 = vsel %vm3441, %v4200, -inf
        %4207 = vmax.xlane.f32.xlu0 %v4206
        %v4208 = vpop.xlane.xlu0 %4207
        %v4209 = vsub.f32 %v4197, %v4205
        %v4210 = vsub.f32 %v4200, %v4208
        %v4211 = vmul.f32 %v4209, 1.442695
        %v4212 = vpow.pop %v4211
        %v4213 = vmul.f32 %v4210, 1.442695
        %v4214 = vpow.pop %v4213
        %v4215 = vsel %vm3441, %v4212, 0.0
        %4216 = vadd.xlane.f32.xlu0 %v4215
        %v4217 = vpop.xlane.xlu0 %4216
        %v4218 = vsel %vm3441, %v4214, 0.0
        %4219 = vadd.xlane.f32.xlu0 %v4218
        %v4220 = vpop.xlane.xlu0 %4219
        %v4221 = vrcp.pop %v4217
        %v4222 = vrcp.pop %v4220
        %v4223 = vmul.f32 %v4212, %v4221
        %v4224 = vmul.f32 %v4214, %v4222
        %v4225 = vpack.c.bf16 %v4224, %v4223
        %v4227 = vsel %vm3441, %v4225, 0
        %4229 = vmatprep.subr.bf16.mxu0 0
        %4230 = vmatpush1.bf16.msra.mxu0 %v4155
        %4231 = vmatprep.subr.bf16.mxu0 0
        %4232 = vmatpush1.bf16.msra.mxu0 0
        %4233 = vmatprep.subr.bf16.mxu0 0
        %4234 = vmatpush1.bf16.msra.mxu0 0
        %4235 = vmatprep.subr.bf16.mxu0 0
        %4236 = vmatpush1.bf16.msra.mxu0 0
        %4237 = vmatprep.subr.bf16.mxu0 0
        %4238 = vmatpush1.bf16.msra.mxu0 0
        %4239 = vmatprep.subr.bf16.mxu0 0
        %4240 = vmatpush1.bf16.msra.mxu0 0
        %4241 = vmatprep.subr.bf16.mxu0 0
        %4242 = vmatpush1.bf16.msra.mxu0 0
        %4243 = vmatprep.subr.bf16.mxu0 0
        %4244 = vmatpush1.bf16.msra.mxu0 0
        %4245 = vmatprep.subr.bf16.mxu0 0
        %4246 = vmatpush1.bf16.msra.mxu0 0
        %4247 = vmatprep.subr.bf16.mxu0 0
        %4248 = vmatpush1.bf16.msra.mxu0 0
        %4249 = vmatprep.subr.bf16.mxu0 0
        %4250 = vmatpush1.bf16.msra.mxu0 0
        %4251 = vmatprep.subr.bf16.mxu0 0
        %4252 = vmatpush1.bf16.msra.mxu0 0
        %4253 = vmatprep.subr.bf16.mxu0 0
        %4254 = vmatpush1.bf16.msra.mxu0 0
        %4255 = vmatprep.subr.bf16.mxu0 0
        %4256 = vmatpush1.bf16.msra.mxu0 0
        %4257 = vmatprep.subr.bf16.mxu0 0
        %4258 = vmatpush1.bf16.msra.mxu0 0
        %4259 = vmatprep.subr.bf16.mxu0 0
        %4260 = vmatpush1.bf16.msra.mxu0 0
        %4261 = vmatprep.mubr.bf16.mxu0 0
        %4262 = vmatmul.mubr.bf16.gmra.mrb[0].mxu0 %v4227
        %v4263 = vpop.f32.mrb[0].mxu0
        %v4264 = vadd.f32 0.0, %v4263
        %v4265 = vpop.f32.mrb[0].mxu0
        %v4266 = vpop.f32.mrb[0].mxu0
        %v4267 = vadd.f32 0.0, %v4266
        %v4268 = vpop.f32.mrb[0].mxu0
        %4269 = vdwg.mxu0
        %v4270 = vpack.c.bf16 %v4267, %v4264
        %v4275 = vunpack.c.l.b16 %v3372
        %v4276 = vunpack.c.h.b16 %v3372
        %v4277 = vunpack.c.l.b16 %v3373
        %v4278 = vunpack.c.h.b16 %v3373
        %v4279 = vunpack.c.l.b16 %v3374
        %v4280 = vunpack.c.h.b16 %v3374
        %v4281 = vunpack.c.l.b16 %v3375
        %v4282 = vunpack.c.h.b16 %v3375
        %v4283 = vpack.c.b16 %v4277, %v4275
        %v4284 = vpack.c.b16 %v4278, %v4276
        %v4285 = vpack.c.b16 %v4281, %v4279
        %v4286 = vpack.c.b16 %v4282, %v4280
        %v4292 = vsel %vm3393, %v4270, 0
        %4294 = vmatprep.subr.bf16.mxu0 %v4284
        %4295 = vmatpush1.bf16.msra.mxu0 %v4283
        %4296 = vmatprep.subr.bf16.mxu0 %v4286
        %4297 = vmatpush1.bf16.msra.mxu0 %v4285
        %4298 = vmatprep.subr.bf16.mxu0 0
        %4299 = vmatpush1.bf16.msra.mxu0 0
        %4300 = vmatprep.subr.bf16.mxu0 0
        %4301 = vmatpush1.bf16.msra.mxu0 0
        %4302 = vmatprep.subr.bf16.mxu0 0
        %4303 = vmatpush1.bf16.msra.mxu0 0
        %4304 = vmatprep.subr.bf16.mxu0 0
        %4305 = vmatpush1.bf16.msra.mxu0 0
        %4306 = vmatprep.subr.bf16.mxu0 0
        %4307 = vmatpush1.bf16.msra.mxu0 0
        %4308 = vmatprep.subr.bf16.mxu0 0
        %4309 = vmatpush1.bf16.msra.mxu0 0
        %4310 = vmatprep.subr.bf16.mxu0 0
        %4311 = vmatpush1.bf16.msra.mxu0 0
        %4312 = vmatprep.subr.bf16.mxu0 0
        %4313 = vmatpush1.bf16.msra.mxu0 0
        %4314 = vmatprep.subr.bf16.mxu0 0
        %4315 = vmatpush1.bf16.msra.mxu0 0
        %4316 = vmatprep.subr.bf16.mxu0 0
        %4317 = vmatpush1.bf16.msra.mxu0 0
        %4318 = vmatprep.subr.bf16.mxu0 0
        %4319 = vmatpush1.bf16.msra.mxu0 0
        %4320 = vmatprep.subr.bf16.mxu0 0
        %4321 = vmatpush1.bf16.msra.mxu0 0
        %4322 = vmatprep.subr.bf16.mxu0 0
        %4323 = vmatpush1.bf16.msra.mxu0 0
        %4324 = vmatprep.subr.bf16.mxu0 0
        %4325 = vmatpush1.bf16.msra.mxu0 0
        %4326 = vmatprep.mubr.bf16.mxu0 0
        %4327 = vmatmul.mubr.bf16.gmra.mrb[0].mxu0 %v4292
        %v4328 = vpop.f32.mrb[0].mxu0
        %v4329 = vadd.f32 0.0, %v4328
        %v4330 = vpop.f32.mrb[0].mxu0
        %v4331 = vadd.f32 0.0, %v4330
        %v4332 = vpop.f32.mrb[0].mxu0
        %v4333 = vadd.f32 0.0, %v4332
        %v4334 = vpop.f32.mrb[0].mxu0
        %v4335 = vadd.f32 0.0, %v4334
        %4336 = vdwg.mxu0
        %v4337 = vadd.f32 %v4147, %v4329
        %v4338 = vadd.f32 %v4148, %v4331
        %v4339 = vadd.f32 %v4149, %v4333
        %v4340 = vadd.f32 %v4150, %v4335
        %4342 = vrot.lane.b32.xlu0 %v4153, 96
        %v4343 = vpop.permute.xlu0 %4342
        %4345 = vrot.lane.b32.xlu0 %v4154, 96
        %v4346 = vpop.permute.xlu0 %4345
        %v4348 = vsel %vm3393, %v4343, 0
        %v4351 = vsel %vm3393, %v4346, 0
        %4353 = vmatprep.subr.bf16.mxu0 0
        %4354 = vmatpush1.bf16.xpose.msra.mxu0 %v4351
        %4355 = vmatprep.subr.bf16.mxu0 0
        %4356 = vmatpush1.bf16.xpose.msra.mxu0 0
        %4357 = vmatprep.subr.bf16.mxu0 0
        %4358 = vmatpush1.bf16.xpose.msra.mxu0 0
        %4359 = vmatprep.subr.bf16.mxu0 0
        %4360 = vmatpush1.bf16.xpose.msra.mxu0 0
        %4361 = vmatprep.subr.bf16.mxu0 0
        %4362 = vmatpush1.bf16.xpose.msra.mxu0 0
        %4363 = vmatprep.subr.bf16.mxu0 0
        %4364 = vmatpush1.bf16.xpose.msra.mxu0 0
        %4365 = vmatprep.subr.bf16.mxu0 0
        %4366 = vmatpush1.bf16.xpose.msra.mxu0 0
        %4367 = vmatprep.subr.bf16.mxu0 0
        %4368 = vmatpush1.bf16.xpose.msra.mxu0 0
        %4369 = vmatprep.subr.bf16.mxu0 0
        %4370 = vmatpush1.bf16.xpose.msra.mxu0 0
        %4371 = vmatprep.subr.bf16.mxu0 0
        %4372 = vmatpush1.bf16.xpose.msra.mxu0 0
        %4373 = vmatprep.subr.bf16.mxu0 0
        %4374 = vmatpush1.bf16.xpose.msra.mxu0 0
        %4375 = vmatprep.subr.bf16.mxu0 0
        %4376 = vmatpush1.bf16.xpose.msra.mxu0 0
        %4377 = vmatprep.subr.bf16.mxu0 0
        %4378 = vmatpush1.bf16.xpose.msra.mxu0 0
        %4379 = vmatprep.subr.bf16.mxu0 0
        %4380 = vmatpush1.bf16.xpose.msra.mxu0 0
        %4381 = vmatprep.subr.bf16.mxu0 0
        %4382 = vmatpush1.bf16.xpose.msra.mxu0 0
        %4383 = vmatprep.subr.bf16.mxu0 0
        %4384 = vmatpush1.bf16.xpose.msra.mxu0 0
        %4385 = vmatprep.mubr.bf16.mxu0 0
        %4386 = vmatmul.mubr.bf16.gmra.mrb[0].mxu0 %v4348
        %v4387 = vpop.f32.mrb[0].mxu0
        %v4388 = vadd.f32 %v3355, %v4387
        %v4389 = vpop.f32.mrb[0].mxu0
        %v4390 = vpop.f32.mrb[0].mxu0
        %v4391 = vadd.f32 %v3355, %v4390
        %v4392 = vpop.f32.mrb[0].mxu0
        %4393 = vdwg.mxu0
        %v4394 = vsel %vm3441, %v4388, -inf
        %4395 = vmax.xlane.f32.xlu0 %v4394
        %v4396 = vpop.xlane.xlu0 %4395
        %v4397 = vsel %vm3441, %v4391, -inf
        %4398 = vmax.xlane.f32.xlu0 %v4397
        %v4399 = vpop.xlane.xlu0 %4398
        %v4400 = vsub.f32 %v4388, %v4396
        %v4401 = vsub.f32 %v4391, %v4399
        %v4402 = vmul.f32 %v4400, 1.442695
        %v4403 = vpow.pop %v4402
        %v4404 = vmul.f32 %v4401, 1.442695
        %v4405 = vpow.pop %v4404
        %v4406 = vsel %vm3441, %v4403, 0.0
        %4407 = vadd.xlane.f32.xlu0 %v4406
        %v4408 = vpop.xlane.xlu0 %4407
        %v4409 = vsel %vm3441, %v4405, 0.0
        %4410 = vadd.xlane.f32.xlu0 %v4409
        %v4411 = vpop.xlane.xlu0 %4410
        %v4412 = vrcp.pop %v4408
        %v4413 = vrcp.pop %v4411
        %v4414 = vmul.f32 %v4403, %v4412
        %v4415 = vmul.f32 %v4405, %v4413
        %v4416 = vpack.c.bf16 %v4415, %v4414
        %4418 = vrot.lane.b32.xlu0 %v4155, 96
        %v4419 = vpop.permute.xlu0 %4418
        %v4422 = vsel %vm3441, %v4416, 0
        %4424 = vmatprep.subr.bf16.mxu0 0
        %4425 = vmatpush1.bf16.msra.mxu0 %v4419
        %4426 = vmatprep.subr.bf16.mxu0 0
        %4427 = vmatpush1.bf16.msra.mxu0 0
        %4428 = vmatprep.subr.bf16.mxu0 0
        %4429 = vmatpush1.bf16.msra.mxu0 0
        %4430 = vmatprep.subr.bf16.mxu0 0
        %4431 = vmatpush1.bf16.msra.mxu0 0
        %4432 = vmatprep.subr.bf16.mxu0 0
        %4433 = vmatpush1.bf16.msra.mxu0 0
        %4434 = vmatprep.subr.bf16.mxu0 0
        %4435 = vmatpush1.bf16.msra.mxu0 0
        %4436 = vmatprep.subr.bf16.mxu0 0
        %4437 = vmatpush1.bf16.msra.mxu0 0
        %4438 = vmatprep.subr.bf16.mxu0 0
        %4439 = vmatpush1.bf16.msra.mxu0 0
        %4440 = vmatprep.subr.bf16.mxu0 0
        %4441 = vmatpush1.bf16.msra.mxu0 0
        %4442 = vmatprep.subr.bf16.mxu0 0
        %4443 = vmatpush1.bf16.msra.mxu0 0
        %4444 = vmatprep.subr.bf16.mxu0 0
        %4445 = vmatpush1.bf16.msra.mxu0 0
        %4446 = vmatprep.subr.bf16.mxu0 0
        %4447 = vmatpush1.bf16.msra.mxu0 0
        %4448 = vmatprep.subr.bf16.mxu0 0
        %4449 = vmatpush1.bf16.msra.mxu0 0
        %4450 = vmatprep.subr.bf16.mxu0 0
        %4451 = vmatpush1.bf16.msra.mxu0 0
        %4452 = vmatprep.subr.bf16.mxu0 0
        %4453 = vmatpush1.bf16.msra.mxu0 0
        %4454 = vmatprep.subr.bf16.mxu0 0
        %4455 = vmatpush1.bf16.msra.mxu0 0
        %4456 = vmatprep.mubr.bf16.mxu0 0
        %4457 = vmatmul.mubr.bf16.gmra.mrb[0].mxu0 %v4422
        %v4458 = vpop.f32.mrb[0].mxu0
        %v4459 = vadd.f32 0.0, %v4458
        %v4460 = vpop.f32.mrb[0].mxu0
        %v4461 = vpop.f32.mrb[0].mxu0
        %v4462 = vadd.f32 0.0, %v4461
        %v4463 = vpop.f32.mrb[0].mxu0
        %4464 = vdwg.mxu0
        %v4465 = vpack.c.bf16 %v4462, %v4459
        %v4470 = vunpack.c.l.b16 %v3376
        %v4471 = vunpack.c.h.b16 %v3376
        %v4472 = vunpack.c.l.b16 %v3377
        %v4473 = vunpack.c.h.b16 %v3377
        %v4474 = vunpack.c.l.b16 %v3378
        %v4475 = vunpack.c.h.b16 %v3378
        %v4476 = vunpack.c.l.b16 %v3379
        %v4477 = vunpack.c.h.b16 %v3379
        %v4478 = vpack.c.b16 %v4472, %v4470
        %v4479 = vpack.c.b16 %v4473, %v4471
        %v4480 = vpack.c.b16 %v4476, %v4474
        %v4481 = vpack.c.b16 %v4477, %v4475
        %v4487 = vsel %vm3393, %v4465, 0
        %4489 = vmatprep.subr.bf16.mxu0 %v4479
        %4490 = vmatpush1.bf16.msra.mxu0 %v4478
        %4491 = vmatprep.subr.bf16.mxu0 %v4481
        %4492 = vmatpush1.bf16.msra.mxu0 %v4480
        %4493 = vmatprep.subr.bf16.mxu0 0
        %4494 = vmatpush1.bf16.msra.mxu0 0
        %4495 = vmatprep.subr.bf16.mxu0 0
        %4496 = vmatpush1.bf16.msra.mxu0 0
        %4497 = vmatprep.subr.bf16.mxu0 0
        %4498 = vmatpush1.bf16.msra.mxu0 0
        %4499 = vmatprep.subr.bf16.mxu0 0
        %4500 = vmatpush1.bf16.msra.mxu0 0
        %4501 = vmatprep.subr.bf16.mxu0 0
        %4502 = vmatpush1.bf16.msra.mxu0 0
        %4503 = vmatprep.subr.bf16.mxu0 0
        %4504 = vmatpush1.bf16.msra.mxu0 0
        %4505 = vmatprep.subr.bf16.mxu0 0
        %4506 = vmatpush1.bf16.msra.mxu0 0
        %4507 = vmatprep.subr.bf16.mxu0 0
        %4508 = vmatpush1.bf16.msra.mxu0 0
        %4509 = vmatprep.subr.bf16.mxu0 0
        %4510 = vmatpush1.bf16.msra.mxu0 0
        %4511 = vmatprep.subr.bf16.mxu0 0
        %4512 = vmatpush1.bf16.msra.mxu0 0
        %4513 = vmatprep.subr.bf16.mxu0 0
        %4514 = vmatpush1.bf16.msra.mxu0 0
        %4515 = vmatprep.subr.bf16.mxu0 0
        %4516 = vmatpush1.bf16.msra.mxu0 0
        %4517 = vmatprep.subr.bf16.mxu0 0
        %4518 = vmatpush1.bf16.msra.mxu0 0
        %4519 = vmatprep.subr.bf16.mxu0 0
        %4520 = vmatpush1.bf16.msra.mxu0 0
        %4521 = vmatprep.mubr.bf16.mxu0 0
        %4522 = vmatmul.mubr.bf16.gmra.mrb[0].mxu0 %v4487
        %v4523 = vpop.f32.mrb[0].mxu0
        %v4524 = vadd.f32 0.0, %v4523
        %v4525 = vpop.f32.mrb[0].mxu0
        %v4526 = vadd.f32 0.0, %v4525
        %v4527 = vpop.f32.mrb[0].mxu0
        %v4528 = vadd.f32 0.0, %v4527
        %v4529 = vpop.f32.mrb[0].mxu0
        %v4530 = vadd.f32 0.0, %v4529
        %4531 = vdwg.mxu0
        %v4532 = vadd.f32 %v4337, %v4524
        %v4533 = vadd.f32 %v4338, %v4526
        %v4534 = vadd.f32 %v4339, %v4528
        %v4535 = vadd.f32 %v4340, %v4530
        %4536 = vrot.lane.b32.xlu0 %v4153, 64
        %v4537 = vpop.permute.xlu0 %4536
        %4538 = vrot.lane.b32.xlu0 %v4154, 64
        %v4539 = vpop.permute.xlu0 %4538
        %v4541 = vsel %vm3393, %v4537, 0
        %v4544 = vsel %vm3393, %v4539, 0
        %4546 = vmatprep.subr.bf16.mxu0 0
        %4547 = vmatpush1.bf16.xpose.msra.mxu0 %v4544
        %4548 = vmatprep.subr.bf16.mxu0 0
        %4549 = vmatpush1.bf16.xpose.msra.mxu0 0
        %4550 = vmatprep.subr.bf16.mxu0 0
        %4551 = vmatpush1.bf16.xpose.msra.mxu0 0
        %4552 = vmatprep.subr.bf16.mxu0 0
        %4553 = vmatpush1.bf16.xpose.msra.mxu0 0
        %4554 = vmatprep.subr.bf16.mxu0 0
        %4555 = vmatpush1.bf16.xpose.msra.mxu0 0
        %4556 = vmatprep.subr.bf16.mxu0 0
        %4557 = vmatpush1.bf16.xpose.msra.mxu0 0
        %4558 = vmatprep.subr.bf16.mxu0 0
        %4559 = vmatpush1.bf16.xpose.msra.mxu0 0
        %4560 = vmatprep.subr.bf16.mxu0 0
        %4561 = vmatpush1.bf16.xpose.msra.mxu0 0
        %4562 = vmatprep.subr.bf16.mxu0 0
        %4563 = vmatpush1.bf16.xpose.msra.mxu0 0
        %4564 = vmatprep.subr.bf16.mxu0 0
        %4565 = vmatpush1.bf16.xpose.msra.mxu0 0
        %4566 = vmatprep.subr.bf16.mxu0 0
        %4567 = vmatpush1.bf16.xpose.msra.mxu0 0
        %4568 = vmatprep.subr.bf16.mxu0 0
        %4569 = vmatpush1.bf16.xpose.msra.mxu0 0
        %4570 = vmatprep.subr.bf16.mxu0 0
        %4571 = vmatpush1.bf16.xpose.msra.mxu0 0
        %4572 = vmatprep.subr.bf16.mxu0 0
        %4573 = vmatpush1.bf16.xpose.msra.mxu0 0
        %4574 = vmatprep.subr.bf16.mxu0 0
        %4575 = vmatpush1.bf16.xpose.msra.mxu0 0
        %4576 = vmatprep.subr.bf16.mxu0 0
        %4577 = vmatpush1.bf16.xpose.msra.mxu0 0
        %4578 = vmatprep.mubr.bf16.mxu0 0
        %4579 = vmatmul.mubr.bf16.gmra.mrb[0].mxu0 %v4541
        %v4580 = vpop.f32.mrb[0].mxu0
        %v4581 = vadd.f32 %v3355, %v4580
        %v4582 = vpop.f32.mrb[0].mxu0
        %v4583 = vpop.f32.mrb[0].mxu0
        %v4584 = vadd.f32 %v3355, %v4583
        %v4585 = vpop.f32.mrb[0].mxu0
        %4586 = vdwg.mxu0
        %v4587 = vsel %vm3441, %v4581, -inf
        %4588 = vmax.xlane.f32.xlu0 %v4587
        %v4589 = vpop.xlane.xlu0 %4588
        %v4590 = vsel %vm3441, %v4584, -inf
        %4591 = vmax.xlane.f32.xlu0 %v4590
        %v4592 = vpop.xlane.xlu0 %4591
        %v4593 = vsub.f32 %v4581, %v4589
        %v4594 = vsub.f32 %v4584, %v4592
        %v4595 = vmul.f32 %v4593, 1.442695
        %v4596 = vpow.pop %v4595
        %v4597 = vmul.f32 %v4594, 1.442695
        %v4598 = vpow.pop %v4597
        %v4599 = vsel %vm3441, %v4596, 0.0
        %4600 = vadd.xlane.f32.xlu0 %v4599
        %v4601 = vpop.xlane.xlu0 %4600
        %v4602 = vsel %vm3441, %v4598, 0.0
        %4603 = vadd.xlane.f32.xlu0 %v4602
        %v4604 = vpop.xlane.xlu0 %4603
        %v4605 = vrcp.pop %v4601
        %v4606 = vrcp.pop %v4604
        %v4607 = vmul.f32 %v4596, %v4605
        %v4608 = vmul.f32 %v4598, %v4606
        %v4609 = vpack.c.bf16 %v4608, %v4607
        %4610 = vrot.lane.b32.xlu0 %v4155, 64
        %v4611 = vpop.permute.xlu0 %4610
        %v4614 = vsel %vm3441, %v4609, 0
        %4616 = vmatprep.subr.bf16.mxu0 0
        %4617 = vmatpush1.bf16.msra.mxu0 %v4611
        %4618 = vmatprep.subr.bf16.mxu0 0
        %4619 = vmatpush1.bf16.msra.mxu0 0
        %4620 = vmatprep.subr.bf16.mxu0 0
        %4621 = vmatpush1.bf16.msra.mxu0 0
        %4622 = vmatprep.subr.bf16.mxu0 0
        %4623 = vmatpush1.bf16.msra.mxu0 0
        %4624 = vmatprep.subr.bf16.mxu0 0
        %4625 = vmatpush1.bf16.msra.mxu0 0
        %4626 = vmatprep.subr.bf16.mxu0 0
        %4627 = vmatpush1.bf16.msra.mxu0 0
        %4628 = vmatprep.subr.bf16.mxu0 0
        %4629 = vmatpush1.bf16.msra.mxu0 0
        %4630 = vmatprep.subr.bf16.mxu0 0
        %4631 = vmatpush1.bf16.msra.mxu0 0
        %4632 = vmatprep.subr.bf16.mxu0 0
        %4633 = vmatpush1.bf16.msra.mxu0 0
        %4634 = vmatprep.subr.bf16.mxu0 0
        %4635 = vmatpush1.bf16.msra.mxu0 0
        %4636 = vmatprep.subr.bf16.mxu0 0
        %4637 = vmatpush1.bf16.msra.mxu0 0
        %4638 = vmatprep.subr.bf16.mxu0 0
        %4639 = vmatpush1.bf16.msra.mxu0 0
        %4640 = vmatprep.subr.bf16.mxu0 0
        %4641 = vmatpush1.bf16.msra.mxu0 0
        %4642 = vmatprep.subr.bf16.mxu0 0
        %4643 = vmatpush1.bf16.msra.mxu0 0
        %4644 = vmatprep.subr.bf16.mxu0 0
        %4645 = vmatpush1.bf16.msra.mxu0 0
        %4646 = vmatprep.subr.bf16.mxu0 0
        %4647 = vmatpush1.bf16.msra.mxu0 0
        %4648 = vmatprep.mubr.bf16.mxu0 0
        %4649 = vmatmul.mubr.bf16.gmra.mrb[0].mxu0 %v4614
        %v4650 = vpop.f32.mrb[0].mxu0
        %v4651 = vadd.f32 0.0, %v4650
        %v4652 = vpop.f32.mrb[0].mxu0
        %v4653 = vpop.f32.mrb[0].mxu0
        %v4654 = vadd.f32 0.0, %v4653
        %v4655 = vpop.f32.mrb[0].mxu0
        %4656 = vdwg.mxu0
        %v4657 = vpack.c.bf16 %v4654, %v4651
        %v4662 = vunpack.c.l.b16 %v3380
        %v4663 = vunpack.c.h.b16 %v3380
        %v4664 = vunpack.c.l.b16 %v3381
        %v4665 = vunpack.c.h.b16 %v3381
        %v4666 = vunpack.c.l.b16 %v3382
        %v4667 = vunpack.c.h.b16 %v3382
        %v4668 = vunpack.c.l.b16 %v3383
        %v4669 = vunpack.c.h.b16 %v3383
        %v4670 = vpack.c.b16 %v4664, %v4662
        %v4671 = vpack.c.b16 %v4665, %v4663
        %v4672 = vpack.c.b16 %v4668, %v4666
        %v4673 = vpack.c.b16 %v4669, %v4667
        %v4679 = vsel %vm3393, %v4657, 0
        %4681 = vmatprep.subr.bf16.mxu0 %v4671
        %4682 = vmatpush1.bf16.msra.mxu0 %v4670
        %4683 = vmatprep.subr.bf16.mxu0 %v4673
        %4684 = vmatpush1.bf16.msra.mxu0 %v4672
        %4685 = vmatprep.subr.bf16.mxu0 0
        %4686 = vmatpush1.bf16.msra.mxu0 0
        %4687 = vmatprep.subr.bf16.mxu0 0
        %4688 = vmatpush1.bf16.msra.mxu0 0
        %4689 = vmatprep.subr.bf16.mxu0 0
        %4690 = vmatpush1.bf16.msra.mxu0 0
        %4691 = vmatprep.subr.bf16.mxu0 0
        %4692 = vmatpush1.bf16.msra.mxu0 0
        %4693 = vmatprep.subr.bf16.mxu0 0
        %4694 = vmatpush1.bf16.msra.mxu0 0
        %4695 = vmatprep.subr.bf16.mxu0 0
        %4696 = vmatpush1.bf16.msra.mxu0 0
        %4697 = vmatprep.subr.bf16.mxu0 0
        %4698 = vmatpush1.bf16.msra.mxu0 0
        %4699 = vmatprep.subr.bf16.mxu0 0
        %4700 = vmatpush1.bf16.msra.mxu0 0
        %4701 = vmatprep.subr.bf16.mxu0 0
        %4702 = vmatpush1.bf16.msra.mxu0 0
        %4703 = vmatprep.subr.bf16.mxu0 0
        %4704 = vmatpush1.bf16.msra.mxu0 0
        %4705 = vmatprep.subr.bf16.mxu0 0
        %4706 = vmatpush1.bf16.msra.mxu0 0
        %4707 = vmatprep.subr.bf16.mxu0 0
        %4708 = vmatpush1.bf16.msra.mxu0 0
        %4709 = vmatprep.subr.bf16.mxu0 0
        %4710 = vmatpush1.bf16.msra.mxu0 0
        %4711 = vmatprep.subr.bf16.mxu0 0
        %4712 = vmatpush1.bf16.msra.mxu0 0
        %4713 = vmatprep.mubr.bf16.mxu0 0
        %4714 = vmatmul.mubr.bf16.gmra.mrb[0].mxu0 %v4679
        %v4715 = vpop.f32.mrb[0].mxu0
        %v4716 = vadd.f32 0.0, %v4715
        %v4717 = vpop.f32.mrb[0].mxu0
        %v4718 = vadd.f32 0.0, %v4717
        %v4719 = vpop.f32.mrb[0].mxu0
        %v4720 = vadd.f32 0.0, %v4719
        %v4721 = vpop.f32.mrb[0].mxu0
        %v4722 = vadd.f32 0.0, %v4721
        %4723 = vdwg.mxu0
        %v4724 = vadd.f32 %v4532, %v4716
        %v4725 = vadd.f32 %v4533, %v4718
        %v4726 = vadd.f32 %v4534, %v4720
        %v4727 = vadd.f32 %v4535, %v4722
        %4728 = vrot.lane.b32.xlu0 %v4153, 32
        %v4729 = vpop.permute.xlu0 %4728
        %4730 = vrot.lane.b32.xlu0 %v4154, 32
        %v4731 = vpop.permute.xlu0 %4730
        %v4733 = vsel %vm3393, %v4729, 0
        %v4736 = vsel %vm3393, %v4731, 0
        %4738 = vmatprep.subr.bf16.mxu0 0
        %4739 = vmatpush1.bf16.xpose.msra.mxu0 %v4736
        %4740 = vmatprep.subr.bf16.mxu0 0
        %4741 = vmatpush1.bf16.xpose.msra.mxu0 0
        %4742 = vmatprep.subr.bf16.mxu0 0
        %4743 = vmatpush1.bf16.xpose.msra.mxu0 0
        %4744 = vmatprep.subr.bf16.mxu0 0
        %4745 = vmatpush1.bf16.xpose.msra.mxu0 0
        %4746 = vmatprep.subr.bf16.mxu0 0
        %4747 = vmatpush1.bf16.xpose.msra.mxu0 0
        %4748 = vmatprep.subr.bf16.mxu0 0
        %4749 = vmatpush1.bf16.xpose.msra.mxu0 0
        %4750 = vmatprep.subr.bf16.mxu0 0
        %4751 = vmatpush1.bf16.xpose.msra.mxu0 0
        %4752 = vmatprep.subr.bf16.mxu0 0
        %4753 = vmatpush1.bf16.xpose.msra.mxu0 0
        %4754 = vmatprep.subr.bf16.mxu0 0
        %4755 = vmatpush1.bf16.xpose.msra.mxu0 0
        %4756 = vmatprep.subr.bf16.mxu0 0
        %4757 = vmatpush1.bf16.xpose.msra.mxu0 0
        %4758 = vmatprep.subr.bf16.mxu0 0
        %4759 = vmatpush1.bf16.xpose.msra.mxu0 0
        %4760 = vmatprep.subr.bf16.mxu0 0
        %4761 = vmatpush1.bf16.xpose.msra.mxu0 0
        %4762 = vmatprep.subr.bf16.mxu0 0
        %4763 = vmatpush1.bf16.xpose.msra.mxu0 0
        %4764 = vmatprep.subr.bf16.mxu0 0
        %4765 = vmatpush1.bf16.xpose.msra.mxu0 0
        %4766 = vmatprep.subr.bf16.mxu0 0
        %4767 = vmatpush1.bf16.xpose.msra.mxu0 0
        %4768 = vmatprep.subr.bf16.mxu0 0
        %4769 = vmatpush1.bf16.xpose.msra.mxu0 0
        %4770 = vmatprep.mubr.bf16.mxu0 0
        %4771 = vmatmul.mubr.bf16.gmra.mrb[0].mxu0 %v4733
        %v4772 = vpop.f32.mrb[0].mxu0
        %v4773 = vadd.f32 %v3355, %v4772
        %v4774 = vpop.f32.mrb[0].mxu0
        %v4775 = vpop.f32.mrb[0].mxu0
        %v4776 = vadd.f32 %v3355, %v4775
        %v4777 = vpop.f32.mrb[0].mxu0
        %4778 = vdwg.mxu0
        %v4779 = vsel %vm3441, %v4773, -inf
        %4780 = vmax.xlane.f32.xlu0 %v4779
        %v4781 = vpop.xlane.xlu0 %4780
        %v4782 = vsel %vm3441, %v4776, -inf
        %4783 = vmax.xlane.f32.xlu0 %v4782
        %v4784 = vpop.xlane.xlu0 %4783
        %v4785 = vsub.f32 %v4773, %v4781
        %v4786 = vsub.f32 %v4776, %v4784
        %v4787 = vmul.f32 %v4785, 1.442695
        %v4788 = vpow.pop %v4787
        %v4789 = vmul.f32 %v4786, 1.442695
        %v4790 = vpow.pop %v4789
        %v4791 = vsel %vm3441, %v4788, 0.0
        %4792 = vadd.xlane.f32.xlu0 %v4791
        %v4793 = vpop.xlane.xlu0 %4792
        %v4794 = vsel %vm3441, %v4790, 0.0
        %4795 = vadd.xlane.f32.xlu0 %v4794
        %v4796 = vpop.xlane.xlu0 %4795
        %v4797 = vrcp.pop %v4793
        %v4798 = vrcp.pop %v4796
        %v4799 = vmul.f32 %v4788, %v4797
        %v4800 = vmul.f32 %v4790, %v4798
        %v4801 = vpack.c.bf16 %v4800, %v4799
        %4802 = vrot.lane.b32.xlu0 %v4155, 32
        %v4803 = vpop.permute.xlu0 %4802
        %v4806 = vsel %vm3441, %v4801, 0
        %4808 = vmatprep.subr.bf16.mxu0 0
        %4809 = vmatpush1.bf16.msra.mxu0 %v4803
        %4810 = vmatprep.subr.bf16.mxu0 0
        %4811 = vmatpush1.bf16.msra.mxu0 0
        %4812 = vmatprep.subr.bf16.mxu0 0
        %4813 = vmatpush1.bf16.msra.mxu0 0
        %4814 = vmatprep.subr.bf16.mxu0 0
        %4815 = vmatpush1.bf16.msra.mxu0 0
        %4816 = vmatprep.subr.bf16.mxu0 0
        %4817 = vmatpush1.bf16.msra.mxu0 0
        %4818 = vmatprep.subr.bf16.mxu0 0
        %4819 = vmatpush1.bf16.msra.mxu0 0
        %4820 = vmatprep.subr.bf16.mxu0 0
        %4821 = vmatpush1.bf16.msra.mxu0 0
        %4822 = vmatprep.subr.bf16.mxu0 0
        %4823 = vmatpush1.bf16.msra.mxu0 0
        %4824 = vmatprep.subr.bf16.mxu0 0
        %4825 = vmatpush1.bf16.msra.mxu0 0
        %4826 = vmatprep.subr.bf16.mxu0 0
        %4827 = vmatpush1.bf16.msra.mxu0 0
        %4828 = vmatprep.subr.bf16.mxu0 0
        %4829 = vmatpush1.bf16.msra.mxu0 0
        %4830 = vmatprep.subr.bf16.mxu0 0
        %4831 = vmatpush1.bf16.msra.mxu0 0
        %4832 = vmatprep.subr.bf16.mxu0 0
        %4833 = vmatpush1.bf16.msra.mxu0 0
        %4834 = vmatprep.subr.bf16.mxu0 0
        %4835 = vmatpush1.bf16.msra.mxu0 0
        %4836 = vmatprep.subr.bf16.mxu0 0
        %4837 = vmatpush1.bf16.msra.mxu0 0
        %4838 = vmatprep.subr.bf16.mxu0 0
        %4839 = vmatpush1.bf16.msra.mxu0 0
        %4840 = vmatprep.mubr.bf16.mxu0 0
        %4841 = vmatmul.mubr.bf16.gmra.mrb[0].mxu0 %v4806
        %v4842 = vpop.f32.mrb[0].mxu0
        %v4843 = vadd.f32 0.0, %v4842
        %v4844 = vpop.f32.mrb[0].mxu0
        %v4845 = vpop.f32.mrb[0].mxu0
        %v4846 = vadd.f32 0.0, %v4845
        %v4847 = vpop.f32.mrb[0].mxu0
        %4848 = vdwg.mxu0
        %v4849 = vpack.c.bf16 %v4846, %v4843
        %v4854 = vunpack.c.l.b16 %v3384
        %v4855 = vunpack.c.h.b16 %v3384
        %v4856 = vunpack.c.l.b16 %v3385
        %v4857 = vunpack.c.h.b16 %v3385
        %v4858 = vunpack.c.l.b16 %v3386
        %v4859 = vunpack.c.h.b16 %v3386
        %v4860 = vunpack.c.l.b16 %v3387
        %v4861 = vunpack.c.h.b16 %v3387
        %v4862 = vpack.c.b16 %v4856, %v4854
        %v4863 = vpack.c.b16 %v4857, %v4855
        %v4864 = vpack.c.b16 %v4860, %v4858
        %v4865 = vpack.c.b16 %v4861, %v4859
        %v4871 = vsel %vm3393, %v4849, 0
        %4873 = vmatprep.subr.bf16.mxu0 %v4863
        %4874 = vmatpush1.bf16.msra.mxu0 %v4862
        %4875 = vmatprep.subr.bf16.mxu0 %v4865
        %4876 = vmatpush1.bf16.msra.mxu0 %v4864
        %4877 = vmatprep.subr.bf16.mxu0 0
        %4878 = vmatpush1.bf16.msra.mxu0 0
        %4879 = vmatprep.subr.bf16.mxu0 0
        %4880 = vmatpush1.bf16.msra.mxu0 0
        %4881 = vmatprep.subr.bf16.mxu0 0
        %4882 = vmatpush1.bf16.msra.mxu0 0
        %4883 = vmatprep.subr.bf16.mxu0 0
        %4884 = vmatpush1.bf16.msra.mxu0 0
        %4885 = vmatprep.subr.bf16.mxu0 0
        %4886 = vmatpush1.bf16.msra.mxu0 0
        %4887 = vmatprep.subr.bf16.mxu0 0
        %4888 = vmatpush1.bf16.msra.mxu0 0
        %4889 = vmatprep.subr.bf16.mxu0 0
        %4890 = vmatpush1.bf16.msra.mxu0 0
        %4891 = vmatprep.subr.bf16.mxu0 0
        %4892 = vmatpush1.bf16.msra.mxu0 0
        %4893 = vmatprep.subr.bf16.mxu0 0
        %4894 = vmatpush1.bf16.msra.mxu0 0
        %4895 = vmatprep.subr.bf16.mxu0 0
        %4896 = vmatpush1.bf16.msra.mxu0 0
        %4897 = vmatprep.subr.bf16.mxu0 0
        %4898 = vmatpush1.bf16.msra.mxu0 0
        %4899 = vmatprep.subr.bf16.mxu0 0
        %4900 = vmatpush1.bf16.msra.mxu0 0
        %4901 = vmatprep.subr.bf16.mxu0 0
        %4902 = vmatpush1.bf16.msra.mxu0 0
        %4903 = vmatprep.subr.bf16.mxu0 0
        %4904 = vmatpush1.bf16.msra.mxu0 0
        %4905 = vmatprep.mubr.bf16.mxu0 0
        %4906 = vmatmul.mubr.bf16.gmra.mrb[0].mxu0 %v4871
        %v4907 = vpop.f32.mrb[0].mxu0
        %v4908 = vadd.f32 0.0, %v4907
        %v4909 = vpop.f32.mrb[0].mxu0
        %v4910 = vadd.f32 0.0, %v4909
        %v4911 = vpop.f32.mrb[0].mxu0
        %v4912 = vadd.f32 0.0, %v4911
        %v4913 = vpop.f32.mrb[0].mxu0
        %v4914 = vadd.f32 0.0, %v4913
        %4915 = vdwg.mxu0
        %v4916 = vadd.f32 %v4724, %v4908
        %v4917 = vadd.f32 %v4725, %v4910
        %v4918 = vadd.f32 %v4726, %v4912
        %v4919 = vadd.f32 %v4727, %v4914
        %v4920 = vadd.f32 %v2605, %v4916
        %v4921 = vadd.f32 %v2607, %v4917
        %v4922 = vadd.f32 %v2609, %v4918
        %v4923 = vadd.f32 %v2611, %v4919
        %v4924 = vld [vmem:[%s19] sm:$0x3]
        %v4926 = vlaneseq
        %v4927 = vshrl.u32 %v4926, 7
        %v4928 = vsub.s32 0, %v4927
        %v4929 = vrot.slane %v4924, %v4928
        %v4930 = vlaneseq
        %v4931 = vshrl.u32 %v4930, 7
        %v4932 = vsub.s32 1, %v4931
        %v4933 = vrot.slane %v4924, %v4932
        %v4936 = vadd.f32 %v4920, %v4929
        %v4937 = vadd.f32 %v4921, %v4933
        %v4938 = vadd.f32 %v4922, %v4929
        %v4939 = vadd.f32 %v4923, %v4933
        %v4940 = vld [vmem:[%s29] sm:$0x3]
        %v4941 = vld [vmem:[%s31] sm:$0x3]
        %v4942 = vadd.f32 %v4936, %v4937
        %4943 = vadd.xlane.f32.xlu0 %v4942
        %v4944 = vpop.xlane.xlu0 %4943
        %v4945 = vadd.f32 %v4938, %v4939
        %4946 = vadd.xlane.f32.xlu0 %v4945
        %v4947 = vpop.xlane.xlu0 %4946
        %v4948 = vmul.f32 %v4944, 0.00390625
        %v4949 = vmul.f32 %v4947, 0.00390625
        %v4950 = vmul.f32 %v4936, %v4936
        %v4951 = vmul.f32 %v4937, %v4937
        %v4952 = vmul.f32 %v4938, %v4938
        %v4953 = vmul.f32 %v4939, %v4939
        %v4954 = vadd.f32 %v4950, %v4951
        %4955 = vadd.xlane.f32.xlu0 %v4954
        %v4956 = vpop.xlane.xlu0 %4955
        %v4957 = vadd.f32 %v4952, %v4953
        %4958 = vadd.xlane.f32.xlu0 %v4957
        %v4959 = vpop.xlane.xlu0 %4958
        %v4960 = vmul.f32 %v4956, 0.00390625
        %v4961 = vmul.f32 %v4959, 0.00390625
        %v4962 = vmul.f32 %v4948, %v4948
        %v4963 = vmul.f32 %v4949, %v4949
        %v4964 = vsub.f32 %v4960, %v4962
        %v4965 = vsub.f32 %v4961, %v4963
        %v4966 = vsub.f32 %v4936, %v4948
        %v4967 = vsub.f32 %v4937, %v4948
        %v4968 = vsub.f32 %v4938, %v4949
        %v4969 = vsub.f32 %v4939, %v4949
        %v4970 = vadd.f32 %v4964, 1e-05
        %v4971 = vadd.f32 %v4965, 1e-05
        %v4972 = vrsqrt.pop %v4970
        %v4973 = vrsqrt.pop %v4971
        %v4974 = vmul.f32 %v4966, %v4972
        %v4975 = vmul.f32 %v4967, %v4972
        %v4976 = vmul.f32 %v4968, %v4973
        %v4977 = vmul.f32 %v4969, %v4973
        %v4979 = vlaneseq
        %v4980 = vshrl.u32 %v4979, 7
        %v4981 = vsub.s32 0, %v4980
        %v4982 = vrot.slane %v4940, %v4981
        %v4983 = vlaneseq
        %v4984 = vshrl.u32 %v4983, 7
        %v4985 = vsub.s32 1, %v4984
        %v4986 = vrot.slane %v4940, %v4985
        %v4989 = vmul.f32 %v4974, %v4982
        %v4990 = vmul.f32 %v4975, %v4986
        %v4991 = vmul.f32 %v4976, %v4982
        %v4992 = vmul.f32 %v4977, %v4986
        %v4994 = vlaneseq
        %v4995 = vshrl.u32 %v4994, 7
        %v4996 = vsub.s32 0, %v4995
        %v4997 = vrot.slane %v4941, %v4996
        %v4998 = vlaneseq
        %v4999 = vshrl.u32 %v4998, 7
        %v5000 = vsub.s32 1, %v4999
        %v5001 = vrot.slane %v4941, %v5000
        %v5004 = vadd.f32 %v4989, %v4997
        %v5005 = vadd.f32 %v4990, %v5001
        %v5006 = vadd.f32 %v4991, %v4997
        %v5007 = vadd.f32 %v4992, %v5001
        %v5008 = vpack.c.bf16 %v5006, %v5004
        %v5009 = vpack.c.bf16 %v5007, %v5005
        %v5010 = vld [vmem:[%s21] sm:$0xf]
        %v5011 = vld [vmem:[%s21 + $0x4] sm:$0xf]
        %v5012 = vld [vmem:[%s21 + $0x8] sm:$0xf]
        %v5013 = vld [vmem:[%s21 + $0xc] sm:$0xf]
        %v5014 = vld [vmem:[%s21 + $0x10] sm:$0xf]
        %v5015 = vld [vmem:[%s21 + $0x14] sm:$0xf]
        %v5016 = vld [vmem:[%s21 + $0x18] sm:$0xf]
        %v5017 = vld [vmem:[%s21 + $0x1c] sm:$0xf]
        %v5018 = vld [vmem:[%s21 + $0x20] sm:$0xf]
        %v5019 = vld [vmem:[%s21 + $0x24] sm:$0xf]
        %v5020 = vld [vmem:[%s21 + $0x28] sm:$0xf]
        %v5021 = vld [vmem:[%s21 + $0x2c] sm:$0xf]
        %v5022 = vld [vmem:[%s21 + $0x30] sm:$0xf]
        %v5023 = vld [vmem:[%s21 + $0x34] sm:$0xf]
        %v5024 = vld [vmem:[%s21 + $0x38] sm:$0xf]
        %v5025 = vld [vmem:[%s21 + $0x3c] sm:$0xf]
        %v5026 = vld [vmem:[%s21 + $0x40] sm:$0xf]
        %v5027 = vld [vmem:[%s21 + $0x44] sm:$0xf]
        %v5028 = vld [vmem:[%s21 + $0x48] sm:$0xf]
        %v5029 = vld [vmem:[%s21 + $0x4c] sm:$0xf]
        %v5030 = vld [vmem:[%s21 + $0x50] sm:$0xf]
        %v5031 = vld [vmem:[%s21 + $0x54] sm:$0xf]
        %v5032 = vld [vmem:[%s21 + $0x58] sm:$0xf]
        %v5033 = vld [vmem:[%s21 + $0x5c] sm:$0xf]
        %v5034 = vld [vmem:[%s21 + $0x60] sm:$0xf]
        %v5035 = vld [vmem:[%s21 + $0x64] sm:$0xf]
        %v5036 = vld [vmem:[%s21 + $0x68] sm:$0xf]
        %v5037 = vld [vmem:[%s21 + $0x6c] sm:$0xf]
        %v5038 = vld [vmem:[%s21 + $0x70] sm:$0xf]
        %v5039 = vld [vmem:[%s21 + $0x74] sm:$0xf]
        %v5040 = vld [vmem:[%s21 + $0x78] sm:$0xf]
        %v5041 = vld [vmem:[%s21 + $0x7c] sm:$0xf]
        %v5042 = vld [vmem:[%s23] sm:$0x1]
        %v5044 = vlaneseq
        %v5045 = vshrl.u32 %v5044, 7
        %v5046 = vsub.s32 0, %v5045
        %v5047 = vrot.slane %v5042, %v5046
        %v5081 = vunpack.c.l.b16 %v5010
        %v5082 = vunpack.c.l.b16 %v5011
        %v5083 = vunpack.c.l.b16 %v5012
        %v5084 = vunpack.c.l.b16 %v5013
        %v5085 = vunpack.c.l.b16 %v5014
        %v5086 = vunpack.c.l.b16 %v5015
        %v5087 = vunpack.c.l.b16 %v5016
        %v5088 = vunpack.c.l.b16 %v5017
        %v5089 = vunpack.c.l.b16 %v5018
        %v5090 = vunpack.c.l.b16 %v5019
        %v5091 = vunpack.c.l.b16 %v5020
        %v5092 = vunpack.c.l.b16 %v5021
        %v5093 = vunpack.c.l.b16 %v5022
        %v5094 = vunpack.c.l.b16 %v5023
        %v5095 = vunpack.c.l.b16 %v5024
        %v5096 = vunpack.c.l.b16 %v5025
        %v5097 = vunpack.c.l.b16 %v5026
        %v5098 = vunpack.c.l.b16 %v5027
        %v5099 = vunpack.c.l.b16 %v5028
        %v5100 = vunpack.c.l.b16 %v5029
        %v5101 = vunpack.c.l.b16 %v5030
        %v5102 = vunpack.c.l.b16 %v5031
        %v5103 = vunpack.c.l.b16 %v5032
        %v5104 = vunpack.c.l.b16 %v5033
        %v5105 = vunpack.c.l.b16 %v5034
        %v5106 = vunpack.c.l.b16 %v5035
        %v5107 = vunpack.c.l.b16 %v5036
        %v5108 = vunpack.c.l.b16 %v5037
        %v5109 = vunpack.c.l.b16 %v5038
        %v5110 = vunpack.c.l.b16 %v5039
        %v5111 = vunpack.c.l.b16 %v5040
        %v5112 = vunpack.c.l.b16 %v5041
        %v5113 = vpack.c.b16 %v5082, %v5081
        %v5114 = vpack.c.b16 %v5084, %v5083
        %v5115 = vpack.c.b16 %v5086, %v5085
        %v5116 = vpack.c.b16 %v5088, %v5087
        %v5117 = vpack.c.b16 %v5090, %v5089
        %v5118 = vpack.c.b16 %v5092, %v5091
        %v5119 = vpack.c.b16 %v5094, %v5093
        %v5120 = vpack.c.b16 %v5096, %v5095
        %v5121 = vpack.c.b16 %v5098, %v5097
        %v5122 = vpack.c.b16 %v5100, %v5099
        %v5123 = vpack.c.b16 %v5102, %v5101
        %v5124 = vpack.c.b16 %v5104, %v5103
        %v5125 = vpack.c.b16 %v5106, %v5105
        %v5126 = vpack.c.b16 %v5108, %v5107
        %v5127 = vpack.c.b16 %v5110, %v5109
        %v5128 = vpack.c.b16 %v5112, %v5111
        %5145 = vmatprep.subr.bf16.mxu0 0
        %5146 = vmatpush1.bf16.msra.mxu0 %v5113
        %5147 = vmatprep.subr.bf16.mxu0 0
        %5148 = vmatpush1.bf16.msra.mxu0 %v5114
        %5149 = vmatprep.subr.bf16.mxu0 0
        %5150 = vmatpush1.bf16.msra.mxu0 %v5115
        %5151 = vmatprep.subr.bf16.mxu0 0
        %5152 = vmatpush1.bf16.msra.mxu0 %v5116
        %5153 = vmatprep.subr.bf16.mxu0 0
        %5154 = vmatpush1.bf16.msra.mxu0 %v5117
        %5155 = vmatprep.subr.bf16.mxu0 0
        %5156 = vmatpush1.bf16.msra.mxu0 %v5118
        %5157 = vmatprep.subr.bf16.mxu0 0
        %5158 = vmatpush1.bf16.msra.mxu0 %v5119
        %5159 = vmatprep.subr.bf16.mxu0 0
        %5160 = vmatpush1.bf16.msra.mxu0 %v5120
        %5161 = vmatprep.subr.bf16.mxu0 0
        %5162 = vmatpush1.bf16.msra.mxu0 %v5121
        %5163 = vmatprep.subr.bf16.mxu0 0
        %5164 = vmatpush1.bf16.msra.mxu0 %v5122
        %5165 = vmatprep.subr.bf16.mxu0 0
        %5166 = vmatpush1.bf16.msra.mxu0 %v5123
        %5167 = vmatprep.subr.bf16.mxu0 0
        %5168 = vmatpush1.bf16.msra.mxu0 %v5124
        %5169 = vmatprep.subr.bf16.mxu0 0
        %5170 = vmatpush1.bf16.msra.mxu0 %v5125
        %5171 = vmatprep.subr.bf16.mxu0 0
        %5172 = vmatpush1.bf16.msra.mxu0 %v5126
        %5173 = vmatprep.subr.bf16.mxu0 0
        %5174 = vmatpush1.bf16.msra.mxu0 %v5127
        %5175 = vmatprep.subr.bf16.mxu0 0
        %5176 = vmatpush1.bf16.msra.mxu0 %v5128
        %5177 = vmatprep.mubr.bf16.mxu0 %v5009
        %5178 = vmatmul.mubr.bf16.gmra.mrb[0].mxu0 %v5008
        %v5179 = vpop.f32.mrb[0].mxu0
        %v5180 = vadd.f32 %v5047, %v5179
        %v5181 = vpop.f32.mrb[0].mxu0
        %v5182 = vpop.f32.mrb[0].mxu0
        %v5183 = vadd.f32 %v5047, %v5182
        %v5184 = vpop.f32.mrb[0].mxu0
        %5185 = vdwg.mxu0
        %v5186 = vmax.f32 %v5180, 0.0
        %v5187 = vmax.f32 %v5183, 0.0
        %v5188 = vpack.c.bf16 %v5187, %v5186
        %v5189 = vld [vmem:[%s25] sm:$0xff]
        %v5190 = vld [vmem:[%s25 + $0x8] sm:$0xff]
        %v5191 = vld [vmem:[%s25 + $0x10] sm:$0xff]
        %v5192 = vld [vmem:[%s25 + $0x18] sm:$0xff]
        %v5193 = vld [vmem:[%s25 + $0x20] sm:$0xff]
        %v5194 = vld [vmem:[%s25 + $0x28] sm:$0xff]
        %v5195 = vld [vmem:[%s25 + $0x30] sm:$0xff]
        %v5196 = vld [vmem:[%s25 + $0x38] sm:$0xff]
        %v5197 = vld [vmem:[%s25 + $0x40] sm:$0xff]
        %v5198 = vld [vmem:[%s25 + $0x48] sm:$0xff]
        %v5199 = vld [vmem:[%s25 + $0x50] sm:$0xff]
        %v5200 = vld [vmem:[%s25 + $0x58] sm:$0xff]
        %v5201 = vld [vmem:[%s25 + $0x60] sm:$0xff]
        %v5202 = vld [vmem:[%s25 + $0x68] sm:$0xff]
        %v5203 = vld [vmem:[%s25 + $0x70] sm:$0xff]
        %v5204 = vld [vmem:[%s25 + $0x78] sm:$0xff]
        %v5205 = vld [vmem:[%s27] sm:$0x3]
        %v5207 = vlaneseq
        %v5208 = vshrl.u32 %v5207, 7
        %v5209 = vsub.s32 0, %v5208
        %v5210 = vrot.slane %v5205, %v5209
        %v5211 = vlaneseq
        %v5212 = vshrl.u32 %v5211, 7
        %v5213 = vsub.s32 1, %v5212
        %v5214 = vrot.slane %v5205, %v5213
        %v5233 = vunpack.c.l.b16 %v5189
        %v5234 = vunpack.c.h.b16 %v5189
        %v5235 = vunpack.c.l.b16 %v5190
        %v5236 = vunpack.c.h.b16 %v5190
        %v5237 = vunpack.c.l.b16 %v5191
        %v5238 = vunpack.c.h.b16 %v5191
        %v5239 = vunpack.c.l.b16 %v5192
        %v5240 = vunpack.c.h.b16 %v5192
        %v5241 = vunpack.c.l.b16 %v5193
        %v5242 = vunpack.c.h.b16 %v5193
        %v5243 = vunpack.c.l.b16 %v5194
        %v5244 = vunpack.c.h.b16 %v5194
        %v5245 = vunpack.c.l.b16 %v5195
        %v5246 = vunpack.c.h.b16 %v5195
        %v5247 = vunpack.c.l.b16 %v5196
        %v5248 = vunpack.c.h.b16 %v5196
        %v5249 = vunpack.c.l.b16 %v5197
        %v5250 = vunpack.c.h.b16 %v5197
        %v5251 = vunpack.c.l.b16 %v5198
        %v5252 = vunpack.c.h.b16 %v5198
        %v5253 = vunpack.c.l.b16 %v5199
        %v5254 = vunpack.c.h.b16 %v5199
        %v5255 = vunpack.c.l.b16 %v5200
        %v5256 = vunpack.c.h.b16 %v5200
        %v5257 = vunpack.c.l.b16 %v5201
        %v5258 = vunpack.c.h.b16 %v5201
        %v5259 = vunpack.c.l.b16 %v5202
        %v5260 = vunpack.c.h.b16 %v5202
        %v5261 = vunpack.c.l.b16 %v5203
        %v5262 = vunpack.c.h.b16 %v5203
        %v5263 = vunpack.c.l.b16 %v5204
        %v5264 = vunpack.c.h.b16 %v5204
        %v5265 = vpack.c.b16 %v5235, %v5233
        %v5266 = vpack.c.b16 %v5236, %v5234
        %v5267 = vpack.c.b16 %v5239, %v5237
        %v5268 = vpack.c.b16 %v5240, %v5238
        %v5269 = vpack.c.b16 %v5243, %v5241
        %v5270 = vpack.c.b16 %v5244, %v5242
        %v5271 = vpack.c.b16 %v5247, %v5245
        %v5272 = vpack.c.b16 %v5248, %v5246
        %v5273 = vpack.c.b16 %v5251, %v5249
        %v5274 = vpack.c.b16 %v5252, %v5250
        %v5275 = vpack.c.b16 %v5255, %v5253
        %v5276 = vpack.c.b16 %v5256, %v5254
        %v5277 = vpack.c.b16 %v5259, %v5257
        %v5278 = vpack.c.b16 %v5260, %v5258
        %v5279 = vpack.c.b16 %v5263, %v5261
        %v5280 = vpack.c.b16 %v5264, %v5262
        %5297 = vmatprep.subr.bf16.mxu0 %v5266
        %5298 = vmatpush1.bf16.msra.mxu0 %v5265
        %5299 = vmatprep.subr.bf16.mxu0 %v5268
        %5300 = vmatpush1.bf16.msra.mxu0 %v5267
        %5301 = vmatprep.subr.bf16.mxu0 %v5270
        %5302 = vmatpush1.bf16.msra.mxu0 %v5269
        %5303 = vmatprep.subr.bf16.mxu0 %v5272
        %5304 = vmatpush1.bf16.msra.mxu0 %v5271
        %5305 = vmatprep.subr.bf16.mxu0 %v5274
        %5306 = vmatpush1.bf16.msra.mxu0 %v5273
        %5307 = vmatprep.subr.bf16.mxu0 %v5276
        %5308 = vmatpush1.bf16.msra.mxu0 %v5275
        %5309 = vmatprep.subr.bf16.mxu0 %v5278
        %5310 = vmatpush1.bf16.msra.mxu0 %v5277
        %5311 = vmatprep.subr.bf16.mxu0 %v5280
        %5312 = vmatpush1.bf16.msra.mxu0 %v5279
        %5313 = vmatprep.subr.bf16.mxu0 0
        %5314 = vmatpush1.bf16.msra.mxu0 0
        %5315 = vmatprep.subr.bf16.mxu0 0
        %5316 = vmatpush1.bf16.msra.mxu0 0
        %5317 = vmatprep.subr.bf16.mxu0 0
        %5318 = vmatpush1.bf16.msra.mxu0 0
        %5319 = vmatprep.subr.bf16.mxu0 0
        %5320 = vmatpush1.bf16.msra.mxu0 0
        %5321 = vmatprep.subr.bf16.mxu0 0
        %5322 = vmatpush1.bf16.msra.mxu0 0
        %5323 = vmatprep.subr.bf16.mxu0 0
        %5324 = vmatpush1.bf16.msra.mxu0 0
        %5325 = vmatprep.subr.bf16.mxu0 0
        %5326 = vmatpush1.bf16.msra.mxu0 0
        %5327 = vmatprep.subr.bf16.mxu0 0
        %5328 = vmatpush1.bf16.msra.mxu0 0
        %5329 = vmatprep.mubr.bf16.mxu0 0
        %5330 = vmatmul.mubr.bf16.gmra.mrb[0].mxu0 %v5188
        %v5331 = vpop.f32.mrb[0].mxu0
        %v5332 = vadd.f32 %v5210, %v5331
        %v5333 = vpop.f32.mrb[0].mxu0
        %v5334 = vadd.f32 %v5214, %v5333
        %v5335 = vpop.f32.mrb[0].mxu0
        %v5336 = vadd.f32 %v5210, %v5335
        %v5337 = vpop.f32.mrb[0].mxu0
        %v5338 = vadd.f32 %v5214, %v5337
        %5339 = vdwg.mxu0
        %v5340 = vadd.f32 %v5004, %v5332
        %v5341 = vadd.f32 %v5005, %v5334
        %v5342 = vadd.f32 %v5006, %v5336
        %v5343 = vadd.f32 %v5007, %v5338
        %v5344 = vld [vmem:[%s33] sm:$0x3]
        %v5345 = vld [vmem:[%s35] sm:$0x3]
        %v5346 = vmul.f32 %v5344, 0.0625
        %v5347 = vmul.f32 %v5345, 0.0625
        %v5348 = vadd.f32 %v5340, %v5341
        %5349 = vadd.xlane.f32.xlu0 %v5348
        %v5350 = vpop.xlane.xlu0 %5349
        %v5351 = vadd.f32 %v5342, %v5343
        %5352 = vadd.xlane.f32.xlu0 %v5351
        %v5353 = vpop.xlane.xlu0 %5352
        %v5354 = vmul.f32 %v5350, 0.00390625
        %v5355 = vmul.f32 %v5353, 0.00390625
        %v5356 = vmul.f32 %v5340, %v5340
        %v5357 = vmul.f32 %v5341, %v5341
        %v5358 = vmul.f32 %v5342, %v5342
        %v5359 = vmul.f32 %v5343, %v5343
        %v5360 = vadd.f32 %v5356, %v5357
        %5361 = vadd.xlane.f32.xlu0 %v5360
        %v5362 = vpop.xlane.xlu0 %5361
        %v5363 = vadd.f32 %v5358, %v5359
        %5364 = vadd.xlane.f32.xlu0 %v5363
        %v5365 = vpop.xlane.xlu0 %5364
        %v5366 = vmul.f32 %v5362, 0.00390625
        %v5367 = vmul.f32 %v5365, 0.00390625
        %v5368 = vmul.f32 %v5354, %v5354
        %v5369 = vmul.f32 %v5355, %v5355
        %v5370 = vsub.f32 %v5366, %v5368
        %v5371 = vsub.f32 %v5367, %v5369
        %v5372 = vsub.f32 %v5340, %v5354
        %v5373 = vsub.f32 %v5341, %v5354
        %v5374 = vsub.f32 %v5342, %v5355
        %v5375 = vsub.f32 %v5343, %v5355
        %v5376 = vadd.f32 %v5370, 1e-05
        %v5377 = vadd.f32 %v5371, 1e-05
        %v5378 = vrsqrt.pop %v5376
        %v5379 = vrsqrt.pop %v5377
        %v5380 = vmul.f32 %v5372, %v5378
        %v5381 = vmul.f32 %v5373, %v5378
        %v5382 = vmul.f32 %v5374, %v5379
        %v5383 = vmul.f32 %v5375, %v5379
        %v5385 = vlaneseq
        %v5386 = vshrl.u32 %v5385, 7
        %v5387 = vsub.s32 0, %v5386
        %v5388 = vrot.slane %v5346, %v5387
        %v5389 = vlaneseq
        %v5390 = vshrl.u32 %v5389, 7
        %v5391 = vsub.s32 1, %v5390
        %v5392 = vrot.slane %v5346, %v5391
        %v5395 = vmul.f32 %v5380, %v5388
        %v5396 = vmul.f32 %v5381, %v5392
        %v5397 = vmul.f32 %v5382, %v5388
        %v5398 = vmul.f32 %v5383, %v5392
        %v5400 = vlaneseq
        %v5401 = vshrl.u32 %v5400, 7
        %v5402 = vsub.s32 0, %v5401
        %v5403 = vrot.slane %v5347, %v5402
        %v5404 = vlaneseq
        %v5405 = vshrl.u32 %v5404, 7
        %v5406 = vsub.s32 1, %v5405
        %v5407 = vrot.slane %v5347, %v5406
        %v5410 = vadd.f32 %v5395, %v5403
        %v5411 = vadd.f32 %v5396, %v5407
        %v5412 = vadd.f32 %v5397, %v5403
        %v5413 = vadd.f32 %v5398, %v5407
        %v5414 = vld [vmem:[%s1069] sm:$0xff]
        %v5415 = vld [vmem:[%s1069 + $0x8] sm:$0xff]
        %v5416 = vld [vmem:[%s1069 + $0x10] sm:$0xff]
        %v5417 = vld [vmem:[%s1069 + $0x18] sm:$0xff]
        %v5418 = vld [vmem:[%s1069 + $0x20] sm:$0xff]
        %v5419 = vld [vmem:[%s37] sm:$0xff]
        %v5420 = vld [vmem:[%s37 + $0x8] sm:$0xff]
        %v5421 = vld [vmem:[%s37 + $0x10] sm:$0xff]
        %v5422 = vld [vmem:[%s37 + $0x18] sm:$0xff]
        %v5423 = vld [vmem:[%s37 + $0x20] sm:$0xff]
        %v5424 = vld [vmem:[%s37 + $0x28] sm:$0xff]
        %v5425 = vld [vmem:[%s37 + $0x30] sm:$0xff]
        %v5426 = vld [vmem:[%s37 + $0x38] sm:$0xff]
        %v5427 = vld [vmem:[%s37 + $0x40] sm:$0xff]
        %v5428 = vld [vmem:[%s37 + $0x48] sm:$0xff]
        %v5429 = vld [vmem:[%s37 + $0x50] sm:$0xff]
        %v5430 = vld [vmem:[%s37 + $0x58] sm:$0xff]
        %v5431 = vld [vmem:[%s37 + $0x60] sm:$0xff]
        %v5432 = vld [vmem:[%s37 + $0x68] sm:$0xff]
        %v5433 = vld [vmem:[%s37 + $0x70] sm:$0xff]
        %v5434 = vld [vmem:[%s37 + $0x78] sm:$0xff]
        %v5435 = vld [vmem:[%s37 + $0x80] sm:$0xff]
        %v5436 = vld [vmem:[%s37 + $0x88] sm:$0xff]
        %v5437 = vld [vmem:[%s37 + $0x90] sm:$0xff]
        %v5438 = vld [vmem:[%s37 + $0x98] sm:$0xff]
        %v5439 = vld [vmem:[%s37 + $0xa0] sm:$0xff]
        %v5440 = vld [vmem:[%s37 + $0xa8] sm:$0xff]
        %v5441 = vld [vmem:[%s37 + $0xb0] sm:$0xff]
        %v5442 = vld [vmem:[%s37 + $0xb8] sm:$0xff]
        %v5443 = vld [vmem:[%s37 + $0xc0] sm:$0xff]
        %v5444 = vld [vmem:[%s37 + $0xc8] sm:$0xff]
        %v5445 = vld [vmem:[%s37 + $0xd0] sm:$0xff]
        %v5446 = vld [vmem:[%s37 + $0xd8] sm:$0xff]
        %v5447 = vld [vmem:[%s37 + $0xe0] sm:$0xff]
        %v5448 = vld [vmem:[%s37 + $0xe8] sm:$0xff]
        %v5449 = vld [vmem:[%s37 + $0xf0] sm:$0xff]
        %v5450 = vld [vmem:[%s37 + $0xf8] sm:$0xff]
        %v5451 = vld [vmem:[%s37 + $0x100] sm:$0xff]
        %v5452 = vld [vmem:[%s37 + $0x108] sm:$0xff]
        %v5453 = vld [vmem:[%s37 + $0x110] sm:$0xff]
        %v5454 = vld [vmem:[%s37 + $0x118] sm:$0xff]
        %v5455 = vld [vmem:[%s37 + $0x120] sm:$0xff]
        %v5456 = vld [vmem:[%s37 + $0x128] sm:$0xff]
        %v5457 = vld [vmem:[%s37 + $0x130] sm:$0xff]
        %v5458 = vld [vmem:[%s37 + $0x138] sm:$0xff]
        %v5459 = vld [vmem:[%s37 + $0x140] sm:$0xff]
        %v5460 = vld [vmem:[%s37 + $0x148] sm:$0xff]
        %v5461 = vld [vmem:[%s37 + $0x150] sm:$0xff]
        %v5462 = vld [vmem:[%s37 + $0x158] sm:$0xff]
        %v5463 = vld [vmem:[%s37 + $0x160] sm:$0xff]
        %v5464 = vld [vmem:[%s37 + $0x168] sm:$0xff]
        %v5465 = vld [vmem:[%s37 + $0x170] sm:$0xff]
        %v5466 = vld [vmem:[%s37 + $0x178] sm:$0xff]
        %v5467 = vld [vmem:[%s37 + $0x180] sm:$0xff]
        %v5468 = vld [vmem:[%s37 + $0x188] sm:$0xff]
        %v5469 = vld [vmem:[%s37 + $0x190] sm:$0xff]
        %v5470 = vld [vmem:[%s37 + $0x198] sm:$0xff]
        %v5471 = vld [vmem:[%s37 + $0x1a0] sm:$0xff]
        %v5472 = vld [vmem:[%s37 + $0x1a8] sm:$0xff]
        %v5473 = vld [vmem:[%s37 + $0x1b0] sm:$0xff]
        %v5474 = vld [vmem:[%s37 + $0x1b8] sm:$0xff]
        %v5475 = vld [vmem:[%s37 + $0x1c0] sm:$0xff]
        %v5476 = vld [vmem:[%s37 + $0x1c8] sm:$0xff]
        %v5477 = vld [vmem:[%s37 + $0x1d0] sm:$0xff]
        %v5478 = vld [vmem:[%s37 + $0x1d8] sm:$0xff]
        %v5479 = vld [vmem:[%s37 + $0x1e0] sm:$0xff]
        %v5480 = vld [vmem:[%s37 + $0x1e8] sm:$0xff]
        %v5481 = vld [vmem:[%s37 + $0x1f0] sm:$0xff]
        %v5482 = vld [vmem:[%s37 + $0x1f8] sm:$0xff]
        %v5488 = vunpack.c.l.b16 %v5414
        %v5489 = vunpack.c.h.b16 %v5414
        %v5490 = vunpack.c.l.b16 %v5415
        %v5491 = vunpack.c.h.b16 %v5415
        %v5492 = vunpack.c.l.b16 %v5416
        %v5493 = vunpack.c.h.b16 %v5416
        %v5494 = vunpack.c.l.b16 %v5417
        %v5495 = vunpack.c.h.b16 %v5417
        %v5496 = vunpack.c.l.b16 %v5418
        %v5497 = vunpack.c.h.b16 %v5418
        %v5498 = vpack.c.b16 %v5490, %v5488
        %v5499 = vpack.c.b16 %v5491, %v5489
        %v5500 = vpack.c.b16 %v5494, %v5492
        %v5501 = vpack.c.b16 %v5495, %v5493
        %v5502 = vpack.c.b16 %v5496, %v5496
        %v5503 = vpack.c.b16 %v5497, %v5497
        %v5505 = vshrl.u32 %v5498, 16
        %v5507 = vshll.u32 %v5498, 16
        %v5509 = vrot.slane %v5507, 1
        %v5510 = vor.u32 %v5505, %v5509
        %v5512 = vshll.u32 %v5500, 16
        %v5514 = vrot.slane %v5512, 1
        %v5515 = vsel %vm1153, %v5510, %v5514
        %v5517 = vshrl.u32 %v5499, 16
        %v5519 = vshll.u32 %v5499, 16
        %v5521 = vrot.slane %v5519, 1
        %v5522 = vor.u32 %v5517, %v5521
        %v5524 = vshll.u32 %v5501, 16
        %v5526 = vrot.slane %v5524, 1
        %v5527 = vsel %vm1153, %v5522, %v5526
        %v5528 = vshrl.u32 %v5500, 16
        %v5530 = vor.u32 %v5528, %v5514
        %v5532 = vshll.u32 %v5502, 16
        %v5534 = vrot.slane %v5532, 1
        %v5535 = vsel %vm1153, %v5530, %v5534
        %v5536 = vshrl.u32 %v5501, 16
        %v5538 = vor.u32 %v5536, %v5526
        %v5540 = vshll.u32 %v5503, 16
        %v5542 = vrot.slane %v5540, 1
        %v5543 = vsel %vm1153, %v5538, %v5542
        %v5580 = vunpack.c.l.b16 %v5451
        %v5581 = vunpack.c.h.b16 %v5451
        %v5582 = vunpack.c.l.b16 %v5452
        %v5583 = vunpack.c.h.b16 %v5452
        %v5584 = vunpack.c.l.b16 %v5453
        %v5585 = vunpack.c.h.b16 %v5453
        %v5586 = vunpack.c.l.b16 %v5454
        %v5587 = vunpack.c.h.b16 %v5454
        %v5588 = vunpack.c.l.b16 %v5455
        %v5589 = vunpack.c.h.b16 %v5455
        %v5590 = vunpack.c.l.b16 %v5456
        %v5591 = vunpack.c.h.b16 %v5456
        %v5592 = vunpack.c.l.b16 %v5457
        %v5593 = vunpack.c.h.b16 %v5457
        %v5594 = vunpack.c.l.b16 %v5458
        %v5595 = vunpack.c.h.b16 %v5458
        %v5596 = vunpack.c.l.b16 %v5459
        %v5597 = vunpack.c.h.b16 %v5459
        %v5598 = vunpack.c.l.b16 %v5460
        %v5599 = vunpack.c.h.b16 %v5460
        %v5600 = vunpack.c.l.b16 %v5461
        %v5601 = vunpack.c.h.b16 %v5461
        %v5602 = vunpack.c.l.b16 %v5462
        %v5603 = vunpack.c.h.b16 %v5462
        %v5604 = vunpack.c.l.b16 %v5463
        %v5605 = vunpack.c.h.b16 %v5463
        %v5606 = vunpack.c.l.b16 %v5464
        %v5607 = vunpack.c.h.b16 %v5464
        %v5608 = vunpack.c.l.b16 %v5465
        %v5609 = vunpack.c.h.b16 %v5465
        %v5610 = vunpack.c.l.b16 %v5466
        %v5611 = vunpack.c.h.b16 %v5466
        %v5612 = vunpack.c.l.b16 %v5467
        %v5613 = vunpack.c.h.b16 %v5467
        %v5614 = vunpack.c.l.b16 %v5468
        %v5615 = vunpack.c.h.b16 %v5468
        %v5616 = vunpack.c.l.b16 %v5469
        %v5617 = vunpack.c.h.b16 %v5469
        %v5618 = vunpack.c.l.b16 %v5470
        %v5619 = vunpack.c.h.b16 %v5470
        %v5620 = vunpack.c.l.b16 %v5471
        %v5621 = vunpack.c.h.b16 %v5471
        %v5622 = vunpack.c.l.b16 %v5472
        %v5623 = vunpack.c.h.b16 %v5472
        %v5624 = vunpack.c.l.b16 %v5473
        %v5625 = vunpack.c.h.b16 %v5473
        %v5626 = vunpack.c.l.b16 %v5474
        %v5627 = vunpack.c.h.b16 %v5474
        %v5628 = vunpack.c.l.b16 %v5475
        %v5629 = vunpack.c.h.b16 %v5475
        %v5630 = vunpack.c.l.b16 %v5476
        %v5631 = vunpack.c.h.b16 %v5476
        %v5632 = vunpack.c.l.b16 %v5477
        %v5633 = vunpack.c.h.b16 %v5477
        %v5634 = vunpack.c.l.b16 %v5478
        %v5635 = vunpack.c.h.b16 %v5478
        %v5636 = vunpack.c.l.b16 %v5479
        %v5637 = vunpack.c.h.b16 %v5479
        %v5638 = vunpack.c.l.b16 %v5480
        %v5639 = vunpack.c.h.b16 %v5480
        %v5640 = vunpack.c.l.b16 %v5481
        %v5641 = vunpack.c.h.b16 %v5481
        %v5642 = vunpack.c.l.b16 %v5482
        %v5643 = vunpack.c.h.b16 %v5482
        %v5644 = vpack.c.b16 %v5582, %v5580
        %v5645 = vpack.c.b16 %v5583, %v5581
        %v5646 = vpack.c.b16 %v5586, %v5584
        %v5647 = vpack.c.b16 %v5587, %v5585
        %v5648 = vpack.c.b16 %v5590, %v5588
        %v5649 = vpack.c.b16 %v5591, %v5589
        %v5650 = vpack.c.b16 %v5594, %v5592
        %v5651 = vpack.c.b16 %v5595, %v5593
        %v5652 = vpack.c.b16 %v5598, %v5596
        %v5653 = vpack.c.b16 %v5599, %v5597
        %v5654 = vpack.c.b16 %v5602, %v5600
        %v5655 = vpack.c.b16 %v5603, %v5601
        %v5656 = vpack.c.b16 %v5606, %v5604
        %v5657 = vpack.c.b16 %v5607, %v5605
        %v5658 = vpack.c.b16 %v5610, %v5608
        %v5659 = vpack.c.b16 %v5611, %v5609
        %v5660 = vpack.c.b16 %v5614, %v5612
        %v5661 = vpack.c.b16 %v5615, %v5613
        %v5662 = vpack.c.b16 %v5618, %v5616
        %v5663 = vpack.c.b16 %v5619, %v5617
        %v5664 = vpack.c.b16 %v5622, %v5620
        %v5665 = vpack.c.b16 %v5623, %v5621
        %v5666 = vpack.c.b16 %v5626, %v5624
        %v5667 = vpack.c.b16 %v5627, %v5625
        %v5668 = vpack.c.b16 %v5630, %v5628
        %v5669 = vpack.c.b16 %v5631, %v5629
        %v5670 = vpack.c.b16 %v5634, %v5632
        %v5671 = vpack.c.b16 %v5635, %v5633
        %v5672 = vpack.c.b16 %v5638, %v5636
        %v5673 = vpack.c.b16 %v5639, %v5637
        %v5674 = vpack.c.b16 %v5642, %v5640
        %v5675 = vpack.c.b16 %v5643, %v5641
        %5708 = vmatprep.subr.bf16.mxu0 %v5645
        %5709 = vmatpush1.bf16.msra.mxu0 %v5644
        %5710 = vmatprep.subr.bf16.mxu0 %v5647
        %5711 = vmatpush1.bf16.msra.mxu0 %v5646
        %5712 = vmatprep.subr.bf16.mxu0 %v5649
        %5713 = vmatpush1.bf16.msra.mxu0 %v5648
        %5714 = vmatprep.subr.bf16.mxu0 %v5651
        %5715 = vmatpush1.bf16.msra.mxu0 %v5650
        %5716 = vmatprep.subr.bf16.mxu0 %v5653
        %5717 = vmatpush1.bf16.msra.mxu0 %v5652
        %5718 = vmatprep.subr.bf16.mxu0 %v5655
        %5719 = vmatpush1.bf16.msra.mxu0 %v5654
        %5720 = vmatprep.subr.bf16.mxu0 %v5657
        %5721 = vmatpush1.bf16.msra.mxu0 %v5656
        %5722 = vmatprep.subr.bf16.mxu0 %v5659
        %5723 = vmatpush1.bf16.msra.mxu0 %v5658
        %5724 = vmatprep.subr.bf16.mxu0 %v5661
        %5725 = vmatpush1.bf16.msra.mxu0 %v5660
        %5726 = vmatprep.subr.bf16.mxu0 %v5663
        %5727 = vmatpush1.bf16.msra.mxu0 %v5662
        %5728 = vmatprep.subr.bf16.mxu0 %v5665
        %5729 = vmatpush1.bf16.msra.mxu0 %v5664
        %5730 = vmatprep.subr.bf16.mxu0 %v5667
        %5731 = vmatpush1.bf16.msra.mxu0 %v5666
        %5732 = vmatprep.subr.bf16.mxu0 %v5669
        %5733 = vmatpush1.bf16.msra.mxu0 %v5668
        %5734 = vmatprep.subr.bf16.mxu0 %v5671
        %5735 = vmatpush1.bf16.msra.mxu0 %v5670
        %5736 = vmatprep.subr.bf16.mxu0 %v5673
        %5737 = vmatpush1.bf16.msra.mxu0 %v5672
        %5738 = vmatprep.subr.bf16.mxu0 %v5675
        %5739 = vmatpush1.bf16.msra.mxu0 %v5674
        %5740 = vmatprep.mubr.bf16.mxu0 %v5527
        %5741 = vmatmul.mubr.bf16.gmra.mrb[0].mxu0 %v5515
        %v5742 = vpop.f32.mrb[0].mxu0
        %v5743 = vadd.f32 0.0, %v5742
        %v5744 = vpop.f32.mrb[0].mxu0
        %v5745 = vadd.f32 0.0, %v5744
        %v5746 = vpop.f32.mrb[0].mxu0
        %v5747 = vadd.f32 0.0, %v5746
        %v5748 = vpop.f32.mrb[0].mxu0
        %v5749 = vadd.f32 0.0, %v5748
        %5750 = vmatprep.mubr.bf16.mxu0 %v5543
        %5751 = vmatmul.mubr.bf16.gmra.mrb[0].mxu0 %v5535
        %v5752 = vpop.f32.mrb[0].mxu0
        %v5753 = vadd.f32 0.0, %v5752
        %v5754 = vpop.f32.mrb[0].mxu0
        %v5755 = vadd.f32 0.0, %v5754
        %v5756 = vpop.f32.mrb[0].mxu0
        %v5757 = vadd.f32 0.0, %v5756
        %v5758 = vpop.f32.mrb[0].mxu0
        %v5759 = vadd.f32 0.0, %v5758
        %5760 = vdwg.mxu0
        %v5797 = vunpack.c.l.b16 %v5419
        %v5798 = vunpack.c.h.b16 %v5419
        %v5799 = vunpack.c.l.b16 %v5420
        %v5800 = vunpack.c.h.b16 %v5420
        %v5801 = vunpack.c.l.b16 %v5421
        %v5802 = vunpack.c.h.b16 %v5421
        %v5803 = vunpack.c.l.b16 %v5422
        %v5804 = vunpack.c.h.b16 %v5422
        %v5805 = vunpack.c.l.b16 %v5423
        %v5806 = vunpack.c.h.b16 %v5423
        %v5807 = vunpack.c.l.b16 %v5424
        %v5808 = vunpack.c.h.b16 %v5424
        %v5809 = vunpack.c.l.b16 %v5425
        %v5810 = vunpack.c.h.b16 %v5425
        %v5811 = vunpack.c.l.b16 %v5426
        %v5812 = vunpack.c.h.b16 %v5426
        %v5813 = vunpack.c.l.b16 %v5427
        %v5814 = vunpack.c.h.b16 %v5427
        %v5815 = vunpack.c.l.b16 %v5428
        %v5816 = vunpack.c.h.b16 %v5428
        %v5817 = vunpack.c.l.b16 %v5429
        %v5818 = vunpack.c.h.b16 %v5429
        %v5819 = vunpack.c.l.b16 %v5430
        %v5820 = vunpack.c.h.b16 %v5430
        %v5821 = vunpack.c.l.b16 %v5431
        %v5822 = vunpack.c.h.b16 %v5431
        %v5823 = vunpack.c.l.b16 %v5432
        %v5824 = vunpack.c.h.b16 %v5432
        %v5825 = vunpack.c.l.b16 %v5433
        %v5826 = vunpack.c.h.b16 %v5433
        %v5827 = vunpack.c.l.b16 %v5434
        %v5828 = vunpack.c.h.b16 %v5434
        %v5829 = vunpack.c.l.b16 %v5435
        %v5830 = vunpack.c.h.b16 %v5435
        %v5831 = vunpack.c.l.b16 %v5436
        %v5832 = vunpack.c.h.b16 %v5436
        %v5833 = vunpack.c.l.b16 %v5437
        %v5834 = vunpack.c.h.b16 %v5437
        %v5835 = vunpack.c.l.b16 %v5438
        %v5836 = vunpack.c.h.b16 %v5438
        %v5837 = vunpack.c.l.b16 %v5439
        %v5838 = vunpack.c.h.b16 %v5439
        %v5839 = vunpack.c.l.b16 %v5440
        %v5840 = vunpack.c.h.b16 %v5440
        %v5841 = vunpack.c.l.b16 %v5441
        %v5842 = vunpack.c.h.b16 %v5441
        %v5843 = vunpack.c.l.b16 %v5442
        %v5844 = vunpack.c.h.b16 %v5442
        %v5845 = vunpack.c.l.b16 %v5443
        %v5846 = vunpack.c.h.b16 %v5443
        %v5847 = vunpack.c.l.b16 %v5444
        %v5848 = vunpack.c.h.b16 %v5444
        %v5849 = vunpack.c.l.b16 %v5445
        %v5850 = vunpack.c.h.b16 %v5445
        %v5851 = vunpack.c.l.b16 %v5446
        %v5852 = vunpack.c.h.b16 %v5446
        %v5853 = vunpack.c.l.b16 %v5447
        %v5854 = vunpack.c.h.b16 %v5447
        %v5855 = vunpack.c.l.b16 %v5448
        %v5856 = vunpack.c.h.b16 %v5448
        %v5857 = vunpack.c.l.b16 %v5449
        %v5858 = vunpack.c.h.b16 %v5449
        %v5859 = vunpack.c.l.b16 %v5450
        %v5860 = vunpack.c.h.b16 %v5450
        %v5861 = vpack.c.b16 %v5799, %v5797
        %v5862 = vpack.c.b16 %v5800, %v5798
        %v5863 = vpack.c.b16 %v5803, %v5801
        %v5864 = vpack.c.b16 %v5804, %v5802
        %v5865 = vpack.c.b16 %v5807, %v5805
        %v5866 = vpack.c.b16 %v5808, %v5806
        %v5867 = vpack.c.b16 %v5811, %v5809
        %v5868 = vpack.c.b16 %v5812, %v5810
        %v5869 = vpack.c.b16 %v5815, %v5813
        %v5870 = vpack.c.b16 %v5816, %v5814
        %v5871 = vpack.c.b16 %v5819, %v5817
        %v5872 = vpack.c.b16 %v5820, %v5818
        %v5873 = vpack.c.b16 %v5823, %v5821
        %v5874 = vpack.c.b16 %v5824, %v5822
        %v5875 = vpack.c.b16 %v5827, %v5825
        %v5876 = vpack.c.b16 %v5828, %v5826
        %v5877 = vpack.c.b16 %v5831, %v5829
        %v5878 = vpack.c.b16 %v5832, %v5830
        %v5879 = vpack.c.b16 %v5835, %v5833
        %v5880 = vpack.c.b16 %v5836, %v5834
        %v5881 = vpack.c.b16 %v5839, %v5837
        %v5882 = vpack.c.b16 %v5840, %v5838
        %v5883 = vpack.c.b16 %v5843, %v5841
        %v5884 = vpack.c.b16 %v5844, %v5842
        %v5885 = vpack.c.b16 %v5847, %v5845
        %v5886 = vpack.c.b16 %v5848, %v5846
        %v5887 = vpack.c.b16 %v5851, %v5849
        %v5888 = vpack.c.b16 %v5852, %v5850
        %v5889 = vpack.c.b16 %v5855, %v5853
        %v5890 = vpack.c.b16 %v5856, %v5854
        %v5891 = vpack.c.b16 %v5859, %v5857
        %v5892 = vpack.c.b16 %v5860, %v5858
        %5925 = vmatprep.subr.bf16.mxu0 %v5862
        %5926 = vmatpush1.bf16.msra.mxu0 %v5861
        %5927 = vmatprep.subr.bf16.mxu0 %v5864
        %5928 = vmatpush1.bf16.msra.mxu0 %v5863
        %5929 = vmatprep.subr.bf16.mxu0 %v5866
        %5930 = vmatpush1.bf16.msra.mxu0 %v5865
        %5931 = vmatprep.subr.bf16.mxu0 %v5868
        %5932 = vmatpush1.bf16.msra.mxu0 %v5867
        %5933 = vmatprep.subr.bf16.mxu0 %v5870
        %5934 = vmatpush1.bf16.msra.mxu0 %v5869
        %5935 = vmatprep.subr.bf16.mxu0 %v5872
        %5936 = vmatpush1.bf16.msra.mxu0 %v5871
        %5937 = vmatprep.subr.bf16.mxu0 %v5874
        %5938 = vmatpush1.bf16.msra.mxu0 %v5873
        %5939 = vmatprep.subr.bf16.mxu0 %v5876
        %5940 = vmatpush1.bf16.msra.mxu0 %v5875
        %5941 = vmatprep.subr.bf16.mxu0 %v5878
        %5942 = vmatpush1.bf16.msra.mxu0 %v5877
        %5943 = vmatprep.subr.bf16.mxu0 %v5880
        %5944 = vmatpush1.bf16.msra.mxu0 %v5879
        %5945 = vmatprep.subr.bf16.mxu0 %v5882
        %5946 = vmatpush1.bf16.msra.mxu0 %v5881
        %5947 = vmatprep.subr.bf16.mxu0 %v5884
        %5948 = vmatpush1.bf16.msra.mxu0 %v5883
        %5949 = vmatprep.subr.bf16.mxu0 %v5886
        %5950 = vmatpush1.bf16.msra.mxu0 %v5885
        %5951 = vmatprep.subr.bf16.mxu0 %v5888
        %5952 = vmatpush1.bf16.msra.mxu0 %v5887
        %5953 = vmatprep.subr.bf16.mxu0 %v5890
        %5954 = vmatpush1.bf16.msra.mxu0 %v5889
        %5955 = vmatprep.subr.bf16.mxu0 %v5892
        %5956 = vmatpush1.bf16.msra.mxu0 %v5891
        %5957 = vmatprep.mubr.bf16.mxu0 %v5499
        %5958 = vmatmul.mubr.bf16.gmra.mrb[0].mxu0 %v5498
        %v5959 = vpop.f32.mrb[0].mxu0
        %v5960 = vadd.f32 %v5743, %v5959
        %v5961 = vpop.f32.mrb[0].mxu0
        %v5962 = vadd.f32 %v5745, %v5961
        %v5963 = vpop.f32.mrb[0].mxu0
        %v5964 = vadd.f32 %v5747, %v5963
        %v5965 = vpop.f32.mrb[0].mxu0
        %v5966 = vadd.f32 %v5749, %v5965
        %5967 = vmatprep.mubr.bf16.mxu0 %v5501
        %5968 = vmatmul.mubr.bf16.gmra.mrb[0].mxu0 %v5500
        %v5969 = vpop.f32.mrb[0].mxu0
        %v5970 = vadd.f32 %v5753, %v5969
        %v5971 = vpop.f32.mrb[0].mxu0
        %v5972 = vadd.f32 %v5755, %v5971
        %v5973 = vpop.f32.mrb[0].mxu0
        %v5974 = vadd.f32 %v5757, %v5973
        %v5975 = vpop.f32.mrb[0].mxu0
        %v5976 = vadd.f32 %v5759, %v5975
        %5977 = vdwg.mxu0
        %v5978 = vld [vmem:[%s37 + $0x200] sm:$0xff]
        %v5979 = vld [vmem:[%s37 + $0x208] sm:$0xff]
        %v5980 = vld [vmem:[%s37 + $0x210] sm:$0xff]
        %v5981 = vld [vmem:[%s37 + $0x218] sm:$0xff]
        %v5982 = vld [vmem:[%s37 + $0x220] sm:$0xff]
        %v5983 = vld [vmem:[%s37 + $0x228] sm:$0xff]
        %v5984 = vld [vmem:[%s37 + $0x230] sm:$0xff]
        %v5985 = vld [vmem:[%s37 + $0x238] sm:$0xff]
        %v5986 = vld [vmem:[%s37 + $0x240] sm:$0xff]
        %v5987 = vld [vmem:[%s37 + $0x248] sm:$0xff]
        %v5988 = vld [vmem:[%s37 + $0x250] sm:$0xff]
        %v5989 = vld [vmem:[%s37 + $0x258] sm:$0xff]
        %v5990 = vld [vmem:[%s37 + $0x260] sm:$0xff]
        %v5991 = vld [vmem:[%s37 + $0x268] sm:$0xff]
        %v5992 = vld [vmem:[%s37 + $0x270] sm:$0xff]
        %v5993 = vld [vmem:[%s37 + $0x278] sm:$0xff]
        %v5994 = vld [vmem:[%s37 + $0x280] sm:$0xff]
        %v5995 = vld [vmem:[%s37 + $0x288] sm:$0xff]
        %v5996 = vld [vmem:[%s37 + $0x290] sm:$0xff]
        %v5997 = vld [vmem:[%s37 + $0x298] sm:$0xff]
        %v5998 = vld [vmem:[%s37 + $0x2a0] sm:$0xff]
        %v5999 = vld [vmem:[%s37 + $0x2a8] sm:$0xff]
        %v6000 = vld [vmem:[%s37 + $0x2b0] sm:$0xff]
        %v6001 = vld [vmem:[%s37 + $0x2b8] sm:$0xff]
        %v6002 = vld [vmem:[%s37 + $0x2c0] sm:$0xff]
        %v6003 = vld [vmem:[%s37 + $0x2c8] sm:$0xff]
        %v6004 = vld [vmem:[%s37 + $0x2d0] sm:$0xff]
        %v6005 = vld [vmem:[%s37 + $0x2d8] sm:$0xff]
        %v6006 = vld [vmem:[%s37 + $0x2e0] sm:$0xff]
        %v6007 = vld [vmem:[%s37 + $0x2e8] sm:$0xff]
        %v6008 = vld [vmem:[%s37 + $0x2f0] sm:$0xff]
        %v6009 = vld [vmem:[%s37 + $0x2f8] sm:$0xff]
        %v6010 = vrot.slane %v5498, 1
        %v6011 = vrot.slane %v5500, 1
        %v6012 = vsel %vm1620, %v6010, %v6011
        %v6013 = vrot.slane %v5499, 1
        %v6014 = vrot.slane %v5501, 1
        %v6015 = vsel %vm1620, %v6013, %v6014
        %v6016 = vrot.slane %v5502, 1
        %v6017 = vsel %vm1620, %v6011, %v6016
        %v6018 = vrot.slane %v5503, 1
        %v6019 = vsel %vm1620, %v6014, %v6018
        %v6056 = vunpack.c.l.b16 %v5978
        %v6057 = vunpack.c.h.b16 %v5978
        %v6058 = vunpack.c.l.b16 %v5979
        %v6059 = vunpack.c.h.b16 %v5979
        %v6060 = vunpack.c.l.b16 %v5980
        %v6061 = vunpack.c.h.b16 %v5980
        %v6062 = vunpack.c.l.b16 %v5981
        %v6063 = vunpack.c.h.b16 %v5981
        %v6064 = vunpack.c.l.b16 %v5982
        %v6065 = vunpack.c.h.b16 %v5982
        %v6066 = vunpack.c.l.b16 %v5983
        %v6067 = vunpack.c.h.b16 %v5983
        %v6068 = vunpack.c.l.b16 %v5984
        %v6069 = vunpack.c.h.b16 %v5984
        %v6070 = vunpack.c.l.b16 %v5985
        %v6071 = vunpack.c.h.b16 %v5985
        %v6072 = vunpack.c.l.b16 %v5986
        %v6073 = vunpack.c.h.b16 %v5986
        %v6074 = vunpack.c.l.b16 %v5987
        %v6075 = vunpack.c.h.b16 %v5987
        %v6076 = vunpack.c.l.b16 %v5988
        %v6077 = vunpack.c.h.b16 %v5988
        %v6078 = vunpack.c.l.b16 %v5989
        %v6079 = vunpack.c.h.b16 %v5989
        %v6080 = vunpack.c.l.b16 %v5990
        %v6081 = vunpack.c.h.b16 %v5990
        %v6082 = vunpack.c.l.b16 %v5991
        %v6083 = vunpack.c.h.b16 %v5991
        %v6084 = vunpack.c.l.b16 %v5992
        %v6085 = vunpack.c.h.b16 %v5992
        %v6086 = vunpack.c.l.b16 %v5993
        %v6087 = vunpack.c.h.b16 %v5993
        %v6088 = vunpack.c.l.b16 %v5994
        %v6089 = vunpack.c.h.b16 %v5994
        %v6090 = vunpack.c.l.b16 %v5995
        %v6091 = vunpack.c.h.b16 %v5995
        %v6092 = vunpack.c.l.b16 %v5996
        %v6093 = vunpack.c.h.b16 %v5996
        %v6094 = vunpack.c.l.b16 %v5997
        %v6095 = vunpack.c.h.b16 %v5997
        %v6096 = vunpack.c.l.b16 %v5998
        %v6097 = vunpack.c.h.b16 %v5998
        %v6098 = vunpack.c.l.b16 %v5999
        %v6099 = vunpack.c.h.b16 %v5999
        %v6100 = vunpack.c.l.b16 %v6000
        %v6101 = vunpack.c.h.b16 %v6000
        %v6102 = vunpack.c.l.b16 %v6001
        %v6103 = vunpack.c.h.b16 %v6001
        %v6104 = vunpack.c.l.b16 %v6002
        %v6105 = vunpack.c.h.b16 %v6002
        %v6106 = vunpack.c.l.b16 %v6003
        %v6107 = vunpack.c.h.b16 %v6003
        %v6108 = vunpack.c.l.b16 %v6004
        %v6109 = vunpack.c.h.b16 %v6004
        %v6110 = vunpack.c.l.b16 %v6005
        %v6111 = vunpack.c.h.b16 %v6005
        %v6112 = vunpack.c.l.b16 %v6006
        %v6113 = vunpack.c.h.b16 %v6006
        %v6114 = vunpack.c.l.b16 %v6007
        %v6115 = vunpack.c.h.b16 %v6007
        %v6116 = vunpack.c.l.b16 %v6008
        %v6117 = vunpack.c.h.b16 %v6008
        %v6118 = vunpack.c.l.b16 %v6009
        %v6119 = vunpack.c.h.b16 %v6009
        %v6120 = vpack.c.b16 %v6058, %v6056
        %v6121 = vpack.c.b16 %v6059, %v6057
        %v6122 = vpack.c.b16 %v6062, %v6060
        %v6123 = vpack.c.b16 %v6063, %v6061
        %v6124 = vpack.c.b16 %v6066, %v6064
        %v6125 = vpack.c.b16 %v6067, %v6065
        %v6126 = vpack.c.b16 %v6070, %v6068
        %v6127 = vpack.c.b16 %v6071, %v6069
        %v6128 = vpack.c.b16 %v6074, %v6072
        %v6129 = vpack.c.b16 %v6075, %v6073
        %v6130 = vpack.c.b16 %v6078, %v6076
        %v6131 = vpack.c.b16 %v6079, %v6077
        %v6132 = vpack.c.b16 %v6082, %v6080
        %v6133 = vpack.c.b16 %v6083, %v6081
        %v6134 = vpack.c.b16 %v6086, %v6084
        %v6135 = vpack.c.b16 %v6087, %v6085
        %v6136 = vpack.c.b16 %v6090, %v6088
        %v6137 = vpack.c.b16 %v6091, %v6089
        %v6138 = vpack.c.b16 %v6094, %v6092
        %v6139 = vpack.c.b16 %v6095, %v6093
        %v6140 = vpack.c.b16 %v6098, %v6096
        %v6141 = vpack.c.b16 %v6099, %v6097
        %v6142 = vpack.c.b16 %v6102, %v6100
        %v6143 = vpack.c.b16 %v6103, %v6101
        %v6144 = vpack.c.b16 %v6106, %v6104
        %v6145 = vpack.c.b16 %v6107, %v6105
        %v6146 = vpack.c.b16 %v6110, %v6108
        %v6147 = vpack.c.b16 %v6111, %v6109
        %v6148 = vpack.c.b16 %v6114, %v6112
        %v6149 = vpack.c.b16 %v6115, %v6113
        %v6150 = vpack.c.b16 %v6118, %v6116
        %v6151 = vpack.c.b16 %v6119, %v6117
        %6184 = vmatprep.subr.bf16.mxu0 %v6121
        %6185 = vmatpush1.bf16.msra.mxu0 %v6120
        %6186 = vmatprep.subr.bf16.mxu0 %v6123
        %6187 = vmatpush1.bf16.msra.mxu0 %v6122
        %6188 = vmatprep.subr.bf16.mxu0 %v6125
        %6189 = vmatpush1.bf16.msra.mxu0 %v6124
        %6190 = vmatprep.subr.bf16.mxu0 %v6127
        %6191 = vmatpush1.bf16.msra.mxu0 %v6126
        %6192 = vmatprep.subr.bf16.mxu0 %v6129
        %6193 = vmatpush1.bf16.msra.mxu0 %v6128
        %6194 = vmatprep.subr.bf16.mxu0 %v6131
        %6195 = vmatpush1.bf16.msra.mxu0 %v6130
        %6196 = vmatprep.subr.bf16.mxu0 %v6133
        %6197 = vmatpush1.bf16.msra.mxu0 %v6132
        %6198 = vmatprep.subr.bf16.mxu0 %v6135
        %6199 = vmatpush1.bf16.msra.mxu0 %v6134
        %6200 = vmatprep.subr.bf16.mxu0 %v6137
        %6201 = vmatpush1.bf16.msra.mxu0 %v6136
        %6202 = vmatprep.subr.bf16.mxu0 %v6139
        %6203 = vmatpush1.bf16.msra.mxu0 %v6138
        %6204 = vmatprep.subr.bf16.mxu0 %v6141
        %6205 = vmatpush1.bf16.msra.mxu0 %v6140
        %6206 = vmatprep.subr.bf16.mxu0 %v6143
        %6207 = vmatpush1.bf16.msra.mxu0 %v6142
        %6208 = vmatprep.subr.bf16.mxu0 %v6145
        %6209 = vmatpush1.bf16.msra.mxu0 %v6144
        %6210 = vmatprep.subr.bf16.mxu0 %v6147
        %6211 = vmatpush1.bf16.msra.mxu0 %v6146
        %6212 = vmatprep.subr.bf16.mxu0 %v6149
        %6213 = vmatpush1.bf16.msra.mxu0 %v6148
        %6214 = vmatprep.subr.bf16.mxu0 %v6151
        %6215 = vmatpush1.bf16.msra.mxu0 %v6150
        %6216 = vmatprep.mubr.bf16.mxu0 %v6015
        %6217 = vmatmul.mubr.bf16.gmra.mrb[0].mxu0 %v6012
        %v6218 = vpop.f32.mrb[0].mxu0
        %v6219 = vadd.f32 0.0, %v6218
        %v6220 = vpop.f32.mrb[0].mxu0
        %v6221 = vadd.f32 0.0, %v6220
        %v6222 = vpop.f32.mrb[0].mxu0
        %v6223 = vadd.f32 0.0, %v6222
        %v6224 = vpop.f32.mrb[0].mxu0
        %v6225 = vadd.f32 0.0, %v6224
        %6226 = vmatprep.mubr.bf16.mxu0 %v6019
        %6227 = vmatmul.mubr.bf16.gmra.mrb[0].mxu0 %v6017
        %v6228 = vpop.f32.mrb[0].mxu0
        %v6229 = vadd.f32 0.0, %v6228
        %v6230 = vpop.f32.mrb[0].mxu0
        %v6231 = vadd.f32 0.0, %v6230
        %v6232 = vpop.f32.mrb[0].mxu0
        %v6233 = vadd.f32 0.0, %v6232
        %v6234 = vpop.f32.mrb[0].mxu0
        %v6235 = vadd.f32 0.0, %v6234
        %6236 = vdwg.mxu0
        %v6237 = vadd.f32 %v5960, %v6219
        %v6238 = vadd.f32 %v5962, %v6221
        %v6239 = vadd.f32 %v5964, %v6223
        %v6240 = vadd.f32 %v5966, %v6225
        %v6241 = vadd.f32 %v5970, %v6229
        %v6242 = vadd.f32 %v5972, %v6231
        %v6243 = vadd.f32 %v5974, %v6233
        %v6244 = vadd.f32 %v5976, %v6235
        %v6245 = vld [vmem:[%s37 + $0x300] sm:$0xff]
        %v6246 = vld [vmem:[%s37 + $0x308] sm:$0xff]
        %v6247 = vld [vmem:[%s37 + $0x310] sm:$0xff]
        %v6248 = vld [vmem:[%s37 + $0x318] sm:$0xff]
        %v6249 = vld [vmem:[%s37 + $0x320] sm:$0xff]
        %v6250 = vld [vmem:[%s37 + $0x328] sm:$0xff]
        %v6251 = vld [vmem:[%s37 + $0x330] sm:$0xff]
        %v6252 = vld [vmem:[%s37 + $0x338] sm:$0xff]
        %v6253 = vld [vmem:[%s37 + $0x340] sm:$0xff]
        %v6254 = vld [vmem:[%s37 + $0x348] sm:$0xff]
        %v6255 = vld [vmem:[%s37 + $0x350] sm:$0xff]
        %v6256 = vld [vmem:[%s37 + $0x358] sm:$0xff]
        %v6257 = vld [vmem:[%s37 + $0x360] sm:$0xff]
        %v6258 = vld [vmem:[%s37 + $0x368] sm:$0xff]
        %v6259 = vld [vmem:[%s37 + $0x370] sm:$0xff]
        %v6260 = vld [vmem:[%s37 + $0x378] sm:$0xff]
        %v6261 = vld [vmem:[%s37 + $0x380] sm:$0xff]
        %v6262 = vld [vmem:[%s37 + $0x388] sm:$0xff]
        %v6263 = vld [vmem:[%s37 + $0x390] sm:$0xff]
        %v6264 = vld [vmem:[%s37 + $0x398] sm:$0xff]
        %v6265 = vld [vmem:[%s37 + $0x3a0] sm:$0xff]
        %v6266 = vld [vmem:[%s37 + $0x3a8] sm:$0xff]
        %v6267 = vld [vmem:[%s37 + $0x3b0] sm:$0xff]
        %v6268 = vld [vmem:[%s37 + $0x3b8] sm:$0xff]
        %v6269 = vld [vmem:[%s37 + $0x3c0] sm:$0xff]
        %v6270 = vld [vmem:[%s37 + $0x3c8] sm:$0xff]
        %v6271 = vld [vmem:[%s37 + $0x3d0] sm:$0xff]
        %v6272 = vld [vmem:[%s37 + $0x3d8] sm:$0xff]
        %v6273 = vld [vmem:[%s37 + $0x3e0] sm:$0xff]
        %v6274 = vld [vmem:[%s37 + $0x3e8] sm:$0xff]
        %v6275 = vld [vmem:[%s37 + $0x3f0] sm:$0xff]
        %v6276 = vld [vmem:[%s37 + $0x3f8] sm:$0xff]
        %v6277 = vrot.slane %v5505, 1
        %v6278 = vrot.slane %v5507, 2
        %v6279 = vor.u32 %v6277, %v6278
        %v6280 = vrot.slane %v5528, 1
        %v6281 = vrot.slane %v5512, 2
        %v6282 = vor.u32 %v6280, %v6281
        %v6283 = vsel %vm1868, %v6279, %v6282
        %v6284 = vrot.slane %v5517, 1
        %v6285 = vrot.slane %v5519, 2
        %v6286 = vor.u32 %v6284, %v6285
        %v6287 = vrot.slane %v5536, 1
        %v6288 = vrot.slane %v5524, 2
        %v6289 = vor.u32 %v6287, %v6288
        %v6290 = vsel %vm1868, %v6286, %v6289
        %v6291 = vshrl.u32 %v5502, 16
        %v6293 = vrot.slane %v6291, 1
        %v6294 = vrot.slane %v5532, 2
        %v6295 = vor.u32 %v6293, %v6294
        %v6296 = vsel %vm1868, %v6282, %v6295
        %v6297 = vshrl.u32 %v5503, 16
        %v6299 = vrot.slane %v6297, 1
        %v6300 = vrot.slane %v5540, 2
        %v6301 = vor.u32 %v6299, %v6300
        %v6302 = vsel %vm1868, %v6289, %v6301
        %v6339 = vunpack.c.l.b16 %v6245
        %v6340 = vunpack.c.h.b16 %v6245
        %v6341 = vunpack.c.l.b16 %v6246
        %v6342 = vunpack.c.h.b16 %v6246
        %v6343 = vunpack.c.l.b16 %v6247
        %v6344 = vunpack.c.h.b16 %v6247
        %v6345 = vunpack.c.l.b16 %v6248
        %v6346 = vunpack.c.h.b16 %v6248
        %v6347 = vunpack.c.l.b16 %v6249
        %v6348 = vunpack.c.h.b16 %v6249
        %v6349 = vunpack.c.l.b16 %v6250
        %v6350 = vunpack.c.h.b16 %v6250
        %v6351 = vunpack.c.l.b16 %v6251
        %v6352 = vunpack.c.h.b16 %v6251
        %v6353 = vunpack.c.l.b16 %v6252
        %v6354 = vunpack.c.h.b16 %v6252
        %v6355 = vunpack.c.l.b16 %v6253
        %v6356 = vunpack.c.h.b16 %v6253
        %v6357 = vunpack.c.l.b16 %v6254
        %v6358 = vunpack.c.h.b16 %v6254
        %v6359 = vunpack.c.l.b16 %v6255
        %v6360 = vunpack.c.h.b16 %v6255
        %v6361 = vunpack.c.l.b16 %v6256
        %v6362 = vunpack.c.h.b16 %v6256
        %v6363 = vunpack.c.l.b16 %v6257
        %v6364 = vunpack.c.h.b16 %v6257
        %v6365 = vunpack.c.l.b16 %v6258
        %v6366 = vunpack.c.h.b16 %v6258
        %v6367 = vunpack.c.l.b16 %v6259
        %v6368 = vunpack.c.h.b16 %v6259
        %v6369 = vunpack.c.l.b16 %v6260
        %v6370 = vunpack.c.h.b16 %v6260
        %v6371 = vunpack.c.l.b16 %v6261
        %v6372 = vunpack.c.h.b16 %v6261
        %v6373 = vunpack.c.l.b16 %v6262
        %v6374 = vunpack.c.h.b16 %v6262
        %v6375 = vunpack.c.l.b16 %v6263
        %v6376 = vunpack.c.h.b16 %v6263
        %v6377 = vunpack.c.l.b16 %v6264
        %v6378 = vunpack.c.h.b16 %v6264
        %v6379 = vunpack.c.l.b16 %v6265
        %v6380 = vunpack.c.h.b16 %v6265
        %v6381 = vunpack.c.l.b16 %v6266
        %v6382 = vunpack.c.h.b16 %v6266
        %v6383 = vunpack.c.l.b16 %v6267
        %v6384 = vunpack.c.h.b16 %v6267
        %v6385 = vunpack.c.l.b16 %v6268
        %v6386 = vunpack.c.h.b16 %v6268
        %v6387 = vunpack.c.l.b16 %v6269
        %v6388 = vunpack.c.h.b16 %v6269
        %v6389 = vunpack.c.l.b16 %v6270
        %v6390 = vunpack.c.h.b16 %v6270
        %v6391 = vunpack.c.l.b16 %v6271
        %v6392 = vunpack.c.h.b16 %v6271
        %v6393 = vunpack.c.l.b16 %v6272
        %v6394 = vunpack.c.h.b16 %v6272
        %v6395 = vunpack.c.l.b16 %v6273
        %v6396 = vunpack.c.h.b16 %v6273
        %v6397 = vunpack.c.l.b16 %v6274
        %v6398 = vunpack.c.h.b16 %v6274
        %v6399 = vunpack.c.l.b16 %v6275
        %v6400 = vunpack.c.h.b16 %v6275
        %v6401 = vunpack.c.l.b16 %v6276
        %v6402 = vunpack.c.h.b16 %v6276
        %v6403 = vpack.c.b16 %v6341, %v6339
        %v6404 = vpack.c.b16 %v6342, %v6340
        %v6405 = vpack.c.b16 %v6345, %v6343
        %v6406 = vpack.c.b16 %v6346, %v6344
        %v6407 = vpack.c.b16 %v6349, %v6347
        %v6408 = vpack.c.b16 %v6350, %v6348
        %v6409 = vpack.c.b16 %v6353, %v6351
        %v6410 = vpack.c.b16 %v6354, %v6352
        %v6411 = vpack.c.b16 %v6357, %v6355
        %v6412 = vpack.c.b16 %v6358, %v6356
        %v6413 = vpack.c.b16 %v6361, %v6359
        %v6414 = vpack.c.b16 %v6362, %v6360
        %v6415 = vpack.c.b16 %v6365, %v6363
        %v6416 = vpack.c.b16 %v6366, %v6364
        %v6417 = vpack.c.b16 %v6369, %v6367
        %v6418 = vpack.c.b16 %v6370, %v6368
        %v6419 = vpack.c.b16 %v6373, %v6371
        %v6420 = vpack.c.b16 %v6374, %v6372
        %v6421 = vpack.c.b16 %v6377, %v6375
        %v6422 = vpack.c.b16 %v6378, %v6376
        %v6423 = vpack.c.b16 %v6381, %v6379
        %v6424 = vpack.c.b16 %v6382, %v6380
        %v6425 = vpack.c.b16 %v6385, %v6383
        %v6426 = vpack.c.b16 %v6386, %v6384
        %v6427 = vpack.c.b16 %v6389, %v6387
        %v6428 = vpack.c.b16 %v6390, %v6388
        %v6429 = vpack.c.b16 %v6393, %v6391
        %v6430 = vpack.c.b16 %v6394, %v6392
        %v6431 = vpack.c.b16 %v6397, %v6395
        %v6432 = vpack.c.b16 %v6398, %v6396
        %v6433 = vpack.c.b16 %v6401, %v6399
        %v6434 = vpack.c.b16 %v6402, %v6400
        %6467 = vmatprep.subr.bf16.mxu0 %v6404
        %6468 = vmatpush1.bf16.msra.mxu0 %v6403
        %6469 = vmatprep.subr.bf16.mxu0 %v6406
        %6470 = vmatpush1.bf16.msra.mxu0 %v6405
        %6471 = vmatprep.subr.bf16.mxu0 %v6408
        %6472 = vmatpush1.bf16.msra.mxu0 %v6407
        %6473 = vmatprep.subr.bf16.mxu0 %v6410
        %6474 = vmatpush1.bf16.msra.mxu0 %v6409
        %6475 = vmatprep.subr.bf16.mxu0 %v6412
        %6476 = vmatpush1.bf16.msra.mxu0 %v6411
        %6477 = vmatprep.subr.bf16.mxu0 %v6414
        %6478 = vmatpush1.bf16.msra.mxu0 %v6413
        %6479 = vmatprep.subr.bf16.mxu0 %v6416
        %6480 = vmatpush1.bf16.msra.mxu0 %v6415
        %6481 = vmatprep.subr.bf16.mxu0 %v6418
        %6482 = vmatpush1.bf16.msra.mxu0 %v6417
        %6483 = vmatprep.subr.bf16.mxu0 %v6420
        %6484 = vmatpush1.bf16.msra.mxu0 %v6419
        %6485 = vmatprep.subr.bf16.mxu0 %v6422
        %6486 = vmatpush1.bf16.msra.mxu0 %v6421
        %6487 = vmatprep.subr.bf16.mxu0 %v6424
        %6488 = vmatpush1.bf16.msra.mxu0 %v6423
        %6489 = vmatprep.subr.bf16.mxu0 %v6426
        %6490 = vmatpush1.bf16.msra.mxu0 %v6425
        %6491 = vmatprep.subr.bf16.mxu0 %v6428
        %6492 = vmatpush1.bf16.msra.mxu0 %v6427
        %6493 = vmatprep.subr.bf16.mxu0 %v6430
        %6494 = vmatpush1.bf16.msra.mxu0 %v6429
        %6495 = vmatprep.subr.bf16.mxu0 %v6432
        %6496 = vmatpush1.bf16.msra.mxu0 %v6431
        %6497 = vmatprep.subr.bf16.mxu0 %v6434
        %6498 = vmatpush1.bf16.msra.mxu0 %v6433
        %6499 = vmatprep.mubr.bf16.mxu0 %v6290
        %6500 = vmatmul.mubr.bf16.gmra.mrb[0].mxu0 %v6283
        %v6501 = vpop.f32.mrb[0].mxu0
        %v6502 = vadd.f32 0.0, %v6501
        %v6503 = vpop.f32.mrb[0].mxu0
        %v6504 = vadd.f32 0.0, %v6503
        %v6505 = vpop.f32.mrb[0].mxu0
        %v6506 = vadd.f32 0.0, %v6505
        %v6507 = vpop.f32.mrb[0].mxu0
        %v6508 = vadd.f32 0.0, %v6507
        %6509 = vmatprep.mubr.bf16.mxu0 %v6302
        %6510 = vmatmul.mubr.bf16.gmra.mrb[0].mxu0 %v6296
        %v6511 = vpop.f32.mrb[0].mxu0
        %v6512 = vadd.f32 0.0, %v6511
        %v6513 = vpop.f32.mrb[0].mxu0
        %v6514 = vadd.f32 0.0, %v6513
        %v6515 = vpop.f32.mrb[0].mxu0
        %v6516 = vadd.f32 0.0, %v6515
        %v6517 = vpop.f32.mrb[0].mxu0
        %v6518 = vadd.f32 0.0, %v6517
        %6519 = vdwg.mxu0
        %v6520 = vadd.f32 %v6237, %v6502
        %v6521 = vadd.f32 %v6238, %v6504
        %v6522 = vadd.f32 %v6239, %v6506
        %v6523 = vadd.f32 %v6240, %v6508
        %v6524 = vadd.f32 %v6241, %v6512
        %v6525 = vadd.f32 %v6242, %v6514
        %v6526 = vadd.f32 %v6243, %v6516
        %v6527 = vadd.f32 %v6244, %v6518
        %v6528 = vld [vmem:[%s37 + $0x400] sm:$0xff]
        %v6529 = vld [vmem:[%s37 + $0x408] sm:$0xff]
        %v6530 = vld [vmem:[%s37 + $0x410] sm:$0xff]
        %v6531 = vld [vmem:[%s37 + $0x418] sm:$0xff]
        %v6532 = vld [vmem:[%s37 + $0x420] sm:$0xff]
        %v6533 = vld [vmem:[%s37 + $0x428] sm:$0xff]
        %v6534 = vld [vmem:[%s37 + $0x430] sm:$0xff]
        %v6535 = vld [vmem:[%s37 + $0x438] sm:$0xff]
        %v6536 = vld [vmem:[%s37 + $0x440] sm:$0xff]
        %v6537 = vld [vmem:[%s37 + $0x448] sm:$0xff]
        %v6538 = vld [vmem:[%s37 + $0x450] sm:$0xff]
        %v6539 = vld [vmem:[%s37 + $0x458] sm:$0xff]
        %v6540 = vld [vmem:[%s37 + $0x460] sm:$0xff]
        %v6541 = vld [vmem:[%s37 + $0x468] sm:$0xff]
        %v6542 = vld [vmem:[%s37 + $0x470] sm:$0xff]
        %v6543 = vld [vmem:[%s37 + $0x478] sm:$0xff]
        %v6544 = vld [vmem:[%s37 + $0x480] sm:$0xff]
        %v6545 = vld [vmem:[%s37 + $0x488] sm:$0xff]
        %v6546 = vld [vmem:[%s37 + $0x490] sm:$0xff]
        %v6547 = vld [vmem:[%s37 + $0x498] sm:$0xff]
        %v6548 = vld [vmem:[%s37 + $0x4a0] sm:$0xff]
        %v6549 = vld [vmem:[%s37 + $0x4a8] sm:$0xff]
        %v6550 = vld [vmem:[%s37 + $0x4b0] sm:$0xff]
        %v6551 = vld [vmem:[%s37 + $0x4b8] sm:$0xff]
        %v6552 = vld [vmem:[%s37 + $0x4c0] sm:$0xff]
        %v6553 = vld [vmem:[%s37 + $0x4c8] sm:$0xff]
        %v6554 = vld [vmem:[%s37 + $0x4d0] sm:$0xff]
        %v6555 = vld [vmem:[%s37 + $0x4d8] sm:$0xff]
        %v6556 = vld [vmem:[%s37 + $0x4e0] sm:$0xff]
        %v6557 = vld [vmem:[%s37 + $0x4e8] sm:$0xff]
        %v6558 = vld [vmem:[%s37 + $0x4f0] sm:$0xff]
        %v6559 = vld [vmem:[%s37 + $0x4f8] sm:$0xff]
        %v6560 = vrot.slane %v5498, 2
        %v6561 = vrot.slane %v5500, 2
        %v6562 = vsel %vm2128, %v6560, %v6561
        %v6563 = vrot.slane %v5499, 2
        %v6564 = vrot.slane %v5501, 2
        %v6565 = vsel %vm2128, %v6563, %v6564
        %v6566 = vrot.slane %v5502, 2
        %v6567 = vsel %vm2128, %v6561, %v6566
        %v6568 = vrot.slane %v5503, 2
        %v6569 = vsel %vm2128, %v6564, %v6568
        %v6606 = vunpack.c.l.b16 %v6528
        %v6607 = vunpack.c.h.b16 %v6528
        %v6608 = vunpack.c.l.b16 %v6529
        %v6609 = vunpack.c.h.b16 %v6529
        %v6610 = vunpack.c.l.b16 %v6530
        %v6611 = vunpack.c.h.b16 %v6530
        %v6612 = vunpack.c.l.b16 %v6531
        %v6613 = vunpack.c.h.b16 %v6531
        %v6614 = vunpack.c.l.b16 %v6532
        %v6615 = vunpack.c.h.b16 %v6532
        %v6616 = vunpack.c.l.b16 %v6533
        %v6617 = vunpack.c.h.b16 %v6533
        %v6618 = vunpack.c.l.b16 %v6534
        %v6619 = vunpack.c.h.b16 %v6534
        %v6620 = vunpack.c.l.b16 %v6535
        %v6621 = vunpack.c.h.b16 %v6535
        %v6622 = vunpack.c.l.b16 %v6536
        %v6623 = vunpack.c.h.b16 %v6536
        %v6624 = vunpack.c.l.b16 %v6537
        %v6625 = vunpack.c.h.b16 %v6537
        %v6626 = vunpack.c.l.b16 %v6538
        %v6627 = vunpack.c.h.b16 %v6538
        %v6628 = vunpack.c.l.b16 %v6539
        %v6629 = vunpack.c.h.b16 %v6539
        %v6630 = vunpack.c.l.b16 %v6540
        %v6631 = vunpack.c.h.b16 %v6540
        %v6632 = vunpack.c.l.b16 %v6541
        %v6633 = vunpack.c.h.b16 %v6541
        %v6634 = vunpack.c.l.b16 %v6542
        %v6635 = vunpack.c.h.b16 %v6542
        %v6636 = vunpack.c.l.b16 %v6543
        %v6637 = vunpack.c.h.b16 %v6543
        %v6638 = vunpack.c.l.b16 %v6544
        %v6639 = vunpack.c.h.b16 %v6544
        %v6640 = vunpack.c.l.b16 %v6545
        %v6641 = vunpack.c.h.b16 %v6545
        %v6642 = vunpack.c.l.b16 %v6546
        %v6643 = vunpack.c.h.b16 %v6546
        %v6644 = vunpack.c.l.b16 %v6547
        %v6645 = vunpack.c.h.b16 %v6547
        %v6646 = vunpack.c.l.b16 %v6548
        %v6647 = vunpack.c.h.b16 %v6548
        %v6648 = vunpack.c.l.b16 %v6549
        %v6649 = vunpack.c.h.b16 %v6549
        %v6650 = vunpack.c.l.b16 %v6550
        %v6651 = vunpack.c.h.b16 %v6550
        %v6652 = vunpack.c.l.b16 %v6551
        %v6653 = vunpack.c.h.b16 %v6551
        %v6654 = vunpack.c.l.b16 %v6552
        %v6655 = vunpack.c.h.b16 %v6552
        %v6656 = vunpack.c.l.b16 %v6553
        %v6657 = vunpack.c.h.b16 %v6553
        %v6658 = vunpack.c.l.b16 %v6554
        %v6659 = vunpack.c.h.b16 %v6554
        %v6660 = vunpack.c.l.b16 %v6555
        %v6661 = vunpack.c.h.b16 %v6555
        %v6662 = vunpack.c.l.b16 %v6556
        %v6663 = vunpack.c.h.b16 %v6556
        %v6664 = vunpack.c.l.b16 %v6557
        %v6665 = vunpack.c.h.b16 %v6557
        %v6666 = vunpack.c.l.b16 %v6558
        %v6667 = vunpack.c.h.b16 %v6558
        %v6668 = vunpack.c.l.b16 %v6559
        %v6669 = vunpack.c.h.b16 %v6559
        %v6670 = vpack.c.b16 %v6608, %v6606
        %v6671 = vpack.c.b16 %v6609, %v6607
        %v6672 = vpack.c.b16 %v6612, %v6610
        %v6673 = vpack.c.b16 %v6613, %v6611
        %v6674 = vpack.c.b16 %v6616, %v6614
        %v6675 = vpack.c.b16 %v6617, %v6615
        %v6676 = vpack.c.b16 %v6620, %v6618
        %v6677 = vpack.c.b16 %v6621, %v6619
        %v6678 = vpack.c.b16 %v6624, %v6622
        %v6679 = vpack.c.b16 %v6625, %v6623
        %v6680 = vpack.c.b16 %v6628, %v6626
        %v6681 = vpack.c.b16 %v6629, %v6627
        %v6682 = vpack.c.b16 %v6632, %v6630
        %v6683 = vpack.c.b16 %v6633, %v6631
        %v6684 = vpack.c.b16 %v6636, %v6634
        %v6685 = vpack.c.b16 %v6637, %v6635
        %v6686 = vpack.c.b16 %v6640, %v6638
        %v6687 = vpack.c.b16 %v6641, %v6639
        %v6688 = vpack.c.b16 %v6644, %v6642
        %v6689 = vpack.c.b16 %v6645, %v6643
        %v6690 = vpack.c.b16 %v6648, %v6646
        %v6691 = vpack.c.b16 %v6649, %v6647
        %v6692 = vpack.c.b16 %v6652, %v6650
        %v6693 = vpack.c.b16 %v6653, %v6651
        %v6694 = vpack.c.b16 %v6656, %v6654
        %v6695 = vpack.c.b16 %v6657, %v6655
        %v6696 = vpack.c.b16 %v6660, %v6658
        %v6697 = vpack.c.b16 %v6661, %v6659
        %v6698 = vpack.c.b16 %v6664, %v6662
        %v6699 = vpack.c.b16 %v6665, %v6663
        %v6700 = vpack.c.b16 %v6668, %v6666
        %v6701 = vpack.c.b16 %v6669, %v6667
        %6734 = vmatprep.subr.bf16.mxu0 %v6671
        %6735 = vmatpush1.bf16.msra.mxu0 %v6670
        %6736 = vmatprep.subr.bf16.mxu0 %v6673
        %6737 = vmatpush1.bf16.msra.mxu0 %v6672
        %6738 = vmatprep.subr.bf16.mxu0 %v6675
        %6739 = vmatpush1.bf16.msra.mxu0 %v6674
        %6740 = vmatprep.subr.bf16.mxu0 %v6677
        %6741 = vmatpush1.bf16.msra.mxu0 %v6676
        %6742 = vmatprep.subr.bf16.mxu0 %v6679
        %6743 = vmatpush1.bf16.msra.mxu0 %v6678
        %6744 = vmatprep.subr.bf16.mxu0 %v6681
        %6745 = vmatpush1.bf16.msra.mxu0 %v6680
        %6746 = vmatprep.subr.bf16.mxu0 %v6683
        %6747 = vmatpush1.bf16.msra.mxu0 %v6682
        %6748 = vmatprep.subr.bf16.mxu0 %v6685
        %6749 = vmatpush1.bf16.msra.mxu0 %v6684
        %6750 = vmatprep.subr.bf16.mxu0 %v6687
        %6751 = vmatpush1.bf16.msra.mxu0 %v6686
        %6752 = vmatprep.subr.bf16.mxu0 %v6689
        %6753 = vmatpush1.bf16.msra.mxu0 %v6688
        %6754 = vmatprep.subr.bf16.mxu0 %v6691
        %6755 = vmatpush1.bf16.msra.mxu0 %v6690
        %6756 = vmatprep.subr.bf16.mxu0 %v6693
        %6757 = vmatpush1.bf16.msra.mxu0 %v6692
        %6758 = vmatprep.subr.bf16.mxu0 %v6695
        %6759 = vmatpush1.bf16.msra.mxu0 %v6694
        %6760 = vmatprep.subr.bf16.mxu0 %v6697
        %6761 = vmatpush1.bf16.msra.mxu0 %v6696
        %6762 = vmatprep.subr.bf16.mxu0 %v6699
        %6763 = vmatpush1.bf16.msra.mxu0 %v6698
        %6764 = vmatprep.subr.bf16.mxu0 %v6701
        %6765 = vmatpush1.bf16.msra.mxu0 %v6700
        %6766 = vmatprep.mubr.bf16.mxu0 %v6565
        %6767 = vmatmul.mubr.bf16.gmra.mrb[0].mxu0 %v6562
        %v6768 = vpop.f32.mrb[0].mxu0
        %v6769 = vadd.f32 0.0, %v6768
        %v6770 = vpop.f32.mrb[0].mxu0
        %v6771 = vadd.f32 0.0, %v6770
        %v6772 = vpop.f32.mrb[0].mxu0
        %v6773 = vadd.f32 0.0, %v6772
        %v6774 = vpop.f32.mrb[0].mxu0
        %v6775 = vadd.f32 0.0, %v6774
        %6776 = vmatprep.mubr.bf16.mxu0 %v6569
        %6777 = vmatmul.mubr.bf16.gmra.mrb[0].mxu0 %v6567
        %v6778 = vpop.f32.mrb[0].mxu0
        %v6779 = vadd.f32 0.0, %v6778
        %v6780 = vpop.f32.mrb[0].mxu0
        %v6781 = vadd.f32 0.0, %v6780
        %v6782 = vpop.f32.mrb[0].mxu0
        %v6783 = vadd.f32 0.0, %v6782
        %v6784 = vpop.f32.mrb[0].mxu0
        %v6785 = vadd.f32 0.0, %v6784
        %6786 = vdwg.mxu0
        %v6787 = vadd.f32 %v6520, %v6769
        %v6788 = vadd.f32 %v6521, %v6771
        %v6789 = vadd.f32 %v6522, %v6773
        %v6790 = vadd.f32 %v6523, %v6775
        %v6791 = vadd.f32 %v6524, %v6779
        %v6792 = vadd.f32 %v6525, %v6781
        %v6793 = vadd.f32 %v6526, %v6783
        %v6794 = vadd.f32 %v6527, %v6785
        %v6795 = vld [vmem:[%s39] sm:$0x3]
        %v6797 = vlaneseq
        %v6798 = vshrl.u32 %v6797, 7
        %v6799 = vsub.s32 0, %v6798
        %v6800 = vrot.slane %v6795, %v6799
        %v6801 = vlaneseq
        %v6802 = vshrl.u32 %v6801, 7
        %v6803 = vsub.s32 1, %v6802
        %v6804 = vrot.slane %v6795, %v6803
        %v6807 = vadd.f32 %v6787, %v6800
        %v6808 = vadd.f32 %v6788, %v6804
        %v6809 = vadd.f32 %v6789, %v6800
        %v6810 = vadd.f32 %v6790, %v6804
        %v6811 = vadd.f32 %v6791, %v6800
        %v6812 = vadd.f32 %v6792, %v6804
        %v6813 = vadd.f32 %v6793, %v6800
        %v6814 = vadd.f32 %v6794, %v6804
        %v6815 = vmax.f32 %v6807, 0.0
        %v6816 = vmax.f32 %v6808, 0.0
        %v6817 = vmax.f32 %v6809, 0.0
        %v6818 = vmax.f32 %v6810, 0.0
        %v6819 = vmax.f32 %v6811, 0.0
        %v6820 = vmax.f32 %v6812, 0.0
        %v6821 = vmax.f32 %v6813, 0.0
        %v6822 = vmax.f32 %v6814, 0.0
        %v6823 = vpack.c.bf16 %v6817, %v6815
        %v6824 = vpack.c.bf16 %v6818, %v6816
        %v6825 = vpack.c.bf16 %v6821, %v6819
        %v6826 = vpack.c.bf16 %v6822, %v6820
        %v6827 = vld [vmem:[%s41] sm:$0xff]
        %v6828 = vld [vmem:[%s41 + $0x8] sm:$0xff]
        %v6829 = vld [vmem:[%s41 + $0x10] sm:$0xff]
        %v6830 = vld [vmem:[%s41 + $0x18] sm:$0xff]
        %v6831 = vld [vmem:[%s41 + $0x20] sm:$0xff]
        %v6832 = vld [vmem:[%s41 + $0x28] sm:$0xff]
        %v6833 = vld [vmem:[%s41 + $0x30] sm:$0xff]
        %v6834 = vld [vmem:[%s41 + $0x38] sm:$0xff]
        %v6835 = vld [vmem:[%s41 + $0x40] sm:$0xff]
        %v6836 = vld [vmem:[%s41 + $0x48] sm:$0xff]
        %v6837 = vld [vmem:[%s41 + $0x50] sm:$0xff]
        %v6838 = vld [vmem:[%s41 + $0x58] sm:$0xff]
        %v6839 = vld [vmem:[%s41 + $0x60] sm:$0xff]
        %v6840 = vld [vmem:[%s41 + $0x68] sm:$0xff]
        %v6841 = vld [vmem:[%s41 + $0x70] sm:$0xff]
        %v6842 = vld [vmem:[%s41 + $0x78] sm:$0xff]
        %v6843 = vld [vmem:[%s41 + $0x80] sm:$0xff]
        %v6844 = vld [vmem:[%s41 + $0x88] sm:$0xff]
        %v6845 = vld [vmem:[%s41 + $0x90] sm:$0xff]
        %v6846 = vld [vmem:[%s41 + $0x98] sm:$0xff]
        %v6847 = vld [vmem:[%s41 + $0xa0] sm:$0xff]
        %v6848 = vld [vmem:[%s41 + $0xa8] sm:$0xff]
        %v6849 = vld [vmem:[%s41 + $0xb0] sm:$0xff]
        %v6850 = vld [vmem:[%s41 + $0xb8] sm:$0xff]
        %v6851 = vld [vmem:[%s41 + $0xc0] sm:$0xff]
        %v6852 = vld [vmem:[%s41 + $0xc8] sm:$0xff]
        %v6853 = vld [vmem:[%s41 + $0xd0] sm:$0xff]
        %v6854 = vld [vmem:[%s41 + $0xd8] sm:$0xff]
        %v6855 = vld [vmem:[%s41 + $0xe0] sm:$0xff]
        %v6856 = vld [vmem:[%s41 + $0xe8] sm:$0xff]
        %v6857 = vld [vmem:[%s41 + $0xf0] sm:$0xff]
        %v6858 = vld [vmem:[%s41 + $0xf8] sm:$0xff]
        %v6859 = vld [vmem:[%s43] sm:$0x3]
        %v6861 = vlaneseq
        %v6862 = vshrl.u32 %v6861, 7
        %v6863 = vsub.s32 0, %v6862
        %v6864 = vrot.slane %v6859, %v6863
        %v6865 = vlaneseq
        %v6866 = vshrl.u32 %v6865, 7
        %v6867 = vsub.s32 1, %v6866
        %v6868 = vrot.slane %v6859, %v6867
        %v6903 = vunpack.c.l.b16 %v6827
        %v6904 = vunpack.c.h.b16 %v6827
        %v6905 = vunpack.c.l.b16 %v6828
        %v6906 = vunpack.c.h.b16 %v6828
        %v6907 = vunpack.c.l.b16 %v6829
        %v6908 = vunpack.c.h.b16 %v6829
        %v6909 = vunpack.c.l.b16 %v6830
        %v6910 = vunpack.c.h.b16 %v6830
        %v6911 = vunpack.c.l.b16 %v6831
        %v6912 = vunpack.c.h.b16 %v6831
        %v6913 = vunpack.c.l.b16 %v6832
        %v6914 = vunpack.c.h.b16 %v6832
        %v6915 = vunpack.c.l.b16 %v6833
        %v6916 = vunpack.c.h.b16 %v6833
        %v6917 = vunpack.c.l.b16 %v6834
        %v6918 = vunpack.c.h.b16 %v6834
        %v6919 = vunpack.c.l.b16 %v6835
        %v6920 = vunpack.c.h.b16 %v6835
        %v6921 = vunpack.c.l.b16 %v6836
        %v6922 = vunpack.c.h.b16 %v6836
        %v6923 = vunpack.c.l.b16 %v6837
        %v6924 = vunpack.c.h.b16 %v6837
        %v6925 = vunpack.c.l.b16 %v6838
        %v6926 = vunpack.c.h.b16 %v6838
        %v6927 = vunpack.c.l.b16 %v6839
        %v6928 = vunpack.c.h.b16 %v6839
        %v6929 = vunpack.c.l.b16 %v6840
        %v6930 = vunpack.c.h.b16 %v6840
        %v6931 = vunpack.c.l.b16 %v6841
        %v6932 = vunpack.c.h.b16 %v6841
        %v6933 = vunpack.c.l.b16 %v6842
        %v6934 = vunpack.c.h.b16 %v6842
        %v6935 = vunpack.c.l.b16 %v6843
        %v6936 = vunpack.c.h.b16 %v6843
        %v6937 = vunpack.c.l.b16 %v6844
        %v6938 = vunpack.c.h.b16 %v6844
        %v6939 = vunpack.c.l.b16 %v6845
        %v6940 = vunpack.c.h.b16 %v6845
        %v6941 = vunpack.c.l.b16 %v6846
        %v6942 = vunpack.c.h.b16 %v6846
        %v6943 = vunpack.c.l.b16 %v6847
        %v6944 = vunpack.c.h.b16 %v6847
        %v6945 = vunpack.c.l.b16 %v6848
        %v6946 = vunpack.c.h.b16 %v6848
        %v6947 = vunpack.c.l.b16 %v6849
        %v6948 = vunpack.c.h.b16 %v6849
        %v6949 = vunpack.c.l.b16 %v6850
        %v6950 = vunpack.c.h.b16 %v6850
        %v6951 = vunpack.c.l.b16 %v6851
        %v6952 = vunpack.c.h.b16 %v6851
        %v6953 = vunpack.c.l.b16 %v6852
        %v6954 = vunpack.c.h.b16 %v6852
        %v6955 = vunpack.c.l.b16 %v6853
        %v6956 = vunpack.c.h.b16 %v6853
        %v6957 = vunpack.c.l.b16 %v6854
        %v6958 = vunpack.c.h.b16 %v6854
        %v6959 = vunpack.c.l.b16 %v6855
        %v6960 = vunpack.c.h.b16 %v6855
        %v6961 = vunpack.c.l.b16 %v6856
        %v6962 = vunpack.c.h.b16 %v6856
        %v6963 = vunpack.c.l.b16 %v6857
        %v6964 = vunpack.c.h.b16 %v6857
        %v6965 = vunpack.c.l.b16 %v6858
        %v6966 = vunpack.c.h.b16 %v6858
        %v6967 = vpack.c.b16 %v6905, %v6903
        %v6968 = vpack.c.b16 %v6906, %v6904
        %v6969 = vpack.c.b16 %v6909, %v6907
        %v6970 = vpack.c.b16 %v6910, %v6908
        %v6971 = vpack.c.b16 %v6913, %v6911
        %v6972 = vpack.c.b16 %v6914, %v6912
        %v6973 = vpack.c.b16 %v6917, %v6915
        %v6974 = vpack.c.b16 %v6918, %v6916
        %v6975 = vpack.c.b16 %v6921, %v6919
        %v6976 = vpack.c.b16 %v6922, %v6920
        %v6977 = vpack.c.b16 %v6925, %v6923
        %v6978 = vpack.c.b16 %v6926, %v6924
        %v6979 = vpack.c.b16 %v6929, %v6927
        %v6980 = vpack.c.b16 %v6930, %v6928
        %v6981 = vpack.c.b16 %v6933, %v6931
        %v6982 = vpack.c.b16 %v6934, %v6932
        %v6983 = vpack.c.b16 %v6937, %v6935
        %v6984 = vpack.c.b16 %v6938, %v6936
        %v6985 = vpack.c.b16 %v6941, %v6939
        %v6986 = vpack.c.b16 %v6942, %v6940
        %v6987 = vpack.c.b16 %v6945, %v6943
        %v6988 = vpack.c.b16 %v6946, %v6944
        %v6989 = vpack.c.b16 %v6949, %v6947
        %v6990 = vpack.c.b16 %v6950, %v6948
        %v6991 = vpack.c.b16 %v6953, %v6951
        %v6992 = vpack.c.b16 %v6954, %v6952
        %v6993 = vpack.c.b16 %v6957, %v6955
        %v6994 = vpack.c.b16 %v6958, %v6956
        %v6995 = vpack.c.b16 %v6961, %v6959
        %v6996 = vpack.c.b16 %v6962, %v6960
        %v6997 = vpack.c.b16 %v6965, %v6963
        %v6998 = vpack.c.b16 %v6966, %v6964
        %7031 = vmatprep.subr.bf16.mxu0 %v6968
        %7032 = vmatpush1.bf16.msra.mxu0 %v6967
        %7033 = vmatprep.subr.bf16.mxu0 %v6970
        %7034 = vmatpush1.bf16.msra.mxu0 %v6969
        %7035 = vmatprep.subr.bf16.mxu0 %v6972
        %7036 = vmatpush1.bf16.msra.mxu0 %v6971
        %7037 = vmatprep.subr.bf16.mxu0 %v6974
        %7038 = vmatpush1.bf16.msra.mxu0 %v6973
        %7039 = vmatprep.subr.bf16.mxu0 %v6976
        %7040 = vmatpush1.bf16.msra.mxu0 %v6975
        %7041 = vmatprep.subr.bf16.mxu0 %v6978
        %7042 = vmatpush1.bf16.msra.mxu0 %v6977
        %7043 = vmatprep.subr.bf16.mxu0 %v6980
        %7044 = vmatpush1.bf16.msra.mxu0 %v6979
        %7045 = vmatprep.subr.bf16.mxu0 %v6982
        %7046 = vmatpush1.bf16.msra.mxu0 %v6981
        %7047 = vmatprep.subr.bf16.mxu0 %v6984
        %7048 = vmatpush1.bf16.msra.mxu0 %v6983
        %7049 = vmatprep.subr.bf16.mxu0 %v6986
        %7050 = vmatpush1.bf16.msra.mxu0 %v6985
        %7051 = vmatprep.subr.bf16.mxu0 %v6988
        %7052 = vmatpush1.bf16.msra.mxu0 %v6987
        %7053 = vmatprep.subr.bf16.mxu0 %v6990
        %7054 = vmatpush1.bf16.msra.mxu0 %v6989
        %7055 = vmatprep.subr.bf16.mxu0 %v6992
        %7056 = vmatpush1.bf16.msra.mxu0 %v6991
        %7057 = vmatprep.subr.bf16.mxu0 %v6994
        %7058 = vmatpush1.bf16.msra.mxu0 %v6993
        %7059 = vmatprep.subr.bf16.mxu0 %v6996
        %7060 = vmatpush1.bf16.msra.mxu0 %v6995
        %7061 = vmatprep.subr.bf16.mxu0 %v6998
        %7062 = vmatpush1.bf16.msra.mxu0 %v6997
        %7063 = vmatprep.mubr.bf16.mxu0 %v6824
        %7064 = vmatmul.mubr.bf16.gmra.mrb[0].mxu0 %v6823
        %v7065 = vpop.f32.mrb[0].mxu0
        %v7066 = vadd.f32 %v6864, %v7065
        %v7067 = vpop.f32.mrb[0].mxu0
        %v7068 = vadd.f32 %v6868, %v7067
        %v7069 = vpop.f32.mrb[0].mxu0
        %v7070 = vadd.f32 %v6864, %v7069
        %v7071 = vpop.f32.mrb[0].mxu0
        %v7072 = vadd.f32 %v6868, %v7071
        %7073 = vmatprep.mubr.bf16.mxu0 %v6826
        %7074 = vmatmul.mubr.bf16.gmra.mrb[0].mxu0 %v6825
        %v7075 = vpop.f32.mrb[0].mxu0
        %v7076 = vadd.f32 %v6864, %v7075
        %v7077 = vpop.f32.mrb[0].mxu0
        %v7078 = vadd.f32 %v6868, %v7077
        %v7079 = vpop.f32.mrb[0].mxu0
        %v7080 = vadd.f32 %v6864, %v7079
        %v7081 = vpop.f32.mrb[0].mxu0
        %v7082 = vadd.f32 %v6868, %v7081
        %7083 = vdwg.mxu0
        %v7084 = vpack.c.bf16 %v7070, %v7066
        %v7085 = vpack.c.bf16 %v7072, %v7068
        %v7086 = vpack.c.bf16 %v7080, %v7076
        %v7087 = vpack.c.bf16 %v7082, %v7078
        %v7088 = vld [vmem:[%s45] sm:$0xff]
        %v7089 = vld [vmem:[%s45 + $0x8] sm:$0xff]
        %v7090 = vld [vmem:[%s45 + $0x10] sm:$0xff]
        %v7091 = vld [vmem:[%s45 + $0x18] sm:$0xff]
        %v7092 = vld [vmem:[%s45 + $0x20] sm:$0xff]
        %v7093 = vld [vmem:[%s45 + $0x28] sm:$0xff]
        %v7094 = vld [vmem:[%s45 + $0x30] sm:$0xff]
        %v7095 = vld [vmem:[%s45 + $0x38] sm:$0xff]
        %v7096 = vld [vmem:[%s45 + $0x40] sm:$0xff]
        %v7097 = vld [vmem:[%s45 + $0x48] sm:$0xff]
        %v7098 = vld [vmem:[%s45 + $0x50] sm:$0xff]
        %v7099 = vld [vmem:[%s45 + $0x58] sm:$0xff]
        %v7100 = vld [vmem:[%s45 + $0x60] sm:$0xff]
        %v7101 = vld [vmem:[%s45 + $0x68] sm:$0xff]
        %v7102 = vld [vmem:[%s45 + $0x70] sm:$0xff]
        %v7103 = vld [vmem:[%s45 + $0x78] sm:$0xff]
        %v7104 = vld [vmem:[%s45 + $0x80] sm:$0xff]
        %v7105 = vld [vmem:[%s45 + $0x88] sm:$0xff]
        %v7106 = vld [vmem:[%s45 + $0x90] sm:$0xff]
        %v7107 = vld [vmem:[%s45 + $0x98] sm:$0xff]
        %v7108 = vld [vmem:[%s45 + $0xa0] sm:$0xff]
        %v7109 = vld [vmem:[%s45 + $0xa8] sm:$0xff]
        %v7110 = vld [vmem:[%s45 + $0xb0] sm:$0xff]
        %v7111 = vld [vmem:[%s45 + $0xb8] sm:$0xff]
        %v7112 = vld [vmem:[%s45 + $0xc0] sm:$0xff]
        %v7113 = vld [vmem:[%s45 + $0xc8] sm:$0xff]
        %v7114 = vld [vmem:[%s45 + $0xd0] sm:$0xff]
        %v7115 = vld [vmem:[%s45 + $0xd8] sm:$0xff]
        %v7116 = vld [vmem:[%s45 + $0xe0] sm:$0xff]
        %v7117 = vld [vmem:[%s45 + $0xe8] sm:$0xff]
        %v7118 = vld [vmem:[%s45 + $0xf0] sm:$0xff]
        %v7119 = vld [vmem:[%s45 + $0xf8] sm:$0xff]
        %v7120 = vld [vmem:[%s45 + $0x100] sm:$0xff]
        %v7121 = vld [vmem:[%s45 + $0x108] sm:$0xff]
        %v7122 = vld [vmem:[%s45 + $0x110] sm:$0xff]
        %v7123 = vld [vmem:[%s45 + $0x118] sm:$0xff]
        %v7124 = vld [vmem:[%s45 + $0x120] sm:$0xff]
        %v7125 = vld [vmem:[%s45 + $0x128] sm:$0xff]
        %v7126 = vld [vmem:[%s45 + $0x130] sm:$0xff]
        %v7127 = vld [vmem:[%s45 + $0x138] sm:$0xff]
        %v7128 = vld [vmem:[%s45 + $0x140] sm:$0xff]
        %v7129 = vld [vmem:[%s45 + $0x148] sm:$0xff]
        %v7130 = vld [vmem:[%s45 + $0x150] sm:$0xff]
        %v7131 = vld [vmem:[%s45 + $0x158] sm:$0xff]
        %v7132 = vld [vmem:[%s45 + $0x160] sm:$0xff]
        %v7133 = vld [vmem:[%s45 + $0x168] sm:$0xff]
        %v7134 = vld [vmem:[%s45 + $0x170] sm:$0xff]
        %v7135 = vld [vmem:[%s45 + $0x178] sm:$0xff]
        %v7136 = vld [vmem:[%s45 + $0x180] sm:$0xff]
        %v7137 = vld [vmem:[%s45 + $0x188] sm:$0xff]
        %v7138 = vld [vmem:[%s45 + $0x190] sm:$0xff]
        %v7139 = vld [vmem:[%s45 + $0x198] sm:$0xff]
        %v7140 = vld [vmem:[%s45 + $0x1a0] sm:$0xff]
        %v7141 = vld [vmem:[%s45 + $0x1a8] sm:$0xff]
        %v7142 = vld [vmem:[%s45 + $0x1b0] sm:$0xff]
        %v7143 = vld [vmem:[%s45 + $0x1b8] sm:$0xff]
        %v7144 = vld [vmem:[%s45 + $0x1c0] sm:$0xff]
        %v7145 = vld [vmem:[%s45 + $0x1c8] sm:$0xff]
        %v7146 = vld [vmem:[%s45 + $0x1d0] sm:$0xff]
        %v7147 = vld [vmem:[%s45 + $0x1d8] sm:$0xff]
        %v7148 = vld [vmem:[%s45 + $0x1e0] sm:$0xff]
        %v7149 = vld [vmem:[%s45 + $0x1e8] sm:$0xff]
        %v7150 = vld [vmem:[%s45 + $0x1f0] sm:$0xff]
        %v7151 = vld [vmem:[%s45 + $0x1f8] sm:$0xff]
        %v7152 = vld [vmem:[%s45 + $0x200] sm:$0xff]
        %v7153 = vld [vmem:[%s45 + $0x208] sm:$0xff]
        %v7154 = vld [vmem:[%s45 + $0x210] sm:$0xff]
        %v7155 = vld [vmem:[%s45 + $0x218] sm:$0xff]
        %v7156 = vld [vmem:[%s45 + $0x220] sm:$0xff]
        %v7157 = vld [vmem:[%s45 + $0x228] sm:$0xff]
        %v7158 = vld [vmem:[%s45 + $0x230] sm:$0xff]
        %v7159 = vld [vmem:[%s45 + $0x238] sm:$0xff]
        %v7160 = vld [vmem:[%s45 + $0x240] sm:$0xff]
        %v7161 = vld [vmem:[%s45 + $0x248] sm:$0xff]
        %v7162 = vld [vmem:[%s45 + $0x250] sm:$0xff]
        %v7163 = vld [vmem:[%s45 + $0x258] sm:$0xff]
        %v7164 = vld [vmem:[%s45 + $0x260] sm:$0xff]
        %v7165 = vld [vmem:[%s45 + $0x268] sm:$0xff]
        %v7166 = vld [vmem:[%s45 + $0x270] sm:$0xff]
        %v7167 = vld [vmem:[%s45 + $0x278] sm:$0xff]
        %v7168 = vld [vmem:[%s45 + $0x280] sm:$0xff]
        %v7169 = vld [vmem:[%s45 + $0x288] sm:$0xff]
        %v7170 = vld [vmem:[%s45 + $0x290] sm:$0xff]
        %v7171 = vld [vmem:[%s45 + $0x298] sm:$0xff]
        %v7172 = vld [vmem:[%s45 + $0x2a0] sm:$0xff]
        %v7173 = vld [vmem:[%s45 + $0x2a8] sm:$0xff]
        %v7174 = vld [vmem:[%s45 + $0x2b0] sm:$0xff]
        %v7175 = vld [vmem:[%s45 + $0x2b8] sm:$0xff]
        %v7176 = vld [vmem:[%s45 + $0x2c0] sm:$0xff]
        %v7177 = vld [vmem:[%s45 + $0x2c8] sm:$0xff]
        %v7178 = vld [vmem:[%s45 + $0x2d0] sm:$0xff]
        %v7179 = vld [vmem:[%s45 + $0x2d8] sm:$0xff]
        %v7180 = vld [vmem:[%s45 + $0x2e0] sm:$0xff]
        %v7181 = vld [vmem:[%s45 + $0x2e8] sm:$0xff]
        %v7182 = vld [vmem:[%s45 + $0x2f0] sm:$0xff]
        %v7183 = vld [vmem:[%s45 + $0x2f8] sm:$0xff]
        %v7184 = vld [vmem:[%s47] sm:$0x3f]
        %v7186 = vlaneseq
        %v7187 = vshrl.u32 %v7186, 7
        %v7188 = vsub.s32 0, %v7187
        %v7189 = vrot.slane %v7184, %v7188
        %v7190 = vlaneseq
        %v7191 = vshrl.u32 %v7190, 7
        %v7192 = vsub.s32 1, %v7191
        %v7193 = vrot.slane %v7184, %v7192
        %v7194 = vlaneseq
        %v7195 = vshrl.u32 %v7194, 7
        %v7196 = vsub.s32 2, %v7195
        %v7197 = vrot.slane %v7184, %v7196
        %v7198 = vlaneseq
        %v7199 = vshrl.u32 %v7198, 7
        %v7200 = vsub.s32 3, %v7199
        %v7201 = vrot.slane %v7184, %v7200
        %v7202 = vlaneseq
        %v7203 = vshrl.u32 %v7202, 7
        %v7204 = vsub.s32 4, %v7203
        %v7205 = vrot.slane %v7184, %v7204
        %v7206 = vlaneseq
        %v7207 = vshrl.u32 %v7206, 7
        %v7208 = vsub.s32 5, %v7207
        %v7209 = vrot.slane %v7184, %v7208
        %v7312 = vunpack.c.l.b16 %v7088
        %v7313 = vunpack.c.h.b16 %v7088
        %v7314 = vunpack.c.l.b16 %v7089
        %v7315 = vunpack.c.h.b16 %v7089
        %v7316 = vunpack.c.l.b16 %v7090
        %v7317 = vunpack.c.h.b16 %v7090
        %v7318 = vunpack.c.l.b16 %v7091
        %v7319 = vunpack.c.h.b16 %v7091
        %v7320 = vunpack.c.l.b16 %v7092
        %v7321 = vunpack.c.h.b16 %v7092
        %v7322 = vunpack.c.l.b16 %v7093
        %v7323 = vunpack.c.h.b16 %v7093
        %v7324 = vunpack.c.l.b16 %v7094
        %v7325 = vunpack.c.h.b16 %v7094
        %v7326 = vunpack.c.l.b16 %v7095
        %v7327 = vunpack.c.h.b16 %v7095
        %v7328 = vunpack.c.l.b16 %v7096
        %v7329 = vunpack.c.h.b16 %v7096
        %v7330 = vunpack.c.l.b16 %v7097
        %v7331 = vunpack.c.h.b16 %v7097
        %v7332 = vunpack.c.l.b16 %v7098
        %v7333 = vunpack.c.h.b16 %v7098
        %v7334 = vunpack.c.l.b16 %v7099
        %v7335 = vunpack.c.h.b16 %v7099
        %v7336 = vunpack.c.l.b16 %v7100
        %v7337 = vunpack.c.h.b16 %v7100
        %v7338 = vunpack.c.l.b16 %v7101
        %v7339 = vunpack.c.h.b16 %v7101
        %v7340 = vunpack.c.l.b16 %v7102
        %v7341 = vunpack.c.h.b16 %v7102
        %v7342 = vunpack.c.l.b16 %v7103
        %v7343 = vunpack.c.h.b16 %v7103
        %v7344 = vunpack.c.l.b16 %v7104
        %v7345 = vunpack.c.h.b16 %v7104
        %v7346 = vunpack.c.l.b16 %v7105
        %v7347 = vunpack.c.h.b16 %v7105
        %v7348 = vunpack.c.l.b16 %v7106
        %v7349 = vunpack.c.h.b16 %v7106
        %v7350 = vunpack.c.l.b16 %v7107
        %v7351 = vunpack.c.h.b16 %v7107
        %v7352 = vunpack.c.l.b16 %v7108
        %v7353 = vunpack.c.h.b16 %v7108
        %v7354 = vunpack.c.l.b16 %v7109
        %v7355 = vunpack.c.h.b16 %v7109
        %v7356 = vunpack.c.l.b16 %v7110
        %v7357 = vunpack.c.h.b16 %v7110
        %v7358 = vunpack.c.l.b16 %v7111
        %v7359 = vunpack.c.h.b16 %v7111
        %v7360 = vunpack.c.l.b16 %v7112
        %v7361 = vunpack.c.h.b16 %v7112
        %v7362 = vunpack.c.l.b16 %v7113
        %v7363 = vunpack.c.h.b16 %v7113
        %v7364 = vunpack.c.l.b16 %v7114
        %v7365 = vunpack.c.h.b16 %v7114
        %v7366 = vunpack.c.l.b16 %v7115
        %v7367 = vunpack.c.h.b16 %v7115
        %v7368 = vunpack.c.l.b16 %v7116
        %v7369 = vunpack.c.h.b16 %v7116
        %v7370 = vunpack.c.l.b16 %v7117
        %v7371 = vunpack.c.h.b16 %v7117
        %v7372 = vunpack.c.l.b16 %v7118
        %v7373 = vunpack.c.h.b16 %v7118
        %v7374 = vunpack.c.l.b16 %v7119
        %v7375 = vunpack.c.h.b16 %v7119
        %v7376 = vunpack.c.l.b16 %v7120
        %v7377 = vunpack.c.h.b16 %v7120
        %v7378 = vunpack.c.l.b16 %v7121
        %v7379 = vunpack.c.h.b16 %v7121
        %v7380 = vunpack.c.l.b16 %v7122
        %v7381 = vunpack.c.h.b16 %v7122
        %v7382 = vunpack.c.l.b16 %v7123
        %v7383 = vunpack.c.h.b16 %v7123
        %v7384 = vunpack.c.l.b16 %v7124
        %v7385 = vunpack.c.h.b16 %v7124
        %v7386 = vunpack.c.l.b16 %v7125
        %v7387 = vunpack.c.h.b16 %v7125
        %v7388 = vunpack.c.l.b16 %v7126
        %v7389 = vunpack.c.h.b16 %v7126
        %v7390 = vunpack.c.l.b16 %v7127
        %v7391 = vunpack.c.h.b16 %v7127
        %v7392 = vunpack.c.l.b16 %v7128
        %v7393 = vunpack.c.h.b16 %v7128
        %v7394 = vunpack.c.l.b16 %v7129
        %v7395 = vunpack.c.h.b16 %v7129
        %v7396 = vunpack.c.l.b16 %v7130
        %v7397 = vunpack.c.h.b16 %v7130
        %v7398 = vunpack.c.l.b16 %v7131
        %v7399 = vunpack.c.h.b16 %v7131
        %v7400 = vunpack.c.l.b16 %v7132
        %v7401 = vunpack.c.h.b16 %v7132
        %v7402 = vunpack.c.l.b16 %v7133
        %v7403 = vunpack.c.h.b16 %v7133
        %v7404 = vunpack.c.l.b16 %v7134
        %v7405 = vunpack.c.h.b16 %v7134
        %v7406 = vunpack.c.l.b16 %v7135
        %v7407 = vunpack.c.h.b16 %v7135
        %v7408 = vunpack.c.l.b16 %v7136
        %v7409 = vunpack.c.h.b16 %v7136
        %v7410 = vunpack.c.l.b16 %v7137
        %v7411 = vunpack.c.h.b16 %v7137
        %v7412 = vunpack.c.l.b16 %v7138
        %v7413 = vunpack.c.h.b16 %v7138
        %v7414 = vunpack.c.l.b16 %v7139
        %v7415 = vunpack.c.h.b16 %v7139
        %v7416 = vunpack.c.l.b16 %v7140
        %v7417 = vunpack.c.h.b16 %v7140
        %v7418 = vunpack.c.l.b16 %v7141
        %v7419 = vunpack.c.h.b16 %v7141
        %v7420 = vunpack.c.l.b16 %v7142
        %v7421 = vunpack.c.h.b16 %v7142
        %v7422 = vunpack.c.l.b16 %v7143
        %v7423 = vunpack.c.h.b16 %v7143
        %v7424 = vunpack.c.l.b16 %v7144
        %v7425 = vunpack.c.h.b16 %v7144
        %v7426 = vunpack.c.l.b16 %v7145
        %v7427 = vunpack.c.h.b16 %v7145
        %v7428 = vunpack.c.l.b16 %v7146
        %v7429 = vunpack.c.h.b16 %v7146
        %v7430 = vunpack.c.l.b16 %v7147
        %v7431 = vunpack.c.h.b16 %v7147
        %v7432 = vunpack.c.l.b16 %v7148
        %v7433 = vunpack.c.h.b16 %v7148
        %v7434 = vunpack.c.l.b16 %v7149
        %v7435 = vunpack.c.h.b16 %v7149
        %v7436 = vunpack.c.l.b16 %v7150
        %v7437 = vunpack.c.h.b16 %v7150
        %v7438 = vunpack.c.l.b16 %v7151
        %v7439 = vunpack.c.h.b16 %v7151
        %v7440 = vunpack.c.l.b16 %v7152
        %v7441 = vunpack.c.h.b16 %v7152
        %v7442 = vunpack.c.l.b16 %v7153
        %v7443 = vunpack.c.h.b16 %v7153
        %v7444 = vunpack.c.l.b16 %v7154
        %v7445 = vunpack.c.h.b16 %v7154
        %v7446 = vunpack.c.l.b16 %v7155
        %v7447 = vunpack.c.h.b16 %v7155
        %v7448 = vunpack.c.l.b16 %v7156
        %v7449 = vunpack.c.h.b16 %v7156
        %v7450 = vunpack.c.l.b16 %v7157
        %v7451 = vunpack.c.h.b16 %v7157
        %v7452 = vunpack.c.l.b16 %v7158
        %v7453 = vunpack.c.h.b16 %v7158
        %v7454 = vunpack.c.l.b16 %v7159
        %v7455 = vunpack.c.h.b16 %v7159
        %v7456 = vunpack.c.l.b16 %v7160
        %v7457 = vunpack.c.h.b16 %v7160
        %v7458 = vunpack.c.l.b16 %v7161
        %v7459 = vunpack.c.h.b16 %v7161
        %v7460 = vunpack.c.l.b16 %v7162
        %v7461 = vunpack.c.h.b16 %v7162
        %v7462 = vunpack.c.l.b16 %v7163
        %v7463 = vunpack.c.h.b16 %v7163
        %v7464 = vunpack.c.l.b16 %v7164
        %v7465 = vunpack.c.h.b16 %v7164
        %v7466 = vunpack.c.l.b16 %v7165
        %v7467 = vunpack.c.h.b16 %v7165
        %v7468 = vunpack.c.l.b16 %v7166
        %v7469 = vunpack.c.h.b16 %v7166
        %v7470 = vunpack.c.l.b16 %v7167
        %v7471 = vunpack.c.h.b16 %v7167
        %v7472 = vunpack.c.l.b16 %v7168
        %v7473 = vunpack.c.h.b16 %v7168
        %v7474 = vunpack.c.l.b16 %v7169
        %v7475 = vunpack.c.h.b16 %v7169
        %v7476 = vunpack.c.l.b16 %v7170
        %v7477 = vunpack.c.h.b16 %v7170
        %v7478 = vunpack.c.l.b16 %v7171
        %v7479 = vunpack.c.h.b16 %v7171
        %v7480 = vunpack.c.l.b16 %v7172
        %v7481 = vunpack.c.h.b16 %v7172
        %v7482 = vunpack.c.l.b16 %v7173
        %v7483 = vunpack.c.h.b16 %v7173
        %v7484 = vunpack.c.l.b16 %v7174
        %v7485 = vunpack.c.h.b16 %v7174
        %v7486 = vunpack.c.l.b16 %v7175
        %v7487 = vunpack.c.h.b16 %v7175
        %v7488 = vunpack.c.l.b16 %v7176
        %v7489 = vunpack.c.h.b16 %v7176
        %v7490 = vunpack.c.l.b16 %v7177
        %v7491 = vunpack.c.h.b16 %v7177
        %v7492 = vunpack.c.l.b16 %v7178
        %v7493 = vunpack.c.h.b16 %v7178
        %v7494 = vunpack.c.l.b16 %v7179
        %v7495 = vunpack.c.h.b16 %v7179
        %v7496 = vunpack.c.l.b16 %v7180
        %v7497 = vunpack.c.h.b16 %v7180
        %v7498 = vunpack.c.l.b16 %v7181
        %v7499 = vunpack.c.h.b16 %v7181
        %v7500 = vunpack.c.l.b16 %v7182
        %v7501 = vunpack.c.h.b16 %v7182
        %v7502 = vunpack.c.l.b16 %v7183
        %v7503 = vunpack.c.h.b16 %v7183
        %v7504 = vpack.c.b16 %v7318, %v7312
        %v7505 = vpack.c.b16 %v7319, %v7313
        %v7506 = vpack.c.b16 %v7320, %v7314
        %v7507 = vpack.c.b16 %v7321, %v7315
        %v7508 = vpack.c.b16 %v7322, %v7316
        %v7509 = vpack.c.b16 %v7323, %v7317
        %v7510 = vpack.c.b16 %v7330, %v7324
        %v7511 = vpack.c.b16 %v7331, %v7325
        %v7512 = vpack.c.b16 %v7332, %v7326
        %v7513 = vpack.c.b16 %v7333, %v7327
        %v7514 = vpack.c.b16 %v7334, %v7328
        %v7515 = vpack.c.b16 %v7335, %v7329
        %v7516 = vpack.c.b16 %v7342, %v7336
        %v7517 = vpack.c.b16 %v7343, %v7337
        %v7518 = vpack.c.b16 %v7344, %v7338
        %v7519 = vpack.c.b16 %v7345, %v7339
        %v7520 = vpack.c.b16 %v7346, %v7340
        %v7521 = vpack.c.b16 %v7347, %v7341
        %v7522 = vpack.c.b16 %v7354, %v7348
        %v7523 = vpack.c.b16 %v7355, %v7349
        %v7524 = vpack.c.b16 %v7356, %v7350
        %v7525 = vpack.c.b16 %v7357, %v7351
        %v7526 = vpack.c.b16 %v7358, %v7352
        %v7527 = vpack.c.b16 %v7359, %v7353
        %v7528 = vpack.c.b16 %v7366, %v7360
        %v7529 = vpack.c.b16 %v7367, %v7361
        %v7530 = vpack.c.b16 %v7368, %v7362
        %v7531 = vpack.c.b16 %v7369, %v7363
        %v7532 = vpack.c.b16 %v7370, %v7364
        %v7533 = vpack.c.b16 %v7371, %v7365
        %v7534 = vpack.c.b16 %v7378, %v7372
        %v7535 = vpack.c.b16 %v7379, %v7373
        %v7536 = vpack.c.b16 %v7380, %v7374
        %v7537 = vpack.c.b16 %v7381, %v7375
        %v7538 = vpack.c.b16 %v7382, %v7376
        %v7539 = vpack.c.b16 %v7383, %v7377
        %v7540 = vpack.c.b16 %v7390, %v7384
        %v7541 = vpack.c.b16 %v7391, %v7385
        %v7542 = vpack.c.b16 %v7392, %v7386
        %v7543 = vpack.c.b16 %v7393, %v7387
        %v7544 = vpack.c.b16 %v7394, %v7388
        %v7545 = vpack.c.b16 %v7395, %v7389
        %v7546 = vpack.c.b16 %v7402, %v7396
        %v7547 = vpack.c.b16 %v7403, %v7397
        %v7548 = vpack.c.b16 %v7404, %v7398
        %v7549 = vpack.c.b16 %v7405, %v7399
        %v7550 = vpack.c.b16 %v7406, %v7400
        %v7551 = vpack.c.b16 %v7407, %v7401
        %v7552 = vpack.c.b16 %v7414, %v7408
        %v7553 = vpack.c.b16 %v7415, %v7409
        %v7554 = vpack.c.b16 %v7416, %v7410
        %v7555 = vpack.c.b16 %v7417, %v7411
        %v7556 = vpack.c.b16 %v7418, %v7412
        %v7557 = vpack.c.b16 %v7419, %v7413
        %v7558 = vpack.c.b16 %v7426, %v7420
        %v7559 = vpack.c.b16 %v7427, %v7421
        %v7560 = vpack.c.b16 %v7428, %v7422
        %v7561 = vpack.c.b16 %v7429, %v7423
        %v7562 = vpack.c.b16 %v7430, %v7424
        %v7563 = vpack.c.b16 %v7431, %v7425
        %v7564 = vpack.c.b16 %v7438, %v7432
        %v7565 = vpack.c.b16 %v7439, %v7433
        %v7566 = vpack.c.b16 %v7440, %v7434
        %v7567 = vpack.c.b16 %v7441, %v7435
        %v7568 = vpack.c.b16 %v7442, %v7436
        %v7569 = vpack.c.b16 %v7443, %v7437
        %v7570 = vpack.c.b16 %v7450, %v7444
        %v7571 = vpack.c.b16 %v7451, %v7445
        %v7572 = vpack.c.b16 %v7452, %v7446
        %v7573 = vpack.c.b16 %v7453, %v7447
        %v7574 = vpack.c.b16 %v7454, %v7448
        %v7575 = vpack.c.b16 %v7455, %v7449
        %v7576 = vpack.c.b16 %v7462, %v7456
        %v7577 = vpack.c.b16 %v7463, %v7457
        %v7578 = vpack.c.b16 %v7464, %v7458
        %v7579 = vpack.c.b16 %v7465, %v7459
        %v7580 = vpack.c.b16 %v7466, %v7460
        %v7581 = vpack.c.b16 %v7467, %v7461
        %v7582 = vpack.c.b16 %v7474, %v7468
        %v7583 = vpack.c.b16 %v7475, %v7469
        %v7584 = vpack.c.b16 %v7476, %v7470
        %v7585 = vpack.c.b16 %v7477, %v7471
        %v7586 = vpack.c.b16 %v7478, %v7472
        %v7587 = vpack.c.b16 %v7479, %v7473
        %v7588 = vpack.c.b16 %v7486, %v7480
        %v7589 = vpack.c.b16 %v7487, %v7481
        %v7590 = vpack.c.b16 %v7488, %v7482
        %v7591 = vpack.c.b16 %v7489, %v7483
        %v7592 = vpack.c.b16 %v7490, %v7484
        %v7593 = vpack.c.b16 %v7491, %v7485
        %v7594 = vpack.c.b16 %v7498, %v7492
        %v7595 = vpack.c.b16 %v7499, %v7493
        %v7596 = vpack.c.b16 %v7500, %v7494
        %v7597 = vpack.c.b16 %v7501, %v7495
        %v7598 = vpack.c.b16 %v7502, %v7496
        %v7599 = vpack.c.b16 %v7503, %v7497
        %7696 = vmatprep.subr.bf16.mxu0 %v7505
        %7697 = vmatpush1.bf16.msra.mxu0 %v7504
        %7698 = vmatprep.subr.bf16.mxu0 %v7511
        %7699 = vmatpush1.bf16.msra.mxu0 %v7510
        %7700 = vmatprep.subr.bf16.mxu0 %v7517
        %7701 = vmatpush1.bf16.msra.mxu0 %v7516
        %7702 = vmatprep.subr.bf16.mxu0 %v7523
        %7703 = vmatpush1.bf16.msra.mxu0 %v7522
        %7704 = vmatprep.subr.bf16.mxu0 %v7529
        %7705 = vmatpush1.bf16.msra.mxu0 %v7528
        %7706 = vmatprep.subr.bf16.mxu0 %v7535
        %7707 = vmatpush1.bf16.msra.mxu0 %v7534
        %7708 = vmatprep.subr.bf16.mxu0 %v7541
        %7709 = vmatpush1.bf16.msra.mxu0 %v7540
        %7710 = vmatprep.subr.bf16.mxu0 %v7547
        %7711 = vmatpush1.bf16.msra.mxu0 %v7546
        %7712 = vmatprep.subr.bf16.mxu0 %v7553
        %7713 = vmatpush1.bf16.msra.mxu0 %v7552
        %7714 = vmatprep.subr.bf16.mxu0 %v7559
        %7715 = vmatpush1.bf16.msra.mxu0 %v7558
        %7716 = vmatprep.subr.bf16.mxu0 %v7565
        %7717 = vmatpush1.bf16.msra.mxu0 %v7564
        %7718 = vmatprep.subr.bf16.mxu0 %v7571
        %7719 = vmatpush1.bf16.msra.mxu0 %v7570
        %7720 = vmatprep.subr.bf16.mxu0 %v7577
        %7721 = vmatpush1.bf16.msra.mxu0 %v7576
        %7722 = vmatprep.subr.bf16.mxu0 %v7583
        %7723 = vmatpush1.bf16.msra.mxu0 %v7582
        %7724 = vmatprep.subr.bf16.mxu0 %v7589
        %7725 = vmatpush1.bf16.msra.mxu0 %v7588
        %7726 = vmatprep.subr.bf16.mxu0 %v7595
        %7727 = vmatpush1.bf16.msra.mxu0 %v7594
        %7728 = vmatprep.mubr.bf16.mxu0 %v7085
        %7729 = vmatmul.mubr.bf16.gmra.mrb[0].mxu0 %v7084
        %v7730 = vpop.f32.mrb[0].mxu0
        %v7731 = vadd.f32 %v7189, %v7730
        %v7732 = vpop.f32.mrb[0].mxu0
        %v7733 = vadd.f32 %v7193, %v7732
        %v7734 = vpop.f32.mrb[0].mxu0
        %v7735 = vadd.f32 %v7189, %v7734
        %v7736 = vpop.f32.mrb[0].mxu0
        %v7737 = vadd.f32 %v7193, %v7736
        %7738 = vmatprep.mubr.bf16.mxu0 %v7087
        %7739 = vmatmul.mubr.bf16.gmra.mrb[0].mxu0 %v7086
        %v7740 = vpop.f32.mrb[0].mxu0
        %v7741 = vadd.f32 %v7189, %v7740
        %v7742 = vpop.f32.mrb[0].mxu0
        %v7743 = vadd.f32 %v7193, %v7742
        %v7744 = vpop.f32.mrb[0].mxu0
        %v7745 = vadd.f32 %v7189, %v7744
        %v7746 = vpop.f32.mrb[0].mxu0
        %v7747 = vadd.f32 %v7193, %v7746
        %7748 = vdwg.mxu0
        %7749 = vmatprep.subr.bf16.mxu0 %v7507
        %7750 = vmatpush1.bf16.msra.mxu0 %v7506
        %7751 = vmatprep.subr.bf16.mxu0 %v7513
        %7752 = vmatpush1.bf16.msra.mxu0 %v7512
        %7753 = vmatprep.subr.bf16.mxu0 %v7519
        %7754 = vmatpush1.bf16.msra.mxu0 %v7518
        %7755 = vmatprep.subr.bf16.mxu0 %v7525
        %7756 = vmatpush1.bf16.msra.mxu0 %v7524
        %7757 = vmatprep.subr.bf16.mxu0 %v7531
        %7758 = vmatpush1.bf16.msra.mxu0 %v7530
        %7759 = vmatprep.subr.bf16.mxu0 %v7537
        %7760 = vmatpush1.bf16.msra.mxu0 %v7536
        %7761 = vmatprep.subr.bf16.mxu0 %v7543
        %7762 = vmatpush1.bf16.msra.mxu0 %v7542
        %7763 = vmatprep.subr.bf16.mxu0 %v7549
        %7764 = vmatpush1.bf16.msra.mxu0 %v7548
        %7765 = vmatprep.subr.bf16.mxu0 %v7555
        %7766 = vmatpush1.bf16.msra.mxu0 %v7554
        %7767 = vmatprep.subr.bf16.mxu0 %v7561
        %7768 = vmatpush1.bf16.msra.mxu0 %v7560
        %7769 = vmatprep.subr.bf16.mxu0 %v7567
        %7770 = vmatpush1.bf16.msra.mxu0 %v7566
        %7771 = vmatprep.subr.bf16.mxu0 %v7573
        %7772 = vmatpush1.bf16.msra.mxu0 %v7572
        %7773 = vmatprep.subr.bf16.mxu0 %v7579
        %7774 = vmatpush1.bf16.msra.mxu0 %v7578
        %7775 = vmatprep.subr.bf16.mxu0 %v7585
        %7776 = vmatpush1.bf16.msra.mxu0 %v7584
        %7777 = vmatprep.subr.bf16.mxu0 %v7591
        %7778 = vmatpush1.bf16.msra.mxu0 %v7590
        %7779 = vmatprep.subr.bf16.mxu0 %v7597
        %7780 = vmatpush1.bf16.msra.mxu0 %v7596
        %7781 = vmatprep.mubr.bf16.mxu0 %v7085
        %7782 = vmatmul.mubr.bf16.gmra.mrb[0].mxu0 %v7084
        %v7783 = vpop.f32.mrb[0].mxu0
        %v7784 = vadd.f32 %v7197, %v7783
        %v7785 = vpop.f32.mrb[0].mxu0
        %v7786 = vadd.f32 %v7201, %v7785
        %v7787 = vpop.f32.mrb[0].mxu0
        %v7788 = vadd.f32 %v7197, %v7787
        %v7789 = vpop.f32.mrb[0].mxu0
        %v7790 = vadd.f32 %v7201, %v7789
        %7791 = vmatprep.mubr.bf16.mxu0 %v7087
        %7792 = vmatmul.mubr.bf16.gmra.mrb[0].mxu0 %v7086
        %v7793 = vpop.f32.mrb[0].mxu0
        %v7794 = vadd.f32 %v7197, %v7793
        %v7795 = vpop.f32.mrb[0].mxu0
        %v7796 = vadd.f32 %v7201, %v7795
        %v7797 = vpop.f32.mrb[0].mxu0
        %v7798 = vadd.f32 %v7197, %v7797
        %v7799 = vpop.f32.mrb[0].mxu0
        %v7800 = vadd.f32 %v7201, %v7799
        %7801 = vdwg.mxu0
        %7802 = vmatprep.subr.bf16.mxu0 %v7509
        %7803 = vmatpush1.bf16.msra.mxu0 %v7508
        %7804 = vmatprep.subr.bf16.mxu0 %v7515
        %7805 = vmatpush1.bf16.msra.mxu0 %v7514
        %7806 = vmatprep.subr.bf16.mxu0 %v7521
        %7807 = vmatpush1.bf16.msra.mxu0 %v7520
        %7808 = vmatprep.subr.bf16.mxu0 %v7527
        %7809 = vmatpush1.bf16.msra.mxu0 %v7526
        %7810 = vmatprep.subr.bf16.mxu0 %v7533
        %7811 = vmatpush1.bf16.msra.mxu0 %v7532
        %7812 = vmatprep.subr.bf16.mxu0 %v7539
        %7813 = vmatpush1.bf16.msra.mxu0 %v7538
        %7814 = vmatprep.subr.bf16.mxu0 %v7545
        %7815 = vmatpush1.bf16.msra.mxu0 %v7544
        %7816 = vmatprep.subr.bf16.mxu0 %v7551
        %7817 = vmatpush1.bf16.msra.mxu0 %v7550
        %7818 = vmatprep.subr.bf16.mxu0 %v7557
        %7819 = vmatpush1.bf16.msra.mxu0 %v7556
        %7820 = vmatprep.subr.bf16.mxu0 %v7563
        %7821 = vmatpush1.bf16.msra.mxu0 %v7562
        %7822 = vmatprep.subr.bf16.mxu0 %v7569
        %7823 = vmatpush1.bf16.msra.mxu0 %v7568
        %7824 = vmatprep.subr.bf16.mxu0 %v7575
        %7825 = vmatpush1.bf16.msra.mxu0 %v7574
        %7826 = vmatprep.subr.bf16.mxu0 %v7581
        %7827 = vmatpush1.bf16.msra.mxu0 %v7580
        %7828 = vmatprep.subr.bf16.mxu0 %v7587
        %7829 = vmatpush1.bf16.msra.mxu0 %v7586
        %7830 = vmatprep.subr.bf16.mxu0 %v7593
        %7831 = vmatpush1.bf16.msra.mxu0 %v7592
        %7832 = vmatprep.subr.bf16.mxu0 %v7599
        %7833 = vmatpush1.bf16.msra.mxu0 %v7598
        %7834 = vmatprep.mubr.bf16.mxu0 %v7085
        %7835 = vmatmul.mubr.bf16.gmra.mrb[0].mxu0 %v7084
        %v7836 = vpop.f32.mrb[0].mxu0
        %v7837 = vadd.f32 %v7205, %v7836
        %v7838 = vpop.f32.mrb[0].mxu0
        %v7839 = vadd.f32 %v7209, %v7838
        %v7840 = vpop.f32.mrb[0].mxu0
        %v7841 = vadd.f32 %v7205, %v7840
        %v7842 = vpop.f32.mrb[0].mxu0
        %v7843 = vadd.f32 %v7209, %v7842
        %7844 = vmatprep.mubr.bf16.mxu0 %v7087
        %7845 = vmatmul.mubr.bf16.gmra.mrb[0].mxu0 %v7086
        %v7846 = vpop.f32.mrb[0].mxu0
        %v7847 = vadd.f32 %v7205, %v7846
        %v7848 = vpop.f32.mrb[0].mxu0
        %v7849 = vadd.f32 %v7209, %v7848
        %v7850 = vpop.f32.mrb[0].mxu0
        %v7851 = vadd.f32 %v7205, %v7850
        %v7852 = vpop.f32.mrb[0].mxu0
        %v7853 = vadd.f32 %v7209, %v7852
        %7854 = vdwg.mxu0
        %vm7855 = vcmp.lt.s32.totalorder %v3353, 24
        %v7856 = vsel %vm7855, 0.0, -1e+30
        %v7857 = vld [vmem:[%s49] sm:$0xff]
        %v7858 = vld [vmem:[%s49 + $0x8] sm:$0xff]
        %v7859 = vld [vmem:[%s49 + $0x10] sm:$0xff]
        %v7860 = vld [vmem:[%s49 + $0x18] sm:$0xff]
        %v7861 = vld [vmem:[%s49 + $0x20] sm:$0xff]
        %v7862 = vld [vmem:[%s49 + $0x28] sm:$0xff]
        %v7863 = vld [vmem:[%s49 + $0x30] sm:$0xff]
        %v7864 = vld [vmem:[%s49 + $0x38] sm:$0xff]
        %v7865 = vld [vmem:[%s49 + $0x40] sm:$0xff]
        %v7866 = vld [vmem:[%s49 + $0x48] sm:$0xff]
        %v7867 = vld [vmem:[%s49 + $0x50] sm:$0xff]
        %v7868 = vld [vmem:[%s49 + $0x58] sm:$0xff]
        %v7869 = vld [vmem:[%s49 + $0x60] sm:$0xff]
        %v7870 = vld [vmem:[%s49 + $0x68] sm:$0xff]
        %v7871 = vld [vmem:[%s49 + $0x70] sm:$0xff]
        %v7872 = vld [vmem:[%s49 + $0x78] sm:$0xff]
        %v7873 = vld [vmem:[%s49 + $0x80] sm:$0xff]
        %v7874 = vld [vmem:[%s49 + $0x88] sm:$0xff]
        %v7875 = vld [vmem:[%s49 + $0x90] sm:$0xff]
        %v7876 = vld [vmem:[%s49 + $0x98] sm:$0xff]
        %v7877 = vld [vmem:[%s49 + $0xa0] sm:$0xff]
        %v7878 = vld [vmem:[%s49 + $0xa8] sm:$0xff]
        %v7879 = vld [vmem:[%s49 + $0xb0] sm:$0xff]
        %v7880 = vld [vmem:[%s49 + $0xb8] sm:$0xff]
        %v7881 = vld [vmem:[%s49 + $0xc0] sm:$0xff]
        %v7882 = vld [vmem:[%s49 + $0xc8] sm:$0xff]
        %v7883 = vld [vmem:[%s49 + $0xd0] sm:$0xff]
        %v7884 = vld [vmem:[%s49 + $0xd8] sm:$0xff]
        %v7885 = vld [vmem:[%s49 + $0xe0] sm:$0xff]
        %v7886 = vld [vmem:[%s49 + $0xe8] sm:$0xff]
        %v7887 = vld [vmem:[%s49 + $0xf0] sm:$0xff]
        %v7888 = vld [vmem:[%s49 + $0xf8] sm:$0xff]
        %v7889 = vmul.f32 %v7731, 0.17677669
        %v7890 = vmul.f32 %v7735, 0.17677669
        %v7891 = vmul.f32 %v7741, 0.17677669
        %v7892 = vmul.f32 %v7745, 0.17677669
        %v7893 = vpack.c.bf16 %v7890, %v7889
        %v7894 = vpack.c.bf16 %v7892, %v7891
        %v7895 = vpack.c.bf16 %v7788, %v7784
        %v7896 = vpack.c.bf16 %v7798, %v7794
        %v7897 = vpack.c.bf16 %v7841, %v7837
        %v7898 = vpack.c.bf16 %v7851, %v7847
        %v7900 = vsel %vm3393, %v7893, 0
        %v7903 = vsel %vm3393, %v7894, 0
        %v7906 = vsel %vm3393, %v7895, 0
        %v7909 = vsel %vm3393, %v7896, 0
        %7911 = vmatprep.subr.bf16.mxu0 0
        %7912 = vmatpush1.bf16.xpose.msra.mxu0 %v7906
        %7913 = vmatprep.subr.bf16.mxu0 0
        %7914 = vmatpush1.bf16.xpose.msra.mxu0 %v7909
        %7915 = vmatprep.subr.bf16.mxu0 0
        %7916 = vmatpush1.bf16.xpose.msra.mxu0 0
        %7917 = vmatprep.subr.bf16.mxu0 0
        %7918 = vmatpush1.bf16.xpose.msra.mxu0 0
        %7919 = vmatprep.subr.bf16.mxu0 0
        %7920 = vmatpush1.bf16.xpose.msra.mxu0 0
        %7921 = vmatprep.subr.bf16.mxu0 0
        %7922 = vmatpush1.bf16.xpose.msra.mxu0 0
        %7923 = vmatprep.subr.bf16.mxu0 0
        %7924 = vmatpush1.bf16.xpose.msra.mxu0 0
        %7925 = vmatprep.subr.bf16.mxu0 0
        %7926 = vmatpush1.bf16.xpose.msra.mxu0 0
        %7927 = vmatprep.subr.bf16.mxu0 0
        %7928 = vmatpush1.bf16.xpose.msra.mxu0 0
        %7929 = vmatprep.subr.bf16.mxu0 0
        %7930 = vmatpush1.bf16.xpose.msra.mxu0 0
        %7931 = vmatprep.subr.bf16.mxu0 0
        %7932 = vmatpush1.bf16.xpose.msra.mxu0 0
        %7933 = vmatprep.subr.bf16.mxu0 0
        %7934 = vmatpush1.bf16.xpose.msra.mxu0 0
        %7935 = vmatprep.subr.bf16.mxu0 0
        %7936 = vmatpush1.bf16.xpose.msra.mxu0 0
        %7937 = vmatprep.subr.bf16.mxu0 0
        %7938 = vmatpush1.bf16.xpose.msra.mxu0 0
        %7939 = vmatprep.subr.bf16.mxu0 0
        %7940 = vmatpush1.bf16.xpose.msra.mxu0 0
        %7941 = vmatprep.subr.bf16.mxu0 0
        %7942 = vmatpush1.bf16.xpose.msra.mxu0 0
        %7943 = vmatprep.mubr.bf16.mxu0 0
        %7944 = vmatmul.mubr.bf16.gmra.mrb[0].mxu0 %v7900
        %v7945 = vpop.f32.mrb[0].mxu0
        %v7946 = vadd.f32 %v7856, %v7945
        %v7947 = vpop.f32.mrb[0].mxu0
        %v7948 = vpop.f32.mrb[0].mxu0
        %v7949 = vadd.f32 %v7856, %v7948
        %v7950 = vpop.f32.mrb[0].mxu0
        %7951 = vmatprep.mubr.bf16.mxu0 0
        %7952 = vmatmul.mubr.bf16.gmra.mrb[0].mxu0 %v7903
        %v7953 = vpop.f32.mrb[0].mxu0
        %v7954 = vadd.f32 %v7856, %v7953
        %v7955 = vpop.f32.mrb[0].mxu0
        %v7956 = vpop.f32.mrb[0].mxu0
        %v7957 = vadd.f32 %v7856, %v7956
        %v7958 = vpop.f32.mrb[0].mxu0
        %7959 = vdwg.mxu0
        %v7960 = vsel %vm3393, %v7946, -inf
        %7961 = vmax.xlane.f32.xlu0 %v7960
        %v7962 = vpop.xlane.xlu0 %7961
        %v7963 = vsel %vm3393, %v7949, -inf
        %7964 = vmax.xlane.f32.xlu0 %v7963
        %v7965 = vpop.xlane.xlu0 %7964
        %v7966 = vsel %vm3393, %v7954, -inf
        %7967 = vmax.xlane.f32.xlu0 %v7966
        %v7968 = vpop.xlane.xlu0 %7967
        %v7969 = vsel %vm3393, %v7957, -inf
        %7970 = vmax.xlane.f32.xlu0 %v7969
        %v7971 = vpop.xlane.xlu0 %7970
        %v7972 = vsub.f32 %v7946, %v7962
        %v7973 = vsub.f32 %v7949, %v7965
        %v7974 = vsub.f32 %v7954, %v7968
        %v7975 = vsub.f32 %v7957, %v7971
        %v7976 = vmul.f32 %v7972, 1.442695
        %v7977 = vpow.pop %v7976
        %v7978 = vmul.f32 %v7973, 1.442695
        %v7979 = vpow.pop %v7978
        %v7980 = vmul.f32 %v7974, 1.442695
        %v7981 = vpow.pop %v7980
        %v7982 = vmul.f32 %v7975, 1.442695
        %v7983 = vpow.pop %v7982
        %v7984 = vsel %vm3393, %v7977, 0.0
        %7985 = vadd.xlane.f32.xlu0 %v7984
        %v7986 = vpop.xlane.xlu0 %7985
        %v7987 = vsel %vm3393, %v7979, 0.0
        %7988 = vadd.xlane.f32.xlu0 %v7987
        %v7989 = vpop.xlane.xlu0 %7988
        %v7990 = vsel %vm3393, %v7981, 0.0
        %7991 = vadd.xlane.f32.xlu0 %v7990
        %v7992 = vpop.xlane.xlu0 %7991
        %v7993 = vsel %vm3393, %v7983, 0.0
        %7994 = vadd.xlane.f32.xlu0 %v7993
        %v7995 = vpop.xlane.xlu0 %7994
        %v7996 = vrcp.pop %v7986
        %v7997 = vrcp.pop %v7989
        %v7998 = vrcp.pop %v7992
        %v7999 = vrcp.pop %v7995
        %v8000 = vmul.f32 %v7977, %v7996
        %v8001 = vmul.f32 %v7979, %v7997
        %v8002 = vmul.f32 %v7981, %v7998
        %v8003 = vmul.f32 %v7983, %v7999
        %v8004 = vpack.c.bf16 %v8001, %v8000
        %v8005 = vpack.c.bf16 %v8003, %v8002
        %v8007 = vsel %vm3393, %v8004, 0
        %v8010 = vsel %vm3393, %v8005, 0
        %8012 = vmatprep.subr.bf16.mxu0 0
        %8013 = vmatpush1.bf16.msra.mxu0 %v7897
        %8014 = vmatprep.subr.bf16.mxu0 0
        %8015 = vmatpush1.bf16.msra.mxu0 %v7898
        %8016 = vmatprep.subr.bf16.mxu0 0
        %8017 = vmatpush1.bf16.msra.mxu0 0
        %8018 = vmatprep.subr.bf16.mxu0 0
        %8019 = vmatpush1.bf16.msra.mxu0 0
        %8020 = vmatprep.subr.bf16.mxu0 0
        %8021 = vmatpush1.bf16.msra.mxu0 0
        %8022 = vmatprep.subr.bf16.mxu0 0
        %8023 = vmatpush1.bf16.msra.mxu0 0
        %8024 = vmatprep.subr.bf16.mxu0 0
        %8025 = vmatpush1.bf16.msra.mxu0 0
        %8026 = vmatprep.subr.bf16.mxu0 0
        %8027 = vmatpush1.bf16.msra.mxu0 0
        %8028 = vmatprep.subr.bf16.mxu0 0
        %8029 = vmatpush1.bf16.msra.mxu0 0
        %8030 = vmatprep.subr.bf16.mxu0 0
        %8031 = vmatpush1.bf16.msra.mxu0 0
        %8032 = vmatprep.subr.bf16.mxu0 0
        %8033 = vmatpush1.bf16.msra.mxu0 0
        %8034 = vmatprep.subr.bf16.mxu0 0
        %8035 = vmatpush1.bf16.msra.mxu0 0
        %8036 = vmatprep.subr.bf16.mxu0 0
        %8037 = vmatpush1.bf16.msra.mxu0 0
        %8038 = vmatprep.subr.bf16.mxu0 0
        %8039 = vmatpush1.bf16.msra.mxu0 0
        %8040 = vmatprep.subr.bf16.mxu0 0
        %8041 = vmatpush1.bf16.msra.mxu0 0
        %8042 = vmatprep.subr.bf16.mxu0 0
        %8043 = vmatpush1.bf16.msra.mxu0 0
        %8044 = vmatprep.mubr.bf16.mxu0 0
        %8045 = vmatmul.mubr.bf16.gmra.mrb[0].mxu0 %v8007
        %v8046 = vpop.f32.mrb[0].mxu0
        %v8047 = vadd.f32 0.0, %v8046
        %v8048 = vpop.f32.mrb[0].mxu0
        %v8049 = vpop.f32.mrb[0].mxu0
        %v8050 = vadd.f32 0.0, %v8049
        %v8051 = vpop.f32.mrb[0].mxu0
        %8052 = vmatprep.mubr.bf16.mxu0 0
        %8053 = vmatmul.mubr.bf16.gmra.mrb[0].mxu0 %v8010
        %v8054 = vpop.f32.mrb[0].mxu0
        %v8055 = vadd.f32 0.0, %v8054
        %v8056 = vpop.f32.mrb[0].mxu0
        %v8057 = vpop.f32.mrb[0].mxu0
        %v8058 = vadd.f32 0.0, %v8057
        %v8059 = vpop.f32.mrb[0].mxu0
        %8060 = vdwg.mxu0
        %v8061 = vpack.c.bf16 %v8050, %v8047
        %v8062 = vpack.c.bf16 %v8058, %v8055
        %8065 = vrot.lane.b32.xlu0 %v7893, 96
        %v8066 = vpop.permute.xlu0 %8065
        %8067 = vrot.lane.b32.xlu0 %v7894, 96
        %v8068 = vpop.permute.xlu0 %8067
        %8071 = vrot.lane.b32.xlu0 %v7895, 96
        %v8072 = vpop.permute.xlu0 %8071
        %8073 = vrot.lane.b32.xlu0 %v7896, 96
        %v8074 = vpop.permute.xlu0 %8073
        %v8076 = vsel %vm3393, %v8066, 0
        %v8079 = vsel %vm3393, %v8068, 0
        %v8082 = vsel %vm3393, %v8072, 0
        %v8085 = vsel %vm3393, %v8074, 0
        %8087 = vmatprep.subr.bf16.mxu0 0
        %8088 = vmatpush1.bf16.xpose.msra.mxu0 %v8082
        %8089 = vmatprep.subr.bf16.mxu0 0
        %8090 = vmatpush1.bf16.xpose.msra.mxu0 %v8085
        %8091 = vmatprep.subr.bf16.mxu0 0
        %8092 = vmatpush1.bf16.xpose.msra.mxu0 0
        %8093 = vmatprep.subr.bf16.mxu0 0
        %8094 = vmatpush1.bf16.xpose.msra.mxu0 0
        %8095 = vmatprep.subr.bf16.mxu0 0
        %8096 = vmatpush1.bf16.xpose.msra.mxu0 0
        %8097 = vmatprep.subr.bf16.mxu0 0
        %8098 = vmatpush1.bf16.xpose.msra.mxu0 0
        %8099 = vmatprep.subr.bf16.mxu0 0
        %8100 = vmatpush1.bf16.xpose.msra.mxu0 0
        %8101 = vmatprep.subr.bf16.mxu0 0
        %8102 = vmatpush1.bf16.xpose.msra.mxu0 0
        %8103 = vmatprep.subr.bf16.mxu0 0
        %8104 = vmatpush1.bf16.xpose.msra.mxu0 0
        %8105 = vmatprep.subr.bf16.mxu0 0
        %8106 = vmatpush1.bf16.xpose.msra.mxu0 0
        %8107 = vmatprep.subr.bf16.mxu0 0
        %8108 = vmatpush1.bf16.xpose.msra.mxu0 0
        %8109 = vmatprep.subr.bf16.mxu0 0
        %8110 = vmatpush1.bf16.xpose.msra.mxu0 0
        %8111 = vmatprep.subr.bf16.mxu0 0
        %8112 = vmatpush1.bf16.xpose.msra.mxu0 0
        %8113 = vmatprep.subr.bf16.mxu0 0
        %8114 = vmatpush1.bf16.xpose.msra.mxu0 0
        %8115 = vmatprep.subr.bf16.mxu0 0
        %8116 = vmatpush1.bf16.xpose.msra.mxu0 0
        %8117 = vmatprep.subr.bf16.mxu0 0
        %8118 = vmatpush1.bf16.xpose.msra.mxu0 0
        %8119 = vmatprep.mubr.bf16.mxu0 0
        %8120 = vmatmul.mubr.bf16.gmra.mrb[0].mxu0 %v8076
        %v8121 = vpop.f32.mrb[0].mxu0
        %v8122 = vadd.f32 %v7856, %v8121
        %v8123 = vpop.f32.mrb[0].mxu0
        %v8124 = vpop.f32.mrb[0].mxu0
        %v8125 = vadd.f32 %v7856, %v8124
        %v8126 = vpop.f32.mrb[0].mxu0
        %8127 = vmatprep.mubr.bf16.mxu0 0
        %8128 = vmatmul.mubr.bf16.gmra.mrb[0].mxu0 %v8079
        %v8129 = vpop.f32.mrb[0].mxu0
        %v8130 = vadd.f32 %v7856, %v8129
        %v8131 = vpop.f32.mrb[0].mxu0
        %v8132 = vpop.f32.mrb[0].mxu0
        %v8133 = vadd.f32 %v7856, %v8132
        %v8134 = vpop.f32.mrb[0].mxu0
        %8135 = vdwg.mxu0
        %v8136 = vsel %vm3393, %v8122, -inf
        %8137 = vmax.xlane.f32.xlu0 %v8136
        %v8138 = vpop.xlane.xlu0 %8137
        %v8139 = vsel %vm3393, %v8125, -inf
        %8140 = vmax.xlane.f32.xlu0 %v8139
        %v8141 = vpop.xlane.xlu0 %8140
        %v8142 = vsel %vm3393, %v8130, -inf
        %8143 = vmax.xlane.f32.xlu0 %v8142
        %v8144 = vpop.xlane.xlu0 %8143
        %v8145 = vsel %vm3393, %v8133, -inf
        %8146 = vmax.xlane.f32.xlu0 %v8145
        %v8147 = vpop.xlane.xlu0 %8146
        %v8148 = vsub.f32 %v8122, %v8138
        %v8149 = vsub.f32 %v8125, %v8141
        %v8150 = vsub.f32 %v8130, %v8144
        %v8151 = vsub.f32 %v8133, %v8147
        %v8152 = vmul.f32 %v8148, 1.442695
        %v8153 = vpow.pop %v8152
        %v8154 = vmul.f32 %v8149, 1.442695
        %v8155 = vpow.pop %v8154
        %v8156 = vmul.f32 %v8150, 1.442695
        %v8157 = vpow.pop %v8156
        %v8158 = vmul.f32 %v8151, 1.442695
        %v8159 = vpow.pop %v8158
        %v8160 = vsel %vm3393, %v8153, 0.0
        %8161 = vadd.xlane.f32.xlu0 %v8160
        %v8162 = vpop.xlane.xlu0 %8161
        %v8163 = vsel %vm3393, %v8155, 0.0
        %8164 = vadd.xlane.f32.xlu0 %v8163
        %v8165 = vpop.xlane.xlu0 %8164
        %v8166 = vsel %vm3393, %v8157, 0.0
        %8167 = vadd.xlane.f32.xlu0 %v8166
        %v8168 = vpop.xlane.xlu0 %8167
        %v8169 = vsel %vm3393, %v8159, 0.0
        %8170 = vadd.xlane.f32.xlu0 %v8169
        %v8171 = vpop.xlane.xlu0 %8170
        %v8172 = vrcp.pop %v8162
        %v8173 = vrcp.pop %v8165
        %v8174 = vrcp.pop %v8168
        %v8175 = vrcp.pop %v8171
        %v8176 = vmul.f32 %v8153, %v8172
        %v8177 = vmul.f32 %v8155, %v8173
        %v8178 = vmul.f32 %v8157, %v8174
        %v8179 = vmul.f32 %v8159, %v8175
        %v8180 = vpack.c.bf16 %v8177, %v8176
        %v8181 = vpack.c.bf16 %v8179, %v8178
        %8184 = vrot.lane.b32.xlu0 %v7897, 96
        %v8185 = vpop.permute.xlu0 %8184
        %8186 = vrot.lane.b32.xlu0 %v7898, 96
        %v8187 = vpop.permute.xlu0 %8186
        %v8191 = vsel %vm3393, %v8180, 0
        %v8194 = vsel %vm3393, %v8181, 0
        %8196 = vmatprep.subr.bf16.mxu0 0
        %8197 = vmatpush1.bf16.msra.mxu0 %v8185
        %8198 = vmatprep.subr.bf16.mxu0 0
        %8199 = vmatpush1.bf16.msra.mxu0 %v8187
        %8200 = vmatprep.subr.bf16.mxu0 0
        %8201 = vmatpush1.bf16.msra.mxu0 0
        %8202 = vmatprep.subr.bf16.mxu0 0
        %8203 = vmatpush1.bf16.msra.mxu0 0
        %8204 = vmatprep.subr.bf16.mxu0 0
        %8205 = vmatpush1.bf16.msra.mxu0 0
        %8206 = vmatprep.subr.bf16.mxu0 0
        %8207 = vmatpush1.bf16.msra.mxu0 0
        %8208 = vmatprep.subr.bf16.mxu0 0
        %8209 = vmatpush1.bf16.msra.mxu0 0
        %8210 = vmatprep.subr.bf16.mxu0 0
        %8211 = vmatpush1.bf16.msra.mxu0 0
        %8212 = vmatprep.subr.bf16.mxu0 0
        %8213 = vmatpush1.bf16.msra.mxu0 0
        %8214 = vmatprep.subr.bf16.mxu0 0
        %8215 = vmatpush1.bf16.msra.mxu0 0
        %8216 = vmatprep.subr.bf16.mxu0 0
        %8217 = vmatpush1.bf16.msra.mxu0 0
        %8218 = vmatprep.subr.bf16.mxu0 0
        %8219 = vmatpush1.bf16.msra.mxu0 0
        %8220 = vmatprep.subr.bf16.mxu0 0
        %8221 = vmatpush1.bf16.msra.mxu0 0
        %8222 = vmatprep.subr.bf16.mxu0 0
        %8223 = vmatpush1.bf16.msra.mxu0 0
        %8224 = vmatprep.subr.bf16.mxu0 0
        %8225 = vmatpush1.bf16.msra.mxu0 0
        %8226 = vmatprep.subr.bf16.mxu0 0
        %8227 = vmatpush1.bf16.msra.mxu0 0
        %8228 = vmatprep.mubr.bf16.mxu0 0
        %8229 = vmatmul.mubr.bf16.gmra.mrb[0].mxu0 %v8191
        %v8230 = vpop.f32.mrb[0].mxu0
        %v8231 = vadd.f32 0.0, %v8230
        %v8232 = vpop.f32.mrb[0].mxu0
        %v8233 = vpop.f32.mrb[0].mxu0
        %v8234 = vadd.f32 0.0, %v8233
        %v8235 = vpop.f32.mrb[0].mxu0
        %8236 = vmatprep.mubr.bf16.mxu0 0
        %8237 = vmatmul.mubr.bf16.gmra.mrb[0].mxu0 %v8194
        %v8238 = vpop.f32.mrb[0].mxu0
        %v8239 = vadd.f32 0.0, %v8238
        %v8240 = vpop.f32.mrb[0].mxu0
        %v8241 = vpop.f32.mrb[0].mxu0
        %v8242 = vadd.f32 0.0, %v8241
        %v8243 = vpop.f32.mrb[0].mxu0
        %8244 = vdwg.mxu0
        %v8245 = vpack.c.bf16 %v8234, %v8231
        %v8246 = vpack.c.bf16 %v8242, %v8239
        %v8251 = vunpack.c.l.b16 %v7861
        %v8252 = vunpack.c.h.b16 %v7861
        %v8253 = vunpack.c.l.b16 %v7862
        %v8254 = vunpack.c.h.b16 %v7862
        %v8255 = vunpack.c.l.b16 %v7863
        %v8256 = vunpack.c.h.b16 %v7863
        %v8257 = vunpack.c.l.b16 %v7864
        %v8258 = vunpack.c.h.b16 %v7864
        %v8259 = vpack.c.b16 %v8253, %v8251
        %v8260 = vpack.c.b16 %v8254, %v8252
        %v8261 = vpack.c.b16 %v8257, %v8255
        %v8262 = vpack.c.b16 %v8258, %v8256
        %v8268 = vsel %vm3393, %v8245, 0
        %v8271 = vsel %vm3393, %v8246, 0
        %8273 = vmatprep.subr.bf16.mxu0 %v8260
        %8274 = vmatpush1.bf16.msra.mxu0 %v8259
        %8275 = vmatprep.subr.bf16.mxu0 %v8262
        %8276 = vmatpush1.bf16.msra.mxu0 %v8261
        %8277 = vmatprep.subr.bf16.mxu0 0
        %8278 = vmatpush1.bf16.msra.mxu0 0
        %8279 = vmatprep.subr.bf16.mxu0 0
        %8280 = vmatpush1.bf16.msra.mxu0 0
        %8281 = vmatprep.subr.bf16.mxu0 0
        %8282 = vmatpush1.bf16.msra.mxu0 0
        %8283 = vmatprep.subr.bf16.mxu0 0
        %8284 = vmatpush1.bf16.msra.mxu0 0
        %8285 = vmatprep.subr.bf16.mxu0 0
        %8286 = vmatpush1.bf16.msra.mxu0 0
        %8287 = vmatprep.subr.bf16.mxu0 0
        %8288 = vmatpush1.bf16.msra.mxu0 0
        %8289 = vmatprep.subr.bf16.mxu0 0
        %8290 = vmatpush1.bf16.msra.mxu0 0
        %8291 = vmatprep.subr.bf16.mxu0 0
        %8292 = vmatpush1.bf16.msra.mxu0 0
        %8293 = vmatprep.subr.bf16.mxu0 0
        %8294 = vmatpush1.bf16.msra.mxu0 0
        %8295 = vmatprep.subr.bf16.mxu0 0
        %8296 = vmatpush1.bf16.msra.mxu0 0
        %8297 = vmatprep.subr.bf16.mxu0 0
        %8298 = vmatpush1.bf16.msra.mxu0 0
        %8299 = vmatprep.subr.bf16.mxu0 0
        %8300 = vmatpush1.bf16.msra.mxu0 0
        %8301 = vmatprep.subr.bf16.mxu0 0
        %8302 = vmatpush1.bf16.msra.mxu0 0
        %8303 = vmatprep.subr.bf16.mxu0 0
        %8304 = vmatpush1.bf16.msra.mxu0 0
        %8305 = vmatprep.mubr.bf16.mxu0 0
        %8306 = vmatmul.mubr.bf16.gmra.mrb[0].mxu0 %v8268
        %v8307 = vpop.f32.mrb[0].mxu0
        %v8308 = vadd.f32 0.0, %v8307
        %v8309 = vpop.f32.mrb[0].mxu0
        %v8310 = vadd.f32 0.0, %v8309
        %v8311 = vpop.f32.mrb[0].mxu0
        %v8312 = vadd.f32 0.0, %v8311
        %v8313 = vpop.f32.mrb[0].mxu0
        %v8314 = vadd.f32 0.0, %v8313
        %8315 = vmatprep.mubr.bf16.mxu0 0
        %8316 = vmatmul.mubr.bf16.gmra.mrb[0].mxu0 %v8271
        %v8317 = vpop.f32.mrb[0].mxu0
        %v8318 = vadd.f32 0.0, %v8317
        %v8319 = vpop.f32.mrb[0].mxu0
        %v8320 = vadd.f32 0.0, %v8319
        %v8321 = vpop.f32.mrb[0].mxu0
        %v8322 = vadd.f32 0.0, %v8321
        %v8323 = vpop.f32.mrb[0].mxu0
        %v8324 = vadd.f32 0.0, %v8323
        %8325 = vdwg.mxu0
        %v8330 = vunpack.c.l.b16 %v7857
        %v8331 = vunpack.c.h.b16 %v7857
        %v8332 = vunpack.c.l.b16 %v7858
        %v8333 = vunpack.c.h.b16 %v7858
        %v8334 = vunpack.c.l.b16 %v7859
        %v8335 = vunpack.c.h.b16 %v7859
        %v8336 = vunpack.c.l.b16 %v7860
        %v8337 = vunpack.c.h.b16 %v7860
        %v8338 = vpack.c.b16 %v8332, %v8330
        %v8339 = vpack.c.b16 %v8333, %v8331
        %v8340 = vpack.c.b16 %v8336, %v8334
        %v8341 = vpack.c.b16 %v8337, %v8335
        %v8347 = vsel %vm3393, %v8061, 0
        %v8350 = vsel %vm3393, %v8062, 0
        %8352 = vmatprep.subr.bf16.mxu0 %v8339
        %8353 = vmatpush1.bf16.msra.mxu0 %v8338
        %8354 = vmatprep.subr.bf16.mxu0 %v8341
        %8355 = vmatpush1.bf16.msra.mxu0 %v8340
        %8356 = vmatprep.subr.bf16.mxu0 0
        %8357 = vmatpush1.bf16.msra.mxu0 0
        %8358 = vmatprep.subr.bf16.mxu0 0
        %8359 = vmatpush1.bf16.msra.mxu0 0
        %8360 = vmatprep.subr.bf16.mxu0 0
        %8361 = vmatpush1.bf16.msra.mxu0 0
        %8362 = vmatprep.subr.bf16.mxu0 0
        %8363 = vmatpush1.bf16.msra.mxu0 0
        %8364 = vmatprep.subr.bf16.mxu0 0
        %8365 = vmatpush1.bf16.msra.mxu0 0
        %8366 = vmatprep.subr.bf16.mxu0 0
        %8367 = vmatpush1.bf16.msra.mxu0 0
        %8368 = vmatprep.subr.bf16.mxu0 0
        %8369 = vmatpush1.bf16.msra.mxu0 0
        %8370 = vmatprep.subr.bf16.mxu0 0
        %8371 = vmatpush1.bf16.msra.mxu0 0
        %8372 = vmatprep.subr.bf16.mxu0 0
        %8373 = vmatpush1.bf16.msra.mxu0 0
        %8374 = vmatprep.subr.bf16.mxu0 0
        %8375 = vmatpush1.bf16.msra.mxu0 0
        %8376 = vmatprep.subr.bf16.mxu0 0
        %8377 = vmatpush1.bf16.msra.mxu0 0
        %8378 = vmatprep.subr.bf16.mxu0 0
        %8379 = vmatpush1.bf16.msra.mxu0 0
        %8380 = vmatprep.subr.bf16.mxu0 0
        %8381 = vmatpush1.bf16.msra.mxu0 0
        %8382 = vmatprep.subr.bf16.mxu0 0
        %8383 = vmatpush1.bf16.msra.mxu0 0
        %8384 = vmatprep.mubr.bf16.mxu0 0
        %8385 = vmatmul.mubr.bf16.gmra.mrb[0].mxu0 %v8347
        %v8386 = vpop.f32.mrb[0].mxu0
        %v8387 = vadd.f32 %v8308, %v8386
        %v8388 = vpop.f32.mrb[0].mxu0
        %v8389 = vadd.f32 %v8310, %v8388
        %v8390 = vpop.f32.mrb[0].mxu0
        %v8391 = vadd.f32 %v8312, %v8390
        %v8392 = vpop.f32.mrb[0].mxu0
        %v8393 = vadd.f32 %v8314, %v8392
        %8394 = vmatprep.mubr.bf16.mxu0 0
        %8395 = vmatmul.mubr.bf16.gmra.mrb[0].mxu0 %v8350
        %v8396 = vpop.f32.mrb[0].mxu0
        %v8397 = vadd.f32 %v8318, %v8396
        %v8398 = vpop.f32.mrb[0].mxu0
        %v8399 = vadd.f32 %v8320, %v8398
        %v8400 = vpop.f32.mrb[0].mxu0
        %v8401 = vadd.f32 %v8322, %v8400
        %v8402 = vpop.f32.mrb[0].mxu0
        %v8403 = vadd.f32 %v8324, %v8402
        %8404 = vdwg.mxu0
        %8405 = vrot.lane.b32.xlu0 %v7893, 64
        %v8406 = vpop.permute.xlu0 %8405
        %8407 = vrot.lane.b32.xlu0 %v7894, 64
        %v8408 = vpop.permute.xlu0 %8407
        %8409 = vrot.lane.b32.xlu0 %v7895, 64
        %v8410 = vpop.permute.xlu0 %8409
        %8411 = vrot.lane.b32.xlu0 %v7896, 64
        %v8412 = vpop.permute.xlu0 %8411
        %v8414 = vsel %vm3393, %v8406, 0
        %v8417 = vsel %vm3393, %v8408, 0
        %v8420 = vsel %vm3393, %v8410, 0
        %v8423 = vsel %vm3393, %v8412, 0
        %8425 = vmatprep.subr.bf16.mxu0 0
        %8426 = vmatpush1.bf16.xpose.msra.mxu0 %v8420
        %8427 = vmatprep.subr.bf16.mxu0 0
        %8428 = vmatpush1.bf16.xpose.msra.mxu0 %v8423
        %8429 = vmatprep.subr.bf16.mxu0 0
        %8430 = vmatpush1.bf16.xpose.msra.mxu0 0
        %8431 = vmatprep.subr.bf16.mxu0 0
        %8432 = vmatpush1.bf16.xpose.msra.mxu0 0
        %8433 = vmatprep.subr.bf16.mxu0 0
        %8434 = vmatpush1.bf16.xpose.msra.mxu0 0
        %8435 = vmatprep.subr.bf16.mxu0 0
        %8436 = vmatpush1.bf16.xpose.msra.mxu0 0
        %8437 = vmatprep.subr.bf16.mxu0 0
        %8438 = vmatpush1.bf16.xpose.msra.mxu0 0
        %8439 = vmatprep.subr.bf16.mxu0 0
        %8440 = vmatpush1.bf16.xpose.msra.mxu0 0
        %8441 = vmatprep.subr.bf16.mxu0 0
        %8442 = vmatpush1.bf16.xpose.msra.mxu0 0
        %8443 = vmatprep.subr.bf16.mxu0 0
        %8444 = vmatpush1.bf16.xpose.msra.mxu0 0
        %8445 = vmatprep.subr.bf16.mxu0 0
        %8446 = vmatpush1.bf16.xpose.msra.mxu0 0
        %8447 = vmatprep.subr.bf16.mxu0 0
        %8448 = vmatpush1.bf16.xpose.msra.mxu0 0
        %8449 = vmatprep.subr.bf16.mxu0 0
        %8450 = vmatpush1.bf16.xpose.msra.mxu0 0
        %8451 = vmatprep.subr.bf16.mxu0 0
        %8452 = vmatpush1.bf16.xpose.msra.mxu0 0
        %8453 = vmatprep.subr.bf16.mxu0 0
        %8454 = vmatpush1.bf16.xpose.msra.mxu0 0
        %8455 = vmatprep.subr.bf16.mxu0 0
        %8456 = vmatpush1.bf16.xpose.msra.mxu0 0
        %8457 = vmatprep.mubr.bf16.mxu0 0
        %8458 = vmatmul.mubr.bf16.gmra.mrb[0].mxu0 %v8414
        %v8459 = vpop.f32.mrb[0].mxu0
        %v8460 = vadd.f32 %v7856, %v8459
        %v8461 = vpop.f32.mrb[0].mxu0
        %v8462 = vpop.f32.mrb[0].mxu0
        %v8463 = vadd.f32 %v7856, %v8462
        %v8464 = vpop.f32.mrb[0].mxu0
        %8465 = vmatprep.mubr.bf16.mxu0 0
        %8466 = vmatmul.mubr.bf16.gmra.mrb[0].mxu0 %v8417
        %v8467 = vpop.f32.mrb[0].mxu0
        %v8468 = vadd.f32 %v7856, %v8467
        %v8469 = vpop.f32.mrb[0].mxu0
        %v8470 = vpop.f32.mrb[0].mxu0
        %v8471 = vadd.f32 %v7856, %v8470
        %v8472 = vpop.f32.mrb[0].mxu0
        %8473 = vdwg.mxu0
        %v8474 = vsel %vm3393, %v8460, -inf
        %8475 = vmax.xlane.f32.xlu0 %v8474
        %v8476 = vpop.xlane.xlu0 %8475
        %v8477 = vsel %vm3393, %v8463, -inf
        %8478 = vmax.xlane.f32.xlu0 %v8477
        %v8479 = vpop.xlane.xlu0 %8478
        %v8480 = vsel %vm3393, %v8468, -inf
        %8481 = vmax.xlane.f32.xlu0 %v8480
        %v8482 = vpop.xlane.xlu0 %8481
        %v8483 = vsel %vm3393, %v8471, -inf
        %8484 = vmax.xlane.f32.xlu0 %v8483
        %v8485 = vpop.xlane.xlu0 %8484
        %v8486 = vsub.f32 %v8460, %v8476
        %v8487 = vsub.f32 %v8463, %v8479
        %v8488 = vsub.f32 %v8468, %v8482
        %v8489 = vsub.f32 %v8471, %v8485
        %v8490 = vmul.f32 %v8486, 1.442695
        %v8491 = vpow.pop %v8490
        %v8492 = vmul.f32 %v8487, 1.442695
        %v8493 = vpow.pop %v8492
        %v8494 = vmul.f32 %v8488, 1.442695
        %v8495 = vpow.pop %v8494
        %v8496 = vmul.f32 %v8489, 1.442695
        %v8497 = vpow.pop %v8496
        %v8498 = vsel %vm3393, %v8491, 0.0
        %8499 = vadd.xlane.f32.xlu0 %v8498
        %v8500 = vpop.xlane.xlu0 %8499
        %v8501 = vsel %vm3393, %v8493, 0.0
        %8502 = vadd.xlane.f32.xlu0 %v8501
        %v8503 = vpop.xlane.xlu0 %8502
        %v8504 = vsel %vm3393, %v8495, 0.0
        %8505 = vadd.xlane.f32.xlu0 %v8504
        %v8506 = vpop.xlane.xlu0 %8505
        %v8507 = vsel %vm3393, %v8497, 0.0
        %8508 = vadd.xlane.f32.xlu0 %v8507
        %v8509 = vpop.xlane.xlu0 %8508
        %v8510 = vrcp.pop %v8500
        %v8511 = vrcp.pop %v8503
        %v8512 = vrcp.pop %v8506
        %v8513 = vrcp.pop %v8509
        %v8514 = vmul.f32 %v8491, %v8510
        %v8515 = vmul.f32 %v8493, %v8511
        %v8516 = vmul.f32 %v8495, %v8512
        %v8517 = vmul.f32 %v8497, %v8513
        %v8518 = vpack.c.bf16 %v8515, %v8514
        %v8519 = vpack.c.bf16 %v8517, %v8516
        %8520 = vrot.lane.b32.xlu0 %v7897, 64
        %v8521 = vpop.permute.xlu0 %8520
        %8522 = vrot.lane.b32.xlu0 %v7898, 64
        %v8523 = vpop.permute.xlu0 %8522
        %v8527 = vsel %vm3393, %v8518, 0
        %v8530 = vsel %vm3393, %v8519, 0
        %8532 = vmatprep.subr.bf16.mxu0 0
        %8533 = vmatpush1.bf16.msra.mxu0 %v8521
        %8534 = vmatprep.subr.bf16.mxu0 0
        %8535 = vmatpush1.bf16.msra.mxu0 %v8523
        %8536 = vmatprep.subr.bf16.mxu0 0
        %8537 = vmatpush1.bf16.msra.mxu0 0
        %8538 = vmatprep.subr.bf16.mxu0 0
        %8539 = vmatpush1.bf16.msra.mxu0 0
        %8540 = vmatprep.subr.bf16.mxu0 0
        %8541 = vmatpush1.bf16.msra.mxu0 0
        %8542 = vmatprep.subr.bf16.mxu0 0
        %8543 = vmatpush1.bf16.msra.mxu0 0
        %8544 = vmatprep.subr.bf16.mxu0 0
        %8545 = vmatpush1.bf16.msra.mxu0 0
        %8546 = vmatprep.subr.bf16.mxu0 0
        %8547 = vmatpush1.bf16.msra.mxu0 0
        %8548 = vmatprep.subr.bf16.mxu0 0
        %8549 = vmatpush1.bf16.msra.mxu0 0
        %8550 = vmatprep.subr.bf16.mxu0 0
        %8551 = vmatpush1.bf16.msra.mxu0 0
        %8552 = vmatprep.subr.bf16.mxu0 0
        %8553 = vmatpush1.bf16.msra.mxu0 0
        %8554 = vmatprep.subr.bf16.mxu0 0
        %8555 = vmatpush1.bf16.msra.mxu0 0
        %8556 = vmatprep.subr.bf16.mxu0 0
        %8557 = vmatpush1.bf16.msra.mxu0 0
        %8558 = vmatprep.subr.bf16.mxu0 0
        %8559 = vmatpush1.bf16.msra.mxu0 0
        %8560 = vmatprep.subr.bf16.mxu0 0
        %8561 = vmatpush1.bf16.msra.mxu0 0
        %8562 = vmatprep.subr.bf16.mxu0 0
        %8563 = vmatpush1.bf16.msra.mxu0 0
        %8564 = vmatprep.mubr.bf16.mxu0 0
        %8565 = vmatmul.mubr.bf16.gmra.mrb[0].mxu0 %v8527
        %v8566 = vpop.f32.mrb[0].mxu0
        %v8567 = vadd.f32 0.0, %v8566
        %v8568 = vpop.f32.mrb[0].mxu0
        %v8569 = vpop.f32.mrb[0].mxu0
        %v8570 = vadd.f32 0.0, %v8569
        %v8571 = vpop.f32.mrb[0].mxu0
        %8572 = vmatprep.mubr.bf16.mxu0 0
        %8573 = vmatmul.mubr.bf16.gmra.mrb[0].mxu0 %v8530
        %v8574 = vpop.f32.mrb[0].mxu0
        %v8575 = vadd.f32 0.0, %v8574
        %v8576 = vpop.f32.mrb[0].mxu0
        %v8577 = vpop.f32.mrb[0].mxu0
        %v8578 = vadd.f32 0.0, %v8577
        %v8579 = vpop.f32.mrb[0].mxu0
        %8580 = vdwg.mxu0
        %v8581 = vpack.c.bf16 %v8570, %v8567
        %v8582 = vpack.c.bf16 %v8578, %v8575
        %v8587 = vunpack.c.l.b16 %v7865
        %v8588 = vunpack.c.h.b16 %v7865
        %v8589 = vunpack.c.l.b16 %v7866
        %v8590 = vunpack.c.h.b16 %v7866
        %v8591 = vunpack.c.l.b16 %v7867
        %v8592 = vunpack.c.h.b16 %v7867
        %v8593 = vunpack.c.l.b16 %v7868
        %v8594 = vunpack.c.h.b16 %v7868
        %v8595 = vpack.c.b16 %v8589, %v8587
        %v8596 = vpack.c.b16 %v8590, %v8588
        %v8597 = vpack.c.b16 %v8593, %v8591
        %v8598 = vpack.c.b16 %v8594, %v8592
        %v8604 = vsel %vm3393, %v8581, 0
        %v8607 = vsel %vm3393, %v8582, 0
        %8609 = vmatprep.subr.bf16.mxu0 %v8596
        %8610 = vmatpush1.bf16.msra.mxu0 %v8595
        %8611 = vmatprep.subr.bf16.mxu0 %v8598
        %8612 = vmatpush1.bf16.msra.mxu0 %v8597
        %8613 = vmatprep.subr.bf16.mxu0 0
        %8614 = vmatpush1.bf16.msra.mxu0 0
        %8615 = vmatprep.subr.bf16.mxu0 0
        %8616 = vmatpush1.bf16.msra.mxu0 0
        %8617 = vmatprep.subr.bf16.mxu0 0
        %8618 = vmatpush1.bf16.msra.mxu0 0
        %8619 = vmatprep.subr.bf16.mxu0 0
        %8620 = vmatpush1.bf16.msra.mxu0 0
        %8621 = vmatprep.subr.bf16.mxu0 0
        %8622 = vmatpush1.bf16.msra.mxu0 0
        %8623 = vmatprep.subr.bf16.mxu0 0
        %8624 = vmatpush1.bf16.msra.mxu0 0
        %8625 = vmatprep.subr.bf16.mxu0 0
        %8626 = vmatpush1.bf16.msra.mxu0 0
        %8627 = vmatprep.subr.bf16.mxu0 0
        %8628 = vmatpush1.bf16.msra.mxu0 0
        %8629 = vmatprep.subr.bf16.mxu0 0
        %8630 = vmatpush1.bf16.msra.mxu0 0
        %8631 = vmatprep.subr.bf16.mxu0 0
        %8632 = vmatpush1.bf16.msra.mxu0 0
        %8633 = vmatprep.subr.bf16.mxu0 0
        %8634 = vmatpush1.bf16.msra.mxu0 0
        %8635 = vmatprep.subr.bf16.mxu0 0
        %8636 = vmatpush1.bf16.msra.mxu0 0
        %8637 = vmatprep.subr.bf16.mxu0 0
        %8638 = vmatpush1.bf16.msra.mxu0 0
        %8639 = vmatprep.subr.bf16.mxu0 0
        %8640 = vmatpush1.bf16.msra.mxu0 0
        %8641 = vmatprep.mubr.bf16.mxu0 0
        %8642 = vmatmul.mubr.bf16.gmra.mrb[0].mxu0 %v8604
        %v8643 = vpop.f32.mrb[0].mxu0
        %v8644 = vadd.f32 0.0, %v8643
        %v8645 = vpop.f32.mrb[0].mxu0
        %v8646 = vadd.f32 0.0, %v8645
        %v8647 = vpop.f32.mrb[0].mxu0
        %v8648 = vadd.f32 0.0, %v8647
        %v8649 = vpop.f32.mrb[0].mxu0
        %v8650 = vadd.f32 0.0, %v8649
        %8651 = vmatprep.mubr.bf16.mxu0 0
        %8652 = vmatmul.mubr.bf16.gmra.mrb[0].mxu0 %v8607
        %v8653 = vpop.f32.mrb[0].mxu0
        %v8654 = vadd.f32 0.0, %v8653
        %v8655 = vpop.f32.mrb[0].mxu0
        %v8656 = vadd.f32 0.0, %v8655
        %v8657 = vpop.f32.mrb[0].mxu0
        %v8658 = vadd.f32 0.0, %v8657
        %v8659 = vpop.f32.mrb[0].mxu0
        %v8660 = vadd.f32 0.0, %v8659
        %8661 = vdwg.mxu0
        %v8662 = vadd.f32 %v8387, %v8644
        %v8663 = vadd.f32 %v8389, %v8646
        %v8664 = vadd.f32 %v8391, %v8648
        %v8665 = vadd.f32 %v8393, %v8650
        %v8666 = vadd.f32 %v8397, %v8654
        %v8667 = vadd.f32 %v8399, %v8656
        %v8668 = vadd.f32 %v8401, %v8658
        %v8669 = vadd.f32 %v8403, %v8660
        %8670 = vrot.lane.b32.xlu0 %v7893, 32
        %v8671 = vpop.permute.xlu0 %8670
        %8672 = vrot.lane.b32.xlu0 %v7894, 32
        %v8673 = vpop.permute.xlu0 %8672
        %8674 = vrot.lane.b32.xlu0 %v7895, 32
        %v8675 = vpop.permute.xlu0 %8674
        %8676 = vrot.lane.b32.xlu0 %v7896, 32
        %v8677 = vpop.permute.xlu0 %8676
        %v8679 = vsel %vm3393, %v8671, 0
        %v8682 = vsel %vm3393, %v8673, 0
        %v8685 = vsel %vm3393, %v8675, 0
        %v8688 = vsel %vm3393, %v8677, 0
        %8690 = vmatprep.subr.bf16.mxu0 0
        %8691 = vmatpush1.bf16.xpose.msra.mxu0 %v8685
        %8692 = vmatprep.subr.bf16.mxu0 0
        %8693 = vmatpush1.bf16.xpose.msra.mxu0 %v8688
        %8694 = vmatprep.subr.bf16.mxu0 0
        %8695 = vmatpush1.bf16.xpose.msra.mxu0 0
        %8696 = vmatprep.subr.bf16.mxu0 0
        %8697 = vmatpush1.bf16.xpose.msra.mxu0 0
        %8698 = vmatprep.subr.bf16.mxu0 0
        %8699 = vmatpush1.bf16.xpose.msra.mxu0 0
        %8700 = vmatprep.subr.bf16.mxu0 0
        %8701 = vmatpush1.bf16.xpose.msra.mxu0 0
        %8702 = vmatprep.subr.bf16.mxu0 0
        %8703 = vmatpush1.bf16.xpose.msra.mxu0 0
        %8704 = vmatprep.subr.bf16.mxu0 0
        %8705 = vmatpush1.bf16.xpose.msra.mxu0 0
        %8706 = vmatprep.subr.bf16.mxu0 0
        %8707 = vmatpush1.bf16.xpose.msra.mxu0 0
        %8708 = vmatprep.subr.bf16.mxu0 0
        %8709 = vmatpush1.bf16.xpose.msra.mxu0 0
        %8710 = vmatprep.subr.bf16.mxu0 0
        %8711 = vmatpush1.bf16.xpose.msra.mxu0 0
        %8712 = vmatprep.subr.bf16.mxu0 0
        %8713 = vmatpush1.bf16.xpose.msra.mxu0 0
        %8714 = vmatprep.subr.bf16.mxu0 0
        %8715 = vmatpush1.bf16.xpose.msra.mxu0 0
        %8716 = vmatprep.subr.bf16.mxu0 0
        %8717 = vmatpush1.bf16.xpose.msra.mxu0 0
        %8718 = vmatprep.subr.bf16.mxu0 0
        %8719 = vmatpush1.bf16.xpose.msra.mxu0 0
        %8720 = vmatprep.subr.bf16.mxu0 0
        %8721 = vmatpush1.bf16.xpose.msra.mxu0 0
        %8722 = vmatprep.mubr.bf16.mxu0 0
        %8723 = vmatmul.mubr.bf16.gmra.mrb[0].mxu0 %v8679
        %v8724 = vpop.f32.mrb[0].mxu0
        %v8725 = vadd.f32 %v7856, %v8724
        %v8726 = vpop.f32.mrb[0].mxu0
        %v8727 = vpop.f32.mrb[0].mxu0
        %v8728 = vadd.f32 %v7856, %v8727
        %v8729 = vpop.f32.mrb[0].mxu0
        %8730 = vmatprep.mubr.bf16.mxu0 0
        %8731 = vmatmul.mubr.bf16.gmra.mrb[0].mxu0 %v8682
        %v8732 = vpop.f32.mrb[0].mxu0
        %v8733 = vadd.f32 %v7856, %v8732
        %v8734 = vpop.f32.mrb[0].mxu0
        %v8735 = vpop.f32.mrb[0].mxu0
        %v8736 = vadd.f32 %v7856, %v8735
        %v8737 = vpop.f32.mrb[0].mxu0
        %8738 = vdwg.mxu0
        %v8739 = vsel %vm3393, %v8725, -inf
        %8740 = vmax.xlane.f32.xlu0 %v8739
        %v8741 = vpop.xlane.xlu0 %8740
        %v8742 = vsel %vm3393, %v8728, -inf
        %8743 = vmax.xlane.f32.xlu0 %v8742
        %v8744 = vpop.xlane.xlu0 %8743
        %v8745 = vsel %vm3393, %v8733, -inf
        %8746 = vmax.xlane.f32.xlu0 %v8745
        %v8747 = vpop.xlane.xlu0 %8746
        %v8748 = vsel %vm3393, %v8736, -inf
        %8749 = vmax.xlane.f32.xlu0 %v8748
        %v8750 = vpop.xlane.xlu0 %8749
        %v8751 = vsub.f32 %v8725, %v8741
        %v8752 = vsub.f32 %v8728, %v8744
        %v8753 = vsub.f32 %v8733, %v8747
        %v8754 = vsub.f32 %v8736, %v8750
        %v8755 = vmul.f32 %v8751, 1.442695
        %v8756 = vpow.pop %v8755
        %v8757 = vmul.f32 %v8752, 1.442695
        %v8758 = vpow.pop %v8757
        %v8759 = vmul.f32 %v8753, 1.442695
        %v8760 = vpow.pop %v8759
        %v8761 = vmul.f32 %v8754, 1.442695
        %v8762 = vpow.pop %v8761
        %v8763 = vsel %vm3393, %v8756, 0.0
        %8764 = vadd.xlane.f32.xlu0 %v8763
        %v8765 = vpop.xlane.xlu0 %8764
        %v8766 = vsel %vm3393, %v8758, 0.0
        %8767 = vadd.xlane.f32.xlu0 %v8766
        %v8768 = vpop.xlane.xlu0 %8767
        %v8769 = vsel %vm3393, %v8760, 0.0
        %8770 = vadd.xlane.f32.xlu0 %v8769
        %v8771 = vpop.xlane.xlu0 %8770
        %v8772 = vsel %vm3393, %v8762, 0.0
        %8773 = vadd.xlane.f32.xlu0 %v8772
        %v8774 = vpop.xlane.xlu0 %8773
        %v8775 = vrcp.pop %v8765
        %v8776 = vrcp.pop %v8768
        %v8777 = vrcp.pop %v8771
        %v8778 = vrcp.pop %v8774
        %v8779 = vmul.f32 %v8756, %v8775
        %v8780 = vmul.f32 %v8758, %v8776
        %v8781 = vmul.f32 %v8760, %v8777
        %v8782 = vmul.f32 %v8762, %v8778
        %v8783 = vpack.c.bf16 %v8780, %v8779
        %v8784 = vpack.c.bf16 %v8782, %v8781
        %8785 = vrot.lane.b32.xlu0 %v7897, 32
        %v8786 = vpop.permute.xlu0 %8785
        %8787 = vrot.lane.b32.xlu0 %v7898, 32
        %v8788 = vpop.permute.xlu0 %8787
        %v8792 = vsel %vm3393, %v8783, 0
        %v8795 = vsel %vm3393, %v8784, 0
        %8797 = vmatprep.subr.bf16.mxu0 0
        %8798 = vmatpush1.bf16.msra.mxu0 %v8786
        %8799 = vmatprep.subr.bf16.mxu0 0
        %8800 = vmatpush1.bf16.msra.mxu0 %v8788
        %8801 = vmatprep.subr.bf16.mxu0 0
        %8802 = vmatpush1.bf16.msra.mxu0 0
        %8803 = vmatprep.subr.bf16.mxu0 0
        %8804 = vmatpush1.bf16.msra.mxu0 0
        %8805 = vmatprep.subr.bf16.mxu0 0
        %8806 = vmatpush1.bf16.msra.mxu0 0
        %8807 = vmatprep.subr.bf16.mxu0 0
        %8808 = vmatpush1.bf16.msra.mxu0 0
        %8809 = vmatprep.subr.bf16.mxu0 0
        %8810 = vmatpush1.bf16.msra.mxu0 0
        %8811 = vmatprep.subr.bf16.mxu0 0
        %8812 = vmatpush1.bf16.msra.mxu0 0
        %8813 = vmatprep.subr.bf16.mxu0 0
        %8814 = vmatpush1.bf16.msra.mxu0 0
        %8815 = vmatprep.subr.bf16.mxu0 0
        %8816 = vmatpush1.bf16.msra.mxu0 0
        %8817 = vmatprep.subr.bf16.mxu0 0
        %8818 = vmatpush1.bf16.msra.mxu0 0
        %8819 = vmatprep.subr.bf16.mxu0 0
        %8820 = vmatpush1.bf16.msra.mxu0 0
        %8821 = vmatprep.subr.bf16.mxu0 0
        %8822 = vmatpush1.bf16.msra.mxu0 0
        %8823 = vmatprep.subr.bf16.mxu0 0
        %8824 = vmatpush1.bf16.msra.mxu0 0
        %8825 = vmatprep.subr.bf16.mxu0 0
        %8826 = vmatpush1.bf16.msra.mxu0 0
        %8827 = vmatprep.subr.bf16.mxu0 0
        %8828 = vmatpush1.bf16.msra.mxu0 0
        %8829 = vmatprep.mubr.bf16.mxu0 0
        %8830 = vmatmul.mubr.bf16.gmra.mrb[0].mxu0 %v8792
        %v8831 = vpop.f32.mrb[0].mxu0
        %v8832 = vadd.f32 0.0, %v8831
        %v8833 = vpop.f32.mrb[0].mxu0
        %v8834 = vpop.f32.mrb[0].mxu0
        %v8835 = vadd.f32 0.0, %v8834
        %v8836 = vpop.f32.mrb[0].mxu0
        %8837 = vmatprep.mubr.bf16.mxu0 0
        %8838 = vmatmul.mubr.bf16.gmra.mrb[0].mxu0 %v8795
        %v8839 = vpop.f32.mrb[0].mxu0
        %v8840 = vadd.f32 0.0, %v8839
        %v8841 = vpop.f32.mrb[0].mxu0
        %v8842 = vpop.f32.mrb[0].mxu0
        %v8843 = vadd.f32 0.0, %v8842
        %v8844 = vpop.f32.mrb[0].mxu0
        %8845 = vdwg.mxu0
        %v8846 = vpack.c.bf16 %v8835, %v8832
        %v8847 = vpack.c.bf16 %v8843, %v8840
        %v8852 = vunpack.c.l.b16 %v7869
        %v8853 = vunpack.c.h.b16 %v7869
        %v8854 = vunpack.c.l.b16 %v7870
        %v8855 = vunpack.c.h.b16 %v7870
        %v8856 = vunpack.c.l.b16 %v7871
        %v8857 = vunpack.c.h.b16 %v7871
        %v8858 = vunpack.c.l.b16 %v7872
        %v8859 = vunpack.c.h.b16 %v7872
        %v8860 = vpack.c.b16 %v8854, %v8852
        %v8861 = vpack.c.b16 %v8855, %v8853
        %v8862 = vpack.c.b16 %v8858, %v8856
        %v8863 = vpack.c.b16 %v8859, %v8857
        %v8869 = vsel %vm3393, %v8846, 0
        %v8872 = vsel %vm3393, %v8847, 0
        %8874 = vmatprep.subr.bf16.mxu0 %v8861
        %8875 = vmatpush1.bf16.msra.mxu0 %v8860
        %8876 = vmatprep.subr.bf16.mxu0 %v8863
        %8877 = vmatpush1.bf16.msra.mxu0 %v8862
        %8878 = vmatprep.subr.bf16.mxu0 0
        %8879 = vmatpush1.bf16.msra.mxu0 0
        %8880 = vmatprep.subr.bf16.mxu0 0
        %8881 = vmatpush1.bf16.msra.mxu0 0
        %8882 = vmatprep.subr.bf16.mxu0 0
        %8883 = vmatpush1.bf16.msra.mxu0 0
        %8884 = vmatprep.subr.bf16.mxu0 0
        %8885 = vmatpush1.bf16.msra.mxu0 0
        %8886 = vmatprep.subr.bf16.mxu0 0
        %8887 = vmatpush1.bf16.msra.mxu0 0
        %8888 = vmatprep.subr.bf16.mxu0 0
        %8889 = vmatpush1.bf16.msra.mxu0 0
        %8890 = vmatprep.subr.bf16.mxu0 0
        %8891 = vmatpush1.bf16.msra.mxu0 0
        %8892 = vmatprep.subr.bf16.mxu0 0
        %8893 = vmatpush1.bf16.msra.mxu0 0
        %8894 = vmatprep.subr.bf16.mxu0 0
        %8895 = vmatpush1.bf16.msra.mxu0 0
        %8896 = vmatprep.subr.bf16.mxu0 0
        %8897 = vmatpush1.bf16.msra.mxu0 0
        %8898 = vmatprep.subr.bf16.mxu0 0
        %8899 = vmatpush1.bf16.msra.mxu0 0
        %8900 = vmatprep.subr.bf16.mxu0 0
        %8901 = vmatpush1.bf16.msra.mxu0 0
        %8902 = vmatprep.subr.bf16.mxu0 0
        %8903 = vmatpush1.bf16.msra.mxu0 0
        %8904 = vmatprep.subr.bf16.mxu0 0
        %8905 = vmatpush1.bf16.msra.mxu0 0
        %8906 = vmatprep.mubr.bf16.mxu0 0
        %8907 = vmatmul.mubr.bf16.gmra.mrb[0].mxu0 %v8869
        %v8908 = vpop.f32.mrb[0].mxu0
        %v8909 = vadd.f32 0.0, %v8908
        %v8910 = vpop.f32.mrb[0].mxu0
        %v8911 = vadd.f32 0.0, %v8910
        %v8912 = vpop.f32.mrb[0].mxu0
        %v8913 = vadd.f32 0.0, %v8912
        %v8914 = vpop.f32.mrb[0].mxu0
        %v8915 = vadd.f32 0.0, %v8914
        %8916 = vmatprep.mubr.bf16.mxu0 0
        %8917 = vmatmul.mubr.bf16.gmra.mrb[0].mxu0 %v8872
        %v8918 = vpop.f32.mrb[0].mxu0
        %v8919 = vadd.f32 0.0, %v8918
        %v8920 = vpop.f32.mrb[0].mxu0
        %v8921 = vadd.f32 0.0, %v8920
        %v8922 = vpop.f32.mrb[0].mxu0
        %v8923 = vadd.f32 0.0, %v8922
        %v8924 = vpop.f32.mrb[0].mxu0
        %v8925 = vadd.f32 0.0, %v8924
        %8926 = vdwg.mxu0
        %v8927 = vadd.f32 %v8662, %v8909
        %v8928 = vadd.f32 %v8663, %v8911
        %v8929 = vadd.f32 %v8664, %v8913
        %v8930 = vadd.f32 %v8665, %v8915
        %v8931 = vadd.f32 %v8666, %v8919
        %v8932 = vadd.f32 %v8667, %v8921
        %v8933 = vadd.f32 %v8668, %v8923
        %v8934 = vadd.f32 %v8669, %v8925
        %v8935 = vmul.f32 %v7733, 0.17677669
        %v8936 = vmul.f32 %v7737, 0.17677669
        %v8937 = vmul.f32 %v7743, 0.17677669
        %v8938 = vmul.f32 %v7747, 0.17677669
        %v8939 = vpack.c.bf16 %v8936, %v8935
        %v8940 = vpack.c.bf16 %v8938, %v8937
        %v8941 = vpack.c.bf16 %v7790, %v7786
        %v8942 = vpack.c.bf16 %v7800, %v7796
        %v8943 = vpack.c.bf16 %v7843, %v7839
        %v8944 = vpack.c.bf16 %v7853, %v7849
        %v8946 = vsel %vm3393, %v8939, 0
        %v8949 = vsel %vm3393, %v8940, 0
        %v8952 = vsel %vm3393, %v8941, 0
        %v8955 = vsel %vm3393, %v8942, 0
        %8957 = vmatprep.subr.bf16.mxu0 0
        %8958 = vmatpush1.bf16.xpose.msra.mxu0 %v8952
        %8959 = vmatprep.subr.bf16.mxu0 0
        %8960 = vmatpush1.bf16.xpose.msra.mxu0 %v8955
        %8961 = vmatprep.subr.bf16.mxu0 0
        %8962 = vmatpush1.bf16.xpose.msra.mxu0 0
        %8963 = vmatprep.subr.bf16.mxu0 0
        %8964 = vmatpush1.bf16.xpose.msra.mxu0 0
        %8965 = vmatprep.subr.bf16.mxu0 0
        %8966 = vmatpush1.bf16.xpose.msra.mxu0 0
        %8967 = vmatprep.subr.bf16.mxu0 0
        %8968 = vmatpush1.bf16.xpose.msra.mxu0 0
        %8969 = vmatprep.subr.bf16.mxu0 0
        %8970 = vmatpush1.bf16.xpose.msra.mxu0 0
        %8971 = vmatprep.subr.bf16.mxu0 0
        %8972 = vmatpush1.bf16.xpose.msra.mxu0 0
        %8973 = vmatprep.subr.bf16.mxu0 0
        %8974 = vmatpush1.bf16.xpose.msra.mxu0 0
        %8975 = vmatprep.subr.bf16.mxu0 0
        %8976 = vmatpush1.bf16.xpose.msra.mxu0 0
        %8977 = vmatprep.subr.bf16.mxu0 0
        %8978 = vmatpush1.bf16.xpose.msra.mxu0 0
        %8979 = vmatprep.subr.bf16.mxu0 0
        %8980 = vmatpush1.bf16.xpose.msra.mxu0 0
        %8981 = vmatprep.subr.bf16.mxu0 0
        %8982 = vmatpush1.bf16.xpose.msra.mxu0 0
        %8983 = vmatprep.subr.bf16.mxu0 0
        %8984 = vmatpush1.bf16.xpose.msra.mxu0 0
        %8985 = vmatprep.subr.bf16.mxu0 0
        %8986 = vmatpush1.bf16.xpose.msra.mxu0 0
        %8987 = vmatprep.subr.bf16.mxu0 0
        %8988 = vmatpush1.bf16.xpose.msra.mxu0 0
        %8989 = vmatprep.mubr.bf16.mxu0 0
        %8990 = vmatmul.mubr.bf16.gmra.mrb[0].mxu0 %v8946
        %v8991 = vpop.f32.mrb[0].mxu0
        %v8992 = vadd.f32 %v7856, %v8991
        %v8993 = vpop.f32.mrb[0].mxu0
        %v8994 = vpop.f32.mrb[0].mxu0
        %v8995 = vadd.f32 %v7856, %v8994
        %v8996 = vpop.f32.mrb[0].mxu0
        %8997 = vmatprep.mubr.bf16.mxu0 0
        %8998 = vmatmul.mubr.bf16.gmra.mrb[0].mxu0 %v8949
        %v8999 = vpop.f32.mrb[0].mxu0
        %v9000 = vadd.f32 %v7856, %v8999
        %v9001 = vpop.f32.mrb[0].mxu0
        %v9002 = vpop.f32.mrb[0].mxu0
        %v9003 = vadd.f32 %v7856, %v9002
        %v9004 = vpop.f32.mrb[0].mxu0
        %9005 = vdwg.mxu0
        %v9006 = vsel %vm3393, %v8992, -inf
        %9007 = vmax.xlane.f32.xlu0 %v9006
        %v9008 = vpop.xlane.xlu0 %9007
        %v9009 = vsel %vm3393, %v8995, -inf
        %9010 = vmax.xlane.f32.xlu0 %v9009
        %v9011 = vpop.xlane.xlu0 %9010
        %v9012 = vsel %vm3393, %v9000, -inf
        %9013 = vmax.xlane.f32.xlu0 %v9012
        %v9014 = vpop.xlane.xlu0 %9013
        %v9015 = vsel %vm3393, %v9003, -inf
        %9016 = vmax.xlane.f32.xlu0 %v9015
        %v9017 = vpop.xlane.xlu0 %9016
        %v9018 = vsub.f32 %v8992, %v9008
        %v9019 = vsub.f32 %v8995, %v9011
        %v9020 = vsub.f32 %v9000, %v9014
        %v9021 = vsub.f32 %v9003, %v9017
        %v9022 = vmul.f32 %v9018, 1.442695
        %v9023 = vpow.pop %v9022
        %v9024 = vmul.f32 %v9019, 1.442695
        %v9025 = vpow.pop %v9024
        %v9026 = vmul.f32 %v9020, 1.442695
        %v9027 = vpow.pop %v9026
        %v9028 = vmul.f32 %v9021, 1.442695
        %v9029 = vpow.pop %v9028
        %v9030 = vsel %vm3393, %v9023, 0.0
        %9031 = vadd.xlane.f32.xlu0 %v9030
        %v9032 = vpop.xlane.xlu0 %9031
        %v9033 = vsel %vm3393, %v9025, 0.0
        %9034 = vadd.xlane.f32.xlu0 %v9033
        %v9035 = vpop.xlane.xlu0 %9034
        %v9036 = vsel %vm3393, %v9027, 0.0
        %9037 = vadd.xlane.f32.xlu0 %v9036
        %v9038 = vpop.xlane.xlu0 %9037
        %v9039 = vsel %vm3393, %v9029, 0.0
        %9040 = vadd.xlane.f32.xlu0 %v9039
        %v9041 = vpop.xlane.xlu0 %9040
        %v9042 = vrcp.pop %v9032
        %v9043 = vrcp.pop %v9035
        %v9044 = vrcp.pop %v9038
        %v9045 = vrcp.pop %v9041
        %v9046 = vmul.f32 %v9023, %v9042
        %v9047 = vmul.f32 %v9025, %v9043
        %v9048 = vmul.f32 %v9027, %v9044
        %v9049 = vmul.f32 %v9029, %v9045
        %v9050 = vpack.c.bf16 %v9047, %v9046
        %v9051 = vpack.c.bf16 %v9049, %v9048
        %v9053 = vsel %vm3393, %v9050, 0
        %v9056 = vsel %vm3393, %v9051, 0
        %9058 = vmatprep.subr.bf16.mxu0 0
        %9059 = vmatpush1.bf16.msra.mxu0 %v8943
        %9060 = vmatprep.subr.bf16.mxu0 0
        %9061 = vmatpush1.bf16.msra.mxu0 %v8944
        %9062 = vmatprep.subr.bf16.mxu0 0
        %9063 = vmatpush1.bf16.msra.mxu0 0
        %9064 = vmatprep.subr.bf16.mxu0 0
        %9065 = vmatpush1.bf16.msra.mxu0 0
        %9066 = vmatprep.subr.bf16.mxu0 0
        %9067 = vmatpush1.bf16.msra.mxu0 0
        %9068 = vmatprep.subr.bf16.mxu0 0
        %9069 = vmatpush1.bf16.msra.mxu0 0
        %9070 = vmatprep.subr.bf16.mxu0 0
        %9071 = vmatpush1.bf16.msra.mxu0 0
        %9072 = vmatprep.subr.bf16.mxu0 0
        %9073 = vmatpush1.bf16.msra.mxu0 0
        %9074 = vmatprep.subr.bf16.mxu0 0
        %9075 = vmatpush1.bf16.msra.mxu0 0
        %9076 = vmatprep.subr.bf16.mxu0 0
        %9077 = vmatpush1.bf16.msra.mxu0 0
        %9078 = vmatprep.subr.bf16.mxu0 0
        %9079 = vmatpush1.bf16.msra.mxu0 0
        %9080 = vmatprep.subr.bf16.mxu0 0
        %9081 = vmatpush1.bf16.msra.mxu0 0
        %9082 = vmatprep.subr.bf16.mxu0 0
        %9083 = vmatpush1.bf16.msra.mxu0 0
        %9084 = vmatprep.subr.bf16.mxu0 0
        %9085 = vmatpush1.bf16.msra.mxu0 0
        %9086 = vmatprep.subr.bf16.mxu0 0
        %9087 = vmatpush1.bf16.msra.mxu0 0
        %9088 = vmatprep.subr.bf16.mxu0 0
        %9089 = vmatpush1.bf16.msra.mxu0 0
        %9090 = vmatprep.mubr.bf16.mxu0 0
        %9091 = vmatmul.mubr.bf16.gmra.mrb[0].mxu0 %v9053
        %v9092 = vpop.f32.mrb[0].mxu0
        %v9093 = vadd.f32 0.0, %v9092
        %v9094 = vpop.f32.mrb[0].mxu0
        %v9095 = vpop.f32.mrb[0].mxu0
        %v9096 = vadd.f32 0.0, %v9095
        %v9097 = vpop.f32.mrb[0].mxu0
        %9098 = vmatprep.mubr.bf16.mxu0 0
        %9099 = vmatmul.mubr.bf16.gmra.mrb[0].mxu0 %v9056
        %v9100 = vpop.f32.mrb[0].mxu0
        %v9101 = vadd.f32 0.0, %v9100
        %v9102 = vpop.f32.mrb[0].mxu0
        %v9103 = vpop.f32.mrb[0].mxu0
        %v9104 = vadd.f32 0.0, %v9103
        %v9105 = vpop.f32.mrb[0].mxu0
        %9106 = vdwg.mxu0
        %v9107 = vpack.c.bf16 %v9096, %v9093
        %v9108 = vpack.c.bf16 %v9104, %v9101
        %v9113 = vunpack.c.l.b16 %v7873
        %v9114 = vunpack.c.h.b16 %v7873
        %v9115 = vunpack.c.l.b16 %v7874
        %v9116 = vunpack.c.h.b16 %v7874
        %v9117 = vunpack.c.l.b16 %v7875
        %v9118 = vunpack.c.h.b16 %v7875
        %v9119 = vunpack.c.l.b16 %v7876
        %v9120 = vunpack.c.h.b16 %v7876
        %v9121 = vpack.c.b16 %v9115, %v9113
        %v9122 = vpack.c.b16 %v9116, %v9114
        %v9123 = vpack.c.b16 %v9119, %v9117
        %v9124 = vpack.c.b16 %v9120, %v9118
        %v9130 = vsel %vm3393, %v9107, 0
        %v9133 = vsel %vm3393, %v9108, 0
        %9135 = vmatprep.subr.bf16.mxu0 %v9122
        %9136 = vmatpush1.bf16.msra.mxu0 %v9121
        %9137 = vmatprep.subr.bf16.mxu0 %v9124
        %9138 = vmatpush1.bf16.msra.mxu0 %v9123
        %9139 = vmatprep.subr.bf16.mxu0 0
        %9140 = vmatpush1.bf16.msra.mxu0 0
        %9141 = vmatprep.subr.bf16.mxu0 0
        %9142 = vmatpush1.bf16.msra.mxu0 0
        %9143 = vmatprep.subr.bf16.mxu0 0
        %9144 = vmatpush1.bf16.msra.mxu0 0
        %9145 = vmatprep.subr.bf16.mxu0 0
        %9146 = vmatpush1.bf16.msra.mxu0 0
        %9147 = vmatprep.subr.bf16.mxu0 0
        %9148 = vmatpush1.bf16.msra.mxu0 0
        %9149 = vmatprep.subr.bf16.mxu0 0
        %9150 = vmatpush1.bf16.msra.mxu0 0
        %9151 = vmatprep.subr.bf16.mxu0 0
        %9152 = vmatpush1.bf16.msra.mxu0 0
        %9153 = vmatprep.subr.bf16.mxu0 0
        %9154 = vmatpush1.bf16.msra.mxu0 0
        %9155 = vmatprep.subr.bf16.mxu0 0
        %9156 = vmatpush1.bf16.msra.mxu0 0
        %9157 = vmatprep.subr.bf16.mxu0 0
        %9158 = vmatpush1.bf16.msra.mxu0 0
        %9159 = vmatprep.subr.bf16.mxu0 0
        %9160 = vmatpush1.bf16.msra.mxu0 0
        %9161 = vmatprep.subr.bf16.mxu0 0
        %9162 = vmatpush1.bf16.msra.mxu0 0
        %9163 = vmatprep.subr.bf16.mxu0 0
        %9164 = vmatpush1.bf16.msra.mxu0 0
        %9165 = vmatprep.subr.bf16.mxu0 0
        %9166 = vmatpush1.bf16.msra.mxu0 0
        %9167 = vmatprep.mubr.bf16.mxu0 0
        %9168 = vmatmul.mubr.bf16.gmra.mrb[0].mxu0 %v9130
        %v9169 = vpop.f32.mrb[0].mxu0
        %v9170 = vadd.f32 0.0, %v9169
        %v9171 = vpop.f32.mrb[0].mxu0
        %v9172 = vadd.f32 0.0, %v9171
        %v9173 = vpop.f32.mrb[0].mxu0
        %v9174 = vadd.f32 0.0, %v9173
        %v9175 = vpop.f32.mrb[0].mxu0
        %v9176 = vadd.f32 0.0, %v9175
        %9177 = vmatprep.mubr.bf16.mxu0 0
        %9178 = vmatmul.mubr.bf16.gmra.mrb[0].mxu0 %v9133
        %v9179 = vpop.f32.mrb[0].mxu0
        %v9180 = vadd.f32 0.0, %v9179
        %v9181 = vpop.f32.mrb[0].mxu0
        %v9182 = vadd.f32 0.0, %v9181
        %v9183 = vpop.f32.mrb[0].mxu0
        %v9184 = vadd.f32 0.0, %v9183
        %v9185 = vpop.f32.mrb[0].mxu0
        %v9186 = vadd.f32 0.0, %v9185
        %9187 = vdwg.mxu0
        %v9188 = vadd.f32 %v8927, %v9170
        %v9189 = vadd.f32 %v8928, %v9172
        %v9190 = vadd.f32 %v8929, %v9174
        %v9191 = vadd.f32 %v8930, %v9176
        %v9192 = vadd.f32 %v8931, %v9180
        %v9193 = vadd.f32 %v8932, %v9182
        %v9194 = vadd.f32 %v8933, %v9184
        %v9195 = vadd.f32 %v8934, %v9186
        %9198 = vrot.lane.b32.xlu0 %v8939, 96
        %v9199 = vpop.permute.xlu0 %9198
        %9200 = vrot.lane.b32.xlu0 %v8940, 96
        %v9201 = vpop.permute.xlu0 %9200
        %9204 = vrot.lane.b32.xlu0 %v8941, 96
        %v9205 = vpop.permute.xlu0 %9204
        %9206 = vrot.lane.b32.xlu0 %v8942, 96
        %v9207 = vpop.permute.xlu0 %9206
        %v9209 = vsel %vm3393, %v9199, 0
        %v9212 = vsel %vm3393, %v9201, 0
        %v9215 = vsel %vm3393, %v9205, 0
        %v9218 = vsel %vm3393, %v9207, 0
        %9220 = vmatprep.subr.bf16.mxu0 0
        %9221 = vmatpush1.bf16.xpose.msra.mxu0 %v9215
        %9222 = vmatprep.subr.bf16.mxu0 0
        %9223 = vmatpush1.bf16.xpose.msra.mxu0 %v9218
        %9224 = vmatprep.subr.bf16.mxu0 0
        %9225 = vmatpush1.bf16.xpose.msra.mxu0 0
        %9226 = vmatprep.subr.bf16.mxu0 0
        %9227 = vmatpush1.bf16.xpose.msra.mxu0 0
        %9228 = vmatprep.subr.bf16.mxu0 0
        %9229 = vmatpush1.bf16.xpose.msra.mxu0 0
        %9230 = vmatprep.subr.bf16.mxu0 0
        %9231 = vmatpush1.bf16.xpose.msra.mxu0 0
        %9232 = vmatprep.subr.bf16.mxu0 0
        %9233 = vmatpush1.bf16.xpose.msra.mxu0 0
        %9234 = vmatprep.subr.bf16.mxu0 0
        %9235 = vmatpush1.bf16.xpose.msra.mxu0 0
        %9236 = vmatprep.subr.bf16.mxu0 0
        %9237 = vmatpush1.bf16.xpose.msra.mxu0 0
        %9238 = vmatprep.subr.bf16.mxu0 0
        %9239 = vmatpush1.bf16.xpose.msra.mxu0 0
        %9240 = vmatprep.subr.bf16.mxu0 0
        %9241 = vmatpush1.bf16.xpose.msra.mxu0 0
        %9242 = vmatprep.subr.bf16.mxu0 0
        %9243 = vmatpush1.bf16.xpose.msra.mxu0 0
        %9244 = vmatprep.subr.bf16.mxu0 0
        %9245 = vmatpush1.bf16.xpose.msra.mxu0 0
        %9246 = vmatprep.subr.bf16.mxu0 0
        %9247 = vmatpush1.bf16.xpose.msra.mxu0 0
        %9248 = vmatprep.subr.bf16.mxu0 0
        %9249 = vmatpush1.bf16.xpose.msra.mxu0 0
        %9250 = vmatprep.subr.bf16.mxu0 0
        %9251 = vmatpush1.bf16.xpose.msra.mxu0 0
        %9252 = vmatprep.mubr.bf16.mxu0 0
        %9253 = vmatmul.mubr.bf16.gmra.mrb[0].mxu0 %v9209
        %v9254 = vpop.f32.mrb[0].mxu0
        %v9255 = vadd.f32 %v7856, %v9254
        %v9256 = vpop.f32.mrb[0].mxu0
        %v9257 = vpop.f32.mrb[0].mxu0
        %v9258 = vadd.f32 %v7856, %v9257
        %v9259 = vpop.f32.mrb[0].mxu0
        %9260 = vmatprep.mubr.bf16.mxu0 0
        %9261 = vmatmul.mubr.bf16.gmra.mrb[0].mxu0 %v9212
        %v9262 = vpop.f32.mrb[0].mxu0
        %v9263 = vadd.f32 %v7856, %v9262
        %v9264 = vpop.f32.mrb[0].mxu0
        %v9265 = vpop.f32.mrb[0].mxu0
        %v9266 = vadd.f32 %v7856, %v9265
        %v9267 = vpop.f32.mrb[0].mxu0
        %9268 = vdwg.mxu0
        %v9269 = vsel %vm3393, %v9255, -inf
        %9270 = vmax.xlane.f32.xlu0 %v9269
        %v9271 = vpop.xlane.xlu0 %9270
        %v9272 = vsel %vm3393, %v9258, -inf
        %9273 = vmax.xlane.f32.xlu0 %v9272
        %v9274 = vpop.xlane.xlu0 %9273
        %v9275 = vsel %vm3393, %v9263, -inf
        %9276 = vmax.xlane.f32.xlu0 %v9275
        %v9277 = vpop.xlane.xlu0 %9276
        %v9278 = vsel %vm3393, %v9266, -inf
        %9279 = vmax.xlane.f32.xlu0 %v9278
        %v9280 = vpop.xlane.xlu0 %9279
        %v9281 = vsub.f32 %v9255, %v9271
        %v9282 = vsub.f32 %v9258, %v9274
        %v9283 = vsub.f32 %v9263, %v9277
        %v9284 = vsub.f32 %v9266, %v9280
        %v9285 = vmul.f32 %v9281, 1.442695
        %v9286 = vpow.pop %v9285
        %v9287 = vmul.f32 %v9282, 1.442695
        %v9288 = vpow.pop %v9287
        %v9289 = vmul.f32 %v9283, 1.442695
        %v9290 = vpow.pop %v9289
        %v9291 = vmul.f32 %v9284, 1.442695
        %v9292 = vpow.pop %v9291
        %v9293 = vsel %vm3393, %v9286, 0.0
        %9294 = vadd.xlane.f32.xlu0 %v9293
        %v9295 = vpop.xlane.xlu0 %9294
        %v9296 = vsel %vm3393, %v9288, 0.0
        %9297 = vadd.xlane.f32.xlu0 %v9296
        %v9298 = vpop.xlane.xlu0 %9297
        %v9299 = vsel %vm3393, %v9290, 0.0
        %9300 = vadd.xlane.f32.xlu0 %v9299
        %v9301 = vpop.xlane.xlu0 %9300
        %v9302 = vsel %vm3393, %v9292, 0.0
        %9303 = vadd.xlane.f32.xlu0 %v9302
        %v9304 = vpop.xlane.xlu0 %9303
        %v9305 = vrcp.pop %v9295
        %v9306 = vrcp.pop %v9298
        %v9307 = vrcp.pop %v9301
        %v9308 = vrcp.pop %v9304
        %v9309 = vmul.f32 %v9286, %v9305
        %v9310 = vmul.f32 %v9288, %v9306
        %v9311 = vmul.f32 %v9290, %v9307
        %v9312 = vmul.f32 %v9292, %v9308
        %v9313 = vpack.c.bf16 %v9310, %v9309
        %v9314 = vpack.c.bf16 %v9312, %v9311
        %9317 = vrot.lane.b32.xlu0 %v8943, 96
        %v9318 = vpop.permute.xlu0 %9317
        %9319 = vrot.lane.b32.xlu0 %v8944, 96
        %v9320 = vpop.permute.xlu0 %9319
        %v9324 = vsel %vm3393, %v9313, 0
        %v9327 = vsel %vm3393, %v9314, 0
        %9329 = vmatprep.subr.bf16.mxu0 0
        %9330 = vmatpush1.bf16.msra.mxu0 %v9318
        %9331 = vmatprep.subr.bf16.mxu0 0
        %9332 = vmatpush1.bf16.msra.mxu0 %v9320
        %9333 = vmatprep.subr.bf16.mxu0 0
        %9334 = vmatpush1.bf16.msra.mxu0 0
        %9335 = vmatprep.subr.bf16.mxu0 0
        %9336 = vmatpush1.bf16.msra.mxu0 0
        %9337 = vmatprep.subr.bf16.mxu0 0
        %9338 = vmatpush1.bf16.msra.mxu0 0
        %9339 = vmatprep.subr.bf16.mxu0 0
        %9340 = vmatpush1.bf16.msra.mxu0 0
        %9341 = vmatprep.subr.bf16.mxu0 0
        %9342 = vmatpush1.bf16.msra.mxu0 0
        %9343 = vmatprep.subr.bf16.mxu0 0
        %9344 = vmatpush1.bf16.msra.mxu0 0
        %9345 = vmatprep.subr.bf16.mxu0 0
        %9346 = vmatpush1.bf16.msra.mxu0 0
        %9347 = vmatprep.subr.bf16.mxu0 0
        %9348 = vmatpush1.bf16.msra.mxu0 0
        %9349 = vmatprep.subr.bf16.mxu0 0
        %9350 = vmatpush1.bf16.msra.mxu0 0
        %9351 = vmatprep.subr.bf16.mxu0 0
        %9352 = vmatpush1.bf16.msra.mxu0 0
        %9353 = vmatprep.subr.bf16.mxu0 0
        %9354 = vmatpush1.bf16.msra.mxu0 0
        %9355 = vmatprep.subr.bf16.mxu0 0
        %9356 = vmatpush1.bf16.msra.mxu0 0
        %9357 = vmatprep.subr.bf16.mxu0 0
        %9358 = vmatpush1.bf16.msra.mxu0 0
        %9359 = vmatprep.subr.bf16.mxu0 0
        %9360 = vmatpush1.bf16.msra.mxu0 0
        %9361 = vmatprep.mubr.bf16.mxu0 0
        %9362 = vmatmul.mubr.bf16.gmra.mrb[0].mxu0 %v9324
        %v9363 = vpop.f32.mrb[0].mxu0
        %v9364 = vadd.f32 0.0, %v9363
        %v9365 = vpop.f32.mrb[0].mxu0
        %v9366 = vpop.f32.mrb[0].mxu0
        %v9367 = vadd.f32 0.0, %v9366
        %v9368 = vpop.f32.mrb[0].mxu0
        %9369 = vmatprep.mubr.bf16.mxu0 0
        %9370 = vmatmul.mubr.bf16.gmra.mrb[0].mxu0 %v9327
        %v9371 = vpop.f32.mrb[0].mxu0
        %v9372 = vadd.f32 0.0, %v9371
        %v9373 = vpop.f32.mrb[0].mxu0
        %v9374 = vpop.f32.mrb[0].mxu0
        %v9375 = vadd.f32 0.0, %v9374
        %v9376 = vpop.f32.mrb[0].mxu0
        %9377 = vdwg.mxu0
        %v9378 = vpack.c.bf16 %v9367, %v9364
        %v9379 = vpack.c.bf16 %v9375, %v9372
        %v9384 = vunpack.c.l.b16 %v7877
        %v9385 = vunpack.c.h.b16 %v7877
        %v9386 = vunpack.c.l.b16 %v7878
        %v9387 = vunpack.c.h.b16 %v7878
        %v9388 = vunpack.c.l.b16 %v7879
        %v9389 = vunpack.c.h.b16 %v7879
        %v9390 = vunpack.c.l.b16 %v7880
        %v9391 = vunpack.c.h.b16 %v7880
        %v9392 = vpack.c.b16 %v9386, %v9384
        %v9393 = vpack.c.b16 %v9387, %v9385
        %v9394 = vpack.c.b16 %v9390, %v9388
        %v9395 = vpack.c.b16 %v9391, %v9389
        %v9401 = vsel %vm3393, %v9378, 0
        %v9404 = vsel %vm3393, %v9379, 0
        %9406 = vmatprep.subr.bf16.mxu0 %v9393
        %9407 = vmatpush1.bf16.msra.mxu0 %v9392
        %9408 = vmatprep.subr.bf16.mxu0 %v9395
        %9409 = vmatpush1.bf16.msra.mxu0 %v9394
        %9410 = vmatprep.subr.bf16.mxu0 0
        %9411 = vmatpush1.bf16.msra.mxu0 0
        %9412 = vmatprep.subr.bf16.mxu0 0
        %9413 = vmatpush1.bf16.msra.mxu0 0
        %9414 = vmatprep.subr.bf16.mxu0 0
        %9415 = vmatpush1.bf16.msra.mxu0 0
        %9416 = vmatprep.subr.bf16.mxu0 0
        %9417 = vmatpush1.bf16.msra.mxu0 0
        %9418 = vmatprep.subr.bf16.mxu0 0
        %9419 = vmatpush1.bf16.msra.mxu0 0
        %9420 = vmatprep.subr.bf16.mxu0 0
        %9421 = vmatpush1.bf16.msra.mxu0 0
        %9422 = vmatprep.subr.bf16.mxu0 0
        %9423 = vmatpush1.bf16.msra.mxu0 0
        %9424 = vmatprep.subr.bf16.mxu0 0
        %9425 = vmatpush1.bf16.msra.mxu0 0
        %9426 = vmatprep.subr.bf16.mxu0 0
        %9427 = vmatpush1.bf16.msra.mxu0 0
        %9428 = vmatprep.subr.bf16.mxu0 0
        %9429 = vmatpush1.bf16.msra.mxu0 0
        %9430 = vmatprep.subr.bf16.mxu0 0
        %9431 = vmatpush1.bf16.msra.mxu0 0
        %9432 = vmatprep.subr.bf16.mxu0 0
        %9433 = vmatpush1.bf16.msra.mxu0 0
        %9434 = vmatprep.subr.bf16.mxu0 0
        %9435 = vmatpush1.bf16.msra.mxu0 0
        %9436 = vmatprep.subr.bf16.mxu0 0
        %9437 = vmatpush1.bf16.msra.mxu0 0
        %9438 = vmatprep.mubr.bf16.mxu0 0
        %9439 = vmatmul.mubr.bf16.gmra.mrb[0].mxu0 %v9401
        %v9440 = vpop.f32.mrb[0].mxu0
        %v9441 = vadd.f32 0.0, %v9440
        %v9442 = vpop.f32.mrb[0].mxu0
        %v9443 = vadd.f32 0.0, %v9442
        %v9444 = vpop.f32.mrb[0].mxu0
        %v9445 = vadd.f32 0.0, %v9444
        %v9446 = vpop.f32.mrb[0].mxu0
        %v9447 = vadd.f32 0.0, %v9446
        %9448 = vmatprep.mubr.bf16.mxu0 0
        %9449 = vmatmul.mubr.bf16.gmra.mrb[0].mxu0 %v9404
        %v9450 = vpop.f32.mrb[0].mxu0
        %v9451 = vadd.f32 0.0, %v9450
        %v9452 = vpop.f32.mrb[0].mxu0
        %v9453 = vadd.f32 0.0, %v9452
        %v9454 = vpop.f32.mrb[0].mxu0
        %v9455 = vadd.f32 0.0, %v9454
        %v9456 = vpop.f32.mrb[0].mxu0
        %v9457 = vadd.f32 0.0, %v9456
        %9458 = vdwg.mxu0
        %v9459 = vadd.f32 %v9188, %v9441
        %v9460 = vadd.f32 %v9189, %v9443
        %v9461 = vadd.f32 %v9190, %v9445
        %v9462 = vadd.f32 %v9191, %v9447
        %v9463 = vadd.f32 %v9192, %v9451
        %v9464 = vadd.f32 %v9193, %v9453
        %v9465 = vadd.f32 %v9194, %v9455
        %v9466 = vadd.f32 %v9195, %v9457
        %9467 = vrot.lane.b32.xlu0 %v8939, 64
        %v9468 = vpop.permute.xlu0 %9467
        %9469 = vrot.lane.b32.xlu0 %v8940, 64
        %v9470 = vpop.permute.xlu0 %9469
        %9471 = vrot.lane.b32.xlu0 %v8941, 64
        %v9472 = vpop.permute.xlu0 %9471
        %9473 = vrot.lane.b32.xlu0 %v8942, 64
        %v9474 = vpop.permute.xlu0 %9473
        %v9476 = vsel %vm3393, %v9468, 0
        %v9479 = vsel %vm3393, %v9470, 0
        %v9482 = vsel %vm3393, %v9472, 0
        %v9485 = vsel %vm3393, %v9474, 0
        %9487 = vmatprep.subr.bf16.mxu0 0
        %9488 = vmatpush1.bf16.xpose.msra.mxu0 %v9482
        %9489 = vmatprep.subr.bf16.mxu0 0
        %9490 = vmatpush1.bf16.xpose.msra.mxu0 %v9485
        %9491 = vmatprep.subr.bf16.mxu0 0
        %9492 = vmatpush1.bf16.xpose.msra.mxu0 0
        %9493 = vmatprep.subr.bf16.mxu0 0
        %9494 = vmatpush1.bf16.xpose.msra.mxu0 0
        %9495 = vmatprep.subr.bf16.mxu0 0
        %9496 = vmatpush1.bf16.xpose.msra.mxu0 0
        %9497 = vmatprep.subr.bf16.mxu0 0
        %9498 = vmatpush1.bf16.xpose.msra.mxu0 0
        %9499 = vmatprep.subr.bf16.mxu0 0
        %9500 = vmatpush1.bf16.xpose.msra.mxu0 0
        %9501 = vmatprep.subr.bf16.mxu0 0
        %9502 = vmatpush1.bf16.xpose.msra.mxu0 0
        %9503 = vmatprep.subr.bf16.mxu0 0
        %9504 = vmatpush1.bf16.xpose.msra.mxu0 0
        %9505 = vmatprep.subr.bf16.mxu0 0
        %9506 = vmatpush1.bf16.xpose.msra.mxu0 0
        %9507 = vmatprep.subr.bf16.mxu0 0
        %9508 = vmatpush1.bf16.xpose.msra.mxu0 0
        %9509 = vmatprep.subr.bf16.mxu0 0
        %9510 = vmatpush1.bf16.xpose.msra.mxu0 0
        %9511 = vmatprep.subr.bf16.mxu0 0
        %9512 = vmatpush1.bf16.xpose.msra.mxu0 0
        %9513 = vmatprep.subr.bf16.mxu0 0
        %9514 = vmatpush1.bf16.xpose.msra.mxu0 0
        %9515 = vmatprep.subr.bf16.mxu0 0
        %9516 = vmatpush1.bf16.xpose.msra.mxu0 0
        %9517 = vmatprep.subr.bf16.mxu0 0
        %9518 = vmatpush1.bf16.xpose.msra.mxu0 0
        %9519 = vmatprep.mubr.bf16.mxu0 0
        %9520 = vmatmul.mubr.bf16.gmra.mrb[0].mxu0 %v9476
        %v9521 = vpop.f32.mrb[0].mxu0
        %v9522 = vadd.f32 %v7856, %v9521
        %v9523 = vpop.f32.mrb[0].mxu0
        %v9524 = vpop.f32.mrb[0].mxu0
        %v9525 = vadd.f32 %v7856, %v9524
        %v9526 = vpop.f32.mrb[0].mxu0
        %9527 = vmatprep.mubr.bf16.mxu0 0
        %9528 = vmatmul.mubr.bf16.gmra.mrb[0].mxu0 %v9479
        %v9529 = vpop.f32.mrb[0].mxu0
        %v9530 = vadd.f32 %v7856, %v9529
        %v9531 = vpop.f32.mrb[0].mxu0
        %v9532 = vpop.f32.mrb[0].mxu0
        %v9533 = vadd.f32 %v7856, %v9532
        %v9534 = vpop.f32.mrb[0].mxu0
        %9535 = vdwg.mxu0
        %v9536 = vsel %vm3393, %v9522, -inf
        %9537 = vmax.xlane.f32.xlu0 %v9536
        %v9538 = vpop.xlane.xlu0 %9537
        %v9539 = vsel %vm3393, %v9525, -inf
        %9540 = vmax.xlane.f32.xlu0 %v9539
        %v9541 = vpop.xlane.xlu0 %9540
        %v9542 = vsel %vm3393, %v9530, -inf
        %9543 = vmax.xlane.f32.xlu0 %v9542
        %v9544 = vpop.xlane.xlu0 %9543
        %v9545 = vsel %vm3393, %v9533, -inf
        %9546 = vmax.xlane.f32.xlu0 %v9545
        %v9547 = vpop.xlane.xlu0 %9546
        %v9548 = vsub.f32 %v9522, %v9538
        %v9549 = vsub.f32 %v9525, %v9541
        %v9550 = vsub.f32 %v9530, %v9544
        %v9551 = vsub.f32 %v9533, %v9547
        %v9552 = vmul.f32 %v9548, 1.442695
        %v9553 = vpow.pop %v9552
        %v9554 = vmul.f32 %v9549, 1.442695
        %v9555 = vpow.pop %v9554
        %v9556 = vmul.f32 %v9550, 1.442695
        %v9557 = vpow.pop %v9556
        %v9558 = vmul.f32 %v9551, 1.442695
        %v9559 = vpow.pop %v9558
        %v9560 = vsel %vm3393, %v9553, 0.0
        %9561 = vadd.xlane.f32.xlu0 %v9560
        %v9562 = vpop.xlane.xlu0 %9561
        %v9563 = vsel %vm3393, %v9555, 0.0
        %9564 = vadd.xlane.f32.xlu0 %v9563
        %v9565 = vpop.xlane.xlu0 %9564
        %v9566 = vsel %vm3393, %v9557, 0.0
        %9567 = vadd.xlane.f32.xlu0 %v9566
        %v9568 = vpop.xlane.xlu0 %9567
        %v9569 = vsel %vm3393, %v9559, 0.0
        %9570 = vadd.xlane.f32.xlu0 %v9569
        %v9571 = vpop.xlane.xlu0 %9570
        %v9572 = vrcp.pop %v9562
        %v9573 = vrcp.pop %v9565
        %v9574 = vrcp.pop %v9568
        %v9575 = vrcp.pop %v9571
        %v9576 = vmul.f32 %v9553, %v9572
        %v9577 = vmul.f32 %v9555, %v9573
        %v9578 = vmul.f32 %v9557, %v9574
        %v9579 = vmul.f32 %v9559, %v9575
        %v9580 = vpack.c.bf16 %v9577, %v9576
        %v9581 = vpack.c.bf16 %v9579, %v9578
        %9582 = vrot.lane.b32.xlu0 %v8943, 64
        %v9583 = vpop.permute.xlu0 %9582
        %9584 = vrot.lane.b32.xlu0 %v8944, 64
        %v9585 = vpop.permute.xlu0 %9584
        %v9589 = vsel %vm3393, %v9580, 0
        %v9592 = vsel %vm3393, %v9581, 0
        %9594 = vmatprep.subr.bf16.mxu0 0
        %9595 = vmatpush1.bf16.msra.mxu0 %v9583
        %9596 = vmatprep.subr.bf16.mxu0 0
        %9597 = vmatpush1.bf16.msra.mxu0 %v9585
        %9598 = vmatprep.subr.bf16.mxu0 0
        %9599 = vmatpush1.bf16.msra.mxu0 0
        %9600 = vmatprep.subr.bf16.mxu0 0
        %9601 = vmatpush1.bf16.msra.mxu0 0
        %9602 = vmatprep.subr.bf16.mxu0 0
        %9603 = vmatpush1.bf16.msra.mxu0 0
        %9604 = vmatprep.subr.bf16.mxu0 0
        %9605 = vmatpush1.bf16.msra.mxu0 0
        %9606 = vmatprep.subr.bf16.mxu0 0
        %9607 = vmatpush1.bf16.msra.mxu0 0
        %9608 = vmatprep.subr.bf16.mxu0 0
        %9609 = vmatpush1.bf16.msra.mxu0 0
        %9610 = vmatprep.subr.bf16.mxu0 0
        %9611 = vmatpush1.bf16.msra.mxu0 0
        %9612 = vmatprep.subr.bf16.mxu0 0
        %9613 = vmatpush1.bf16.msra.mxu0 0
        %9614 = vmatprep.subr.bf16.mxu0 0
        %9615 = vmatpush1.bf16.msra.mxu0 0
        %9616 = vmatprep.subr.bf16.mxu0 0
        %9617 = vmatpush1.bf16.msra.mxu0 0
        %9618 = vmatprep.subr.bf16.mxu0 0
        %9619 = vmatpush1.bf16.msra.mxu0 0
        %9620 = vmatprep.subr.bf16.mxu0 0
        %9621 = vmatpush1.bf16.msra.mxu0 0
        %9622 = vmatprep.subr.bf16.mxu0 0
        %9623 = vmatpush1.bf16.msra.mxu0 0
        %9624 = vmatprep.subr.bf16.mxu0 0
        %9625 = vmatpush1.bf16.msra.mxu0 0
        %9626 = vmatprep.mubr.bf16.mxu0 0
        %9627 = vmatmul.mubr.bf16.gmra.mrb[0].mxu0 %v9589
        %v9628 = vpop.f32.mrb[0].mxu0
        %v9629 = vadd.f32 0.0, %v9628
        %v9630 = vpop.f32.mrb[0].mxu0
        %v9631 = vpop.f32.mrb[0].mxu0
        %v9632 = vadd.f32 0.0, %v9631
        %v9633 = vpop.f32.mrb[0].mxu0
        %9634 = vmatprep.mubr.bf16.mxu0 0
        %9635 = vmatmul.mubr.bf16.gmra.mrb[0].mxu0 %v9592
        %v9636 = vpop.f32.mrb[0].mxu0
        %v9637 = vadd.f32 0.0, %v9636
        %v9638 = vpop.f32.mrb[0].mxu0
        %v9639 = vpop.f32.mrb[0].mxu0
        %v9640 = vadd.f32 0.0, %v9639
        %v9641 = vpop.f32.mrb[0].mxu0
        %9642 = vdwg.mxu0
        %v9643 = vpack.c.bf16 %v9632, %v9629
        %v9644 = vpack.c.bf16 %v9640, %v9637
        %v9649 = vunpack.c.l.b16 %v7881
        %v9650 = vunpack.c.h.b16 %v7881
        %v9651 = vunpack.c.l.b16 %v7882
        %v9652 = vunpack.c.h.b16 %v7882
        %v9653 = vunpack.c.l.b16 %v7883
        %v9654 = vunpack.c.h.b16 %v7883
        %v9655 = vunpack.c.l.b16 %v7884
        %v9656 = vunpack.c.h.b16 %v7884
        %v9657 = vpack.c.b16 %v9651, %v9649
        %v9658 = vpack.c.b16 %v9652, %v9650
        %v9659 = vpack.c.b16 %v9655, %v9653
        %v9660 = vpack.c.b16 %v9656, %v9654
        %v9666 = vsel %vm3393, %v9643, 0
        %v9669 = vsel %vm3393, %v9644, 0
        %9671 = vmatprep.subr.bf16.mxu0 %v9658
        %9672 = vmatpush1.bf16.msra.mxu0 %v9657
        %9673 = vmatprep.subr.bf16.mxu0 %v9660
        %9674 = vmatpush1.bf16.msra.mxu0 %v9659
        %9675 = vmatprep.subr.bf16.mxu0 0
        %9676 = vmatpush1.bf16.msra.mxu0 0
        %9677 = vmatprep.subr.bf16.mxu0 0
        %9678 = vmatpush1.bf16.msra.mxu0 0
        %9679 = vmatprep.subr.bf16.mxu0 0
        %9680 = vmatpush1.bf16.msra.mxu0 0
        %9681 = vmatprep.subr.bf16.mxu0 0
        %9682 = vmatpush1.bf16.msra.mxu0 0
        %9683 = vmatprep.subr.bf16.mxu0 0
        %9684 = vmatpush1.bf16.msra.mxu0 0
        %9685 = vmatprep.subr.bf16.mxu0 0
        %9686 = vmatpush1.bf16.msra.mxu0 0
        %9687 = vmatprep.subr.bf16.mxu0 0
        %9688 = vmatpush1.bf16.msra.mxu0 0
        %9689 = vmatprep.subr.bf16.mxu0 0
        %9690 = vmatpush1.bf16.msra.mxu0 0
        %9691 = vmatprep.subr.bf16.mxu0 0
        %9692 = vmatpush1.bf16.msra.mxu0 0
        %9693 = vmatprep.subr.bf16.mxu0 0
        %9694 = vmatpush1.bf16.msra.mxu0 0
        %9695 = vmatprep.subr.bf16.mxu0 0
        %9696 = vmatpush1.bf16.msra.mxu0 0
        %9697 = vmatprep.subr.bf16.mxu0 0
        %9698 = vmatpush1.bf16.msra.mxu0 0
        %9699 = vmatprep.subr.bf16.mxu0 0
        %9700 = vmatpush1.bf16.msra.mxu0 0
        %9701 = vmatprep.subr.bf16.mxu0 0
        %9702 = vmatpush1.bf16.msra.mxu0 0
        %9703 = vmatprep.mubr.bf16.mxu0 0
        %9704 = vmatmul.mubr.bf16.gmra.mrb[0].mxu0 %v9666
        %v9705 = vpop.f32.mrb[0].mxu0
        %v9706 = vadd.f32 0.0, %v9705
        %v9707 = vpop.f32.mrb[0].mxu0
        %v9708 = vadd.f32 0.0, %v9707
        %v9709 = vpop.f32.mrb[0].mxu0
        %v9710 = vadd.f32 0.0, %v9709
        %v9711 = vpop.f32.mrb[0].mxu0
        %v9712 = vadd.f32 0.0, %v9711
        %9713 = vmatprep.mubr.bf16.mxu0 0
        %9714 = vmatmul.mubr.bf16.gmra.mrb[0].mxu0 %v9669
        %v9715 = vpop.f32.mrb[0].mxu0
        %v9716 = vadd.f32 0.0, %v9715
        %v9717 = vpop.f32.mrb[0].mxu0
        %v9718 = vadd.f32 0.0, %v9717
        %v9719 = vpop.f32.mrb[0].mxu0
        %v9720 = vadd.f32 0.0, %v9719
        %v9721 = vpop.f32.mrb[0].mxu0
        %v9722 = vadd.f32 0.0, %v9721
        %9723 = vdwg.mxu0
        %v9724 = vadd.f32 %v9459, %v9706
        %v9725 = vadd.f32 %v9460, %v9708
        %v9726 = vadd.f32 %v9461, %v9710
        %v9727 = vadd.f32 %v9462, %v9712
        %v9728 = vadd.f32 %v9463, %v9716
        %v9729 = vadd.f32 %v9464, %v9718
        %v9730 = vadd.f32 %v9465, %v9720
        %v9731 = vadd.f32 %v9466, %v9722
        %9732 = vrot.lane.b32.xlu0 %v8939, 32
        %v9733 = vpop.permute.xlu0 %9732
        %9734 = vrot.lane.b32.xlu0 %v8940, 32
        %v9735 = vpop.permute.xlu0 %9734
        %9736 = vrot.lane.b32.xlu0 %v8941, 32
        %v9737 = vpop.permute.xlu0 %9736
        %9738 = vrot.lane.b32.xlu0 %v8942, 32
        %v9739 = vpop.permute.xlu0 %9738
        %v9741 = vsel %vm3393, %v9733, 0
        %v9744 = vsel %vm3393, %v9735, 0
        %v9747 = vsel %vm3393, %v9737, 0
        %v9750 = vsel %vm3393, %v9739, 0
        %9752 = vmatprep.subr.bf16.mxu0 0
        %9753 = vmatpush1.bf16.xpose.msra.mxu0 %v9747
        %9754 = vmatprep.subr.bf16.mxu0 0
        %9755 = vmatpush1.bf16.xpose.msra.mxu0 %v9750
        %9756 = vmatprep.subr.bf16.mxu0 0
        %9757 = vmatpush1.bf16.xpose.msra.mxu0 0
        %9758 = vmatprep.subr.bf16.mxu0 0
        %9759 = vmatpush1.bf16.xpose.msra.mxu0 0
        %9760 = vmatprep.subr.bf16.mxu0 0
        %9761 = vmatpush1.bf16.xpose.msra.mxu0 0
        %9762 = vmatprep.subr.bf16.mxu0 0
        %9763 = vmatpush1.bf16.xpose.msra.mxu0 0
        %9764 = vmatprep.subr.bf16.mxu0 0
        %9765 = vmatpush1.bf16.xpose.msra.mxu0 0
        %9766 = vmatprep.subr.bf16.mxu0 0
        %9767 = vmatpush1.bf16.xpose.msra.mxu0 0
        %9768 = vmatprep.subr.bf16.mxu0 0
        %9769 = vmatpush1.bf16.xpose.msra.mxu0 0
        %9770 = vmatprep.subr.bf16.mxu0 0
        %9771 = vmatpush1.bf16.xpose.msra.mxu0 0
        %9772 = vmatprep.subr.bf16.mxu0 0
        %9773 = vmatpush1.bf16.xpose.msra.mxu0 0
        %9774 = vmatprep.subr.bf16.mxu0 0
        %9775 = vmatpush1.bf16.xpose.msra.mxu0 0
        %9776 = vmatprep.subr.bf16.mxu0 0
        %9777 = vmatpush1.bf16.xpose.msra.mxu0 0
        %9778 = vmatprep.subr.bf16.mxu0 0
        %9779 = vmatpush1.bf16.xpose.msra.mxu0 0
        %9780 = vmatprep.subr.bf16.mxu0 0
        %9781 = vmatpush1.bf16.xpose.msra.mxu0 0
        %9782 = vmatprep.subr.bf16.mxu0 0
        %9783 = vmatpush1.bf16.xpose.msra.mxu0 0
        %9784 = vmatprep.mubr.bf16.mxu0 0
        %9785 = vmatmul.mubr.bf16.gmra.mrb[0].mxu0 %v9741
        %v9786 = vpop.f32.mrb[0].mxu0
        %v9787 = vadd.f32 %v7856, %v9786
        %v9788 = vpop.f32.mrb[0].mxu0
        %v9789 = vpop.f32.mrb[0].mxu0
        %v9790 = vadd.f32 %v7856, %v9789
        %v9791 = vpop.f32.mrb[0].mxu0
        %9792 = vmatprep.mubr.bf16.mxu0 0
        %9793 = vmatmul.mubr.bf16.gmra.mrb[0].mxu0 %v9744
        %v9794 = vpop.f32.mrb[0].mxu0
        %v9795 = vadd.f32 %v7856, %v9794
        %v9796 = vpop.f32.mrb[0].mxu0
        %v9797 = vpop.f32.mrb[0].mxu0
        %v9798 = vadd.f32 %v7856, %v9797
        %v9799 = vpop.f32.mrb[0].mxu0
        %9800 = vdwg.mxu0
        %v9801 = vsel %vm3393, %v9787, -inf
        %9802 = vmax.xlane.f32.xlu0 %v9801
        %v9803 = vpop.xlane.xlu0 %9802
        %v9804 = vsel %vm3393, %v9790, -inf
        %9805 = vmax.xlane.f32.xlu0 %v9804
        %v9806 = vpop.xlane.xlu0 %9805
        %v9807 = vsel %vm3393, %v9795, -inf
        %9808 = vmax.xlane.f32.xlu0 %v9807
        %v9809 = vpop.xlane.xlu0 %9808
        %v9810 = vsel %vm3393, %v9798, -inf
        %9811 = vmax.xlane.f32.xlu0 %v9810
        %v9812 = vpop.xlane.xlu0 %9811
        %v9813 = vsub.f32 %v9787, %v9803
        %v9814 = vsub.f32 %v9790, %v9806
        %v9815 = vsub.f32 %v9795, %v9809
        %v9816 = vsub.f32 %v9798, %v9812
        %v9817 = vmul.f32 %v9813, 1.442695
        %v9818 = vpow.pop %v9817
        %v9819 = vmul.f32 %v9814, 1.442695
        %v9820 = vpow.pop %v9819
        %v9821 = vmul.f32 %v9815, 1.442695
        %v9822 = vpow.pop %v9821
        %v9823 = vmul.f32 %v9816, 1.442695
        %v9824 = vpow.pop %v9823
        %v9825 = vsel %vm3393, %v9818, 0.0
        %9826 = vadd.xlane.f32.xlu0 %v9825
        %v9827 = vpop.xlane.xlu0 %9826
        %v9828 = vsel %vm3393, %v9820, 0.0
        %9829 = vadd.xlane.f32.xlu0 %v9828
        %v9830 = vpop.xlane.xlu0 %9829
        %v9831 = vsel %vm3393, %v9822, 0.0
        %9832 = vadd.xlane.f32.xlu0 %v9831
        %v9833 = vpop.xlane.xlu0 %9832
        %v9834 = vsel %vm3393, %v9824, 0.0
        %9835 = vadd.xlane.f32.xlu0 %v9834
        %v9836 = vpop.xlane.xlu0 %9835
        %v9837 = vrcp.pop %v9827
        %v9838 = vrcp.pop %v9830
        %v9839 = vrcp.pop %v9833
        %v9840 = vrcp.pop %v9836
        %v9841 = vmul.f32 %v9818, %v9837
        %v9842 = vmul.f32 %v9820, %v9838
        %v9843 = vmul.f32 %v9822, %v9839
        %v9844 = vmul.f32 %v9824, %v9840
        %v9845 = vpack.c.bf16 %v9842, %v9841
        %v9846 = vpack.c.bf16 %v9844, %v9843
        %9847 = vrot.lane.b32.xlu0 %v8943, 32
        %v9848 = vpop.permute.xlu0 %9847
        %9849 = vrot.lane.b32.xlu0 %v8944, 32
        %v9850 = vpop.permute.xlu0 %9849
        %v9854 = vsel %vm3393, %v9845, 0
        %v9857 = vsel %vm3393, %v9846, 0
        %9859 = vmatprep.subr.bf16.mxu0 0
        %9860 = vmatpush1.bf16.msra.mxu0 %v9848
        %9861 = vmatprep.subr.bf16.mxu0 0
        %9862 = vmatpush1.bf16.msra.mxu0 %v9850
        %9863 = vmatprep.subr.bf16.mxu0 0
        %9864 = vmatpush1.bf16.msra.mxu0 0
        %9865 = vmatprep.subr.bf16.mxu0 0
        %9866 = vmatpush1.bf16.msra.mxu0 0
        %9867 = vmatprep.subr.bf16.mxu0 0
        %9868 = vmatpush1.bf16.msra.mxu0 0
        %9869 = vmatprep.subr.bf16.mxu0 0
        %9870 = vmatpush1.bf16.msra.mxu0 0
        %9871 = vmatprep.subr.bf16.mxu0 0
        %9872 = vmatpush1.bf16.msra.mxu0 0
        %9873 = vmatprep.subr.bf16.mxu0 0
        %9874 = vmatpush1.bf16.msra.mxu0 0
        %9875 = vmatprep.subr.bf16.mxu0 0
        %9876 = vmatpush1.bf16.msra.mxu0 0
        %9877 = vmatprep.subr.bf16.mxu0 0
        %9878 = vmatpush1.bf16.msra.mxu0 0
        %9879 = vmatprep.subr.bf16.mxu0 0
        %9880 = vmatpush1.bf16.msra.mxu0 0
        %9881 = vmatprep.subr.bf16.mxu0 0
        %9882 = vmatpush1.bf16.msra.mxu0 0
        %9883 = vmatprep.subr.bf16.mxu0 0
        %9884 = vmatpush1.bf16.msra.mxu0 0
        %9885 = vmatprep.subr.bf16.mxu0 0
        %9886 = vmatpush1.bf16.msra.mxu0 0
        %9887 = vmatprep.subr.bf16.mxu0 0
        %9888 = vmatpush1.bf16.msra.mxu0 0
        %9889 = vmatprep.subr.bf16.mxu0 0
        %9890 = vmatpush1.bf16.msra.mxu0 0
        %9891 = vmatprep.mubr.bf16.mxu0 0
        %9892 = vmatmul.mubr.bf16.gmra.mrb[0].mxu0 %v9854
        %v9893 = vpop.f32.mrb[0].mxu0
        %v9894 = vadd.f32 0.0, %v9893
        %v9895 = vpop.f32.mrb[0].mxu0
        %v9896 = vpop.f32.mrb[0].mxu0
        %v9897 = vadd.f32 0.0, %v9896
        %v9898 = vpop.f32.mrb[0].mxu0
        %9899 = vmatprep.mubr.bf16.mxu0 0
        %9900 = vmatmul.mubr.bf16.gmra.mrb[0].mxu0 %v9857
        %v9901 = vpop.f32.mrb[0].mxu0
        %v9902 = vadd.f32 0.0, %v9901
        %v9903 = vpop.f32.mrb[0].mxu0
        %v9904 = vpop.f32.mrb[0].mxu0
        %v9905 = vadd.f32 0.0, %v9904
        %v9906 = vpop.f32.mrb[0].mxu0
        %9907 = vdwg.mxu0
        %v9908 = vpack.c.bf16 %v9897, %v9894
        %v9909 = vpack.c.bf16 %v9905, %v9902
        %v9914 = vunpack.c.l.b16 %v7885
        %v9915 = vunpack.c.h.b16 %v7885
        %v9916 = vunpack.c.l.b16 %v7886
        %v9917 = vunpack.c.h.b16 %v7886
        %v9918 = vunpack.c.l.b16 %v7887
        %v9919 = vunpack.c.h.b16 %v7887
        %v9920 = vunpack.c.l.b16 %v7888
        %v9921 = vunpack.c.h.b16 %v7888
        %v9922 = vpack.c.b16 %v9916, %v9914
        %v9923 = vpack.c.b16 %v9917, %v9915
        %v9924 = vpack.c.b16 %v9920, %v9918
        %v9925 = vpack.c.b16 %v9921, %v9919
        %v9931 = vsel %vm3393, %v9908, 0
        %v9934 = vsel %vm3393, %v9909, 0
        %9936 = vmatprep.subr.bf16.mxu0 %v9923
        %9937 = vmatpush1.bf16.msra.mxu0 %v9922
        %9938 = vmatprep.subr.bf16.mxu0 %v9925
        %9939 = vmatpush1.bf16.msra.mxu0 %v9924
        %9940 = vmatprep.subr.bf16.mxu0 0
        %9941 = vmatpush1.bf16.msra.mxu0 0
        %9942 = vmatprep.subr.bf16.mxu0 0
        %9943 = vmatpush1.bf16.msra.mxu0 0
        %9944 = vmatprep.subr.bf16.mxu0 0
        %9945 = vmatpush1.bf16.msra.mxu0 0
        %9946 = vmatprep.subr.bf16.mxu0 0
        %9947 = vmatpush1.bf16.msra.mxu0 0
        %9948 = vmatprep.subr.bf16.mxu0 0
        %9949 = vmatpush1.bf16.msra.mxu0 0
        %9950 = vmatprep.subr.bf16.mxu0 0
        %9951 = vmatpush1.bf16.msra.mxu0 0
        %9952 = vmatprep.subr.bf16.mxu0 0
        %9953 = vmatpush1.bf16.msra.mxu0 0
        %9954 = vmatprep.subr.bf16.mxu0 0
        %9955 = vmatpush1.bf16.msra.mxu0 0
        %9956 = vmatprep.subr.bf16.mxu0 0
        %9957 = vmatpush1.bf16.msra.mxu0 0
        %9958 = vmatprep.subr.bf16.mxu0 0
        %9959 = vmatpush1.bf16.msra.mxu0 0
        %9960 = vmatprep.subr.bf16.mxu0 0
        %9961 = vmatpush1.bf16.msra.mxu0 0
        %9962 = vmatprep.subr.bf16.mxu0 0
        %9963 = vmatpush1.bf16.msra.mxu0 0
        %9964 = vmatprep.subr.bf16.mxu0 0
        %9965 = vmatpush1.bf16.msra.mxu0 0
        %9966 = vmatprep.subr.bf16.mxu0 0
        %9967 = vmatpush1.bf16.msra.mxu0 0
        %9968 = vmatprep.mubr.bf16.mxu0 0
        %9969 = vmatmul.mubr.bf16.gmra.mrb[0].mxu0 %v9931
        %v9970 = vpop.f32.mrb[0].mxu0
        %v9971 = vadd.f32 0.0, %v9970
        %v9972 = vpop.f32.mrb[0].mxu0
        %v9973 = vadd.f32 0.0, %v9972
        %v9974 = vpop.f32.mrb[0].mxu0
        %v9975 = vadd.f32 0.0, %v9974
        %v9976 = vpop.f32.mrb[0].mxu0
        %v9977 = vadd.f32 0.0, %v9976
        %9978 = vmatprep.mubr.bf16.mxu0 0
        %9979 = vmatmul.mubr.bf16.gmra.mrb[0].mxu0 %v9934
        %v9980 = vpop.f32.mrb[0].mxu0
        %v9981 = vadd.f32 0.0, %v9980
        %v9982 = vpop.f32.mrb[0].mxu0
        %v9983 = vadd.f32 0.0, %v9982
        %v9984 = vpop.f32.mrb[0].mxu0
        %v9985 = vadd.f32 0.0, %v9984
        %v9986 = vpop.f32.mrb[0].mxu0
        %v9987 = vadd.f32 0.0, %v9986
        %9988 = vdwg.mxu0
        %v9989 = vadd.f32 %v9724, %v9971
        %v9990 = vadd.f32 %v9725, %v9973
        %v9991 = vadd.f32 %v9726, %v9975
        %v9992 = vadd.f32 %v9727, %v9977
        %v9993 = vadd.f32 %v9728, %v9981
        %v9994 = vadd.f32 %v9729, %v9983
        %v9995 = vadd.f32 %v9730, %v9985
        %v9996 = vadd.f32 %v9731, %v9987
        %v9997 = vadd.f32 %v7066, %v9989
        %v9998 = vadd.f32 %v7068, %v9990
        %v9999 = vadd.f32 %v7070, %v9991
        %v10000 = vadd.f32 %v7072, %v9992
        %v10001 = vadd.f32 %v7076, %v9993
        %v10002 = vadd.f32 %v7078, %v9994
        %v10003 = vadd.f32 %v7080, %v9995
        %v10004 = vadd.f32 %v7082, %v9996
        %v10005 = vld [vmem:[%s51] sm:$0x3]
        %v10007 = vlaneseq
        %v10008 = vshrl.u32 %v10007, 7
        %v10009 = vsub.s32 0, %v10008
        %v10010 = vrot.slane %v10005, %v10009
        %v10011 = vlaneseq
        %v10012 = vshrl.u32 %v10011, 7
        %v10013 = vsub.s32 1, %v10012
        %v10014 = vrot.slane %v10005, %v10013
        %v10017 = vadd.f32 %v9997, %v10010
        %v10018 = vadd.f32 %v9998, %v10014
        %v10019 = vadd.f32 %v9999, %v10010
        %v10020 = vadd.f32 %v10000, %v10014
        %v10021 = vadd.f32 %v10001, %v10010
        %v10022 = vadd.f32 %v10002, %v10014
        %v10023 = vadd.f32 %v10003, %v10010
        %v10024 = vadd.f32 %v10004, %v10014
        %v10025 = vld [vmem:[%s61] sm:$0x3]
        %v10026 = vld [vmem:[%s63] sm:$0x3]
        %v10027 = vadd.f32 %v10017, %v10018
        %10028 = vadd.xlane.f32.xlu0 %v10027
        %v10029 = vpop.xlane.xlu0 %10028
        %v10030 = vadd.f32 %v10019, %v10020
        %10031 = vadd.xlane.f32.xlu0 %v10030
        %v10032 = vpop.xlane.xlu0 %10031
        %v10033 = vadd.f32 %v10021, %v10022
        %10034 = vadd.xlane.f32.xlu0 %v10033
        %v10035 = vpop.xlane.xlu0 %10034
        %v10036 = vadd.f32 %v10023, %v10024
        %10037 = vadd.xlane.f32.xlu0 %v10036
        %v10038 = vpop.xlane.xlu0 %10037
        %v10039 = vmul.f32 %v10029, 0.00390625
        %v10040 = vmul.f32 %v10032, 0.00390625
        %v10041 = vmul.f32 %v10035, 0.00390625
        %v10042 = vmul.f32 %v10038, 0.00390625
        %v10043 = vmul.f32 %v10017, %v10017
        %v10044 = vmul.f32 %v10018, %v10018
        %v10045 = vmul.f32 %v10019, %v10019
        %v10046 = vmul.f32 %v10020, %v10020
        %v10047 = vmul.f32 %v10021, %v10021
        %v10048 = vmul.f32 %v10022, %v10022
        %v10049 = vmul.f32 %v10023, %v10023
        %v10050 = vmul.f32 %v10024, %v10024
        %v10051 = vadd.f32 %v10043, %v10044
        %10052 = vadd.xlane.f32.xlu0 %v10051
        %v10053 = vpop.xlane.xlu0 %10052
        %v10054 = vadd.f32 %v10045, %v10046
        %10055 = vadd.xlane.f32.xlu0 %v10054
        %v10056 = vpop.xlane.xlu0 %10055
        %v10057 = vadd.f32 %v10047, %v10048
        %10058 = vadd.xlane.f32.xlu0 %v10057
        %v10059 = vpop.xlane.xlu0 %10058
        %v10060 = vadd.f32 %v10049, %v10050
        %10061 = vadd.xlane.f32.xlu0 %v10060
        %v10062 = vpop.xlane.xlu0 %10061
        %v10063 = vmul.f32 %v10053, 0.00390625
        %v10064 = vmul.f32 %v10056, 0.00390625
        %v10065 = vmul.f32 %v10059, 0.00390625
        %v10066 = vmul.f32 %v10062, 0.00390625
        %v10067 = vmul.f32 %v10039, %v10039
        %v10068 = vmul.f32 %v10040, %v10040
        %v10069 = vmul.f32 %v10041, %v10041
        %v10070 = vmul.f32 %v10042, %v10042
        %v10071 = vsub.f32 %v10063, %v10067
        %v10072 = vsub.f32 %v10064, %v10068
        %v10073 = vsub.f32 %v10065, %v10069
        %v10074 = vsub.f32 %v10066, %v10070
        %v10075 = vsub.f32 %v10017, %v10039
        %v10076 = vsub.f32 %v10018, %v10039
        %v10077 = vsub.f32 %v10019, %v10040
        %v10078 = vsub.f32 %v10020, %v10040
        %v10079 = vsub.f32 %v10021, %v10041
        %v10080 = vsub.f32 %v10022, %v10041
        %v10081 = vsub.f32 %v10023, %v10042
        %v10082 = vsub.f32 %v10024, %v10042
        %v10083 = vadd.f32 %v10071, 1e-05
        %v10084 = vadd.f32 %v10072, 1e-05
        %v10085 = vadd.f32 %v10073, 1e-05
        %v10086 = vadd.f32 %v10074, 1e-05
        %v10087 = vrsqrt.pop %v10083
        %v10088 = vrsqrt.pop %v10084
        %v10089 = vrsqrt.pop %v10085
        %v10090 = vrsqrt.pop %v10086
        %v10091 = vmul.f32 %v10075, %v10087
        %v10092 = vmul.f32 %v10076, %v10087
        %v10093 = vmul.f32 %v10077, %v10088
        %v10094 = vmul.f32 %v10078, %v10088
        %v10095 = vmul.f32 %v10079, %v10089
        %v10096 = vmul.f32 %v10080, %v10089
        %v10097 = vmul.f32 %v10081, %v10090
        %v10098 = vmul.f32 %v10082, %v10090
        %v10100 = vlaneseq
        %v10101 = vshrl.u32 %v10100, 7
        %v10102 = vsub.s32 0, %v10101
        %v10103 = vrot.slane %v10025, %v10102
        %v10104 = vlaneseq
        %v10105 = vshrl.u32 %v10104, 7
        %v10106 = vsub.s32 1, %v10105
        %v10107 = vrot.slane %v10025, %v10106
        %v10110 = vmul.f32 %v10091, %v10103
        %v10111 = vmul.f32 %v10092, %v10107
        %v10112 = vmul.f32 %v10093, %v10103
        %v10113 = vmul.f32 %v10094, %v10107
        %v10114 = vmul.f32 %v10095, %v10103
        %v10115 = vmul.f32 %v10096, %v10107
        %v10116 = vmul.f32 %v10097, %v10103
        %v10117 = vmul.f32 %v10098, %v10107
        %v10119 = vlaneseq
        %v10120 = vshrl.u32 %v10119, 7
        %v10121 = vsub.s32 0, %v10120
        %v10122 = vrot.slane %v10026, %v10121
        %v10123 = vlaneseq
        %v10124 = vshrl.u32 %v10123, 7
        %v10125 = vsub.s32 1, %v10124
        %v10126 = vrot.slane %v10026, %v10125
        %v10129 = vadd.f32 %v10110, %v10122
        %v10130 = vadd.f32 %v10111, %v10126
        %v10131 = vadd.f32 %v10112, %v10122
        %v10132 = vadd.f32 %v10113, %v10126
        %v10133 = vadd.f32 %v10114, %v10122
        %v10134 = vadd.f32 %v10115, %v10126
        %v10135 = vadd.f32 %v10116, %v10122
        %v10136 = vadd.f32 %v10117, %v10126
        %v10137 = vpack.c.bf16 %v10131, %v10129
        %v10138 = vpack.c.bf16 %v10132, %v10130
        %v10139 = vpack.c.bf16 %v10135, %v10133
        %v10140 = vpack.c.bf16 %v10136, %v10134
        %v10141 = vld [vmem:[%s53] sm:$0xf]
        %v10142 = vld [vmem:[%s53 + $0x4] sm:$0xf]
        %v10143 = vld [vmem:[%s53 + $0x8] sm:$0xf]
        %v10144 = vld [vmem:[%s53 + $0xc] sm:$0xf]
        %v10145 = vld [vmem:[%s53 + $0x10] sm:$0xf]
        %v10146 = vld [vmem:[%s53 + $0x14] sm:$0xf]
        %v10147 = vld [vmem:[%s53 + $0x18] sm:$0xf]
        %v10148 = vld [vmem:[%s53 + $0x1c] sm:$0xf]
        %v10149 = vld [vmem:[%s53 + $0x20] sm:$0xf]
        %v10150 = vld [vmem:[%s53 + $0x24] sm:$0xf]
        %v10151 = vld [vmem:[%s53 + $0x28] sm:$0xf]
        %v10152 = vld [vmem:[%s53 + $0x2c] sm:$0xf]
        %v10153 = vld [vmem:[%s53 + $0x30] sm:$0xf]
        %v10154 = vld [vmem:[%s53 + $0x34] sm:$0xf]
        %v10155 = vld [vmem:[%s53 + $0x38] sm:$0xf]
        %v10156 = vld [vmem:[%s53 + $0x3c] sm:$0xf]
        %v10157 = vld [vmem:[%s53 + $0x40] sm:$0xf]
        %v10158 = vld [vmem:[%s53 + $0x44] sm:$0xf]
        %v10159 = vld [vmem:[%s53 + $0x48] sm:$0xf]
        %v10160 = vld [vmem:[%s53 + $0x4c] sm:$0xf]
        %v10161 = vld [vmem:[%s53 + $0x50] sm:$0xf]
        %v10162 = vld [vmem:[%s53 + $0x54] sm:$0xf]
        %v10163 = vld [vmem:[%s53 + $0x58] sm:$0xf]
        %v10164 = vld [vmem:[%s53 + $0x5c] sm:$0xf]
        %v10165 = vld [vmem:[%s53 + $0x60] sm:$0xf]
        %v10166 = vld [vmem:[%s53 + $0x64] sm:$0xf]
        %v10167 = vld [vmem:[%s53 + $0x68] sm:$0xf]
        %v10168 = vld [vmem:[%s53 + $0x6c] sm:$0xf]
        %v10169 = vld [vmem:[%s53 + $0x70] sm:$0xf]
        %v10170 = vld [vmem:[%s53 + $0x74] sm:$0xf]
        %v10171 = vld [vmem:[%s53 + $0x78] sm:$0xf]
        %v10172 = vld [vmem:[%s53 + $0x7c] sm:$0xf]
        %v10173 = vld [vmem:[%s55] sm:$0x1]
        %v10175 = vlaneseq
        %v10176 = vshrl.u32 %v10175, 7
        %v10177 = vsub.s32 0, %v10176
        %v10178 = vrot.slane %v10173, %v10177
        %v10212 = vunpack.c.l.b16 %v10141
        %v10213 = vunpack.c.l.b16 %v10142
        %v10214 = vunpack.c.l.b16 %v10143
        %v10215 = vunpack.c.l.b16 %v10144
        %v10216 = vunpack.c.l.b16 %v10145
        %v10217 = vunpack.c.l.b16 %v10146
        %v10218 = vunpack.c.l.b16 %v10147
        %v10219 = vunpack.c.l.b16 %v10148
        %v10220 = vunpack.c.l.b16 %v10149
        %v10221 = vunpack.c.l.b16 %v10150
        %v10222 = vunpack.c.l.b16 %v10151
        %v10223 = vunpack.c.l.b16 %v10152
        %v10224 = vunpack.c.l.b16 %v10153
        %v10225 = vunpack.c.l.b16 %v10154
        %v10226 = vunpack.c.l.b16 %v10155
        %v10227 = vunpack.c.l.b16 %v10156
        %v10228 = vunpack.c.l.b16 %v10157
        %v10229 = vunpack.c.l.b16 %v10158
        %v10230 = vunpack.c.l.b16 %v10159
        %v10231 = vunpack.c.l.b16 %v10160
        %v10232 = vunpack.c.l.b16 %v10161
        %v10233 = vunpack.c.l.b16 %v10162
        %v10234 = vunpack.c.l.b16 %v10163
        %v10235 = vunpack.c.l.b16 %v10164
        %v10236 = vunpack.c.l.b16 %v10165
        %v10237 = vunpack.c.l.b16 %v10166
        %v10238 = vunpack.c.l.b16 %v10167
        %v10239 = vunpack.c.l.b16 %v10168
        %v10240 = vunpack.c.l.b16 %v10169
        %v10241 = vunpack.c.l.b16 %v10170
        %v10242 = vunpack.c.l.b16 %v10171
        %v10243 = vunpack.c.l.b16 %v10172
        %v10244 = vpack.c.b16 %v10213, %v10212
        %v10245 = vpack.c.b16 %v10215, %v10214
        %v10246 = vpack.c.b16 %v10217, %v10216
        %v10247 = vpack.c.b16 %v10219, %v10218
        %v10248 = vpack.c.b16 %v10221, %v10220
        %v10249 = vpack.c.b16 %v10223, %v10222
        %v10250 = vpack.c.b16 %v10225, %v10224
        %v10251 = vpack.c.b16 %v10227, %v10226
        %v10252 = vpack.c.b16 %v10229, %v10228
        %v10253 = vpack.c.b16 %v10231, %v10230
        %v10254 = vpack.c.b16 %v10233, %v10232
        %v10255 = vpack.c.b16 %v10235, %v10234
        %v10256 = vpack.c.b16 %v10237, %v10236
        %v10257 = vpack.c.b16 %v10239, %v10238
        %v10258 = vpack.c.b16 %v10241, %v10240
        %v10259 = vpack.c.b16 %v10243, %v10242
        %10276 = vmatprep.subr.bf16.mxu0 0
        %10277 = vmatpush1.bf16.msra.mxu0 %v10244
        %10278 = vmatprep.subr.bf16.mxu0 0
        %10279 = vmatpush1.bf16.msra.mxu0 %v10245
        %10280 = vmatprep.subr.bf16.mxu0 0
        %10281 = vmatpush1.bf16.msra.mxu0 %v10246
        %10282 = vmatprep.subr.bf16.mxu0 0
        %10283 = vmatpush1.bf16.msra.mxu0 %v10247
        %10284 = vmatprep.subr.bf16.mxu0 0
        %10285 = vmatpush1.bf16.msra.mxu0 %v10248
        %10286 = vmatprep.subr.bf16.mxu0 0
        %10287 = vmatpush1.bf16.msra.mxu0 %v10249
        %10288 = vmatprep.subr.bf16.mxu0 0
        %10289 = vmatpush1.bf16.msra.mxu0 %v10250
        %10290 = vmatprep.subr.bf16.mxu0 0
        %10291 = vmatpush1.bf16.msra.mxu0 %v10251
        %10292 = vmatprep.subr.bf16.mxu0 0
        %10293 = vmatpush1.bf16.msra.mxu0 %v10252
        %10294 = vmatprep.subr.bf16.mxu0 0
        %10295 = vmatpush1.bf16.msra.mxu0 %v10253
        %10296 = vmatprep.subr.bf16.mxu0 0
        %10297 = vmatpush1.bf16.msra.mxu0 %v10254
        %10298 = vmatprep.subr.bf16.mxu0 0
        %10299 = vmatpush1.bf16.msra.mxu0 %v10255
        %10300 = vmatprep.subr.bf16.mxu0 0
        %10301 = vmatpush1.bf16.msra.mxu0 %v10256
        %10302 = vmatprep.subr.bf16.mxu0 0
        %10303 = vmatpush1.bf16.msra.mxu0 %v10257
        %10304 = vmatprep.subr.bf16.mxu0 0
        %10305 = vmatpush1.bf16.msra.mxu0 %v10258
        %10306 = vmatprep.subr.bf16.mxu0 0
        %10307 = vmatpush1.bf16.msra.mxu0 %v10259
        %10308 = vmatprep.mubr.bf16.mxu0 %v10138
        %10309 = vmatmul.mubr.bf16.gmra.mrb[0].mxu0 %v10137
        %v10310 = vpop.f32.mrb[0].mxu0
        %v10311 = vadd.f32 %v10178, %v10310
        %v10312 = vpop.f32.mrb[0].mxu0
        %v10313 = vpop.f32.mrb[0].mxu0
        %v10314 = vadd.f32 %v10178, %v10313
        %v10315 = vpop.f32.mrb[0].mxu0
        %10316 = vmatprep.mubr.bf16.mxu0 %v10140
        %10317 = vmatmul.mubr.bf16.gmra.mrb[0].mxu0 %v10139
        %v10318 = vpop.f32.mrb[0].mxu0
        %v10319 = vadd.f32 %v10178, %v10318
        %v10320 = vpop.f32.mrb[0].mxu0
        %v10321 = vpop.f32.mrb[0].mxu0
        %v10322 = vadd.f32 %v10178, %v10321
        %v10323 = vpop.f32.mrb[0].mxu0
        %10324 = vdwg.mxu0
        %v10325 = vmax.f32 %v10311, 0.0
        %v10326 = vmax.f32 %v10314, 0.0
        %v10327 = vmax.f32 %v10319, 0.0
        %v10328 = vmax.f32 %v10322, 0.0
        %v10329 = vpack.c.bf16 %v10326, %v10325
        %v10330 = vpack.c.bf16 %v10328, %v10327
        %v10331 = vld [vmem:[%s57] sm:$0xff]
        %v10332 = vld [vmem:[%s57 + $0x8] sm:$0xff]
        %v10333 = vld [vmem:[%s57 + $0x10] sm:$0xff]
        %v10334 = vld [vmem:[%s57 + $0x18] sm:$0xff]
        %v10335 = vld [vmem:[%s57 + $0x20] sm:$0xff]
        %v10336 = vld [vmem:[%s57 + $0x28] sm:$0xff]
        %v10337 = vld [vmem:[%s57 + $0x30] sm:$0xff]
        %v10338 = vld [vmem:[%s57 + $0x38] sm:$0xff]
        %v10339 = vld [vmem:[%s57 + $0x40] sm:$0xff]
        %v10340 = vld [vmem:[%s57 + $0x48] sm:$0xff]
        %v10341 = vld [vmem:[%s57 + $0x50] sm:$0xff]
        %v10342 = vld [vmem:[%s57 + $0x58] sm:$0xff]
        %v10343 = vld [vmem:[%s57 + $0x60] sm:$0xff]
        %v10344 = vld [vmem:[%s57 + $0x68] sm:$0xff]
        %v10345 = vld [vmem:[%s57 + $0x70] sm:$0xff]
        %v10346 = vld [vmem:[%s57 + $0x78] sm:$0xff]
        %v10347 = vld [vmem:[%s59] sm:$0x3]
        %v10349 = vlaneseq
        %v10350 = vshrl.u32 %v10349, 7
        %v10351 = vsub.s32 0, %v10350
        %v10352 = vrot.slane %v10347, %v10351
        %v10353 = vlaneseq
        %v10354 = vshrl.u32 %v10353, 7
        %v10355 = vsub.s32 1, %v10354
        %v10356 = vrot.slane %v10347, %v10355
        %v10375 = vunpack.c.l.b16 %v10331
        %v10376 = vunpack.c.h.b16 %v10331
        %v10377 = vunpack.c.l.b16 %v10332
        %v10378 = vunpack.c.h.b16 %v10332
        %v10379 = vunpack.c.l.b16 %v10333
        %v10380 = vunpack.c.h.b16 %v10333
        %v10381 = vunpack.c.l.b16 %v10334
        %v10382 = vunpack.c.h.b16 %v10334
        %v10383 = vunpack.c.l.b16 %v10335
        %v10384 = vunpack.c.h.b16 %v10335
        %v10385 = vunpack.c.l.b16 %v10336
        %v10386 = vunpack.c.h.b16 %v10336
        %v10387 = vunpack.c.l.b16 %v10337
        %v10388 = vunpack.c.h.b16 %v10337
        %v10389 = vunpack.c.l.b16 %v10338
        %v10390 = vunpack.c.h.b16 %v10338
        %v10391 = vunpack.c.l.b16 %v10339
        %v10392 = vunpack.c.h.b16 %v10339
        %v10393 = vunpack.c.l.b16 %v10340
        %v10394 = vunpack.c.h.b16 %v10340
        %v10395 = vunpack.c.l.b16 %v10341
        %v10396 = vunpack.c.h.b16 %v10341
        %v10397 = vunpack.c.l.b16 %v10342
        %v10398 = vunpack.c.h.b16 %v10342
        %v10399 = vunpack.c.l.b16 %v10343
        %v10400 = vunpack.c.h.b16 %v10343
        %v10401 = vunpack.c.l.b16 %v10344
        %v10402 = vunpack.c.h.b16 %v10344
        %v10403 = vunpack.c.l.b16 %v10345
        %v10404 = vunpack.c.h.b16 %v10345
        %v10405 = vunpack.c.l.b16 %v10346
        %v10406 = vunpack.c.h.b16 %v10346
        %v10407 = vpack.c.b16 %v10377, %v10375
        %v10408 = vpack.c.b16 %v10378, %v10376
        %v10409 = vpack.c.b16 %v10381, %v10379
        %v10410 = vpack.c.b16 %v10382, %v10380
        %v10411 = vpack.c.b16 %v10385, %v10383
        %v10412 = vpack.c.b16 %v10386, %v10384
        %v10413 = vpack.c.b16 %v10389, %v10387
        %v10414 = vpack.c.b16 %v10390, %v10388
        %v10415 = vpack.c.b16 %v10393, %v10391
        %v10416 = vpack.c.b16 %v10394, %v10392
        %v10417 = vpack.c.b16 %v10397, %v10395
        %v10418 = vpack.c.b16 %v10398, %v10396
        %v10419 = vpack.c.b16 %v10401, %v10399
        %v10420 = vpack.c.b16 %v10402, %v10400
        %v10421 = vpack.c.b16 %v10405, %v10403
        %v10422 = vpack.c.b16 %v10406, %v10404
        %10439 = vmatprep.subr.bf16.mxu0 %v10408
        %10440 = vmatpush1.bf16.msra.mxu0 %v10407
        %10441 = vmatprep.subr.bf16.mxu0 %v10410
        %10442 = vmatpush1.bf16.msra.mxu0 %v10409
        %10443 = vmatprep.subr.bf16.mxu0 %v10412
        %10444 = vmatpush1.bf16.msra.mxu0 %v10411
        %10445 = vmatprep.subr.bf16.mxu0 %v10414
        %10446 = vmatpush1.bf16.msra.mxu0 %v10413
        %10447 = vmatprep.subr.bf16.mxu0 %v10416
        %10448 = vmatpush1.bf16.msra.mxu0 %v10415
        %10449 = vmatprep.subr.bf16.mxu0 %v10418
        %10450 = vmatpush1.bf16.msra.mxu0 %v10417
        %10451 = vmatprep.subr.bf16.mxu0 %v10420
        %10452 = vmatpush1.bf16.msra.mxu0 %v10419
        %10453 = vmatprep.subr.bf16.mxu0 %v10422
        %10454 = vmatpush1.bf16.msra.mxu0 %v10421
        %10455 = vmatprep.subr.bf16.mxu0 0
        %10456 = vmatpush1.bf16.msra.mxu0 0
        %10457 = vmatprep.subr.bf16.mxu0 0
        %10458 = vmatpush1.bf16.msra.mxu0 0
        %10459 = vmatprep.subr.bf16.mxu0 0
        %10460 = vmatpush1.bf16.msra.mxu0 0
        %10461 = vmatprep.subr.bf16.mxu0 0
        %10462 = vmatpush1.bf16.msra.mxu0 0
        %10463 = vmatprep.subr.bf16.mxu0 0
        %10464 = vmatpush1.bf16.msra.mxu0 0
        %10465 = vmatprep.subr.bf16.mxu0 0
        %10466 = vmatpush1.bf16.msra.mxu0 0
        %10467 = vmatprep.subr.bf16.mxu0 0
        %10468 = vmatpush1.bf16.msra.mxu0 0
        %10469 = vmatprep.subr.bf16.mxu0 0
        %10470 = vmatpush1.bf16.msra.mxu0 0
        %10471 = vmatprep.mubr.bf16.mxu0 0
        %10472 = vmatmul.mubr.bf16.gmra.mrb[0].mxu0 %v10329
        %v10473 = vpop.f32.mrb[0].mxu0
        %v10474 = vadd.f32 %v10352, %v10473
        %v10475 = vpop.f32.mrb[0].mxu0
        %v10476 = vadd.f32 %v10356, %v10475
        %v10477 = vpop.f32.mrb[0].mxu0
        %v10478 = vadd.f32 %v10352, %v10477
        %v10479 = vpop.f32.mrb[0].mxu0
        %v10480 = vadd.f32 %v10356, %v10479
        %10481 = vmatprep.mubr.bf16.mxu0 0
        %10482 = vmatmul.mubr.bf16.gmra.mrb[0].mxu0 %v10330
        %v10483 = vpop.f32.mrb[0].mxu0
        %v10484 = vadd.f32 %v10352, %v10483
        %v10485 = vpop.f32.mrb[0].mxu0
        %v10486 = vadd.f32 %v10356, %v10485
        %v10487 = vpop.f32.mrb[0].mxu0
        %v10488 = vadd.f32 %v10352, %v10487
        %v10489 = vpop.f32.mrb[0].mxu0
        %v10490 = vadd.f32 %v10356, %v10489
        %10491 = vdwg.mxu0
        %v10492 = vadd.f32 %v10129, %v10474
        %v10493 = vadd.f32 %v10130, %v10476
        %v10494 = vadd.f32 %v10131, %v10478
        %v10495 = vadd.f32 %v10132, %v10480
        %v10496 = vadd.f32 %v10133, %v10484
        %v10497 = vadd.f32 %v10134, %v10486
        %v10498 = vadd.f32 %v10135, %v10488
        %v10499 = vadd.f32 %v10136, %v10490
        %v10500 = vld [vmem:[%s65] sm:$0x3]
        %v10501 = vld [vmem:[%s67] sm:$0x3]
        %v10502 = vadd.f32 %v10492, %v10493
        %10503 = vadd.xlane.f32.xlu0 %v10502
        %v10504 = vpop.xlane.xlu0 %10503
        %v10505 = vadd.f32 %v10494, %v10495
        %10506 = vadd.xlane.f32.xlu0 %v10505
        %v10507 = vpop.xlane.xlu0 %10506
        %v10508 = vadd.f32 %v10496, %v10497
        %10509 = vadd.xlane.f32.xlu0 %v10508
        %v10510 = vpop.xlane.xlu0 %10509
        %v10511 = vadd.f32 %v10498, %v10499
        %10512 = vadd.xlane.f32.xlu0 %v10511
        %v10513 = vpop.xlane.xlu0 %10512
        %v10514 = vmul.f32 %v10504, 0.00390625
        %v10515 = vmul.f32 %v10507, 0.00390625
        %v10516 = vmul.f32 %v10510, 0.00390625
        %v10517 = vmul.f32 %v10513, 0.00390625
        %v10518 = vmul.f32 %v10492, %v10492
        %v10519 = vmul.f32 %v10493, %v10493
        %v10520 = vmul.f32 %v10494, %v10494
        %v10521 = vmul.f32 %v10495, %v10495
        %v10522 = vmul.f32 %v10496, %v10496
        %v10523 = vmul.f32 %v10497, %v10497
        %v10524 = vmul.f32 %v10498, %v10498
        %v10525 = vmul.f32 %v10499, %v10499
        %v10526 = vadd.f32 %v10518, %v10519
        %10527 = vadd.xlane.f32.xlu0 %v10526
        %v10528 = vpop.xlane.xlu0 %10527
        %v10529 = vadd.f32 %v10520, %v10521
        %10530 = vadd.xlane.f32.xlu0 %v10529
        %v10531 = vpop.xlane.xlu0 %10530
        %v10532 = vadd.f32 %v10522, %v10523
        %10533 = vadd.xlane.f32.xlu0 %v10532
        %v10534 = vpop.xlane.xlu0 %10533
        %v10535 = vadd.f32 %v10524, %v10525
        %10536 = vadd.xlane.f32.xlu0 %v10535
        %v10537 = vpop.xlane.xlu0 %10536
        %v10538 = vmul.f32 %v10528, 0.00390625
        %v10539 = vmul.f32 %v10531, 0.00390625
        %v10540 = vmul.f32 %v10534, 0.00390625
        %v10541 = vmul.f32 %v10537, 0.00390625
        %v10542 = vmul.f32 %v10514, %v10514
        %v10543 = vmul.f32 %v10515, %v10515
        %v10544 = vmul.f32 %v10516, %v10516
        %v10545 = vmul.f32 %v10517, %v10517
        %v10546 = vsub.f32 %v10538, %v10542
        %v10547 = vsub.f32 %v10539, %v10543
        %v10548 = vsub.f32 %v10540, %v10544
        %v10549 = vsub.f32 %v10541, %v10545
        %v10550 = vsub.f32 %v10492, %v10514
        %v10551 = vsub.f32 %v10493, %v10514
        %v10552 = vsub.f32 %v10494, %v10515
        %v10553 = vsub.f32 %v10495, %v10515
        %v10554 = vsub.f32 %v10496, %v10516
        %v10555 = vsub.f32 %v10497, %v10516
        %v10556 = vsub.f32 %v10498, %v10517
        %v10557 = vsub.f32 %v10499, %v10517
        %v10558 = vadd.f32 %v10546, 1e-05
        %v10559 = vadd.f32 %v10547, 1e-05
        %v10560 = vadd.f32 %v10548, 1e-05
        %v10561 = vadd.f32 %v10549, 1e-05
        %v10562 = vrsqrt.pop %v10558
        %v10563 = vrsqrt.pop %v10559
        %v10564 = vrsqrt.pop %v10560
        %v10565 = vrsqrt.pop %v10561
        %v10566 = vmul.f32 %v10550, %v10562
        %v10567 = vmul.f32 %v10551, %v10562
        %v10568 = vmul.f32 %v10552, %v10563
        %v10569 = vmul.f32 %v10553, %v10563
        %v10570 = vmul.f32 %v10554, %v10564
        %v10571 = vmul.f32 %v10555, %v10564
        %v10572 = vmul.f32 %v10556, %v10565
        %v10573 = vmul.f32 %v10557, %v10565
        %v10575 = vlaneseq
        %v10576 = vshrl.u32 %v10575, 7
        %v10577 = vsub.s32 0, %v10576
        %v10578 = vrot.slane %v10500, %v10577
        %v10579 = vlaneseq
        %v10580 = vshrl.u32 %v10579, 7
        %v10581 = vsub.s32 1, %v10580
        %v10582 = vrot.slane %v10500, %v10581
        %v10585 = vmul.f32 %v10566, %v10578
        %v10586 = vmul.f32 %v10567, %v10582
        %v10587 = vmul.f32 %v10568, %v10578
        %v10588 = vmul.f32 %v10569, %v10582
        %v10589 = vmul.f32 %v10570, %v10578
        %v10590 = vmul.f32 %v10571, %v10582
        %v10591 = vmul.f32 %v10572, %v10578
        %v10592 = vmul.f32 %v10573, %v10582
        %v10594 = vlaneseq
        %v10595 = vshrl.u32 %v10594, 7
        %v10596 = vsub.s32 0, %v10595
        %v10597 = vrot.slane %v10501, %v10596
        %v10598 = vlaneseq
        %v10599 = vshrl.u32 %v10598, 7
        %v10600 = vsub.s32 1, %v10599
        %v10601 = vrot.slane %v10501, %v10600
        %v10604 = vadd.f32 %v10585, %v10597
        %v10605 = vadd.f32 %v10586, %v10601
        %v10606 = vadd.f32 %v10587, %v10597
        %v10607 = vadd.f32 %v10588, %v10601
        %v10608 = vadd.f32 %v10589, %v10597
        %v10609 = vadd.f32 %v10590, %v10601
        %v10610 = vadd.f32 %v10591, %v10597
        %v10611 = vadd.f32 %v10592, %v10601
        %v10612 = vpack.c.bf16 %v5412, %v5410
        %v10613 = vpack.c.bf16 %v5413, %v5411
        %v10614 = vpack.c.bf16 %v10606, %v10604
        %v10615 = vpack.c.bf16 %v10607, %v10605
        %v10616 = vpack.c.bf16 %v10610, %v10608
        %v10617 = vpack.c.bf16 %v10611, %v10609
        %10618 = vmatprep.subr.bf16.mxu0 %v10615
        %10619 = vmatpush1.bf16.xpose.msra.mxu0 %v10614
        %10620 = vmatprep.subr.bf16.mxu0 %v10617
        %10621 = vmatpush1.bf16.xpose.msra.mxu0 %v10616
        %10622 = vmatprep.subr.bf16.mxu0 0
        %10623 = vmatpush1.bf16.xpose.msra.mxu0 0
        %10624 = vmatprep.subr.bf16.mxu0 0
        %10625 = vmatpush1.bf16.xpose.msra.mxu0 0
        %10626 = vmatprep.subr.bf16.mxu0 0
        %10627 = vmatpush1.bf16.xpose.msra.mxu0 0
        %10628 = vmatprep.subr.bf16.mxu0 0
        %10629 = vmatpush1.bf16.xpose.msra.mxu0 0
        %10630 = vmatprep.subr.bf16.mxu0 0
        %10631 = vmatpush1.bf16.xpose.msra.mxu0 0
        %10632 = vmatprep.subr.bf16.mxu0 0
        %10633 = vmatpush1.bf16.xpose.msra.mxu0 0
        %10634 = vmatprep.subr.bf16.mxu0 0
        %10635 = vmatpush1.bf16.xpose.msra.mxu0 0
        %10636 = vmatprep.subr.bf16.mxu0 0
        %10637 = vmatpush1.bf16.xpose.msra.mxu0 0
        %10638 = vmatprep.subr.bf16.mxu0 0
        %10639 = vmatpush1.bf16.xpose.msra.mxu0 0
        %10640 = vmatprep.subr.bf16.mxu0 0
        %10641 = vmatpush1.bf16.xpose.msra.mxu0 0
        %10642 = vmatprep.subr.bf16.mxu0 0
        %10643 = vmatpush1.bf16.xpose.msra.mxu0 0
        %10644 = vmatprep.subr.bf16.mxu0 0
        %10645 = vmatpush1.bf16.xpose.msra.mxu0 0
        %10646 = vmatprep.subr.bf16.mxu0 0
        %10647 = vmatpush1.bf16.xpose.msra.mxu0 0
        %10648 = vmatprep.subr.bf16.mxu0 0
        %10649 = vmatpush1.bf16.xpose.msra.mxu0 0
        %10650 = vmatprep.mubr.bf16.mxu0 %v10613
        %10651 = vmatmul.mubr.bf16.gmra.mrb[0].mxu0 %v10612
        %v10652 = vpop.f32.mrb[0].mxu0
        %v10653 = vadd.f32 0.0, %v10652
        %v10654 = vpop.f32.mrb[0].mxu0
        %v10655 = vpop.f32.mrb[0].mxu0
        %v10656 = vadd.f32 0.0, %v10655
        %v10657 = vpop.f32.mrb[0].mxu0
        %10658 = vdwg.mxu0
        %10659 = vst.msk [vmem:[%s1056] sm:$0xff] %vm3393, %v10653
        %10660 = vst.msk [vmem:[%s1056 + $0x8] sm:$0xff] %vm3393, %v10656
        %s10661 = sand.u32 %s815, 1
        %s10662 = scalar_lea.sflag [#allocation3], %s10661
        %s10663 = sand.u32 %s815, 1
        %s10664 = smul.addr %s10663, 16
        %s10665 = scalar_lea.vmem [#allocation2], %s10664
        // Predicated region
        $region157: #{_lambda_.1} parent=155 // pred_check
          %p10666 = pneg %p825
        $region158: #{_lambda_.1} parent=155 // pred_check_branch
          %10668 = sbr.rel (%p10666) target = $region160
        $region159: #{_lambda_.1} parent=155 // pred_region
          %s10669 = smul.u32 2, %s83
          %s10671 = ssub.s32 256, 256
          %10672 = vsyncadd %s10662, %s10671
          %s10673 = smul.addr %s10669, 128
          %s10674 = scalar_lea.hbm %s69, %s10673
          %s10675 = sshll.u32 %s10665, 4
          %s10676 = int_to_ptr.vmem [resolvable:$true] %s10675
          %10681 = dma.vmem_to_hbm [thread:$0]  %s10676, 256, %s10674, %s10662, 128, 128, 8
        $region160: #{_lambda_.1} parent=155 // pred_fallthru
          _
      $region156: #{_lambda_.1} parent=5 // pred_fallthru
        _
      %p10682 = scmp.le.s32.totalorder 2, %s78
      // Predicated region
      $region161: #{_lambda_.1} parent=5 // pred_check
        %p10683 = pneg %p10682
      $region162: #{_lambda_.1} parent=5 // pred_check_branch
        %10685 = sbr.rel (%p10683) target = $region164
      $region163: #{_lambda_.1} parent=5 // pred_region
        %s10686 = ssub.s32 %s78, 2
        // Predicated region
        $region165: #{_lambda_.1} parent=163 // pred_check
          %p10687 = pneg %p831
        $region166: #{_lambda_.1} parent=163 // pred_check_branch
          %10689 = sbr.rel (%p10687) target = $region168
        $region167: #{_lambda_.1} parent=163 // pred_region
          %s10690 = sand.u32 %s816, 1
          %s10691 = scalar_lea.sflag [#allocation3], %s10690
          %s10692 = sand.u32 %s816, 1
          %s10693 = smul.addr %s10692, 16
          %s10694 = scalar_lea.vmem [#allocation2], %s10693
          %10695 = dma.done %s10691, 256
        $region168: #{_lambda_.1} parent=163 // pred_fallthru
          _
      $region164: #{_lambda_.1} parent=5 // pred_fallthru
        _
    $region6: #{_lambda_.1} parent=1 // loop_footer
      %s82 = sadd.s32 1, %s78
    $region7: #{_lambda_.1} parent=1 // loop_footer_branch
      %77 = sbr.rel target = $region3
    $region8: #{_lambda_.1} parent=1 // loop_exit
      _
    %10696 = vsyncpa [#allocation3], 1
    %s10697 = scalar_lea.sflag [#allocation3], 1
    %10698 = vsyncpa %s10697, 1

</llo_original>
